<compile_context>
chip_gen: v7x
topology: tpu7x:2x2x1
jax: 0.10.0
libtpu: 0.0.40
codegen_flags: <defaults>
</compile_context>

<pallas_src>
import functools

import numpy as np
import jax
import jax.numpy as jnp
from jax import lax
from jax.experimental import pallas as pl
from jax.experimental.pallas import tpu as pltpu

F32 = jnp.float32
BF16 = jnp.bfloat16

# The 1x1 convs are HBM-bound at the channel counts this module uses, so full
# f32 MXU precision is free.  On v5e with large channel counts switch this to
# lax.Precision.DEFAULT (single-pass bf16).
_CONV_PREC = lax.Precision.HIGHEST

_VMEM_LIMIT = 48 * 1024 * 1024          # explicit scoped-VMEM request (fits v7x 64 MiB)
_CONV_VMEM_BUDGET = 24 * 1024 * 1024    # per-step block bytes (incl. double buffering)
_DFT_VMEM_BUDGET = 6 * 1024 * 1024      # per-step input-block budget for DFT kernels


# --------------------------- tiling helpers -----------------------------------

def _pick_tile(s, bytes_per_col, cap=32768):
    """Lane-dense spatial tile under a VMEM budget.

    Prefers a divisor of `s` (no remainder block); otherwise returns the largest
    multiple of 128 under the budget (callers use a cdiv grid; Pallas masks the
    remainder block, which is safe because every spatial column is independent)."""
    max_t = max(128, min(s, cap, _CONV_VMEM_BUDGET // max(bytes_per_col, 1)))
    if s <= max_t:
        return s                       # full extent: always a legal block shape
    for t in range(max_t, 127, -1):
        if s % t == 0 and t % 128 == 0:
            return t
    return (max_t // 128) * 128        # non-divisor fallback (cdiv grid)


def _pick_channel_tile(c, hw, prefer_split=False):
    """Channel tile for the DFT kernels: keeps per-step VMEM ~O(MB) on v7x."""
    cap = max(1, _DFT_VMEM_BUDGET // (hw * 48))
    tc = 1
    for t in range(1, c + 1):
        if c % t == 0 and t <= cap:
            tc = t
    if prefer_split and tc == c and c > 1:
        # keep >= 2 channel tiles so both v7x TensorCores get work when B == 1
        tc = max(t for t in range(1, c) if c % t == 0)
    return tc


# --------------------------- 1x1 conv kernels ---------------------------------

def _conv1x1_relu_kernel(x_ref, w_ref, o_ref):
    # x_ref: (1, Ci, tn)   w_ref: (Co, Ci)   o_ref: (1, Co, tn)
    o_ref[0] = jnp.maximum(
        jnp.dot(w_ref[...], x_ref[0], preferred_element_type=F32,
                precision=_CONV_PREC), 0.0)


def conv1x1_relu(x, w):
    """relu(conv2d_1x1(x, w)) on NCHW, computed on the free (B, C, H*W) view."""
    B, Ci, H, W = x.shape
    Co = w.shape[0]
    S = H * W
    tn = _pick_tile(S, bytes_per_col=2 * 4 * (Ci + Co))
    out = pl.pallas_call(
        _conv1x1_relu_kernel,
        out_shape=jax.ShapeDtypeStruct((B, Co, S), F32),
        grid=(B, pl.cdiv(S, tn)),
        in_specs=[pl.BlockSpec((1, Ci, tn), lambda b, s: (b, 0, s)),
                  pl.BlockSpec((Co, Ci), lambda b, s: (0, 0))],
        out_specs=pl.BlockSpec((1, Co, tn), lambda b, s: (b, 0, s)),
        compiler_params=pltpu.CompilerParams(
            dimension_semantics=("parallel", "parallel"),
            vmem_limit_bytes=_VMEM_LIMIT),
    )(x.reshape(B, Ci, S), w)
    return out.reshape(B, Co, H, W)


def _add3_conv1x1_kernel(a_ref, b_ref, c_ref, w_ref, o_ref):
    # conv2(x1 + fu + lfu): fused 3-way add + (Co,Ci)@(Ci,tn) matmul
    s = a_ref[0] + b_ref[0] + c_ref[0]
    o_ref[0] = jnp.dot(w_ref[...], s, preferred_element_type=F32,
                       precision=_CONV_PREC)


def add3_conv1x1(a, b, c_half, w):
    """conv2d_1x1(a + b + repeat_H(c_half), w).

    `c_half` is the LFU output already repeated along W only (B, Ci, H//2, W);
    the H-direction repeat is a block-index identity in its index_map.  The grid
    iterates (B, s-tile, h-half) with h-half innermost so the LFU block index is
    constant across the two repeat steps and stays VMEM-resident."""
    B, Ci, H, W = a.shape
    Co = w.shape[0]
    S = H * W
    Hh, Wc = c_half.shape[2], c_half.shape[3]
    assert Wc == W and 2 * Hh == H, "LFU half must cover half of the H extent"
    S2 = Hh * W
    tn = _pick_tile(S2, bytes_per_col=2 * 4 * (3 * Ci + Co))
    if S2 % tn:
        # TODO(synk): masked remainder blocks are incompatible with the H-repeat
        # index trick; fall back to one block per spatial half.
        tn = S2
    nxs = S2 // tn
    out = pl.pallas_call(
        _add3_conv1x1_kernel,
        out_shape=jax.ShapeDtypeStruct((B, Co, S), F32),
        grid=(B, nxs, 2),
        in_specs=[pl.BlockSpec((1, Ci, tn), lambda bb, s, h: (bb, 0, h * nxs + s)),
                  pl.BlockSpec((1, Ci, tn), lambda bb, s, h: (bb, 0, h * nxs + s)),
                  pl.BlockSpec((1, Ci, tn), lambda bb, s, h: (bb, 0, s)),
                  pl.BlockSpec((Co, Ci), lambda bb, s, h: (0, 0))],
        out_specs=pl.BlockSpec((1, Co, tn), lambda bb, s, h: (bb, 0, h * nxs + s)),
        compiler_params=pltpu.CompilerParams(
            dimension_semantics=("parallel", "parallel", "arbitrary"),
            vmem_limit_bytes=_VMEM_LIMIT),
    )(a.reshape(B, Ci, S), b.reshape(B, Ci, S), c_half.reshape(B, Ci, S2), w)
    return out.reshape(B, Co, H, W)


# --------------------------- DFT constants -------------------------------------

@functools.lru_cache(maxsize=None)
def _dft_consts(H, W):
    """'ortho' cos/sin matrices, with the +- Re/Im combines folded into stacked
    (2H,H)/(2W,W) constants so they run on the MXU (built in numpy at trace
    time, stored bf16)."""
    def cs(n):
        idx = np.arange(n, dtype=np.float64)
        ang = 2.0 * np.pi * np.outer(idx, idx) / n
        sc = 1.0 / np.sqrt(n)
        return np.cos(ang) * sc, np.sin(ang) * sc
    ch, sh = cs(H)
    cw, sw = cs(W)
    fwd_re = np.concatenate([ch, -sh], axis=0)   # (2H, H): lanes [a1 | a2] -> Xr
    fwd_im = np.concatenate([-sh, -ch], axis=0)  # (2H, H): lanes [a1 | a2] -> Xi
    inv_re = np.concatenate([ch, -sh], axis=0)   # (2H, H): lanes [yr | yi] -> ur
    inv_im = np.concatenate([sh, ch], axis=0)    # (2H, H): lanes [yr | yi] -> ui
    inv_w = np.concatenate([cw, -sw], axis=0)    # (2W, W): lanes [ur | ui] -> out
    to = lambda a: jnp.asarray(a, dtype=BF16)
    return to(cw), to(sw), to(fwd_re), to(fwd_im), to(inv_re), to(inv_im), to(inv_w)


# --------------------------- forward 2-D DFT kernel ----------------------------

def _fwd_dft_kernel(x_ref, cw_ref, sw_ref, fre_ref, fim_ref, re_ref, im_ref):
    """Per (batch, channel-tile) block: 'ortho' fft2 of a real (tc, H, W) block.

    a1 = x @ cw, a2 = x @ sw as de-batched (tc*H, W)@(W, W) matmuls, then the
    H-axis DFT + Re/Im combine as (tc*W, 2H)@(2H, H) matmuls against stacked
    cos/sin constants.  Outputs are stored spatially transposed as (tc, W, H):
    the mix is pointwise over frequencies, so orientation is a free choice."""
    _, tc, H, W = x_ref.shape
    xf = x_ref[0].reshape(tc * H, W).astype(BF16)
    a1 = jnp.dot(xf, cw_ref[...], preferred_element_type=F32)        # (tc*H, W)
    a2 = jnp.dot(xf, sw_ref[...], preferred_element_type=F32)        # = -Im part
    a1t = jnp.swapaxes(a1.reshape(tc, H, W), 1, 2).reshape(tc * W, H)
    a2t = jnp.swapaxes(a2.reshape(tc, H, W), 1, 2).reshape(tc * W, H)
    at = jnp.concatenate([a1t, a2t], axis=-1).astype(BF16)           # (tc*W, 2H)
    re = jnp.dot(at, fre_ref[...], preferred_element_type=F32)       # (tc*W, H)
    im = jnp.dot(at, fim_ref[...], preferred_element_type=F32)
    re_ref[0] = re.reshape(tc, W, H).astype(re_ref.dtype)
    im_ref[0] = im.reshape(tc, W, H).astype(im_ref.dtype)


def _dft2_forward(x):
    B, C, H, W = x.shape
    cw, sw, fre, fim, _, _, _ = _dft_consts(H, W)
    tc = _pick_channel_tile(C, H * W, prefer_split=(B == 1))
    mat = lambda a: pl.BlockSpec(a.shape, lambda b, c: (0, 0))
    spec_in = pl.BlockSpec((1, tc, H, W), lambda b, c: (b, c, 0, 0))
    spec_out = pl.BlockSpec((1, tc, W, H), lambda b, c: (b, c, 0, 0))
    re, im = pl.pallas_call(
        _fwd_dft_kernel,
        out_shape=(jax.ShapeDtypeStruct((B, C, W, H), BF16),
                   jax.ShapeDtypeStruct((B, C, W, H), BF16)),
        grid=(B, C // tc),
        in_specs=[spec_in, mat(cw), mat(sw), mat(fre), mat(fim)],
        out_specs=(spec_out, spec_out),
        compiler_params=pltpu.CompilerParams(
            dimension_semantics=("parallel", "parallel"),
            vmem_limit_bytes=_VMEM_LIMIT),
    )(x, cw, sw, fre, fim)
    return re, im


# --------------------------- spectral 1x1 mix kernel ---------------------------

def _mix_kernel(re_ref, im_ref, wrr_ref, wri_ref, wir_ref, wii_ref, yr_ref, yi_ref):
    # relu(conv1x1 over interleaved Re/Im channels), as (C,C)@(C,tn) MXU matmuls
    re = re_ref[0]                                   # (C, tn) bf16
    im = im_ref[0]
    yr = (jnp.dot(wrr_ref[...], re, preferred_element_type=F32)
          + jnp.dot(wri_ref[...], im, preferred_element_type=F32))
    yi = (jnp.dot(wir_ref[...], re, preferred_element_type=F32)
          + jnp.dot(wii_ref[...], im, preferred_element_type=F32))
    yr_ref[0] = jnp.maximum(yr, 0.0).astype(yr_ref.dtype)
    yi_ref[0] = jnp.maximum(yi, 0.0).astype(yi_ref.dtype)


def _spectral_mix(re, im, w_conv):
    """y = relu(Conv2d_1x1(interleave(Re, Im))), tiled lane-dense over frequencies.

    torch interleaves Re/Im on the channel axis (2c = Re, 2c+1 = Im), so the
    (2C, 2C) weight is de-interleaved host-side into four (C, C) quarters."""
    B, C, Wd, Hd = re.shape
    S = Wd * Hd
    wrr = w_conv[0::2, 0::2].astype(BF16)
    wri = w_conv[0::2, 1::2].astype(BF16)
    wir = w_conv[1::2, 0::2].astype(BF16)
    wii = w_conv[1::2, 1::2].astype(BF16)
    tn = _pick_tile(S, bytes_per_col=2 * 2 * (2 * C + 2 * C))
    io_spec = pl.BlockSpec((1, C, tn), lambda b, s: (b, 0, s))
    w_spec = pl.BlockSpec((C, C), lambda b, s: (0, 0))
    yr, yi = pl.pallas_call(
        _mix_kernel,
        out_shape=(jax.ShapeDtypeStruct((B, C, S), BF16),
                   jax.ShapeDtypeStruct((B, C, S), BF16)),
        grid=(B, pl.cdiv(S, tn)),
        in_specs=[io_spec, io_spec, w_spec, w_spec, w_spec, w_spec],
        out_specs=(io_spec, io_spec),
        compiler_params=pltpu.CompilerParams(
            dimension_semantics=("parallel", "parallel"),
            vmem_limit_bytes=_VMEM_LIMIT),
    )(re.reshape(B, C, S), im.reshape(B, C, S), wrr, wri, wir, wii)
    return yr.reshape(B, C, Wd, Hd), yi.reshape(B, C, Wd, Hd)


# --------------------------- inverse 2-D DFT kernel ----------------------------

def _inv_dft_kernel(yr_ref, yi_ref, gre_ref, gim_ref, gw_ref, o_ref, *, repeat_w):
    """Real part of the 'ortho' ifft2 of (yr + i*yi) stored as (tc, W, H) blocks.

    K=2H and K=2W stacked-constant matmuls; if repeat_w, the repeat(1,1,_,2)
    along W is fused into the store (never materialized separately in HBM)."""
    _, tc, Wd, Hd = yr_ref.shape
    yr = yr_ref[0].reshape(tc * Wd, Hd)
    yi = yi_ref[0].reshape(tc * Wd, Hd)
    y2 = jnp.concatenate([yr, yi], axis=-1)                          # (tc*W, 2H) bf16
    ur = jnp.dot(y2, gre_ref[...], preferred_element_type=F32)       # (tc*W, H)
    ui = jnp.dot(y2, gim_ref[...], preferred_element_type=F32)
    urt = jnp.swapaxes(ur.reshape(tc, Wd, Hd), 1, 2).reshape(tc * Hd, Wd)
    uit = jnp.swapaxes(ui.reshape(tc, Wd, Hd), 1, 2).reshape(tc * Hd, Wd)
    u2 = jnp.concatenate([urt, uit], axis=-1).astype(BF16)           # (tc*H, 2W)
    out = jnp.dot(u2, gw_ref[...], preferred_element_type=F32)       # (tc*H, W)
    out = out.reshape(tc, Hd, Wd)
    if repeat_w:
        out = jnp.concatenate([out, out], axis=-1)
    o_ref[0] = out.astype(o_ref.dtype)


def _dft2_inverse(yr, yi, repeat_w=False):
    B, C, Wd, Hd = yr.shape
    _, _, _, _, gre, gim, gw = _dft_consts(Hd, Wd)
    Wout = Wd * (2 if repeat_w else 1)
    tc = _pick_channel_tile(C, Hd * Wd, prefer_split=(B == 1))
    mat = lambda a: pl.BlockSpec(a.shape, lambda b, c: (0, 0))
    spec_in = pl.BlockSpec((1, tc, Wd, Hd), lambda b, c: (b, c, 0, 0))
    spec_out = pl.BlockSpec((1, tc, Hd, Wout), lambda b, c: (b, c, 0, 0))
    return pl.pallas_call(
        functools.partial(_inv_dft_kernel, repeat_w=repeat_w),
        out_shape=jax.ShapeDtypeStruct((B, C, Hd, Wout), F32),
        grid=(B, C // tc),
        in_specs=[spec_in, spec_in, mat(gre), mat(gim), mat(gw)],
        out_specs=spec_out,
        compiler_params=pltpu.CompilerParams(
            dimension_semantics=("parallel", "parallel"),
            vmem_limit_bytes=_VMEM_LIMIT),
    )(yr, yi, gre, gim, gw)


def fourier_unit(x, w_conv, repeat_w=False):
    """MAM_FourierUnit (spa_mask=None, default kwargs): fft2 -> 1x1 conv + ReLU
    over interleaved Re/Im channels -> Re(ifft2).

    # TODO(synk): the CBAMLayer (use_se branch) is not defined in the provided
    # source; the cbam attention is treated as identity.
    """
    re, im = _dft2_forward(x)
    yr, yi = _spectral_mix(re, im, w_conv)
    return _dft2_inverse(yr, yi, repeat_w=repeat_w)


# --------------------------- full module forward ------------------------------

def mam_spectral_transform(x, params):
    """MAM_SpectralTransform.forward (stride=1 -> Identity downsample,
    enable_lfu=True, groups=1, spa_mask=None, default FourierUnit kwargs)."""
    x1 = conv1x1_relu(x, params["conv1_w"])              # conv1 = 1x1 conv + ReLU
    fu = fourier_unit(x1, params["fu_conv_w"])           # mam_fu (real part of ifft2)
    B, C, H, W = x1.shape
    # LFU branch: 2x2 spatial split of the first C//4 channels stacked on channels.
    # TODO(synk): fold this split/concat into the forward-DFT BlockSpecs; the
    # W-half split is blocked by the 128-lane block-shape constraint at small W.
    xs = x1[:, : C // 4]
    xs = jnp.concatenate(jnp.split(xs, 2, axis=2), axis=1)
    xs = jnp.concatenate(jnp.split(xs, 2, axis=3), axis=1)
    lfu = fourier_unit(xs, params["lfu_conv_w"], repeat_w=True)   # (B, C, H//2, W)
    # repeat(1,1,2,2): the W-copy was fused into the inverse-DFT store above;
    # the H-copy is a block-index identity inside add3_conv1x1.
    return add3_conv1x1(x1, fu, lfu, params["conv2_w"])


# --------------------------- pure-JAX reference ------------------------------

_PREC = lax.Precision.HIGHEST


def _fourier_unit_ref(x, w_conv):
    B, C, H, W = x.shape
    f = jnp.fft.fftn(x, axes=(-2, -1), norm="ortho")
    st = jnp.stack([f.real, f.imag], axis=-1)
    st = jnp.transpose(st, (0, 1, 4, 2, 3)).reshape(B, 2 * C, H, W)
    y = jnp.maximum(jnp.einsum("oi,bihw->bohw", w_conv, st, precision=_PREC), 0.0)
    y = y.reshape(B, C, 2, H, W).transpose(0, 1, 3, 4, 2)
    comp = y[..., 0] + 1j * y[..., 1]
    out = jnp.fft.ifftn(comp, s=(H, W), axes=(-2, -1), norm="ortho")
    return jnp.real(out).astype(F32)


def _spectral_transform_ref(x, params):
    x1 = jnp.maximum(jnp.einsum("oi,bihw->bohw", params["conv1_w"], x,
                                precision=_PREC), 0.0)
    out = _fourier_unit_ref(x1, params["fu_conv_w"])
    B, c, h, w = x1.shape
    xs = x1[:, : c // 4]
    xs = jnp.concatenate(jnp.split(xs, 2, axis=-2), axis=1)
    xs = jnp.concatenate(jnp.split(xs, 2, axis=-1), axis=1)
    xs = _fourier_unit_ref(xs, params["lfu_conv_w"])
    xs = jnp.tile(xs, (1, 1, 2, 2))
    return jnp.einsum("oi,bihw->bohw", params["conv2_w"], x1 + out + xs,
                      precision=_PREC)


# ------------------------------------ main -----------------------------------

if __name__ == "__main__":
    B, Cin, Cout, H, W = 2, 4, 8, 16, 16
    Ch = Cout // 2
    key = jax.random.PRNGKey(0)
    kx, k1, k2, k3, k4 = jax.random.split(key, 5)
    x = jax.random.normal(kx, (B, Cin, H, W), dtype=F32)
    params = {
        "conv1_w": 0.25 * jax.random.normal(k1, (Ch, Cin), dtype=F32),           # Conv2d(Cin, Ch, 1)
        "fu_conv_w": 0.25 * jax.random.normal(k2, (2 * Ch, 2 * Ch), dtype=F32),   # FU conv
        "lfu_conv_w": 0.25 * jax.random.normal(k3, (2 * Ch, 2 * Ch), dtype=F32),  # LFU conv
        "conv2_w": 0.25 * jax.random.normal(k4, (Cout, Ch), dtype=F32),           # Conv2d(Ch, Cout, 1)
    }

    y = jax.block_until_ready(jax.jit(mam_spectral_transform)(x, params))
    assert y.shape == (B, Cout, H, W), y.shape

    y_ref = _spectral_transform_ref(x, params)
    np.testing.assert_allclose(np.asarray(y), np.asarray(y_ref), atol=2e-2, rtol=2e-2)
    print("KERNEL_OK")
</pallas_src>

<mosaic_0001>
module attributes {stable_mosaic.version = 11 : i64} {
  func.func @_conv1x1_relu_kernel(%arg0: i32, %arg1: i32, %arg2: memref<1x4x256xf32, #tpu.memory_space<vmem>>, %arg3: memref<4x4xf32, #tpu.memory_space<vmem>>, %arg4: memref<1x4x256xf32, #tpu.memory_space<vmem>>) attributes {dimension_semantics = [#tpu.dimension_semantics<parallel>, #tpu.dimension_semantics<parallel>], iteration_bounds = array<i64: 2, 1>, scalar_prefetch = 0 : i64, scratch_operands = 0 : i64, tpu.core_type = #tpu.core_type<tc>, window_params = [{transform_indices = @transform_0, window_bounds = array<i64: 1, 4, 256>}, {pipeline_mode = #tpu.pipeline_mode<synchronous>, transform_indices = @transform_1, window_bounds = array<i64: 4, 4>}, {transform_indices = @transform_2, window_bounds = array<i64: 1, 4, 256>}]} {
    %c0 = arith.constant 0 : index
    %c0_0 = arith.constant 0 : index
    %0 = vector.load %arg3[%c0, %c0_0] : memref<4x4xf32, #tpu.memory_space<vmem>>, vector<4x4xf32>
    %c0_1 = arith.constant 0 : index
    %c0_2 = arith.constant 0 : index
    %c0_3 = arith.constant 0 : index
    %1 = vector.load %arg2[%c0_1, %c0_2, %c0_3] : memref<1x4x256xf32, #tpu.memory_space<vmem>>, vector<1x4x256xf32>
    %2 = vector.shape_cast %1 : vector<1x4x256xf32> to vector<4x256xf32>
    %cst = arith.constant dense<0.000000e+00> : vector<4x256xf32>
    %3 = tpu.matmul %0, %2, %cst {dimension_numbers = #tpu.dot_dimension_numbers<[1], [0], [0], [1], [0, 0, 1, 1], [], []>, precision = #tpu.contract_precision<fp32>} : vector<4x4xf32>, vector<4x256xf32>, vector<4x256xf32> -> vector<4x256xf32>
    %cst_4 = arith.constant 0.000000e+00 : f32
    %4 = vector.broadcast %cst_4 : f32 to vector<4x256xf32>
    %5 = arith.maximumf %3, %4 : vector<4x256xf32>
    %c0_5 = arith.constant 0 : index
    %c0_6 = arith.constant 0 : index
    %c0_7 = arith.constant 0 : index
    %6 = vector.load %arg4[%c0_5, %c0_6, %c0_7] : memref<1x4x256xf32, #tpu.memory_space<vmem>>, vector<1x4x256xf32>
    %7 = vector.shape_cast %6 : vector<1x4x256xf32> to vector<4x256xf32>
    %8 = vector.shape_cast %5 : vector<4x256xf32> to vector<1x4x256xf32>
    tpu.vector_store %arg4[%c0_5, %c0_6, %c0_7], %8 {strides = array<i32>} : memref<1x4x256xf32, #tpu.memory_space<vmem>>, vector<1x4x256xf32>,
    return
  }
  func.func @transform_0(%arg0: i32, %arg1: i32) -> (i32, i32, i32) {
    %c0_i32 = arith.constant 0 : i32
    %c0_i32_0 = arith.constant 0 : i32
    return %arg0, %c0_i32, %arg1 : i32, i32, i32
  }
  func.func @transform_1(%arg0: i32, %arg1: i32) -> (i32, i32) {
    %c0_i32 = arith.constant 0 : i32
    %c0_i32_0 = arith.constant 0 : i32
    %c0_i32_1 = arith.constant 0 : i32
    return %c0_i32, %c0_i32_0 : i32, i32
  }
  func.func @transform_2(%arg0: i32, %arg1: i32) -> (i32, i32, i32) {
    %c0_i32 = arith.constant 0 : i32
    %c0_i32_0 = arith.constant 0 : i32
    return %arg0, %c0_i32, %arg1 : i32, i32, i32
  }
}

module attributes {stable_mosaic.version = 11 : i64} {
  func.func @_fwd_dft_kernel(%arg0: i32, %arg1: i32, %arg2: memref<1x4x8x8xf32, #tpu.memory_space<vmem>>, %arg3: memref<8x8xbf16, #tpu.memory_space<vmem>>, %arg4: memref<8x8xbf16, #tpu.memory_space<vmem>>, %arg5: memref<16x8xbf16, #tpu.memory_space<vmem>>, %arg6: memref<16x8xbf16, #tpu.memory_space<vmem>>, %arg7: memref<1x4x8x8xbf16, #tpu.memory_space<vmem>>, %arg8: memref<1x4x8x8xbf16, #tpu.memory_space<vmem>>) attributes {dimension_semantics = [#tpu.dimension_semantics<parallel>, #tpu.dimension_semantics<parallel>], iteration_bounds = array<i64: 2, 1>, scalar_prefetch = 0 : i64, scratch_operands = 0 : i64, tpu.core_type = #tpu.core_type<tc>, window_params = [{transform_indices = @transform_0, window_bounds = array<i64: 1, 4, 8, 8>}, {pipeline_mode = #tpu.pipeline_mode<synchronous>, transform_indices = @transform_1, window_bounds = array<i64: 8, 8>}, {pipeline_mode = #tpu.pipeline_mode<synchronous>, transform_indices = @transform_2, window_bounds = array<i64: 8, 8>}, {pipeline_mode = #tpu.pipeline_mode<synchronous>, transform_indices = @transform_3, window_bounds = array<i64: 16, 8>}, {pipeline_mode = #tpu.pipeline_mode<synchronous>, transform_indices = @transform_4, window_bounds = array<i64: 16, 8>}, {transform_indices = @transform_5, window_bounds = array<i64: 1, 4, 8, 8>}, {transform_indices = @transform_6, window_bounds = array<i64: 1, 4, 8, 8>}]} {
    %c0 = arith.constant 0 : index
    %c0_0 = arith.constant 0 : index
    %c0_1 = arith.constant 0 : index
    %c0_2 = arith.constant 0 : index
    %0 = vector.load %arg2[%c0, %c0_0, %c0_1, %c0_2] : memref<1x4x8x8xf32, #tpu.memory_space<vmem>>, vector<1x4x8x8xf32>
    %1 = vector.shape_cast %0 : vector<1x4x8x8xf32> to vector<4x8x8xf32>
    %2 = vector.shape_cast %1 : vector<4x8x8xf32> to vector<32x8xf32>
    %3 = arith.truncf %2 : vector<32x8xf32> to vector<32x8xbf16>
    %c0_3 = arith.constant 0 : index
    %c0_4 = arith.constant 0 : index
    %4 = vector.load %arg3[%c0_3, %c0_4] : memref<8x8xbf16, #tpu.memory_space<vmem>>, vector<8x8xbf16>
    %cst = arith.constant dense<0.000000e+00> : vector<32x8xf32>
    %5 = tpu.matmul %3, %4, %cst {dimension_numbers = #tpu.dot_dimension_numbers<[1], [0], [0], [1], [0, 0, 1, 1], [], []>} : vector<32x8xbf16>, vector<8x8xbf16>, vector<32x8xf32> -> vector<32x8xf32>
    %c0_5 = arith.constant 0 : index
    %c0_6 = arith.constant 0 : index
    %6 = vector.load %arg4[%c0_5, %c0_6] : memref<8x8xbf16, #tpu.memory_space<vmem>>, vector<8x8xbf16>
    %cst_7 = arith.constant dense<0.000000e+00> : vector<32x8xf32>
    %7 = tpu.matmul %3, %6, %cst_7 {dimension_numbers = #tpu.dot_dimension_numbers<[1], [0], [0], [1], [0, 0, 1, 1], [], []>} : vector<32x8xbf16>, vector<8x8xbf16>, vector<32x8xf32> -> vector<32x8xf32>
    %8 = vector.shape_cast %5 : vector<32x8xf32> to vector<4x8x8xf32>
    %9 = tpu.transpose %8, [0, 2, 1] : vector<4x8x8xf32> -> vector<4x8x8xf32>
    %10 = vector.shape_cast %9 : vector<4x8x8xf32> to vector<32x8xf32>
    %11 = vector.shape_cast %7 : vector<32x8xf32> to vector<4x8x8xf32>
    %12 = tpu.transpose %11, [0, 2, 1] : vector<4x8x8xf32> -> vector<4x8x8xf32>
    %13 = vector.shape_cast %12 : vector<4x8x8xf32> to vector<32x8xf32>
    %14 = tpu.concatenate %10, %13 in 1 : vector<32x8xf32>, vector<32x8xf32> -> vector<32x16xf32>
    %15 = arith.truncf %14 : vector<32x16xf32> to vector<32x16xbf16>
    %c0_8 = arith.constant 0 : index
    %c0_9 = arith.constant 0 : index
    %16 = vector.load %arg5[%c0_8, %c0_9] : memref<16x8xbf16, #tpu.memory_space<vmem>>, vector<16x8xbf16>
    %cst_10 = arith.constant dense<0.000000e+00> : vector<32x8xf32>
    %17 = tpu.matmul %15, %16, %cst_10 {dimension_numbers = #tpu.dot_dimension_numbers<[1], [0], [0], [1], [0, 0, 1, 1], [], []>} : vector<32x16xbf16>, vector<16x8xbf16>, vector<32x8xf32> -> vector<32x8xf32>
    %c0_11 = arith.constant 0 : index
    %c0_12 = arith.constant 0 : index
    %18 = vector.load %arg6[%c0_11, %c0_12] : memref<16x8xbf16, #tpu.memory_space<vmem>>, vector<16x8xbf16>
    %cst_13 = arith.constant dense<0.000000e+00> : vector<32x8xf32>
    %19 = tpu.matmul %15, %18, %cst_13 {dimension_numbers = #tpu.dot_dimension_numbers<[1], [0], [0], [1], [0, 0, 1, 1], [], []>} : vector<32x16xbf16>, vector<16x8xbf16>, vector<32x8xf32> -> vector<32x8xf32>
    %20 = vector.shape_cast %17 : vector<32x8xf32> to vector<4x8x8xf32>
    %21 = arith.truncf %20 : vector<4x8x8xf32> to vector<4x8x8xbf16>
    %c0_14 = arith.constant 0 : index
    %c0_15 = arith.constant 0 : index
    %c0_16 = arith.constant 0 : index
    %c0_17 = arith.constant 0 : index
    %22 = vector.load %arg7[%c0_14, %c0_15, %c0_16, %c0_17] : memref<1x4x8x8xbf16, #tpu.memory_space<vmem>>, vector<1x4x8x8xbf16>
    %23 = vector.shape_cast %22 : vector<1x4x8x8xbf16> to vector<4x8x8xbf16>
    %24 = vector.shape_cast %21 : vector<4x8x8xbf16> to vector<1x4x8x8xbf16>
    tpu.vector_store %arg7[%c0_14, %c0_15, %c0_16, %c0_17], %24 {strides = array<i32>} : memref<1x4x8x8xbf16, #tpu.memory_space<vmem>>, vector<1x4x8x8xbf16>,
    %25 = vector.shape_cast %19 : vector<32x8xf32> to vector<4x8x8xf32>
    %26 = arith.truncf %25 : vector<4x8x8xf32> to vector<4x8x8xbf16>
    %c0_18 = arith.constant 0 : index
    %c0_19 = arith.constant 0 : index
    %c0_20 = arith.constant 0 : index
    %c0_21 = arith.constant 0 : index
    %27 = vector.load %arg8[%c0_18, %c0_19, %c0_20, %c0_21] : memref<1x4x8x8xbf16, #tpu.memory_space<vmem>>, vector<1x4x8x8xbf16>
    %28 = vector.shape_cast %27 : vector<1x4x8x8xbf16> to vector<4x8x8xbf16>
    %29 = vector.shape_cast %26 : vector<4x8x8xbf16> to vector<1x4x8x8xbf16>
    tpu.vector_store %arg8[%c0_18, %c0_19, %c0_20, %c0_21], %29 {strides = array<i32>} : memref<1x4x8x8xbf16, #tpu.memory_space<vmem>>, vector<1x4x8x8xbf16>,
    return
  }
  func.func @transform_0(%arg0: i32, %arg1: i32) -> (i32, i32, i32, i32) {
    %c0_i32 = arith.constant 0 : i32
    %c0_i32_0 = arith.constant 0 : i32
    %c0_i32_1 = arith.constant 0 : i32
    return %arg0, %arg1, %c0_i32, %c0_i32_0 : i32, i32, i32, i32
  }
  func.func @transform_1(%arg0: i32, %arg1: i32) -> (i32, i32) {
    %c0_i32 = arith.constant 0 : i32
    %c0_i32_0 = arith.constant 0 : i32
    %c0_i32_1 = arith.constant 0 : i32
    return %c0_i32, %c0_i32_0 : i32, i32
  }
  func.func @transform_2(%arg0: i32, %arg1: i32) -> (i32, i32) {
    %c0_i32 = arith.constant 0 : i32
    %c0_i32_0 = arith.constant 0 : i32
    %c0_i32_1 = arith.constant 0 : i32
    return %c0_i32, %c0_i32_0 : i32, i32
  }
  func.func @transform_3(%arg0: i32, %arg1: i32) -> (i32, i32) {
    %c0_i32 = arith.constant 0 : i32
    %c0_i32_0 = arith.constant 0 : i32
    %c0_i32_1 = arith.constant 0 : i32
    return %c0_i32, %c0_i32_0 : i32, i32
  }
  func.func @transform_4(%arg0: i32, %arg1: i32) -> (i32, i32) {
    %c0_i32 = arith.constant 0 : i32
    %c0_i32_0 = arith.constant 0 : i32
    %c0_i32_1 = arith.constant 0 : i32
    return %c0_i32, %c0_i32_0 : i32, i32
  }
  func.func @transform_5(%arg0: i32, %arg1: i32) -> (i32, i32, i32, i32) {
    %c0_i32 = arith.constant 0 : i32
    %c0_i32_0 = arith.constant 0 : i32
    %c0_i32_1 = arith.constant 0 : i32
    return %arg0, %arg1, %c0_i32, %c0_i32_0 : i32, i32, i32, i32
  }
  func.func @transform_6(%arg0: i32, %arg1: i32) -> (i32, i32, i32, i32) {
    %c0_i32 = arith.constant 0 : i32
    %c0_i32_0 = arith.constant 0 : i32
    %c0_i32_1 = arith.constant 0 : i32
    return %arg0, %arg1, %c0_i32, %c0_i32_0 : i32, i32, i32, i32
  }
}

module attributes {stable_mosaic.version = 11 : i64} {
  func.func @_mix_kernel(%arg0: i32, %arg1: i32, %arg2: memref<1x4x64xbf16, #tpu.memory_space<vmem>>, %arg3: memref<1x4x64xbf16, #tpu.memory_space<vmem>>, %arg4: memref<4x4xbf16, #tpu.memory_space<vmem>>, %arg5: memref<4x4xbf16, #tpu.memory_space<vmem>>, %arg6: memref<4x4xbf16, #tpu.memory_space<vmem>>, %arg7: memref<4x4xbf16, #tpu.memory_space<vmem>>, %arg8: memref<1x4x64xbf16, #tpu.memory_space<vmem>>, %arg9: memref<1x4x64xbf16, #tpu.memory_space<vmem>>) attributes {dimension_semantics = [#tpu.dimension_semantics<parallel>, #tpu.dimension_semantics<parallel>], iteration_bounds = array<i64: 2, 1>, scalar_prefetch = 0 : i64, scratch_operands = 0 : i64, tpu.core_type = #tpu.core_type<tc>, window_params = [{transform_indices = @transform_0, window_bounds = array<i64: 1, 4, 64>}, {transform_indices = @transform_1, window_bounds = array<i64: 1, 4, 64>}, {pipeline_mode = #tpu.pipeline_mode<synchronous>, transform_indices = @transform_2, window_bounds = array<i64: 4, 4>}, {pipeline_mode = #tpu.pipeline_mode<synchronous>, transform_indices = @transform_3, window_bounds = array<i64: 4, 4>}, {pipeline_mode = #tpu.pipeline_mode<synchronous>, transform_indices = @transform_4, window_bounds = array<i64: 4, 4>}, {pipeline_mode = #tpu.pipeline_mode<synchronous>, transform_indices = @transform_5, window_bounds = array<i64: 4, 4>}, {transform_indices = @transform_6, window_bounds = array<i64: 1, 4, 64>}, {transform_indices = @transform_7, window_bounds = array<i64: 1, 4, 64>}]} {
    %c0 = arith.constant 0 : index
    %c0_0 = arith.constant 0 : index
    %c0_1 = arith.constant 0 : index
    %0 = vector.load %arg2[%c0, %c0_0, %c0_1] : memref<1x4x64xbf16, #tpu.memory_space<vmem>>, vector<1x4x64xbf16>
    %1 = vector.shape_cast %0 : vector<1x4x64xbf16> to vector<4x64xbf16>
    %c0_2 = arith.constant 0 : index
    %c0_3 = arith.constant 0 : index
    %c0_4 = arith.constant 0 : index
    %2 = vector.load %arg3[%c0_2, %c0_3, %c0_4] : memref<1x4x64xbf16, #tpu.memory_space<vmem>>, vector<1x4x64xbf16>
    %3 = vector.shape_cast %2 : vector<1x4x64xbf16> to vector<4x64xbf16>
    %c0_5 = arith.constant 0 : index
    %c0_6 = arith.constant 0 : index
    %4 = vector.load %arg4[%c0_5, %c0_6] : memref<4x4xbf16, #tpu.memory_space<vmem>>, vector<4x4xbf16>
    %cst = arith.constant dense<0.000000e+00> : vector<4x64xf32>
    %5 = tpu.matmul %4, %1, %cst {dimension_numbers = #tpu.dot_dimension_numbers<[1], [0], [0], [1], [0, 0, 1, 1], [], []>} : vector<4x4xbf16>, vector<4x64xbf16>, vector<4x64xf32> -> vector<4x64xf32>
    %c0_7 = arith.constant 0 : index
    %c0_8 = arith.constant 0 : index
    %6 = vector.load %arg5[%c0_7, %c0_8] : memref<4x4xbf16, #tpu.memory_space<vmem>>, vector<4x4xbf16>
    %cst_9 = arith.constant dense<0.000000e+00> : vector<4x64xf32>
    %7 = tpu.matmul %6, %3, %cst_9 {dimension_numbers = #tpu.dot_dimension_numbers<[1], [0], [0], [1], [0, 0, 1, 1], [], []>} : vector<4x4xbf16>, vector<4x64xbf16>, vector<4x64xf32> -> vector<4x64xf32>
    %8 = arith.addf %5, %7 : vector<4x64xf32>
    %c0_10 = arith.constant 0 : index
    %c0_11 = arith.constant 0 : index
    %9 = vector.load %arg6[%c0_10, %c0_11] : memref<4x4xbf16, #tpu.memory_space<vmem>>, vector<4x4xbf16>
    %cst_12 = arith.constant dense<0.000000e+00> : vector<4x64xf32>
    %10 = tpu.matmul %9, %1, %cst_12 {dimension_numbers = #tpu.dot_dimension_numbers<[1], [0], [0], [1], [0, 0, 1, 1], [], []>} : vector<4x4xbf16>, vector<4x64xbf16>, vector<4x64xf32> -> vector<4x64xf32>
    %c0_13 = arith.constant 0 : index
    %c0_14 = arith.constant 0 : index
    %11 = vector.load %arg7[%c0_13, %c0_14] : memref<4x4xbf16, #tpu.memory_space<vmem>>, vector<4x4xbf16>
    %cst_15 = arith.constant dense<0.000000e+00> : vector<4x64xf32>
    %12 = tpu.matmul %11, %3, %cst_15 {dimension_numbers = #tpu.dot_dimension_numbers<[1], [0], [0], [1], [0, 0, 1, 1], [], []>} : vector<4x4xbf16>, vector<4x64xbf16>, vector<4x64xf32> -> vector<4x64xf32>
    %13 = arith.addf %10, %12 : vector<4x64xf32>
    %cst_16 = arith.constant 0.000000e+00 : f32
    %14 = vector.broadcast %cst_16 : f32 to vector<4x64xf32>
    %15 = arith.maximumf %8, %14 : vector<4x64xf32>
    %16 = arith.truncf %15 : vector<4x64xf32> to vector<4x64xbf16>
    %c0_17 = arith.constant 0 : index
    %c0_18 = arith.constant 0 : index
    %c0_19 = arith.constant 0 : index
    %17 = vector.load %arg8[%c0_17, %c0_18, %c0_19] : memref<1x4x64xbf16, #tpu.memory_space<vmem>>, vector<1x4x64xbf16>
    %18 = vector.shape_cast %17 : vector<1x4x64xbf16> to vector<4x64xbf16>
    %19 = vector.shape_cast %16 : vector<4x64xbf16> to vector<1x4x64xbf16>
    tpu.vector_store %arg8[%c0_17, %c0_18, %c0_19], %19 {strides = array<i32>} : memref<1x4x64xbf16, #tpu.memory_space<vmem>>, vector<1x4x64xbf16>,
    %cst_20 = arith.constant 0.000000e+00 : f32
    %20 = vector.broadcast %cst_20 : f32 to vector<4x64xf32>
    %21 = arith.maximumf %13, %20 : vector<4x64xf32>
    %22 = arith.truncf %21 : vector<4x64xf32> to vector<4x64xbf16>
    %c0_21 = arith.constant 0 : index
    %c0_22 = arith.constant 0 : index
    %c0_23 = arith.constant 0 : index
    %23 = vector.load %arg9[%c0_21, %c0_22, %c0_23] : memref<1x4x64xbf16, #tpu.memory_space<vmem>>, vector<1x4x64xbf16>
    %24 = vector.shape_cast %23 : vector<1x4x64xbf16> to vector<4x64xbf16>
    %25 = vector.shape_cast %22 : vector<4x64xbf16> to vector<1x4x64xbf16>
    tpu.vector_store %arg9[%c0_21, %c0_22, %c0_23], %25 {strides = array<i32>} : memref<1x4x64xbf16, #tpu.memory_space<vmem>>, vector<1x4x64xbf16>,
    return
  }
  func.func @transform_0(%arg0: i32, %arg1: i32) -> (i32, i32, i32) {
    %c0_i32 = arith.constant 0 : i32
    %c0_i32_0 = arith.constant 0 : i32
    return %arg0, %c0_i32, %arg1 : i32, i32, i32
  }
  func.func @transform_1(%arg0: i32, %arg1: i32) -> (i32, i32, i32) {
    %c0_i32 = arith.constant 0 : i32
    %c0_i32_0 = arith.constant 0 : i32
    return %arg0, %c0_i32, %arg1 : i32, i32, i32
  }
  func.func @transform_2(%arg0: i32, %arg1: i32) -> (i32, i32) {
    %c0_i32 = arith.constant 0 : i32
    %c0_i32_0 = arith.constant 0 : i32
    %c0_i32_1 = arith.constant 0 : i32
    return %c0_i32, %c0_i32_0 : i32, i32
  }
  func.func @transform_3(%arg0: i32, %arg1: i32) -> (i32, i32) {
    %c0_i32 = arith.constant 0 : i32
    %c0_i32_0 = arith.constant 0 : i32
    %c0_i32_1 = arith.constant 0 : i32
    return %c0_i32, %c0_i32_0 : i32, i32
  }
  func.func @transform_4(%arg0: i32, %arg1: i32) -> (i32, i32) {
    %c0_i32 = arith.constant 0 : i32
    %c0_i32_0 = arith.constant 0 : i32
    %c0_i32_1 = arith.constant 0 : i32
    return %c0_i32, %c0_i32_0 : i32, i32
  }
  func.func @transform_5(%arg0: i32, %arg1: i32) -> (i32, i32) {
    %c0_i32 = arith.constant 0 : i32
    %c0_i32_0 = arith.constant 0 : i32
    %c0_i32_1 = arith.constant 0 : i32
    return %c0_i32, %c0_i32_0 : i32, i32
  }
  func.func @transform_6(%arg0: i32, %arg1: i32) -> (i32, i32, i32) {
    %c0_i32 = arith.constant 0 : i32
    %c0_i32_0 = arith.constant 0 : i32
    return %arg0, %c0_i32, %arg1 : i32, i32, i32
  }
  func.func @transform_7(%arg0: i32, %arg1: i32) -> (i32, i32, i32) {
    %c0_i32 = arith.constant 0 : i32
    %c0_i32_0 = arith.constant 0 : i32
    return %arg0, %c0_i32, %arg1 : i32, i32, i32
  }
}

module attributes {stable_mosaic.version = 11 : i64} {
  func.func @_inv_dft_kernel(%arg0: i32, %arg1: i32, %arg2: memref<1x4x8x8xbf16, #tpu.memory_space<vmem>>, %arg3: memref<1x4x8x8xbf16, #tpu.memory_space<vmem>>, %arg4: memref<16x8xbf16, #tpu.memory_space<vmem>>, %arg5: memref<16x8xbf16, #tpu.memory_space<vmem>>, %arg6: memref<16x8xbf16, #tpu.memory_space<vmem>>, %arg7: memref<1x4x8x16xf32, #tpu.memory_space<vmem>>) attributes {dimension_semantics = [#tpu.dimension_semantics<parallel>, #tpu.dimension_semantics<parallel>], iteration_bounds = array<i64: 2, 1>, scalar_prefetch = 0 : i64, scratch_operands = 0 : i64, tpu.core_type = #tpu.core_type<tc>, window_params = [{transform_indices = @transform_0, window_bounds = array<i64: 1, 4, 8, 8>}, {transform_indices = @transform_1, window_bounds = array<i64: 1, 4, 8, 8>}, {pipeline_mode = #tpu.pipeline_mode<synchronous>, transform_indices = @transform_2, window_bounds = array<i64: 16, 8>}, {pipeline_mode = #tpu.pipeline_mode<synchronous>, transform_indices = @transform_3, window_bounds = array<i64: 16, 8>}, {pipeline_mode = #tpu.pipeline_mode<synchronous>, transform_indices = @transform_4, window_bounds = array<i64: 16, 8>}, {transform_indices = @transform_5, window_bounds = array<i64: 1, 4, 8, 16>}]} {
    %c0 = arith.constant 0 : index
    %c0_0 = arith.constant 0 : index
    %c0_1 = arith.constant 0 : index
    %c0_2 = arith.constant 0 : index
    %0 = vector.load %arg2[%c0, %c0_0, %c0_1, %c0_2] : memref<1x4x8x8xbf16, #tpu.memory_space<vmem>>, vector<1x4x8x8xbf16>
    %1 = vector.shape_cast %0 : vector<1x4x8x8xbf16> to vector<4x8x8xbf16>
    %2 = vector.shape_cast %1 : vector<4x8x8xbf16> to vector<32x8xbf16>
    %c0_3 = arith.constant 0 : index
    %c0_4 = arith.constant 0 : index
    %c0_5 = arith.constant 0 : index
    %c0_6 = arith.constant 0 : index
    %3 = vector.load %arg3[%c0_3, %c0_4, %c0_5, %c0_6] : memref<1x4x8x8xbf16, #tpu.memory_space<vmem>>, vector<1x4x8x8xbf16>
    %4 = vector.shape_cast %3 : vector<1x4x8x8xbf16> to vector<4x8x8xbf16>
    %5 = vector.shape_cast %4 : vector<4x8x8xbf16> to vector<32x8xbf16>
    %6 = tpu.concatenate %2, %5 in 1 : vector<32x8xbf16>, vector<32x8xbf16> -> vector<32x16xbf16>
    %c0_7 = arith.constant 0 : index
    %c0_8 = arith.constant 0 : index
    %7 = vector.load %arg4[%c0_7, %c0_8] : memref<16x8xbf16, #tpu.memory_space<vmem>>, vector<16x8xbf16>
    %cst = arith.constant dense<0.000000e+00> : vector<32x8xf32>
    %8 = tpu.matmul %6, %7, %cst {dimension_numbers = #tpu.dot_dimension_numbers<[1], [0], [0], [1], [0, 0, 1, 1], [], []>} : vector<32x16xbf16>, vector<16x8xbf16>, vector<32x8xf32> -> vector<32x8xf32>
    %c0_9 = arith.constant 0 : index
    %c0_10 = arith.constant 0 : index
    %9 = vector.load %arg5[%c0_9, %c0_10] : memref<16x8xbf16, #tpu.memory_space<vmem>>, vector<16x8xbf16>
    %cst_11 = arith.constant dense<0.000000e+00> : vector<32x8xf32>
    %10 = tpu.matmul %6, %9, %cst_11 {dimension_numbers = #tpu.dot_dimension_numbers<[1], [0], [0], [1], [0, 0, 1, 1], [], []>} : vector<32x16xbf16>, vector<16x8xbf16>, vector<32x8xf32> -> vector<32x8xf32>
    %11 = vector.shape_cast %8 : vector<32x8xf32> to vector<4x8x8xf32>
    %12 = tpu.transpose %11, [0, 2, 1] : vector<4x8x8xf32> -> vector<4x8x8xf32>
    %13 = vector.shape_cast %12 : vector<4x8x8xf32> to vector<32x8xf32>
    %14 = vector.shape_cast %10 : vector<32x8xf32> to vector<4x8x8xf32>
    %15 = tpu.transpose %14, [0, 2, 1] : vector<4x8x8xf32> -> vector<4x8x8xf32>
    %16 = vector.shape_cast %15 : vector<4x8x8xf32> to vector<32x8xf32>
    %17 = tpu.concatenate %13, %16 in 1 : vector<32x8xf32>, vector<32x8xf32> -> vector<32x16xf32>
    %18 = arith.truncf %17 : vector<32x16xf32> to vector<32x16xbf16>
    %c0_12 = arith.constant 0 : index
    %c0_13 = arith.constant 0 : index
    %19 = vector.load %arg6[%c0_12, %c0_13] : memref<16x8xbf16, #tpu.memory_space<vmem>>, vector<16x8xbf16>
    %cst_14 = arith.constant dense<0.000000e+00> : vector<32x8xf32>
    %20 = tpu.matmul %18, %19, %cst_14 {dimension_numbers = #tpu.dot_dimension_numbers<[1], [0], [0], [1], [0, 0, 1, 1], [], []>} : vector<32x16xbf16>, vector<16x8xbf16>, vector<32x8xf32> -> vector<32x8xf32>
    %21 = vector.shape_cast %20 : vector<32x8xf32> to vector<4x8x8xf32>
    %22 = tpu.concatenate %21, %21 in 2 : vector<4x8x8xf32>, vector<4x8x8xf32> -> vector<4x8x16xf32>
    %c0_15 = arith.constant 0 : index
    %c0_16 = arith.constant 0 : index
    %c0_17 = arith.constant 0 : index
    %c0_18 = arith.constant 0 : index
    %23 = vector.load %arg7[%c0_15, %c0_16, %c0_17, %c0_18] : memref<1x4x8x16xf32, #tpu.memory_space<vmem>>, vector<1x4x8x16xf32>
    %24 = vector.shape_cast %23 : vector<1x4x8x16xf32> to vector<4x8x16xf32>
    %25 = vector.shape_cast %22 : vector<4x8x16xf32> to vector<1x4x8x16xf32>
    tpu.vector_store %arg7[%c0_15, %c0_16, %c0_17, %c0_18], %25 {strides = array<i32>} : memref<1x4x8x16xf32, #tpu.memory_space<vmem>>, vector<1x4x8x16xf32>,
    return
  }
  func.func @transform_0(%arg0: i32, %arg1: i32) -> (i32, i32, i32, i32) {
    %c0_i32 = arith.constant 0 : i32
    %c0_i32_0 = arith.constant 0 : i32
    %c0_i32_1 = arith.constant 0 : i32
    return %arg0, %arg1, %c0_i32, %c0_i32_0 : i32, i32, i32, i32
  }
  func.func @transform_1(%arg0: i32, %arg1: i32) -> (i32, i32, i32, i32) {
    %c0_i32 = arith.constant 0 : i32
    %c0_i32_0 = arith.constant 0 : i32
    %c0_i32_1 = arith.constant 0 : i32
    return %arg0, %arg1, %c0_i32, %c0_i32_0 : i32, i32, i32, i32
  }
  func.func @transform_2(%arg0: i32, %arg1: i32) -> (i32, i32) {
    %c0_i32 = arith.constant 0 : i32
    %c0_i32_0 = arith.constant 0 : i32
    %c0_i32_1 = arith.constant 0 : i32
    return %c0_i32, %c0_i32_0 : i32, i32
  }
  func.func @transform_3(%arg0: i32, %arg1: i32) -> (i32, i32) {
    %c0_i32 = arith.constant 0 : i32
    %c0_i32_0 = arith.constant 0 : i32
    %c0_i32_1 = arith.constant 0 : i32
    return %c0_i32, %c0_i32_0 : i32, i32
  }
  func.func @transform_4(%arg0: i32, %arg1: i32) -> (i32, i32) {
    %c0_i32 = arith.constant 0 : i32
    %c0_i32_0 = arith.constant 0 : i32
    %c0_i32_1 = arith.constant 0 : i32
    return %c0_i32, %c0_i32_0 : i32, i32
  }
  func.func @transform_5(%arg0: i32, %arg1: i32) -> (i32, i32, i32, i32) {
    %c0_i32 = arith.constant 0 : i32
    %c0_i32_0 = arith.constant 0 : i32
    %c0_i32_1 = arith.constant 0 : i32
    return %arg0, %arg1, %c0_i32, %c0_i32_0 : i32, i32, i32, i32
  }
}

module attributes {stable_mosaic.version = 11 : i64} {
  func.func @_fwd_dft_kernel(%arg0: i32, %arg1: i32, %arg2: memref<1x4x16x16xf32, #tpu.memory_space<vmem>>, %arg3: memref<16x16xbf16, #tpu.memory_space<vmem>>, %arg4: memref<16x16xbf16, #tpu.memory_space<vmem>>, %arg5: memref<32x16xbf16, #tpu.memory_space<vmem>>, %arg6: memref<32x16xbf16, #tpu.memory_space<vmem>>, %arg7: memref<1x4x16x16xbf16, #tpu.memory_space<vmem>>, %arg8: memref<1x4x16x16xbf16, #tpu.memory_space<vmem>>) attributes {dimension_semantics = [#tpu.dimension_semantics<parallel>, #tpu.dimension_semantics<parallel>], iteration_bounds = array<i64: 2, 1>, scalar_prefetch = 0 : i64, scratch_operands = 0 : i64, tpu.core_type = #tpu.core_type<tc>, window_params = [{transform_indices = @transform_0, window_bounds = array<i64: 1, 4, 16, 16>}, {pipeline_mode = #tpu.pipeline_mode<synchronous>, transform_indices = @transform_1, window_bounds = array<i64: 16, 16>}, {pipeline_mode = #tpu.pipeline_mode<synchronous>, transform_indices = @transform_2, window_bounds = array<i64: 16, 16>}, {pipeline_mode = #tpu.pipeline_mode<synchronous>, transform_indices = @transform_3, window_bounds = array<i64: 32, 16>}, {pipeline_mode = #tpu.pipeline_mode<synchronous>, transform_indices = @transform_4, window_bounds = array<i64: 32, 16>}, {transform_indices = @transform_5, window_bounds = array<i64: 1, 4, 16, 16>}, {transform_indices = @transform_6, window_bounds = array<i64: 1, 4, 16, 16>}]} {
    %c0 = arith.constant 0 : index
    %c0_0 = arith.constant 0 : index
    %c0_1 = arith.constant 0 : index
    %c0_2 = arith.constant 0 : index
    %0 = vector.load %arg2[%c0, %c0_0, %c0_1, %c0_2] : memref<1x4x16x16xf32, #tpu.memory_space<vmem>>, vector<1x4x16x16xf32>
    %1 = vector.shape_cast %0 : vector<1x4x16x16xf32> to vector<4x16x16xf32>
    %2 = vector.shape_cast %1 : vector<4x16x16xf32> to vector<64x16xf32>
    %3 = arith.truncf %2 : vector<64x16xf32> to vector<64x16xbf16>
    %c0_3 = arith.constant 0 : index
    %c0_4 = arith.constant 0 : index
    %4 = vector.load %arg3[%c0_3, %c0_4] : memref<16x16xbf16, #tpu.memory_space<vmem>>, vector<16x16xbf16>
    %cst = arith.constant dense<0.000000e+00> : vector<64x16xf32>
    %5 = tpu.matmul %3, %4, %cst {dimension_numbers = #tpu.dot_dimension_numbers<[1], [0], [0], [1], [0, 0, 1, 1], [], []>} : vector<64x16xbf16>, vector<16x16xbf16>, vector<64x16xf32> -> vector<64x16xf32>
    %c0_5 = arith.constant 0 : index
    %c0_6 = arith.constant 0 : index
    %6 = vector.load %arg4[%c0_5, %c0_6] : memref<16x16xbf16, #tpu.memory_space<vmem>>, vector<16x16xbf16>
    %cst_7 = arith.constant dense<0.000000e+00> : vector<64x16xf32>
    %7 = tpu.matmul %3, %6, %cst_7 {dimension_numbers = #tpu.dot_dimension_numbers<[1], [0], [0], [1], [0, 0, 1, 1], [], []>} : vector<64x16xbf16>, vector<16x16xbf16>, vector<64x16xf32> -> vector<64x16xf32>
    %8 = vector.shape_cast %5 : vector<64x16xf32> to vector<4x16x16xf32>
    %9 = tpu.transpose %8, [0, 2, 1] : vector<4x16x16xf32> -> vector<4x16x16xf32>
    %10 = vector.shape_cast %9 : vector<4x16x16xf32> to vector<64x16xf32>
    %11 = vector.shape_cast %7 : vector<64x16xf32> to vector<4x16x16xf32>
    %12 = tpu.transpose %11, [0, 2, 1] : vector<4x16x16xf32> -> vector<4x16x16xf32>
    %13 = vector.shape_cast %12 : vector<4x16x16xf32> to vector<64x16xf32>
    %14 = tpu.concatenate %10, %13 in 1 : vector<64x16xf32>, vector<64x16xf32> -> vector<64x32xf32>
    %15 = arith.truncf %14 : vector<64x32xf32> to vector<64x32xbf16>
    %c0_8 = arith.constant 0 : index
    %c0_9 = arith.constant 0 : index
    %16 = vector.load %arg5[%c0_8, %c0_9] : memref<32x16xbf16, #tpu.memory_space<vmem>>, vector<32x16xbf16>
    %cst_10 = arith.constant dense<0.000000e+00> : vector<64x16xf32>
    %17 = tpu.matmul %15, %16, %cst_10 {dimension_numbers = #tpu.dot_dimension_numbers<[1], [0], [0], [1], [0, 0, 1, 1], [], []>} : vector<64x32xbf16>, vector<32x16xbf16>, vector<64x16xf32> -> vector<64x16xf32>
    %c0_11 = arith.constant 0 : index
    %c0_12 = arith.constant 0 : index
    %18 = vector.load %arg6[%c0_11, %c0_12] : memref<32x16xbf16, #tpu.memory_space<vmem>>, vector<32x16xbf16>
    %cst_13 = arith.constant dense<0.000000e+00> : vector<64x16xf32>
    %19 = tpu.matmul %15, %18, %cst_13 {dimension_numbers = #tpu.dot_dimension_numbers<[1], [0], [0], [1], [0, 0, 1, 1], [], []>} : vector<64x32xbf16>, vector<32x16xbf16>, vector<64x16xf32> -> vector<64x16xf32>
    %20 = vector.shape_cast %17 : vector<64x16xf32> to vector<4x16x16xf32>
    %21 = arith.truncf %20 : vector<4x16x16xf32> to vector<4x16x16xbf16>
    %c0_14 = arith.constant 0 : index
    %c0_15 = arith.constant 0 : index
    %c0_16 = arith.constant 0 : index
    %c0_17 = arith.constant 0 : index
    %22 = vector.load %arg7[%c0_14, %c0_15, %c0_16, %c0_17] : memref<1x4x16x16xbf16, #tpu.memory_space<vmem>>, vector<1x4x16x16xbf16>
    %23 = vector.shape_cast %22 : vector<1x4x16x16xbf16> to vector<4x16x16xbf16>
    %24 = vector.shape_cast %21 : vector<4x16x16xbf16> to vector<1x4x16x16xbf16>
    tpu.vector_store %arg7[%c0_14, %c0_15, %c0_16, %c0_17], %24 {strides = array<i32>} : memref<1x4x16x16xbf16, #tpu.memory_space<vmem>>, vector<1x4x16x16xbf16>,
    %25 = vector.shape_cast %19 : vector<64x16xf32> to vector<4x16x16xf32>
    %26 = arith.truncf %25 : vector<4x16x16xf32> to vector<4x16x16xbf16>
    %c0_18 = arith.constant 0 : index
    %c0_19 = arith.constant 0 : index
    %c0_20 = arith.constant 0 : index
    %c0_21 = arith.constant 0 : index
    %27 = vector.load %arg8[%c0_18, %c0_19, %c0_20, %c0_21] : memref<1x4x16x16xbf16, #tpu.memory_space<vmem>>, vector<1x4x16x16xbf16>
    %28 = vector.shape_cast %27 : vector<1x4x16x16xbf16> to vector<4x16x16xbf16>
    %29 = vector.shape_cast %26 : vector<4x16x16xbf16> to vector<1x4x16x16xbf16>
    tpu.vector_store %arg8[%c0_18, %c0_19, %c0_20, %c0_21], %29 {strides = array<i32>} : memref<1x4x16x16xbf16, #tpu.memory_space<vmem>>, vector<1x4x16x16xbf16>,
    return
  }
  func.func @transform_0(%arg0: i32, %arg1: i32) -> (i32, i32, i32, i32) {
    %c0_i32 = arith.constant 0 : i32
    %c0_i32_0 = arith.constant 0 : i32
    %c0_i32_1 = arith.constant 0 : i32
    return %arg0, %arg1, %c0_i32, %c0_i32_0 : i32, i32, i32, i32
  }
  func.func @transform_1(%arg0: i32, %arg1: i32) -> (i32, i32) {
    %c0_i32 = arith.constant 0 : i32
    %c0_i32_0 = arith.constant 0 : i32
    %c0_i32_1 = arith.constant 0 : i32
    return %c0_i32, %c0_i32_0 : i32, i32
  }
  func.func @transform_2(%arg0: i32, %arg1: i32) -> (i32, i32) {
    %c0_i32 = arith.constant 0 : i32
    %c0_i32_0 = arith.constant 0 : i32
    %c0_i32_1 = arith.constant 0 : i32
    return %c0_i32, %c0_i32_0 : i32, i32
  }
  func.func @transform_3(%arg0: i32, %arg1: i32) -> (i32, i32) {
    %c0_i32 = arith.constant 0 : i32
    %c0_i32_0 = arith.constant 0 : i32
    %c0_i32_1 = arith.constant 0 : i32
    return %c0_i32, %c0_i32_0 : i32, i32
  }
  func.func @transform_4(%arg0: i32, %arg1: i32) -> (i32, i32) {
    %c0_i32 = arith.constant 0 : i32
    %c0_i32_0 = arith.constant 0 : i32
    %c0_i32_1 = arith.constant 0 : i32
    return %c0_i32, %c0_i32_0 : i32, i32
  }
  func.func @transform_5(%arg0: i32, %arg1: i32) -> (i32, i32, i32, i32) {
    %c0_i32 = arith.constant 0 : i32
    %c0_i32_0 = arith.constant 0 : i32
    %c0_i32_1 = arith.constant 0 : i32
    return %arg0, %arg1, %c0_i32, %c0_i32_0 : i32, i32, i32, i32
  }
  func.func @transform_6(%arg0: i32, %arg1: i32) -> (i32, i32, i32, i32) {
    %c0_i32 = arith.constant 0 : i32
    %c0_i32_0 = arith.constant 0 : i32
    %c0_i32_1 = arith.constant 0 : i32
    return %arg0, %arg1, %c0_i32, %c0_i32_0 : i32, i32, i32, i32
  }
}

module attributes {stable_mosaic.version = 11 : i64} {
  func.func @_mix_kernel(%arg0: i32, %arg1: i32, %arg2: memref<1x4x256xbf16, #tpu.memory_space<vmem>>, %arg3: memref<1x4x256xbf16, #tpu.memory_space<vmem>>, %arg4: memref<4x4xbf16, #tpu.memory_space<vmem>>, %arg5: memref<4x4xbf16, #tpu.memory_space<vmem>>, %arg6: memref<4x4xbf16, #tpu.memory_space<vmem>>, %arg7: memref<4x4xbf16, #tpu.memory_space<vmem>>, %arg8: memref<1x4x256xbf16, #tpu.memory_space<vmem>>, %arg9: memref<1x4x256xbf16, #tpu.memory_space<vmem>>) attributes {dimension_semantics = [#tpu.dimension_semantics<parallel>, #tpu.dimension_semantics<parallel>], iteration_bounds = array<i64: 2, 1>, scalar_prefetch = 0 : i64, scratch_operands = 0 : i64, tpu.core_type = #tpu.core_type<tc>, window_params = [{transform_indices = @transform_0, window_bounds = array<i64: 1, 4, 256>}, {transform_indices = @transform_1, window_bounds = array<i64: 1, 4, 256>}, {pipeline_mode = #tpu.pipeline_mode<synchronous>, transform_indices = @transform_2, window_bounds = array<i64: 4, 4>}, {pipeline_mode = #tpu.pipeline_mode<synchronous>, transform_indices = @transform_3, window_bounds = array<i64: 4, 4>}, {pipeline_mode = #tpu.pipeline_mode<synchronous>, transform_indices = @transform_4, window_bounds = array<i64: 4, 4>}, {pipeline_mode = #tpu.pipeline_mode<synchronous>, transform_indices = @transform_5, window_bounds = array<i64: 4, 4>}, {transform_indices = @transform_6, window_bounds = array<i64: 1, 4, 256>}, {transform_indices = @transform_7, window_bounds = array<i64: 1, 4, 256>}]} {
    %c0 = arith.constant 0 : index
    %c0_0 = arith.constant 0 : index
    %c0_1 = arith.constant 0 : index
    %0 = vector.load %arg2[%c0, %c0_0, %c0_1] : memref<1x4x256xbf16, #tpu.memory_space<vmem>>, vector<1x4x256xbf16>
    %1 = vector.shape_cast %0 : vector<1x4x256xbf16> to vector<4x256xbf16>
    %c0_2 = arith.constant 0 : index
    %c0_3 = arith.constant 0 : index
    %c0_4 = arith.constant 0 : index
    %2 = vector.load %arg3[%c0_2, %c0_3, %c0_4] : memref<1x4x256xbf16, #tpu.memory_space<vmem>>, vector<1x4x256xbf16>
    %3 = vector.shape_cast %2 : vector<1x4x256xbf16> to vector<4x256xbf16>
    %c0_5 = arith.constant 0 : index
    %c0_6 = arith.constant 0 : index
    %4 = vector.load %arg4[%c0_5, %c0_6] : memref<4x4xbf16, #tpu.memory_space<vmem>>, vector<4x4xbf16>
    %cst = arith.constant dense<0.000000e+00> : vector<4x256xf32>
    %5 = tpu.matmul %4, %1, %cst {dimension_numbers = #tpu.dot_dimension_numbers<[1], [0], [0], [1], [0, 0, 1, 1], [], []>} : vector<4x4xbf16>, vector<4x256xbf16>, vector<4x256xf32> -> vector<4x256xf32>
    %c0_7 = arith.constant 0 : index
    %c0_8 = arith.constant 0 : index
    %6 = vector.load %arg5[%c0_7, %c0_8] : memref<4x4xbf16, #tpu.memory_space<vmem>>, vector<4x4xbf16>
    %cst_9 = arith.constant dense<0.000000e+00> : vector<4x256xf32>
    %7 = tpu.matmul %6, %3, %cst_9 {dimension_numbers = #tpu.dot_dimension_numbers<[1], [0], [0], [1], [0, 0, 1, 1], [], []>} : vector<4x4xbf16>, vector<4x256xbf16>, vector<4x256xf32> -> vector<4x256xf32>
    %8 = arith.addf %5, %7 : vector<4x256xf32>
    %c0_10 = arith.constant 0 : index
    %c0_11 = arith.constant 0 : index
    %9 = vector.load %arg6[%c0_10, %c0_11] : memref<4x4xbf16, #tpu.memory_space<vmem>>, vector<4x4xbf16>
    %cst_12 = arith.constant dense<0.000000e+00> : vector<4x256xf32>
    %10 = tpu.matmul %9, %1, %cst_12 {dimension_numbers = #tpu.dot_dimension_numbers<[1], [0], [0], [1], [0, 0, 1, 1], [], []>} : vector<4x4xbf16>, vector<4x256xbf16>, vector<4x256xf32> -> vector<4x256xf32>
    %c0_13 = arith.constant 0 : index
    %c0_14 = arith.constant 0 : index
    %11 = vector.load %arg7[%c0_13, %c0_14] : memref<4x4xbf16, #tpu.memory_space<vmem>>, vector<4x4xbf16>
    %cst_15 = arith.constant dense<0.000000e+00> : vector<4x256xf32>
    %12 = tpu.matmul %11, %3, %cst_15 {dimension_numbers = #tpu.dot_dimension_numbers<[1], [0], [0], [1], [0, 0, 1, 1], [], []>} : vector<4x4xbf16>, vector<4x256xbf16>, vector<4x256xf32> -> vector<4x256xf32>
    %13 = arith.addf %10, %12 : vector<4x256xf32>
    %cst_16 = arith.constant 0.000000e+00 : f32
    %14 = vector.broadcast %cst_16 : f32 to vector<4x256xf32>
    %15 = arith.maximumf %8, %14 : vector<4x256xf32>
    %16 = arith.truncf %15 : vector<4x256xf32> to vector<4x256xbf16>
    %c0_17 = arith.constant 0 : index
    %c0_18 = arith.constant 0 : index
    %c0_19 = arith.constant 0 : index
    %17 = vector.load %arg8[%c0_17, %c0_18, %c0_19] : memref<1x4x256xbf16, #tpu.memory_space<vmem>>, vector<1x4x256xbf16>
    %18 = vector.shape_cast %17 : vector<1x4x256xbf16> to vector<4x256xbf16>
    %19 = vector.shape_cast %16 : vector<4x256xbf16> to vector<1x4x256xbf16>
    tpu.vector_store %arg8[%c0_17, %c0_18, %c0_19], %19 {strides = array<i32>} : memref<1x4x256xbf16, #tpu.memory_space<vmem>>, vector<1x4x256xbf16>,
    %cst_20 = arith.constant 0.000000e+00 : f32
    %20 = vector.broadcast %cst_20 : f32 to vector<4x256xf32>
    %21 = arith.maximumf %13, %20 : vector<4x256xf32>
    %22 = arith.truncf %21 : vector<4x256xf32> to vector<4x256xbf16>
    %c0_21 = arith.constant 0 : index
    %c0_22 = arith.constant 0 : index
    %c0_23 = arith.constant 0 : index
    %23 = vector.load %arg9[%c0_21, %c0_22, %c0_23] : memref<1x4x256xbf16, #tpu.memory_space<vmem>>, vector<1x4x256xbf16>
    %24 = vector.shape_cast %23 : vector<1x4x256xbf16> to vector<4x256xbf16>
    %25 = vector.shape_cast %22 : vector<4x256xbf16> to vector<1x4x256xbf16>
    tpu.vector_store %arg9[%c0_21, %c0_22, %c0_23], %25 {strides = array<i32>} : memref<1x4x256xbf16, #tpu.memory_space<vmem>>, vector<1x4x256xbf16>,
    return
  }
  func.func @transform_0(%arg0: i32, %arg1: i32) -> (i32, i32, i32) {
    %c0_i32 = arith.constant 0 : i32
    %c0_i32_0 = arith.constant 0 : i32
    return %arg0, %c0_i32, %arg1 : i32, i32, i32
  }
  func.func @transform_1(%arg0: i32, %arg1: i32) -> (i32, i32, i32) {
    %c0_i32 = arith.constant 0 : i32
    %c0_i32_0 = arith.constant 0 : i32
    return %arg0, %c0_i32, %arg1 : i32, i32, i32
  }
  func.func @transform_2(%arg0: i32, %arg1: i32) -> (i32, i32) {
    %c0_i32 = arith.constant 0 : i32
    %c0_i32_0 = arith.constant 0 : i32
    %c0_i32_1 = arith.constant 0 : i32
    return %c0_i32, %c0_i32_0 : i32, i32
  }
  func.func @transform_3(%arg0: i32, %arg1: i32) -> (i32, i32) {
    %c0_i32 = arith.constant 0 : i32
    %c0_i32_0 = arith.constant 0 : i32
    %c0_i32_1 = arith.constant 0 : i32
    return %c0_i32, %c0_i32_0 : i32, i32
  }
  func.func @transform_4(%arg0: i32, %arg1: i32) -> (i32, i32) {
    %c0_i32 = arith.constant 0 : i32
    %c0_i32_0 = arith.constant 0 : i32
    %c0_i32_1 = arith.constant 0 : i32
    return %c0_i32, %c0_i32_0 : i32, i32
  }
  func.func @transform_5(%arg0: i32, %arg1: i32) -> (i32, i32) {
    %c0_i32 = arith.constant 0 : i32
    %c0_i32_0 = arith.constant 0 : i32
    %c0_i32_1 = arith.constant 0 : i32
    return %c0_i32, %c0_i32_0 : i32, i32
  }
  func.func @transform_6(%arg0: i32, %arg1: i32) -> (i32, i32, i32) {
    %c0_i32 = arith.constant 0 : i32
    %c0_i32_0 = arith.constant 0 : i32
    return %arg0, %c0_i32, %arg1 : i32, i32, i32
  }
  func.func @transform_7(%arg0: i32, %arg1: i32) -> (i32, i32, i32) {
    %c0_i32 = arith.constant 0 : i32
    %c0_i32_0 = arith.constant 0 : i32
    return %arg0, %c0_i32, %arg1 : i32, i32, i32
  }
}

module attributes {stable_mosaic.version = 11 : i64} {
  func.func @_inv_dft_kernel(%arg0: i32, %arg1: i32, %arg2: memref<1x4x16x16xbf16, #tpu.memory_space<vmem>>, %arg3: memref<1x4x16x16xbf16, #tpu.memory_space<vmem>>, %arg4: memref<32x16xbf16, #tpu.memory_space<vmem>>, %arg5: memref<32x16xbf16, #tpu.memory_space<vmem>>, %arg6: memref<32x16xbf16, #tpu.memory_space<vmem>>, %arg7: memref<1x4x16x16xf32, #tpu.memory_space<vmem>>) attributes {dimension_semantics = [#tpu.dimension_semantics<parallel>, #tpu.dimension_semantics<parallel>], iteration_bounds = array<i64: 2, 1>, scalar_prefetch = 0 : i64, scratch_operands = 0 : i64, tpu.core_type = #tpu.core_type<tc>, window_params = [{transform_indices = @transform_0, window_bounds = array<i64: 1, 4, 16, 16>}, {transform_indices = @transform_1, window_bounds = array<i64: 1, 4, 16, 16>}, {pipeline_mode = #tpu.pipeline_mode<synchronous>, transform_indices = @transform_2, window_bounds = array<i64: 32, 16>}, {pipeline_mode = #tpu.pipeline_mode<synchronous>, transform_indices = @transform_3, window_bounds = array<i64: 32, 16>}, {pipeline_mode = #tpu.pipeline_mode<synchronous>, transform_indices = @transform_4, window_bounds = array<i64: 32, 16>}, {transform_indices = @transform_5, window_bounds = array<i64: 1, 4, 16, 16>}]} {
    %c0 = arith.constant 0 : index
    %c0_0 = arith.constant 0 : index
    %c0_1 = arith.constant 0 : index
    %c0_2 = arith.constant 0 : index
    %0 = vector.load %arg2[%c0, %c0_0, %c0_1, %c0_2] : memref<1x4x16x16xbf16, #tpu.memory_space<vmem>>, vector<1x4x16x16xbf16>
    %1 = vector.shape_cast %0 : vector<1x4x16x16xbf16> to vector<4x16x16xbf16>
    %2 = vector.shape_cast %1 : vector<4x16x16xbf16> to vector<64x16xbf16>
    %c0_3 = arith.constant 0 : index
    %c0_4 = arith.constant 0 : index
    %c0_5 = arith.constant 0 : index
    %c0_6 = arith.constant 0 : index
    %3 = vector.load %arg3[%c0_3, %c0_4, %c0_5, %c0_6] : memref<1x4x16x16xbf16, #tpu.memory_space<vmem>>, vector<1x4x16x16xbf16>
    %4 = vector.shape_cast %3 : vector<1x4x16x16xbf16> to vector<4x16x16xbf16>
    %5 = vector.shape_cast %4 : vector<4x16x16xbf16> to vector<64x16xbf16>
    %6 = tpu.concatenate %2, %5 in 1 : vector<64x16xbf16>, vector<64x16xbf16> -> vector<64x32xbf16>
    %c0_7 = arith.constant 0 : index
    %c0_8 = arith.constant 0 : index
    %7 = vector.load %arg4[%c0_7, %c0_8] : memref<32x16xbf16, #tpu.memory_space<vmem>>, vector<32x16xbf16>
    %cst = arith.constant dense<0.000000e+00> : vector<64x16xf32>
    %8 = tpu.matmul %6, %7, %cst {dimension_numbers = #tpu.dot_dimension_numbers<[1], [0], [0], [1], [0, 0, 1, 1], [], []>} : vector<64x32xbf16>, vector<32x16xbf16>, vector<64x16xf32> -> vector<64x16xf32>
    %c0_9 = arith.constant 0 : index
    %c0_10 = arith.constant 0 : index
    %9 = vector.load %arg5[%c0_9, %c0_10] : memref<32x16xbf16, #tpu.memory_space<vmem>>, vector<32x16xbf16>
    %cst_11 = arith.constant dense<0.000000e+00> : vector<64x16xf32>
    %10 = tpu.matmul %6, %9, %cst_11 {dimension_numbers = #tpu.dot_dimension_numbers<[1], [0], [0], [1], [0, 0, 1, 1], [], []>} : vector<64x32xbf16>, vector<32x16xbf16>, vector<64x16xf32> -> vector<64x16xf32>
    %11 = vector.shape_cast %8 : vector<64x16xf32> to vector<4x16x16xf32>
    %12 = tpu.transpose %11, [0, 2, 1] : vector<4x16x16xf32> -> vector<4x16x16xf32>
    %13 = vector.shape_cast %12 : vector<4x16x16xf32> to vector<64x16xf32>
    %14 = vector.shape_cast %10 : vector<64x16xf32> to vector<4x16x16xf32>
    %15 = tpu.transpose %14, [0, 2, 1] : vector<4x16x16xf32> -> vector<4x16x16xf32>
    %16 = vector.shape_cast %15 : vector<4x16x16xf32> to vector<64x16xf32>
    %17 = tpu.concatenate %13, %16 in 1 : vector<64x16xf32>, vector<64x16xf32> -> vector<64x32xf32>
    %18 = arith.truncf %17 : vector<64x32xf32> to vector<64x32xbf16>
    %c0_12 = arith.constant 0 : index
    %c0_13 = arith.constant 0 : index
    %19 = vector.load %arg6[%c0_12, %c0_13] : memref<32x16xbf16, #tpu.memory_space<vmem>>, vector<32x16xbf16>
    %cst_14 = arith.constant dense<0.000000e+00> : vector<64x16xf32>
    %20 = tpu.matmul %18, %19, %cst_14 {dimension_numbers = #tpu.dot_dimension_numbers<[1], [0], [0], [1], [0, 0, 1, 1], [], []>} : vector<64x32xbf16>, vector<32x16xbf16>, vector<64x16xf32> -> vector<64x16xf32>
    %21 = vector.shape_cast %20 : vector<64x16xf32> to vector<4x16x16xf32>
    %c0_15 = arith.constant 0 : index
    %c0_16 = arith.constant 0 : index
    %c0_17 = arith.constant 0 : index
    %c0_18 = arith.constant 0 : index
    %22 = vector.load %arg7[%c0_15, %c0_16, %c0_17, %c0_18] : memref<1x4x16x16xf32, #tpu.memory_space<vmem>>, vector<1x4x16x16xf32>
    %23 = vector.shape_cast %22 : vector<1x4x16x16xf32> to vector<4x16x16xf32>
    %24 = vector.shape_cast %21 : vector<4x16x16xf32> to vector<1x4x16x16xf32>
    tpu.vector_store %arg7[%c0_15, %c0_16, %c0_17, %c0_18], %24 {strides = array<i32>} : memref<1x4x16x16xf32, #tpu.memory_space<vmem>>, vector<1x4x16x16xf32>,
    return
  }
  func.func @transform_0(%arg0: i32, %arg1: i32) -> (i32, i32, i32, i32) {
    %c0_i32 = arith.constant 0 : i32
    %c0_i32_0 = arith.constant 0 : i32
    %c0_i32_1 = arith.constant 0 : i32
    return %arg0, %arg1, %c0_i32, %c0_i32_0 : i32, i32, i32, i32
  }
  func.func @transform_1(%arg0: i32, %arg1: i32) -> (i32, i32, i32, i32) {
    %c0_i32 = arith.constant 0 : i32
    %c0_i32_0 = arith.constant 0 : i32
    %c0_i32_1 = arith.constant 0 : i32
    return %arg0, %arg1, %c0_i32, %c0_i32_0 : i32, i32, i32, i32
  }
  func.func @transform_2(%arg0: i32, %arg1: i32) -> (i32, i32) {
    %c0_i32 = arith.constant 0 : i32
    %c0_i32_0 = arith.constant 0 : i32
    %c0_i32_1 = arith.constant 0 : i32
    return %c0_i32, %c0_i32_0 : i32, i32
  }
  func.func @transform_3(%arg0: i32, %arg1: i32) -> (i32, i32) {
    %c0_i32 = arith.constant 0 : i32
    %c0_i32_0 = arith.constant 0 : i32
    %c0_i32_1 = arith.constant 0 : i32
    return %c0_i32, %c0_i32_0 : i32, i32
  }
  func.func @transform_4(%arg0: i32, %arg1: i32) -> (i32, i32) {
    %c0_i32 = arith.constant 0 : i32
    %c0_i32_0 = arith.constant 0 : i32
    %c0_i32_1 = arith.constant 0 : i32
    return %c0_i32, %c0_i32_0 : i32, i32
  }
  func.func @transform_5(%arg0: i32, %arg1: i32) -> (i32, i32, i32, i32) {
    %c0_i32 = arith.constant 0 : i32
    %c0_i32_0 = arith.constant 0 : i32
    %c0_i32_1 = arith.constant 0 : i32
    return %arg0, %arg1, %c0_i32, %c0_i32_0 : i32, i32, i32, i32
  }
}

module attributes {stable_mosaic.version = 11 : i64} {
  func.func @_add3_conv1x1_kernel(%arg0: i32, %arg1: i32, %arg2: i32, %arg3: memref<1x4x128xf32, #tpu.memory_space<vmem>>, %arg4: memref<1x4x128xf32, #tpu.memory_space<vmem>>, %arg5: memref<1x4x128xf32, #tpu.memory_space<vmem>>, %arg6: memref<8x4xf32, #tpu.memory_space<vmem>>, %arg7: memref<1x8x128xf32, #tpu.memory_space<vmem>>) attributes {dimension_semantics = [#tpu.dimension_semantics<parallel>, #tpu.dimension_semantics<parallel>, #tpu.dimension_semantics<arbitrary>], iteration_bounds = array<i64: 2, 1, 2>, scalar_prefetch = 0 : i64, scratch_operands = 0 : i64, tpu.core_type = #tpu.core_type<tc>, window_params = [{transform_indices = @transform_0, window_bounds = array<i64: 1, 4, 128>}, {transform_indices = @transform_1, window_bounds = array<i64: 1, 4, 128>}, {transform_indices = @transform_2, window_bounds = array<i64: 1, 4, 128>}, {pipeline_mode = #tpu.pipeline_mode<synchronous>, transform_indices = @transform_3, window_bounds = array<i64: 8, 4>}, {transform_indices = @transform_4, window_bounds = array<i64: 1, 8, 128>}]} {
    %c0 = arith.constant 0 : index
    %c0_0 = arith.constant 0 : index
    %c0_1 = arith.constant 0 : index
    %0 = vector.load %arg3[%c0, %c0_0, %c0_1] : memref<1x4x128xf32, #tpu.memory_space<vmem>>, vector<1x4x128xf32>
    %1 = vector.shape_cast %0 : vector<1x4x128xf32> to vector<4x128xf32>
    %c0_2 = arith.constant 0 : index
    %c0_3 = arith.constant 0 : index
    %c0_4 = arith.constant 0 : index
    %2 = vector.load %arg4[%c0_2, %c0_3, %c0_4] : memref<1x4x128xf32, #tpu.memory_space<vmem>>, vector<1x4x128xf32>
    %3 = vector.shape_cast %2 : vector<1x4x128xf32> to vector<4x128xf32>
    %4 = arith.addf %1, %3 : vector<4x128xf32>
    %c0_5 = arith.constant 0 : index
    %c0_6 = arith.constant 0 : index
    %c0_7 = arith.constant 0 : index
    %5 = vector.load %arg5[%c0_5, %c0_6, %c0_7] : memref<1x4x128xf32, #tpu.memory_space<vmem>>, vector<1x4x128xf32>
    %6 = vector.shape_cast %5 : vector<1x4x128xf32> to vector<4x128xf32>
    %7 = arith.addf %4, %6 : vector<4x128xf32>
    %c0_8 = arith.constant 0 : index
    %c0_9 = arith.constant 0 : index
    %8 = vector.load %arg6[%c0_8, %c0_9] : memref<8x4xf32, #tpu.memory_space<vmem>>, vector<8x4xf32>
    %cst = arith.constant dense<0.000000e+00> : vector<8x128xf32>
    %9 = tpu.matmul %8, %7, %cst {dimension_numbers = #tpu.dot_dimension_numbers<[1], [0], [0], [1], [0, 0, 1, 1], [], []>, precision = #tpu.contract_precision<fp32>} : vector<8x4xf32>, vector<4x128xf32>, vector<8x128xf32> -> vector<8x128xf32>
    %c0_10 = arith.constant 0 : index
    %c0_11 = arith.constant 0 : index
    %c0_12 = arith.constant 0 : index
    %10 = vector.load %arg7[%c0_10, %c0_11, %c0_12] : memref<1x8x128xf32, #tpu.memory_space<vmem>>, vector<1x8x128xf32>
    %11 = vector.shape_cast %10 : vector<1x8x128xf32> to vector<8x128xf32>
    %12 = vector.shape_cast %9 : vector<8x128xf32> to vector<1x8x128xf32>
    tpu.vector_store %arg7[%c0_10, %c0_11, %c0_12], %12 {strides = array<i32>} : memref<1x8x128xf32, #tpu.memory_space<vmem>>, vector<1x8x128xf32>,
    return
  }
  func.func @transform_0(%arg0: i32, %arg1: i32, %arg2: i32) -> (i32, i32, i32) {
    %c1_i32 = arith.constant 1 : i32
    %0 = arith.muli %arg2, %c1_i32 : i32
    %1 = arith.addi %0, %arg1 : i32
    %c0_i32 = arith.constant 0 : i32
    %c0_i32_0 = arith.constant 0 : i32
    return %arg0, %c0_i32, %1 : i32, i32, i32
  }
  func.func @transform_1(%arg0: i32, %arg1: i32, %arg2: i32) -> (i32, i32, i32) {
    %c1_i32 = arith.constant 1 : i32
    %0 = arith.muli %arg2, %c1_i32 : i32
    %1 = arith.addi %0, %arg1 : i32
    %c0_i32 = arith.constant 0 : i32
    %c0_i32_0 = arith.constant 0 : i32
    return %arg0, %c0_i32, %1 : i32, i32, i32
  }
  func.func @transform_2(%arg0: i32, %arg1: i32, %arg2: i32) -> (i32, i32, i32) {
    %c0_i32 = arith.constant 0 : i32
    %c0_i32_0 = arith.constant 0 : i32
    return %arg0, %c0_i32, %arg1 : i32, i32, i32
  }
  func.func @transform_3(%arg0: i32, %arg1: i32, %arg2: i32) -> (i32, i32) {
    %c0_i32 = arith.constant 0 : i32
    %c0_i32_0 = arith.constant 0 : i32
    %c0_i32_1 = arith.constant 0 : i32
    return %c0_i32, %c0_i32_0 : i32, i32
  }
  func.func @transform_4(%arg0: i32, %arg1: i32, %arg2: i32) -> (i32, i32, i32) {
    %c1_i32 = arith.constant 1 : i32
    %0 = arith.muli %arg2, %c1_i32 : i32
    %1 = arith.addi %0, %arg1 : i32
    %c0_i32 = arith.constant 0 : i32
    %c0_i32_0 = arith.constant 0 : i32
    return %arg0, %c0_i32, %1 : i32, i32, i32
  }
}

</mosaic_0001>

<llo_original>
// kernel: mam_spectral_transform.8
$region0: #{mam_spectral_transform.8}
  #allocation0 [shape = 'u32[]', space=smem, size = 0x4, offset = 0x4, fixed_abs, tag = 'smem constant byte address 0x4 - core index']
  #allocation1 [shape = 'u32[144,128]{1,0:T(1,128)}', space=vmem, size = 0x12000, scoped, tag = 'internal scratch']
  %s0 = inlined_call_operand.vmem [shape: f32[2,4,256], index: 0, kind: input, shape index: {}]
  %s1 = inlined_call_operand.vmem [shape: f32[4,4], index: 1, kind: input, shape index: {}]
  %s2 = inlined_call_operand.vmem [shape: f32[2,4,256], index: 2, kind: output, shape index: {}]
  %s3 = sld [smem:[#allocation0]]
  $region41: #{mam_spectral_transform.8} parent=0
    _
  %s5 = ssub.s32 1, %s3
  %s6 = scalar_select 0, %s5, %s3
  loop: start=0, step=1, limit=4
  $region2: #{mam_spectral_transform.8} parent=0 // loop_pre_header
    _
  $region3: #{mam_spectral_transform.8} parent=0 // loop_header
    %s8 = sphi 0, %s12
    %p9 = scmp.ge.s32.totalorder %s8, 4
    %s15 = sphi 0, %s27
    %s16 = sphi 0, %s23
    %s17 = sphi 0, %s15
    %s18 = sphi 0, %s16
    %s19 = sphi 0, %s17
    %s20 = sphi 0, %s18
    %s32 = sphi 0, %s34
    %s35 = sphi 0, %s32
    %s36 = sphi 0, %s35
    %s52 = sphi 0, %s36
    %s56 = sphi 0, %s56
    %s58 = sphi 0, %s56
    %s59 = sphi 0, %s58
    %s73 = sphi 0, %s59
    %s81 = sphi 0, %s83
    %s84 = sphi 0, %s81
    %s85 = sphi 0, %s84
    %s101 = sphi 0, %s85
  $region4: #{mam_spectral_transform.8} parent=0 // loop_header_branch
    %11 = sbr.rel (%p9) target = $region8
  $region5: #{mam_spectral_transform.8} parent=0 // loop_body
    %s13 = ssub.s32 %s8, 1
    %s14 = ssub.s32 %s8, 2
    %s21 = sadd.s32 1, %s16
    %p22 = scmp.ge.s32.totalorder %s21, 1
    %s23 = scalar_select %p22, 0, %s21
    %s24 = sadd.s32 1, %s15
    %s25 = scalar_select %p22, %s24, %s15
    %p26 = scmp.ge.s32.totalorder %s25, 2
    %s27 = scalar_select %p26, 0, %s25
    %s28 = ssub.s32 %s15, %s27
    %s29 = ssub.s32 %s16, %s23
    %s30 = sor.u32 %s28, %s29
    %p31 = scmp.eq.s32.totalorder %s30, 0
    %s33 = sadd.s32 %s32, 1
    %s34 = scalar_select %p31, %s32, %s33
    %p37 = pneg %p31
    %p38 = scmp.eq.s32.totalorder %s8, 1
    %p39 = por %p37, %p38
    %p40 = scmp.ne.s32.totalorder %s32, %s35
    %p41 = scmp.eq.s32.totalorder %s8, 0
    %p42 = por %p40, %p41
    %p43 = scmp.ne.s32.totalorder %s32, %s35
    %p44 = scmp.eq.s32.totalorder %s13, 1
    %p45 = por %p43, %p44
    %p46 = scmp.ne.s32.totalorder %s35, %s36
    %p47 = scmp.eq.s32.totalorder %s13, 0
    %p48 = por %p46, %p47
    %p49 = scmp.ne.s32.totalorder %s35, %s36
    %p50 = scmp.eq.s32.totalorder %s14, 1
    %p51 = por %p49, %p50
    %p53 = scmp.ne.s32.totalorder %s36, %s52
    %p54 = scmp.eq.s32.totalorder %s14, 0
    %p55 = por %p53, %p54
    %s57 = sadd.s32 %s56, 1
    %p60 = scmp.eq.s32.totalorder %s8, 1
    %p61 = scmp.ne.s32.totalorder %s56, %s58
    %p62 = scmp.eq.s32.totalorder %s8, 0
    %p63 = por %p61, %p62
    %p64 = scmp.ne.s32.totalorder %s56, %s58
    %p65 = scmp.eq.s32.totalorder %s13, 1
    %p66 = por %p64, %p65
    %p67 = scmp.ne.s32.totalorder %s58, %s59
    %p68 = scmp.eq.s32.totalorder %s13, 0
    %p69 = por %p67, %p68
    %p70 = scmp.ne.s32.totalorder %s58, %s59
    %p71 = scmp.eq.s32.totalorder %s14, 1
    %p72 = por %p70, %p71
    %p74 = scmp.ne.s32.totalorder %s59, %s73
    %p75 = scmp.eq.s32.totalorder %s14, 0
    %p76 = por %p74, %p75
    %s77 = ssub.s32 %s15, %s27
    %s78 = ssub.s32 %s16, %s23
    %s79 = sor.u32 %s77, %s78
    %p80 = scmp.eq.s32.totalorder %s79, 0
    %s82 = sadd.s32 %s81, 1
    %s83 = scalar_select %p80, %s81, %s82
    %p86 = pneg %p80
    %p87 = scmp.eq.s32.totalorder %s8, 1
    %p88 = por %p86, %p87
    %p89 = scmp.ne.s32.totalorder %s81, %s84
    %p90 = scmp.eq.s32.totalorder %s8, 0
    %p91 = por %p89, %p90
    %p92 = scmp.ne.s32.totalorder %s81, %s84
    %p93 = scmp.eq.s32.totalorder %s13, 1
    %p94 = por %p92, %p93
    %p95 = scmp.ne.s32.totalorder %s84, %s85
    %p96 = scmp.eq.s32.totalorder %s13, 0
    %p97 = por %p95, %p96
    %p98 = scmp.ne.s32.totalorder %s84, %s85
    %p99 = scmp.eq.s32.totalorder %s14, 1
    %p100 = por %p98, %p99
    %p102 = scmp.ne.s32.totalorder %s85, %s101
    %p103 = scmp.eq.s32.totalorder %s14, 0
    %p104 = por %p102, %p103
    %p105 = scmp.le.s32.totalorder 1, %s8
    %p106 = scmp.lt.s32.totalorder %s8, 3
    %p107 = pnand %p105, %p106
    %p108 = pneg %p107
    // Predicated region
    $region9: #{mam_spectral_transform.8} parent=5 // pred_check
      _
    $region10: #{mam_spectral_transform.8} parent=5 // pred_check_branch
      %110 = sbr.rel (%p107) target = $region12
    $region11: #{mam_spectral_transform.8} parent=5 // pred_region
      %s111 = ssub.s32 %s8, 1
      // Predicated region
      $region13: #{mam_spectral_transform.8} parent=11 // pred_check
        %p112 = pneg %p69
      $region14: #{mam_spectral_transform.8} parent=11 // pred_check_branch
        %114 = sbr.rel (%p112) target = $region16
      $region15: #{mam_spectral_transform.8} parent=11 // pred_region
        _
      $region16: #{mam_spectral_transform.8} parent=11 // pred_fallthru
        _
    $region12: #{mam_spectral_transform.8} parent=5 // pred_fallthru
      _
    %p115 = scmp.lt.s32.totalorder %s8, 2
    // Predicated region
    $region17: #{mam_spectral_transform.8} parent=5 // pred_check
      %p116 = pneg %p115
    $region18: #{mam_spectral_transform.8} parent=5 // pred_check_branch
      %118 = sbr.rel (%p116) target = $region20
    $region19: #{mam_spectral_transform.8} parent=5 // pred_region
      // Predicated region
      $region21: #{mam_spectral_transform.8} parent=19 // pred_check
        %p119 = pneg %p42
      $region22: #{mam_spectral_transform.8} parent=19 // pred_check_branch
        %121 = sbr.rel (%p119) target = $region24
      $region23: #{mam_spectral_transform.8} parent=19 // pred_region
        %s122 = smul.u32 2, %s16
        %p123 = scmp.lt.s32.totalorder %s15, 1
        %s124 = scalar_select %p123, %s15, 1
        %p125 = scmp.lt.s32.totalorder %s122, 1
        %s126 = scalar_select %p125, %s122, 1
        %s127 = smul.addr %s124, 2
        %s128 = sadd.s32 %s126, %s127
        %s129 = smul.addr %s128, 4
        %s130 = scalar_lea.vmem %s0, %s129
        %s131 = smul.u32 2, %s16
      $region24: #{mam_spectral_transform.8} parent=19 // pred_fallthru
        _
    $region20: #{mam_spectral_transform.8} parent=5 // pred_fallthru
      _
    %p132 = scmp.le.s32.totalorder 1, %s8
    %p133 = scmp.lt.s32.totalorder %s8, 3
    %p134 = pnand %p132, %p133
    %p135 = pneg %p134
    // Predicated region
    $region25: #{mam_spectral_transform.8} parent=5 // pred_check
      _
    $region26: #{mam_spectral_transform.8} parent=5 // pred_check_branch
      %137 = sbr.rel (%p134) target = $region28
    $region27: #{mam_spectral_transform.8} parent=5 // pred_region
      %s138 = ssub.s32 %s8, 1
      %s139 = smul.u32 2, %s18
      %p140 = scmp.lt.s32.totalorder %s17, 1
      %s141 = scalar_select %p140, %s17, 1
      %p142 = scmp.lt.s32.totalorder %s139, 1
      %s143 = scalar_select %p142, %s139, 1
      %s144 = smul.addr %s141, 2
      %s145 = sadd.s32 %s143, %s144
      %s146 = smul.addr %s145, 4
      %s147 = scalar_lea.vmem %s0, %s146
      %p148 = pneg %p48
      %p149 = pneg %p45
      %p150 = pneg %p69
      %p151 = pneg %p66
      %p152 = pneg %p97
      %p153 = pneg %p94
      %s154 = smul.u32 2, %s18
      %p155 = scmp.lt.s32.totalorder %s17, 1
      %s156 = scalar_select %p155, %s17, 1
      %p157 = scmp.lt.s32.totalorder %s154, 1
      %s158 = scalar_select %p157, %s154, 1
      %s159 = smul.addr %s156, 2
      %s160 = sadd.s32 %s158, %s159
      %s161 = smul.addr %s160, 4
      %s162 = scalar_lea.vmem %s2, %s161
      %s163 = smul.u32 2, %s18
      %p164 = scmp.lt.s32.totalorder %s17, 1
      %s165 = scalar_select %p164, %s17, 1
      %p166 = scmp.lt.s32.totalorder %s163, 1
      %s167 = scalar_select %p166, %s163, 1
      %s168 = smul.addr %s165, 2
      %s169 = sadd.s32 %s167, %s168
      %s170 = smul.addr %s169, 4
      %s171 = scalar_lea.vmem %s0, %s170
      %s172 = smul.u32 2, %s18
      %s173 = smul.u32 2, %s18
      %p174 = scmp.lt.s32.totalorder %s17, 1
      %s175 = scalar_select %p174, %s17, 1
      %p176 = scmp.lt.s32.totalorder %s173, 1
      %s177 = scalar_select %p176, %s173, 1
      %s178 = smul.addr %s175, 2
      %s179 = sadd.s32 %s177, %s178
      %s180 = smul.addr %s179, 4
      %s181 = scalar_lea.vmem %s2, %s180
      %s182 = smul.u32 2, %s18
      %v183 = vld [vmem:[%s1] sm:$0xf]
      %v184 = vld [vmem:[%s171] sm:$0xff]
      %v186 = vcombine.high %v184, %v184
      %vm187 = vcmask 31744
      %v189 = vsel %vm187, %v183, 0
      %vm191 = vcmask 1043456
      %v192 = vsel %vm191, %v184, 0
      %v194 = vsel %vm191, %v186, 0
      %v196 = vand.u32 %v194, 4294901760
      %197 = vmatprep.subr.mxu0 %v196
      %v198 = vand.u32 %v192, 4294901760
      %199 = vmatpush1.msra.mxu0 %v198
      %200 = vmatprep.subr.mxu0 0.0
      %201 = vmatpush1.msra.mxu0 0.0
      %202 = vmatprep.subr.mxu0 0.0
      %203 = vmatpush1.msra.mxu0 0.0
      %204 = vmatprep.subr.mxu0 0.0
      %205 = vmatpush1.msra.mxu0 0.0
      %206 = vmatprep.subr.mxu0 0.0
      %207 = vmatpush1.msra.mxu0 0.0
      %208 = vmatprep.subr.mxu0 0.0
      %209 = vmatpush1.msra.mxu0 0.0
      %210 = vmatprep.subr.mxu0 0.0
      %211 = vmatpush1.msra.mxu0 0.0
      %212 = vmatprep.subr.mxu0 0.0
      %213 = vmatpush1.msra.mxu0 0.0
      %214 = vmatprep.subr.mxu0 0.0
      %215 = vmatpush1.msra.mxu0 0.0
      %216 = vmatprep.subr.mxu0 0.0
      %217 = vmatpush1.msra.mxu0 0.0
      %218 = vmatprep.subr.mxu0 0.0
      %219 = vmatpush1.msra.mxu0 0.0
      %220 = vmatprep.subr.mxu0 0.0
      %221 = vmatpush1.msra.mxu0 0.0
      %222 = vmatprep.subr.mxu0 0.0
      %223 = vmatpush1.msra.mxu0 0.0
      %224 = vmatprep.subr.mxu0 0.0
      %225 = vmatpush1.msra.mxu0 0.0
      %226 = vmatprep.subr.mxu0 0.0
      %227 = vmatpush1.msra.mxu0 0.0
      %228 = vmatprep.subr.mxu0 0.0
      %229 = vmatpush1.msra.mxu0 0.0
      %230 = vmatprep.subr.mxu0 0.0
      %231 = vmatpush1.msra.mxu0 0.0
      %232 = vmatprep.subr.mxu0 0.0
      %233 = vmatpush1.msra.mxu0 0.0
      %234 = vmatprep.subr.mxu0 0.0
      %235 = vmatpush1.msra.mxu0 0.0
      %236 = vmatprep.subr.mxu0 0.0
      %237 = vmatpush1.msra.mxu0 0.0
      %238 = vmatprep.subr.mxu0 0.0
      %239 = vmatpush1.msra.mxu0 0.0
      %240 = vmatprep.subr.mxu0 0.0
      %241 = vmatpush1.msra.mxu0 0.0
      %242 = vmatprep.subr.mxu0 0.0
      %243 = vmatpush1.msra.mxu0 0.0
      %244 = vmatprep.subr.mxu0 0.0
      %245 = vmatpush1.msra.mxu0 0.0
      %246 = vmatprep.subr.mxu0 0.0
      %247 = vmatpush1.msra.mxu0 0.0
      %248 = vmatprep.subr.mxu0 0.0
      %249 = vmatpush1.msra.mxu0 0.0
      %250 = vmatprep.subr.mxu0 0.0
      %251 = vmatpush1.msra.mxu0 0.0
      %252 = vmatprep.subr.mxu0 0.0
      %253 = vmatpush1.msra.mxu0 0.0
      %254 = vmatprep.subr.mxu0 0.0
      %255 = vmatpush1.msra.mxu0 0.0
      %256 = vmatprep.subr.mxu0 0.0
      %257 = vmatpush1.msra.mxu0 0.0
      %258 = vmatprep.subr.mxu0 0.0
      %259 = vmatpush1.msra.mxu0 0.0
      %260 = vmatprep.subr.mxu0 0.0
      %261 = vmatpush1.msra.mxu0 0.0
      %262 = vmatprep.mubr.f32.mxu0 0.0
      %v263 = vand.u32 %v189, 4294901760
      %v264 = vsub.f32 %v189, %v263
      %v265 = vand.u32 %v264, 4294901760
      %v266 = vsub.f32 %v264, %v265
      %v267 = vand.u32 %v266, 4294901760
      %268 = vmatmul.mubr.f32.gmra.mrb[0].mxu0 %v267
      %v269 = vpop.f32.mrb[0].mxu0
      %v270 = vadd.f32 0.0, %v269
      %v271 = vpop.f32.mrb[0].mxu0
      %v272 = vadd.f32 0.0, %v271
      %273 = vdwg.mxu0
      %v274 = vand.u32 %v194, 4294901760
      %v275 = vsub.f32 %v194, %v274
      %v276 = vand.u32 %v275, 4294901760
      %v277 = vsub.f32 %v275, %v276
      %v278 = vand.u32 %v277, 4294901760
      %279 = vmatprep.subr.mxu0 %v278
      %v280 = vand.u32 %v192, 4294901760
      %v281 = vsub.f32 %v192, %v280
      %v282 = vand.u32 %v281, 4294901760
      %v283 = vsub.f32 %v281, %v282
      %v284 = vand.u32 %v283, 4294901760
      %285 = vmatpush1.msra.mxu0 %v284
      %286 = vmatprep.subr.mxu0 0.0
      %287 = vmatpush1.msra.mxu0 0.0
      %288 = vmatprep.subr.mxu0 0.0
      %289 = vmatpush1.msra.mxu0 0.0
      %290 = vmatprep.subr.mxu0 0.0
      %291 = vmatpush1.msra.mxu0 0.0
      %292 = vmatprep.subr.mxu0 0.0
      %293 = vmatpush1.msra.mxu0 0.0
      %294 = vmatprep.subr.mxu0 0.0
      %295 = vmatpush1.msra.mxu0 0.0
      %296 = vmatprep.subr.mxu0 0.0
      %297 = vmatpush1.msra.mxu0 0.0
      %298 = vmatprep.subr.mxu0 0.0
      %299 = vmatpush1.msra.mxu0 0.0
      %300 = vmatprep.subr.mxu0 0.0
      %301 = vmatpush1.msra.mxu0 0.0
      %302 = vmatprep.subr.mxu0 0.0
      %303 = vmatpush1.msra.mxu0 0.0
      %304 = vmatprep.subr.mxu0 0.0
      %305 = vmatpush1.msra.mxu0 0.0
      %306 = vmatprep.subr.mxu0 0.0
      %307 = vmatpush1.msra.mxu0 0.0
      %308 = vmatprep.subr.mxu0 0.0
      %309 = vmatpush1.msra.mxu0 0.0
      %310 = vmatprep.subr.mxu0 0.0
      %311 = vmatpush1.msra.mxu0 0.0
      %312 = vmatprep.subr.mxu0 0.0
      %313 = vmatpush1.msra.mxu0 0.0
      %314 = vmatprep.subr.mxu0 0.0
      %315 = vmatpush1.msra.mxu0 0.0
      %316 = vmatprep.subr.mxu0 0.0
      %317 = vmatpush1.msra.mxu0 0.0
      %318 = vmatprep.subr.mxu0 0.0
      %319 = vmatpush1.msra.mxu0 0.0
      %320 = vmatprep.subr.mxu0 0.0
      %321 = vmatpush1.msra.mxu0 0.0
      %322 = vmatprep.subr.mxu0 0.0
      %323 = vmatpush1.msra.mxu0 0.0
      %324 = vmatprep.subr.mxu0 0.0
      %325 = vmatpush1.msra.mxu0 0.0
      %326 = vmatprep.subr.mxu0 0.0
      %327 = vmatpush1.msra.mxu0 0.0
      %328 = vmatprep.subr.mxu0 0.0
      %329 = vmatpush1.msra.mxu0 0.0
      %330 = vmatprep.subr.mxu0 0.0
      %331 = vmatpush1.msra.mxu0 0.0
      %332 = vmatprep.subr.mxu0 0.0
      %333 = vmatpush1.msra.mxu0 0.0
      %334 = vmatprep.subr.mxu0 0.0
      %335 = vmatpush1.msra.mxu0 0.0
      %336 = vmatprep.subr.mxu0 0.0
      %337 = vmatpush1.msra.mxu0 0.0
      %338 = vmatprep.subr.mxu0 0.0
      %339 = vmatpush1.msra.mxu0 0.0
      %340 = vmatprep.subr.mxu0 0.0
      %341 = vmatpush1.msra.mxu0 0.0
      %342 = vmatprep.subr.mxu0 0.0
      %343 = vmatpush1.msra.mxu0 0.0
      %344 = vmatprep.subr.mxu0 0.0
      %345 = vmatpush1.msra.mxu0 0.0
      %346 = vmatprep.subr.mxu0 0.0
      %347 = vmatpush1.msra.mxu0 0.0
      %348 = vmatprep.mubr.f32.mxu0 0.0
      %v349 = vand.u32 %v189, 4294901760
      %350 = vmatmul.mubr.f32.gmra.mrb[0].mxu0 %v349
      %v351 = vpop.f32.mrb[0].mxu0
      %v352 = vadd.f32 %v270, %v351
      %v353 = vpop.f32.mrb[0].mxu0
      %v354 = vadd.f32 %v272, %v353
      %355 = vdwg.mxu0
      %v356 = vand.u32 %v194, 4294901760
      %v357 = vsub.f32 %v194, %v356
      %358 = vmatprep.subr.mxu0 %v357
      %v359 = vand.u32 %v192, 4294901760
      %v360 = vsub.f32 %v192, %v359
      %361 = vmatpush1.msra.mxu0 %v360
      %362 = vmatprep.subr.mxu0 0.0
      %363 = vmatpush1.msra.mxu0 0.0
      %364 = vmatprep.subr.mxu0 0.0
      %365 = vmatpush1.msra.mxu0 0.0
      %366 = vmatprep.subr.mxu0 0.0
      %367 = vmatpush1.msra.mxu0 0.0
      %368 = vmatprep.subr.mxu0 0.0
      %369 = vmatpush1.msra.mxu0 0.0
      %370 = vmatprep.subr.mxu0 0.0
      %371 = vmatpush1.msra.mxu0 0.0
      %372 = vmatprep.subr.mxu0 0.0
      %373 = vmatpush1.msra.mxu0 0.0
      %374 = vmatprep.subr.mxu0 0.0
      %375 = vmatpush1.msra.mxu0 0.0
      %376 = vmatprep.subr.mxu0 0.0
      %377 = vmatpush1.msra.mxu0 0.0
      %378 = vmatprep.subr.mxu0 0.0
      %379 = vmatpush1.msra.mxu0 0.0
      %380 = vmatprep.subr.mxu0 0.0
      %381 = vmatpush1.msra.mxu0 0.0
      %382 = vmatprep.subr.mxu0 0.0
      %383 = vmatpush1.msra.mxu0 0.0
      %384 = vmatprep.subr.mxu0 0.0
      %385 = vmatpush1.msra.mxu0 0.0
      %386 = vmatprep.subr.mxu0 0.0
      %387 = vmatpush1.msra.mxu0 0.0
      %388 = vmatprep.subr.mxu0 0.0
      %389 = vmatpush1.msra.mxu0 0.0
      %390 = vmatprep.subr.mxu0 0.0
      %391 = vmatpush1.msra.mxu0 0.0
      %392 = vmatprep.subr.mxu0 0.0
      %393 = vmatpush1.msra.mxu0 0.0
      %394 = vmatprep.subr.mxu0 0.0
      %395 = vmatpush1.msra.mxu0 0.0
      %396 = vmatprep.subr.mxu0 0.0
      %397 = vmatpush1.msra.mxu0 0.0
      %398 = vmatprep.subr.mxu0 0.0
      %399 = vmatpush1.msra.mxu0 0.0
      %400 = vmatprep.subr.mxu0 0.0
      %401 = vmatpush1.msra.mxu0 0.0
      %402 = vmatprep.subr.mxu0 0.0
      %403 = vmatpush1.msra.mxu0 0.0
      %404 = vmatprep.subr.mxu0 0.0
      %405 = vmatpush1.msra.mxu0 0.0
      %406 = vmatprep.subr.mxu0 0.0
      %407 = vmatpush1.msra.mxu0 0.0
      %408 = vmatprep.subr.mxu0 0.0
      %409 = vmatpush1.msra.mxu0 0.0
      %410 = vmatprep.subr.mxu0 0.0
      %411 = vmatpush1.msra.mxu0 0.0
      %412 = vmatprep.subr.mxu0 0.0
      %413 = vmatpush1.msra.mxu0 0.0
      %414 = vmatprep.subr.mxu0 0.0
      %415 = vmatpush1.msra.mxu0 0.0
      %416 = vmatprep.subr.mxu0 0.0
      %417 = vmatpush1.msra.mxu0 0.0
      %418 = vmatprep.subr.mxu0 0.0
      %419 = vmatpush1.msra.mxu0 0.0
      %420 = vmatprep.subr.mxu0 0.0
      %421 = vmatpush1.msra.mxu0 0.0
      %422 = vmatprep.subr.mxu0 0.0
      %423 = vmatpush1.msra.mxu0 0.0
      %424 = vmatprep.mubr.f32.mxu0 0.0
      %v425 = vand.u32 %v189, 4294901760
      %v426 = vsub.f32 %v189, %v425
      %427 = vmatmul.mubr.f32.gmra.mrb[0].mxu0 %v426
      %v428 = vpop.f32.mrb[0].mxu0
      %v429 = vadd.f32 %v352, %v428
      %v430 = vpop.f32.mrb[0].mxu0
      %v431 = vadd.f32 %v354, %v430
      %432 = vdwg.mxu0
      %v433 = vand.u32 %v194, 4294901760
      %434 = vmatprep.subr.mxu0 %v433
      %v435 = vand.u32 %v192, 4294901760
      %436 = vmatpush1.msra.mxu0 %v435
      %437 = vmatprep.subr.mxu0 0.0
      %438 = vmatpush1.msra.mxu0 0.0
      %439 = vmatprep.subr.mxu0 0.0
      %440 = vmatpush1.msra.mxu0 0.0
      %441 = vmatprep.subr.mxu0 0.0
      %442 = vmatpush1.msra.mxu0 0.0
      %443 = vmatprep.subr.mxu0 0.0
      %444 = vmatpush1.msra.mxu0 0.0
      %445 = vmatprep.subr.mxu0 0.0
      %446 = vmatpush1.msra.mxu0 0.0
      %447 = vmatprep.subr.mxu0 0.0
      %448 = vmatpush1.msra.mxu0 0.0
      %449 = vmatprep.subr.mxu0 0.0
      %450 = vmatpush1.msra.mxu0 0.0
      %451 = vmatprep.subr.mxu0 0.0
      %452 = vmatpush1.msra.mxu0 0.0
      %453 = vmatprep.subr.mxu0 0.0
      %454 = vmatpush1.msra.mxu0 0.0
      %455 = vmatprep.subr.mxu0 0.0
      %456 = vmatpush1.msra.mxu0 0.0
      %457 = vmatprep.subr.mxu0 0.0
      %458 = vmatpush1.msra.mxu0 0.0
      %459 = vmatprep.subr.mxu0 0.0
      %460 = vmatpush1.msra.mxu0 0.0
      %461 = vmatprep.subr.mxu0 0.0
      %462 = vmatpush1.msra.mxu0 0.0
      %463 = vmatprep.subr.mxu0 0.0
      %464 = vmatpush1.msra.mxu0 0.0
      %465 = vmatprep.subr.mxu0 0.0
      %466 = vmatpush1.msra.mxu0 0.0
      %467 = vmatprep.subr.mxu0 0.0
      %468 = vmatpush1.msra.mxu0 0.0
      %469 = vmatprep.subr.mxu0 0.0
      %470 = vmatpush1.msra.mxu0 0.0
      %471 = vmatprep.subr.mxu0 0.0
      %472 = vmatpush1.msra.mxu0 0.0
      %473 = vmatprep.subr.mxu0 0.0
      %474 = vmatpush1.msra.mxu0 0.0
      %475 = vmatprep.subr.mxu0 0.0
      %476 = vmatpush1.msra.mxu0 0.0
      %477 = vmatprep.subr.mxu0 0.0
      %478 = vmatpush1.msra.mxu0 0.0
      %479 = vmatprep.subr.mxu0 0.0
      %480 = vmatpush1.msra.mxu0 0.0
      %481 = vmatprep.subr.mxu0 0.0
      %482 = vmatpush1.msra.mxu0 0.0
      %483 = vmatprep.subr.mxu0 0.0
      %484 = vmatpush1.msra.mxu0 0.0
      %485 = vmatprep.subr.mxu0 0.0
      %486 = vmatpush1.msra.mxu0 0.0
      %487 = vmatprep.subr.mxu0 0.0
      %488 = vmatpush1.msra.mxu0 0.0
      %489 = vmatprep.subr.mxu0 0.0
      %490 = vmatpush1.msra.mxu0 0.0
      %491 = vmatprep.subr.mxu0 0.0
      %492 = vmatpush1.msra.mxu0 0.0
      %493 = vmatprep.subr.mxu0 0.0
      %494 = vmatpush1.msra.mxu0 0.0
      %495 = vmatprep.subr.mxu0 0.0
      %496 = vmatpush1.msra.mxu0 0.0
      %497 = vmatprep.subr.mxu0 0.0
      %498 = vmatpush1.msra.mxu0 0.0
      %499 = vmatprep.mubr.f32.mxu0 0.0
      %v500 = vand.u32 %v189, 4294901760
      %v501 = vsub.f32 %v189, %v500
      %v502 = vand.u32 %v501, 4294901760
      %503 = vmatmul.mubr.f32.gmra.mrb[0].mxu0 %v502
      %v504 = vpop.f32.mrb[0].mxu0
      %v505 = vadd.f32 %v429, %v504
      %v506 = vpop.f32.mrb[0].mxu0
      %v507 = vadd.f32 %v431, %v506
      %508 = vdwg.mxu0
      %v509 = vand.u32 %v194, 4294901760
      %v510 = vsub.f32 %v194, %v509
      %v511 = vand.u32 %v510, 4294901760
      %512 = vmatprep.subr.mxu0 %v511
      %v513 = vand.u32 %v192, 4294901760
      %v514 = vsub.f32 %v192, %v513
      %v515 = vand.u32 %v514, 4294901760
      %516 = vmatpush1.msra.mxu0 %v515
      %517 = vmatprep.subr.mxu0 0.0
      %518 = vmatpush1.msra.mxu0 0.0
      %519 = vmatprep.subr.mxu0 0.0
      %520 = vmatpush1.msra.mxu0 0.0
      %521 = vmatprep.subr.mxu0 0.0
      %522 = vmatpush1.msra.mxu0 0.0
      %523 = vmatprep.subr.mxu0 0.0
      %524 = vmatpush1.msra.mxu0 0.0
      %525 = vmatprep.subr.mxu0 0.0
      %526 = vmatpush1.msra.mxu0 0.0
      %527 = vmatprep.subr.mxu0 0.0
      %528 = vmatpush1.msra.mxu0 0.0
      %529 = vmatprep.subr.mxu0 0.0
      %530 = vmatpush1.msra.mxu0 0.0
      %531 = vmatprep.subr.mxu0 0.0
      %532 = vmatpush1.msra.mxu0 0.0
      %533 = vmatprep.subr.mxu0 0.0
      %534 = vmatpush1.msra.mxu0 0.0
      %535 = vmatprep.subr.mxu0 0.0
      %536 = vmatpush1.msra.mxu0 0.0
      %537 = vmatprep.subr.mxu0 0.0
      %538 = vmatpush1.msra.mxu0 0.0
      %539 = vmatprep.subr.mxu0 0.0
      %540 = vmatpush1.msra.mxu0 0.0
      %541 = vmatprep.subr.mxu0 0.0
      %542 = vmatpush1.msra.mxu0 0.0
      %543 = vmatprep.subr.mxu0 0.0
      %544 = vmatpush1.msra.mxu0 0.0
      %545 = vmatprep.subr.mxu0 0.0
      %546 = vmatpush1.msra.mxu0 0.0
      %547 = vmatprep.subr.mxu0 0.0
      %548 = vmatpush1.msra.mxu0 0.0
      %549 = vmatprep.subr.mxu0 0.0
      %550 = vmatpush1.msra.mxu0 0.0
      %551 = vmatprep.subr.mxu0 0.0
      %552 = vmatpush1.msra.mxu0 0.0
      %553 = vmatprep.subr.mxu0 0.0
      %554 = vmatpush1.msra.mxu0 0.0
      %555 = vmatprep.subr.mxu0 0.0
      %556 = vmatpush1.msra.mxu0 0.0
      %557 = vmatprep.subr.mxu0 0.0
      %558 = vmatpush1.msra.mxu0 0.0
      %559 = vmatprep.subr.mxu0 0.0
      %560 = vmatpush1.msra.mxu0 0.0
      %561 = vmatprep.subr.mxu0 0.0
      %562 = vmatpush1.msra.mxu0 0.0
      %563 = vmatprep.subr.mxu0 0.0
      %564 = vmatpush1.msra.mxu0 0.0
      %565 = vmatprep.subr.mxu0 0.0
      %566 = vmatpush1.msra.mxu0 0.0
      %567 = vmatprep.subr.mxu0 0.0
      %568 = vmatpush1.msra.mxu0 0.0
      %569 = vmatprep.subr.mxu0 0.0
      %570 = vmatpush1.msra.mxu0 0.0
      %571 = vmatprep.subr.mxu0 0.0
      %572 = vmatpush1.msra.mxu0 0.0
      %573 = vmatprep.subr.mxu0 0.0
      %574 = vmatpush1.msra.mxu0 0.0
      %575 = vmatprep.subr.mxu0 0.0
      %576 = vmatpush1.msra.mxu0 0.0
      %577 = vmatprep.subr.mxu0 0.0
      %578 = vmatpush1.msra.mxu0 0.0
      %579 = vmatprep.mubr.f32.mxu0 0.0
      %v580 = vand.u32 %v189, 4294901760
      %581 = vmatmul.mubr.f32.gmra.mrb[0].mxu0 %v580
      %v582 = vpop.f32.mrb[0].mxu0
      %v583 = vadd.f32 %v505, %v582
      %v584 = vpop.f32.mrb[0].mxu0
      %v585 = vadd.f32 %v507, %v584
      %586 = vdwg.mxu0
      %v587 = vand.u32 %v194, 4294901760
      %588 = vmatprep.subr.mxu0 %v587
      %v589 = vand.u32 %v192, 4294901760
      %590 = vmatpush1.msra.mxu0 %v589
      %591 = vmatprep.subr.mxu0 0.0
      %592 = vmatpush1.msra.mxu0 0.0
      %593 = vmatprep.subr.mxu0 0.0
      %594 = vmatpush1.msra.mxu0 0.0
      %595 = vmatprep.subr.mxu0 0.0
      %596 = vmatpush1.msra.mxu0 0.0
      %597 = vmatprep.subr.mxu0 0.0
      %598 = vmatpush1.msra.mxu0 0.0
      %599 = vmatprep.subr.mxu0 0.0
      %600 = vmatpush1.msra.mxu0 0.0
      %601 = vmatprep.subr.mxu0 0.0
      %602 = vmatpush1.msra.mxu0 0.0
      %603 = vmatprep.subr.mxu0 0.0
      %604 = vmatpush1.msra.mxu0 0.0
      %605 = vmatprep.subr.mxu0 0.0
      %606 = vmatpush1.msra.mxu0 0.0
      %607 = vmatprep.subr.mxu0 0.0
      %608 = vmatpush1.msra.mxu0 0.0
      %609 = vmatprep.subr.mxu0 0.0
      %610 = vmatpush1.msra.mxu0 0.0
      %611 = vmatprep.subr.mxu0 0.0
      %612 = vmatpush1.msra.mxu0 0.0
      %613 = vmatprep.subr.mxu0 0.0
      %614 = vmatpush1.msra.mxu0 0.0
      %615 = vmatprep.subr.mxu0 0.0
      %616 = vmatpush1.msra.mxu0 0.0
      %617 = vmatprep.subr.mxu0 0.0
      %618 = vmatpush1.msra.mxu0 0.0
      %619 = vmatprep.subr.mxu0 0.0
      %620 = vmatpush1.msra.mxu0 0.0
      %621 = vmatprep.subr.mxu0 0.0
      %622 = vmatpush1.msra.mxu0 0.0
      %623 = vmatprep.subr.mxu0 0.0
      %624 = vmatpush1.msra.mxu0 0.0
      %625 = vmatprep.subr.mxu0 0.0
      %626 = vmatpush1.msra.mxu0 0.0
      %627 = vmatprep.subr.mxu0 0.0
      %628 = vmatpush1.msra.mxu0 0.0
      %629 = vmatprep.subr.mxu0 0.0
      %630 = vmatpush1.msra.mxu0 0.0
      %631 = vmatprep.subr.mxu0 0.0
      %632 = vmatpush1.msra.mxu0 0.0
      %633 = vmatprep.subr.mxu0 0.0
      %634 = vmatpush1.msra.mxu0 0.0
      %635 = vmatprep.subr.mxu0 0.0
      %636 = vmatpush1.msra.mxu0 0.0
      %637 = vmatprep.subr.mxu0 0.0
      %638 = vmatpush1.msra.mxu0 0.0
      %639 = vmatprep.subr.mxu0 0.0
      %640 = vmatpush1.msra.mxu0 0.0
      %641 = vmatprep.subr.mxu0 0.0
      %642 = vmatpush1.msra.mxu0 0.0
      %643 = vmatprep.subr.mxu0 0.0
      %644 = vmatpush1.msra.mxu0 0.0
      %645 = vmatprep.subr.mxu0 0.0
      %646 = vmatpush1.msra.mxu0 0.0
      %647 = vmatprep.subr.mxu0 0.0
      %648 = vmatpush1.msra.mxu0 0.0
      %649 = vmatprep.subr.mxu0 0.0
      %650 = vmatpush1.msra.mxu0 0.0
      %651 = vmatprep.subr.mxu0 0.0
      %652 = vmatpush1.msra.mxu0 0.0
      %653 = vmatprep.mubr.f32.mxu0 0.0
      %v654 = vand.u32 %v189, 4294901760
      %655 = vmatmul.mubr.f32.gmra.mrb[0].mxu0 %v654
      %v656 = vpop.f32.mrb[0].mxu0
      %v657 = vadd.f32 %v583, %v656
      %v658 = vpop.f32.mrb[0].mxu0
      %v659 = vadd.f32 %v585, %v658
      %660 = vdwg.mxu0
      %v661 = vmax.f32 %v657, 0.0
      %v662 = vmax.f32 %v659, 0.0
      %v665 = vcombine.low %v661, %v662
      %667 = vst [vmem:[%s181] sm:$0xff] %v665
      %s668 = smul.u32 2, %s18
      %p669 = scmp.lt.s32.totalorder %s17, 1
      %s670 = scalar_select %p669, %s17, 1
      %p671 = scmp.lt.s32.totalorder %s668, 1
      %s672 = scalar_select %p671, %s668, 1
      %s673 = smul.addr %s670, 2
      %s674 = sadd.s32 %s672, %s673
      %s675 = smul.addr %s674, 4
      %s676 = scalar_lea.vmem %s2, %s675
      // Predicated region
      $region29: #{mam_spectral_transform.8} parent=27 // pred_check
        %p677 = pneg %p94
      $region30: #{mam_spectral_transform.8} parent=27 // pred_check_branch
        %679 = sbr.rel (%p677) target = $region32
      $region31: #{mam_spectral_transform.8} parent=27 // pred_region
        %s680 = smul.u32 2, %s18
      $region32: #{mam_spectral_transform.8} parent=27 // pred_fallthru
        _
    $region28: #{mam_spectral_transform.8} parent=5 // pred_fallthru
      _
    %p681 = scmp.le.s32.totalorder 2, %s8
    // Predicated region
    $region33: #{mam_spectral_transform.8} parent=5 // pred_check
      %p682 = pneg %p681
    $region34: #{mam_spectral_transform.8} parent=5 // pred_check_branch
      %684 = sbr.rel (%p682) target = $region36
    $region35: #{mam_spectral_transform.8} parent=5 // pred_region
      %s685 = ssub.s32 %s8, 2
      // Predicated region
      $region37: #{mam_spectral_transform.8} parent=35 // pred_check
        %p686 = pneg %p100
      $region38: #{mam_spectral_transform.8} parent=35 // pred_check_branch
        %688 = sbr.rel (%p686) target = $region40
      $region39: #{mam_spectral_transform.8} parent=35 // pred_region
        %s689 = smul.u32 2, %s20
        %p690 = scmp.lt.s32.totalorder %s19, 1
        %s691 = scalar_select %p690, %s19, 1
        %p692 = scmp.lt.s32.totalorder %s689, 1
        %s693 = scalar_select %p692, %s689, 1
        %s694 = smul.addr %s691, 2
        %s695 = sadd.s32 %s693, %s694
        %s696 = smul.addr %s695, 4
        %s697 = scalar_lea.vmem %s2, %s696
      $region40: #{mam_spectral_transform.8} parent=35 // pred_fallthru
        _
    $region36: #{mam_spectral_transform.8} parent=5 // pred_fallthru
      _
  $region6: #{mam_spectral_transform.8} parent=0 // loop_footer
    %s12 = sadd.s32 1, %s8
  $region7: #{mam_spectral_transform.8} parent=0 // loop_footer_branch
    %7 = sbr.rel target = $region3
  $region8: #{mam_spectral_transform.8} parent=0 // loop_exit
    _

// kernel: mam_spectral_transform.12
$region0: #{mam_spectral_transform.12}
  #allocation0 [shape = 'u32[]', space=smem, size = 0x4, offset = 0x4, fixed_abs, tag = 'smem constant byte address 0x4 - core index']
  #allocation1 [shape = 'u32[144,128]{1,0:T(1,128)}', space=vmem, size = 0x12000, scoped, tag = 'internal scratch']
  %s0 = inlined_call_operand.vmem [shape: f32[2,4,8,8], index: 0, kind: input, shape index: {}]
  %s1 = inlined_call_operand.vmem [shape: bf16[8,8], index: 1, kind: input, shape index: {}]
  %s2 = inlined_call_operand.vmem [shape: bf16[8,8], index: 2, kind: input, shape index: {}]
  %s3 = inlined_call_operand.vmem [shape: bf16[16,8], index: 3, kind: input, shape index: {}]
  %s4 = inlined_call_operand.vmem [shape: bf16[16,8], index: 4, kind: input, shape index: {}]
  %s5 = inlined_call_operand.vmem [shape: bf16[2,4,8,8], index: 5, kind: output, shape index: {0}]
  %s6 = inlined_call_operand.vmem [shape: bf16[2,4,8,8], index: 6, kind: output, shape index: {1}]
  %7 = xla_tuple %s5, %s6
  %s8 = sld [smem:[#allocation0]]
  $region61: #{mam_spectral_transform.12} parent=0
    _
  %s10 = ssub.s32 1, %s8
  %s11 = scalar_select 0, %s10, %s8
  loop: start=0, step=1, limit=4
  $region2: #{mam_spectral_transform.12} parent=0 // loop_pre_header
    _
  $region3: #{mam_spectral_transform.12} parent=0 // loop_header
    %s13 = sphi 0, %s17
    %p14 = scmp.ge.s32.totalorder %s13, 4
    %s20 = sphi 0, %s32
    %s21 = sphi 0, %s28
    %s22 = sphi 0, %s20
    %s23 = sphi 0, %s21
    %s24 = sphi 0, %s22
    %s25 = sphi 0, %s23
    %s37 = sphi 0, %s39
    %s40 = sphi 0, %s37
    %s41 = sphi 0, %s40
    %s57 = sphi 0, %s41
    %s61 = sphi 0, %s61
    %s63 = sphi 0, %s61
    %s64 = sphi 0, %s63
    %s78 = sphi 0, %s64
    %s82 = sphi 0, %s82
    %s84 = sphi 0, %s82
    %s85 = sphi 0, %s84
    %s99 = sphi 0, %s85
    %s103 = sphi 0, %s103
    %s105 = sphi 0, %s103
    %s106 = sphi 0, %s105
    %s120 = sphi 0, %s106
    %s124 = sphi 0, %s124
    %s126 = sphi 0, %s124
    %s127 = sphi 0, %s126
    %s141 = sphi 0, %s127
    %s149 = sphi 0, %s151
    %s152 = sphi 0, %s149
    %s153 = sphi 0, %s152
    %s169 = sphi 0, %s153
    %s177 = sphi 0, %s179
    %s180 = sphi 0, %s177
    %s181 = sphi 0, %s180
    %s197 = sphi 0, %s181
  $region4: #{mam_spectral_transform.12} parent=0 // loop_header_branch
    %16 = sbr.rel (%p14) target = $region8
  $region5: #{mam_spectral_transform.12} parent=0 // loop_body
    %s18 = ssub.s32 %s13, 1
    %s19 = ssub.s32 %s13, 2
    %s26 = sadd.s32 1, %s21
    %p27 = scmp.ge.s32.totalorder %s26, 1
    %s28 = scalar_select %p27, 0, %s26
    %s29 = sadd.s32 1, %s20
    %s30 = scalar_select %p27, %s29, %s20
    %p31 = scmp.ge.s32.totalorder %s30, 2
    %s32 = scalar_select %p31, 0, %s30
    %s33 = ssub.s32 %s20, %s32
    %s34 = ssub.s32 %s21, %s28
    %s35 = sor.u32 %s33, %s34
    %p36 = scmp.eq.s32.totalorder %s35, 0
    %s38 = sadd.s32 %s37, 1
    %s39 = scalar_select %p36, %s37, %s38
    %p42 = pneg %p36
    %p43 = scmp.eq.s32.totalorder %s13, 1
    %p44 = por %p42, %p43
    %p45 = scmp.ne.s32.totalorder %s37, %s40
    %p46 = scmp.eq.s32.totalorder %s13, 0
    %p47 = por %p45, %p46
    %p48 = scmp.ne.s32.totalorder %s37, %s40
    %p49 = scmp.eq.s32.totalorder %s18, 1
    %p50 = por %p48, %p49
    %p51 = scmp.ne.s32.totalorder %s40, %s41
    %p52 = scmp.eq.s32.totalorder %s18, 0
    %p53 = por %p51, %p52
    %p54 = scmp.ne.s32.totalorder %s40, %s41
    %p55 = scmp.eq.s32.totalorder %s19, 1
    %p56 = por %p54, %p55
    %p58 = scmp.ne.s32.totalorder %s41, %s57
    %p59 = scmp.eq.s32.totalorder %s19, 0
    %p60 = por %p58, %p59
    %s62 = sadd.s32 %s61, 1
    %p65 = scmp.eq.s32.totalorder %s13, 1
    %p66 = scmp.ne.s32.totalorder %s61, %s63
    %p67 = scmp.eq.s32.totalorder %s13, 0
    %p68 = por %p66, %p67
    %p69 = scmp.ne.s32.totalorder %s61, %s63
    %p70 = scmp.eq.s32.totalorder %s18, 1
    %p71 = por %p69, %p70
    %p72 = scmp.ne.s32.totalorder %s63, %s64
    %p73 = scmp.eq.s32.totalorder %s18, 0
    %p74 = por %p72, %p73
    %p75 = scmp.ne.s32.totalorder %s63, %s64
    %p76 = scmp.eq.s32.totalorder %s19, 1
    %p77 = por %p75, %p76
    %p79 = scmp.ne.s32.totalorder %s64, %s78
    %p80 = scmp.eq.s32.totalorder %s19, 0
    %p81 = por %p79, %p80
    %s83 = sadd.s32 %s82, 1
    %p86 = scmp.eq.s32.totalorder %s13, 1
    %p87 = scmp.ne.s32.totalorder %s82, %s84
    %p88 = scmp.eq.s32.totalorder %s13, 0
    %p89 = por %p87, %p88
    %p90 = scmp.ne.s32.totalorder %s82, %s84
    %p91 = scmp.eq.s32.totalorder %s18, 1
    %p92 = por %p90, %p91
    %p93 = scmp.ne.s32.totalorder %s84, %s85
    %p94 = scmp.eq.s32.totalorder %s18, 0
    %p95 = por %p93, %p94
    %p96 = scmp.ne.s32.totalorder %s84, %s85
    %p97 = scmp.eq.s32.totalorder %s19, 1
    %p98 = por %p96, %p97
    %p100 = scmp.ne.s32.totalorder %s85, %s99
    %p101 = scmp.eq.s32.totalorder %s19, 0
    %p102 = por %p100, %p101
    %s104 = sadd.s32 %s103, 1
    %p107 = scmp.eq.s32.totalorder %s13, 1
    %p108 = scmp.ne.s32.totalorder %s103, %s105
    %p109 = scmp.eq.s32.totalorder %s13, 0
    %p110 = por %p108, %p109
    %p111 = scmp.ne.s32.totalorder %s103, %s105
    %p112 = scmp.eq.s32.totalorder %s18, 1
    %p113 = por %p111, %p112
    %p114 = scmp.ne.s32.totalorder %s105, %s106
    %p115 = scmp.eq.s32.totalorder %s18, 0
    %p116 = por %p114, %p115
    %p117 = scmp.ne.s32.totalorder %s105, %s106
    %p118 = scmp.eq.s32.totalorder %s19, 1
    %p119 = por %p117, %p118
    %p121 = scmp.ne.s32.totalorder %s106, %s120
    %p122 = scmp.eq.s32.totalorder %s19, 0
    %p123 = por %p121, %p122
    %s125 = sadd.s32 %s124, 1
    %p128 = scmp.eq.s32.totalorder %s13, 1
    %p129 = scmp.ne.s32.totalorder %s124, %s126
    %p130 = scmp.eq.s32.totalorder %s13, 0
    %p131 = por %p129, %p130
    %p132 = scmp.ne.s32.totalorder %s124, %s126
    %p133 = scmp.eq.s32.totalorder %s18, 1
    %p134 = por %p132, %p133
    %p135 = scmp.ne.s32.totalorder %s126, %s127
    %p136 = scmp.eq.s32.totalorder %s18, 0
    %p137 = por %p135, %p136
    %p138 = scmp.ne.s32.totalorder %s126, %s127
    %p139 = scmp.eq.s32.totalorder %s19, 1
    %p140 = por %p138, %p139
    %p142 = scmp.ne.s32.totalorder %s127, %s141
    %p143 = scmp.eq.s32.totalorder %s19, 0
    %p144 = por %p142, %p143
    %s145 = ssub.s32 %s20, %s32
    %s146 = ssub.s32 %s21, %s28
    %s147 = sor.u32 %s145, %s146
    %p148 = scmp.eq.s32.totalorder %s147, 0
    %s150 = sadd.s32 %s149, 1
    %s151 = scalar_select %p148, %s149, %s150
    %p154 = pneg %p148
    %p155 = scmp.eq.s32.totalorder %s13, 1
    %p156 = por %p154, %p155
    %p157 = scmp.ne.s32.totalorder %s149, %s152
    %p158 = scmp.eq.s32.totalorder %s13, 0
    %p159 = por %p157, %p158
    %p160 = scmp.ne.s32.totalorder %s149, %s152
    %p161 = scmp.eq.s32.totalorder %s18, 1
    %p162 = por %p160, %p161
    %p163 = scmp.ne.s32.totalorder %s152, %s153
    %p164 = scmp.eq.s32.totalorder %s18, 0
    %p165 = por %p163, %p164
    %p166 = scmp.ne.s32.totalorder %s152, %s153
    %p167 = scmp.eq.s32.totalorder %s19, 1
    %p168 = por %p166, %p167
    %p170 = scmp.ne.s32.totalorder %s153, %s169
    %p171 = scmp.eq.s32.totalorder %s19, 0
    %p172 = por %p170, %p171
    %s173 = ssub.s32 %s20, %s32
    %s174 = ssub.s32 %s21, %s28
    %s175 = sor.u32 %s173, %s174
    %p176 = scmp.eq.s32.totalorder %s175, 0
    %s178 = sadd.s32 %s177, 1
    %s179 = scalar_select %p176, %s177, %s178
    %p182 = pneg %p176
    %p183 = scmp.eq.s32.totalorder %s13, 1
    %p184 = por %p182, %p183
    %p185 = scmp.ne.s32.totalorder %s177, %s180
    %p186 = scmp.eq.s32.totalorder %s13, 0
    %p187 = por %p185, %p186
    %p188 = scmp.ne.s32.totalorder %s177, %s180
    %p189 = scmp.eq.s32.totalorder %s18, 1
    %p190 = por %p188, %p189
    %p191 = scmp.ne.s32.totalorder %s180, %s181
    %p192 = scmp.eq.s32.totalorder %s18, 0
    %p193 = por %p191, %p192
    %p194 = scmp.ne.s32.totalorder %s180, %s181
    %p195 = scmp.eq.s32.totalorder %s19, 1
    %p196 = por %p194, %p195
    %p198 = scmp.ne.s32.totalorder %s181, %s197
    %p199 = scmp.eq.s32.totalorder %s19, 0
    %p200 = por %p198, %p199
    %p201 = scmp.le.s32.totalorder 1, %s13
    %p202 = scmp.lt.s32.totalorder %s13, 3
    %p203 = pnand %p201, %p202
    %p204 = pneg %p203
    // Predicated region
    $region9: #{mam_spectral_transform.12} parent=5 // pred_check
      _
    $region10: #{mam_spectral_transform.12} parent=5 // pred_check_branch
      %206 = sbr.rel (%p203) target = $region12
    $region11: #{mam_spectral_transform.12} parent=5 // pred_region
      %s207 = ssub.s32 %s13, 1
      // Predicated region
      $region13: #{mam_spectral_transform.12} parent=11 // pred_check
        %p208 = pneg %p74
      $region14: #{mam_spectral_transform.12} parent=11 // pred_check_branch
        %210 = sbr.rel (%p208) target = $region16
      $region15: #{mam_spectral_transform.12} parent=11 // pred_region
        _
      $region16: #{mam_spectral_transform.12} parent=11 // pred_fallthru
        _
      // Predicated region
      $region17: #{mam_spectral_transform.12} parent=11 // pred_check
        %p211 = pneg %p95
      $region18: #{mam_spectral_transform.12} parent=11 // pred_check_branch
        %213 = sbr.rel (%p211) target = $region20
      $region19: #{mam_spectral_transform.12} parent=11 // pred_region
        _
      $region20: #{mam_spectral_transform.12} parent=11 // pred_fallthru
        _
      // Predicated region
      $region21: #{mam_spectral_transform.12} parent=11 // pred_check
        %p214 = pneg %p116
      $region22: #{mam_spectral_transform.12} parent=11 // pred_check_branch
        %216 = sbr.rel (%p214) target = $region24
      $region23: #{mam_spectral_transform.12} parent=11 // pred_region
        _
      $region24: #{mam_spectral_transform.12} parent=11 // pred_fallthru
        _
      // Predicated region
      $region25: #{mam_spectral_transform.12} parent=11 // pred_check
        %p217 = pneg %p137
      $region26: #{mam_spectral_transform.12} parent=11 // pred_check_branch
        %219 = sbr.rel (%p217) target = $region28
      $region27: #{mam_spectral_transform.12} parent=11 // pred_region
        _
      $region28: #{mam_spectral_transform.12} parent=11 // pred_fallthru
        _
    $region12: #{mam_spectral_transform.12} parent=5 // pred_fallthru
      _
    %p220 = scmp.lt.s32.totalorder %s13, 2
    // Predicated region
    $region29: #{mam_spectral_transform.12} parent=5 // pred_check
      %p221 = pneg %p220
    $region30: #{mam_spectral_transform.12} parent=5 // pred_check_branch
      %223 = sbr.rel (%p221) target = $region32
    $region31: #{mam_spectral_transform.12} parent=5 // pred_region
      // Predicated region
      $region33: #{mam_spectral_transform.12} parent=31 // pred_check
        %p224 = pneg %p47
      $region34: #{mam_spectral_transform.12} parent=31 // pred_check_branch
        %226 = sbr.rel (%p224) target = $region36
      $region35: #{mam_spectral_transform.12} parent=31 // pred_region
        %s227 = smul.u32 4, %s21
        %p228 = scmp.lt.s32.totalorder %s20, 1
        %s229 = scalar_select %p228, %s20, 1
        %p230 = scmp.lt.s32.totalorder %s227, 3
        %s231 = scalar_select %p230, %s227, 3
        %s232 = smul.addr %s229, 4
        %s233 = sadd.s32 %s231, %s232
        %s234 = smul.addr %s233, 8
        %s235 = scalar_lea.vmem %s0, %s234
        %s236 = smul.u32 4, %s21
      $region36: #{mam_spectral_transform.12} parent=31 // pred_fallthru
        _
    $region32: #{mam_spectral_transform.12} parent=5 // pred_fallthru
      _
    %p237 = scmp.le.s32.totalorder 1, %s13
    %p238 = scmp.lt.s32.totalorder %s13, 3
    %p239 = pnand %p237, %p238
    %p240 = pneg %p239
    // Predicated region
    $region37: #{mam_spectral_transform.12} parent=5 // pred_check
      _
    $region38: #{mam_spectral_transform.12} parent=5 // pred_check_branch
      %242 = sbr.rel (%p239) target = $region40
    $region39: #{mam_spectral_transform.12} parent=5 // pred_region
      %s243 = ssub.s32 %s13, 1
      %s244 = smul.u32 4, %s23
      %p245 = scmp.lt.s32.totalorder %s22, 1
      %s246 = scalar_select %p245, %s22, 1
      %p247 = scmp.lt.s32.totalorder %s244, 3
      %s248 = scalar_select %p247, %s244, 3
      %s249 = smul.addr %s246, 4
      %s250 = sadd.s32 %s248, %s249
      %s251 = smul.addr %s250, 8
      %s252 = scalar_lea.vmem %s0, %s251
      %p253 = pneg %p53
      %p254 = pneg %p50
      %p255 = pneg %p74
      %p256 = pneg %p71
      %p257 = pneg %p95
      %p258 = pneg %p92
      %p259 = pneg %p116
      %p260 = pneg %p113
      %p261 = pneg %p137
      %p262 = pneg %p134
      %p263 = pneg %p165
      %p264 = pneg %p162
      %s265 = smul.u32 4, %s23
      %p266 = scmp.lt.s32.totalorder %s22, 1
      %s267 = scalar_select %p266, %s22, 1
      %p268 = scmp.lt.s32.totalorder %s265, 3
      %s269 = scalar_select %p268, %s265, 3
      %s270 = smul.addr %s267, 4
      %s271 = sadd.s32 %s269, %s270
      %s272 = smul.addr %s271, 4
      %s273 = scalar_lea.vmem %s5, %s272
      %p274 = pneg %p193
      %p275 = pneg %p190
      %s276 = smul.u32 4, %s23
      %p277 = scmp.lt.s32.totalorder %s22, 1
      %s278 = scalar_select %p277, %s22, 1
      %p279 = scmp.lt.s32.totalorder %s276, 3
      %s280 = scalar_select %p279, %s276, 3
      %s281 = smul.addr %s278, 4
      %s282 = sadd.s32 %s280, %s281
      %s283 = smul.addr %s282, 4
      %s284 = scalar_lea.vmem %s6, %s283
      %s285 = smul.u32 4, %s23
      %p286 = scmp.lt.s32.totalorder %s22, 1
      %s287 = scalar_select %p286, %s22, 1
      %p288 = scmp.lt.s32.totalorder %s285, 3
      %s289 = scalar_select %p288, %s285, 3
      %s290 = smul.addr %s287, 4
      %s291 = sadd.s32 %s289, %s290
      %s292 = smul.addr %s291, 8
      %s293 = scalar_lea.vmem %s0, %s292
      %s294 = smul.u32 4, %s23
      %s295 = smul.u32 4, %s23
      %p296 = scmp.lt.s32.totalorder %s22, 1
      %s297 = scalar_select %p296, %s22, 1
      %p298 = scmp.lt.s32.totalorder %s295, 3
      %s299 = scalar_select %p298, %s295, 3
      %s300 = smul.addr %s297, 4
      %s301 = sadd.s32 %s299, %s300
      %s302 = smul.addr %s301, 4
      %s303 = scalar_lea.vmem %s5, %s302
      %s304 = smul.u32 4, %s23
      %s305 = smul.u32 4, %s23
      %p306 = scmp.lt.s32.totalorder %s22, 1
      %s307 = scalar_select %p306, %s22, 1
      %p308 = scmp.lt.s32.totalorder %s305, 3
      %s309 = scalar_select %p308, %s305, 3
      %s310 = smul.addr %s307, 4
      %s311 = sadd.s32 %s309, %s310
      %s312 = smul.addr %s311, 4
      %s313 = scalar_lea.vmem %s6, %s312
      %s314 = smul.u32 4, %s23
      %v316 = vld [vmem:[%s293] sm:$0xff]
      %v317 = vld [vmem:[%s293 + $0x8] sm:$0xff]
      %v318 = vld [vmem:[%s293 + $0x10] sm:$0xff]
      %v319 = vld [vmem:[%s293 + $0x18] sm:$0xff]
      %v320 = vpack.c.bf16 %v317, %v316
      %v321 = vpack.c.bf16 %v319, %v318
      %v322 = vld [vmem:[%s1] sm:$0xf]
      %vm323 = vcmask 64512
      %v325 = vsel %vm323, %v320, 0
      %v328 = vsel %vm323, %v321, 0
      %vm330 = vcmask 1043456
      %v332 = vsel %vm330, %v322, 0
      %334 = vmatprep.subr.bf16.mxu0 0
      %335 = vmatpush1.bf16.msra.mxu0 %v332
      %336 = vmatprep.subr.bf16.mxu0 0
      %337 = vmatpush1.bf16.msra.mxu0 0
      %338 = vmatprep.subr.bf16.mxu0 0
      %339 = vmatpush1.bf16.msra.mxu0 0
      %340 = vmatprep.subr.bf16.mxu0 0
      %341 = vmatpush1.bf16.msra.mxu0 0
      %342 = vmatprep.subr.bf16.mxu0 0
      %343 = vmatpush1.bf16.msra.mxu0 0
      %344 = vmatprep.subr.bf16.mxu0 0
      %345 = vmatpush1.bf16.msra.mxu0 0
      %346 = vmatprep.subr.bf16.mxu0 0
      %347 = vmatpush1.bf16.msra.mxu0 0
      %348 = vmatprep.subr.bf16.mxu0 0
      %349 = vmatpush1.bf16.msra.mxu0 0
      %350 = vmatprep.subr.bf16.mxu0 0
      %351 = vmatpush1.bf16.msra.mxu0 0
      %352 = vmatprep.subr.bf16.mxu0 0
      %353 = vmatpush1.bf16.msra.mxu0 0
      %354 = vmatprep.subr.bf16.mxu0 0
      %355 = vmatpush1.bf16.msra.mxu0 0
      %356 = vmatprep.subr.bf16.mxu0 0
      %357 = vmatpush1.bf16.msra.mxu0 0
      %358 = vmatprep.subr.bf16.mxu0 0
      %359 = vmatpush1.bf16.msra.mxu0 0
      %360 = vmatprep.subr.bf16.mxu0 0
      %361 = vmatpush1.bf16.msra.mxu0 0
      %362 = vmatprep.subr.bf16.mxu0 0
      %363 = vmatpush1.bf16.msra.mxu0 0
      %364 = vmatprep.subr.bf16.mxu0 0
      %365 = vmatpush1.bf16.msra.mxu0 0
      %366 = vmatprep.mubr.bf16.mxu0 0
      %367 = vmatmul.mubr.bf16.gmra.mrb[0].mxu0 %v325
      %v368 = vpop.f32.mrb[0].mxu0
      %v369 = vadd.f32 0.0, %v368
      %v370 = vpop.f32.mrb[0].mxu0
      %v371 = vpop.f32.mrb[0].mxu0
      %v372 = vadd.f32 0.0, %v371
      %v373 = vpop.f32.mrb[0].mxu0
      %374 = vmatprep.mubr.bf16.mxu0 0
      %375 = vmatmul.mubr.bf16.gmra.mrb[0].mxu0 %v328
      %v376 = vpop.f32.mrb[0].mxu0
      %v377 = vadd.f32 0.0, %v376
      %v378 = vpop.f32.mrb[0].mxu0
      %v379 = vpop.f32.mrb[0].mxu0
      %v380 = vadd.f32 0.0, %v379
      %v381 = vpop.f32.mrb[0].mxu0
      %382 = vdwg.mxu0
      %v383 = vld [vmem:[%s2] sm:$0xf]
      %v385 = vsel %vm330, %v383, 0
      %387 = vmatprep.subr.bf16.mxu0 0
      %388 = vmatpush1.bf16.msra.mxu0 %v385
      %389 = vmatprep.subr.bf16.mxu0 0
      %390 = vmatpush1.bf16.msra.mxu0 0
      %391 = vmatprep.subr.bf16.mxu0 0
      %392 = vmatpush1.bf16.msra.mxu0 0
      %393 = vmatprep.subr.bf16.mxu0 0
      %394 = vmatpush1.bf16.msra.mxu0 0
      %395 = vmatprep.subr.bf16.mxu0 0
      %396 = vmatpush1.bf16.msra.mxu0 0
      %397 = vmatprep.subr.bf16.mxu0 0
      %398 = vmatpush1.bf16.msra.mxu0 0
      %399 = vmatprep.subr.bf16.mxu0 0
      %400 = vmatpush1.bf16.msra.mxu0 0
      %401 = vmatprep.subr.bf16.mxu0 0
      %402 = vmatpush1.bf16.msra.mxu0 0
      %403 = vmatprep.subr.bf16.mxu0 0
      %404 = vmatpush1.bf16.msra.mxu0 0
      %405 = vmatprep.subr.bf16.mxu0 0
      %406 = vmatpush1.bf16.msra.mxu0 0
      %407 = vmatprep.subr.bf16.mxu0 0
      %408 = vmatpush1.bf16.msra.mxu0 0
      %409 = vmatprep.subr.bf16.mxu0 0
      %410 = vmatpush1.bf16.msra.mxu0 0
      %411 = vmatprep.subr.bf16.mxu0 0
      %412 = vmatpush1.bf16.msra.mxu0 0
      %413 = vmatprep.subr.bf16.mxu0 0
      %414 = vmatpush1.bf16.msra.mxu0 0
      %415 = vmatprep.subr.bf16.mxu0 0
      %416 = vmatpush1.bf16.msra.mxu0 0
      %417 = vmatprep.subr.bf16.mxu0 0
      %418 = vmatpush1.bf16.msra.mxu0 0
      %419 = vmatprep.mubr.bf16.mxu0 0
      %420 = vmatmul.mubr.bf16.gmra.mrb[0].mxu0 %v325
      %v421 = vpop.f32.mrb[0].mxu0
      %v422 = vadd.f32 0.0, %v421
      %v423 = vpop.f32.mrb[0].mxu0
      %v424 = vpop.f32.mrb[0].mxu0
      %v425 = vadd.f32 0.0, %v424
      %v426 = vpop.f32.mrb[0].mxu0
      %427 = vmatprep.mubr.bf16.mxu0 0
      %428 = vmatmul.mubr.bf16.gmra.mrb[0].mxu0 %v328
      %v429 = vpop.f32.mrb[0].mxu0
      %v430 = vadd.f32 0.0, %v429
      %v431 = vpop.f32.mrb[0].mxu0
      %v432 = vpop.f32.mrb[0].mxu0
      %v433 = vadd.f32 0.0, %v432
      %v434 = vpop.f32.mrb[0].mxu0
      %435 = vdwg.mxu0
      %436 = vxpose.xlu0.b32.start [1/16] %v369, 128
      %437 = vxpose.xlu0.b32.cont [2/16] 0.0, 128
      %438 = vxpose.xlu0.b32.cont [3/16] 0.0, 128
      %439 = vxpose.xlu0.b32.cont [4/16] 0.0, 128
      %440 = vxpose.xlu0.b32.cont [5/16] 0.0, 128
      %441 = vxpose.xlu0.b32.cont [6/16] 0.0, 128
      %442 = vxpose.xlu0.b32.cont [7/16] 0.0, 128
      %443 = vxpose.xlu0.b32.cont [8/16] 0.0, 128
      %444 = vxpose.xlu0.b32.cont [9/16] 0.0, 128
      %445 = vxpose.xlu0.b32.cont [10/16] 0.0, 128
      %446 = vxpose.xlu0.b32.cont [11/16] 0.0, 128
      %447 = vxpose.xlu0.b32.cont [12/16] 0.0, 128
      %448 = vxpose.xlu0.b32.cont [13/16] 0.0, 128
      %449 = vxpose.xlu0.b32.cont [14/16] 0.0, 128
      %450 = vxpose.xlu0.b32.cont [15/16] 0.0, 128
      %451 = vxpose.xlu0.b32.end [16/16] 0.0, 128
      %v452 = vpop.trf.xlu0
      %v453 = vpop.trf.xlu0
      %v454 = vpop.trf.xlu0
      %v455 = vpop.trf.xlu0
      %v456 = vpop.trf.xlu0
      %v457 = vpop.trf.xlu0
      %v458 = vpop.trf.xlu0
      %v459 = vpop.trf.xlu0
      %v460 = vpop.trf.xlu0
      %v461 = vpop.trf.xlu0
      %v462 = vpop.trf.xlu0
      %v463 = vpop.trf.xlu0
      %v464 = vpop.trf.xlu0
      %v465 = vpop.trf.xlu0
      %v466 = vpop.trf.xlu0
      %v467 = vpop.trf.xlu0
      %468 = vxpose.xlu0.b32.start [1/16] %v372, 128
      %469 = vxpose.xlu0.b32.cont [2/16] 0.0, 128
      %470 = vxpose.xlu0.b32.cont [3/16] 0.0, 128
      %471 = vxpose.xlu0.b32.cont [4/16] 0.0, 128
      %472 = vxpose.xlu0.b32.cont [5/16] 0.0, 128
      %473 = vxpose.xlu0.b32.cont [6/16] 0.0, 128
      %474 = vxpose.xlu0.b32.cont [7/16] 0.0, 128
      %475 = vxpose.xlu0.b32.cont [8/16] 0.0, 128
      %476 = vxpose.xlu0.b32.cont [9/16] 0.0, 128
      %477 = vxpose.xlu0.b32.cont [10/16] 0.0, 128
      %478 = vxpose.xlu0.b32.cont [11/16] 0.0, 128
      %479 = vxpose.xlu0.b32.cont [12/16] 0.0, 128
      %480 = vxpose.xlu0.b32.cont [13/16] 0.0, 128
      %481 = vxpose.xlu0.b32.cont [14/16] 0.0, 128
      %482 = vxpose.xlu0.b32.cont [15/16] 0.0, 128
      %483 = vxpose.xlu0.b32.end [16/16] 0.0, 128
      %v484 = vpop.trf.xlu0
      %v485 = vpop.trf.xlu0
      %v486 = vpop.trf.xlu0
      %v487 = vpop.trf.xlu0
      %v488 = vpop.trf.xlu0
      %v489 = vpop.trf.xlu0
      %v490 = vpop.trf.xlu0
      %v491 = vpop.trf.xlu0
      %v492 = vpop.trf.xlu0
      %v493 = vpop.trf.xlu0
      %v494 = vpop.trf.xlu0
      %v495 = vpop.trf.xlu0
      %v496 = vpop.trf.xlu0
      %v497 = vpop.trf.xlu0
      %v498 = vpop.trf.xlu0
      %v499 = vpop.trf.xlu0
      %500 = vxpose.xlu0.b32.start [1/16] %v377, 128
      %501 = vxpose.xlu0.b32.cont [2/16] 0.0, 128
      %502 = vxpose.xlu0.b32.cont [3/16] 0.0, 128
      %503 = vxpose.xlu0.b32.cont [4/16] 0.0, 128
      %504 = vxpose.xlu0.b32.cont [5/16] 0.0, 128
      %505 = vxpose.xlu0.b32.cont [6/16] 0.0, 128
      %506 = vxpose.xlu0.b32.cont [7/16] 0.0, 128
      %507 = vxpose.xlu0.b32.cont [8/16] 0.0, 128
      %508 = vxpose.xlu0.b32.cont [9/16] 0.0, 128
      %509 = vxpose.xlu0.b32.cont [10/16] 0.0, 128
      %510 = vxpose.xlu0.b32.cont [11/16] 0.0, 128
      %511 = vxpose.xlu0.b32.cont [12/16] 0.0, 128
      %512 = vxpose.xlu0.b32.cont [13/16] 0.0, 128
      %513 = vxpose.xlu0.b32.cont [14/16] 0.0, 128
      %514 = vxpose.xlu0.b32.cont [15/16] 0.0, 128
      %515 = vxpose.xlu0.b32.end [16/16] 0.0, 128
      %v516 = vpop.trf.xlu0
      %v517 = vpop.trf.xlu0
      %v518 = vpop.trf.xlu0
      %v519 = vpop.trf.xlu0
      %v520 = vpop.trf.xlu0
      %v521 = vpop.trf.xlu0
      %v522 = vpop.trf.xlu0
      %v523 = vpop.trf.xlu0
      %v524 = vpop.trf.xlu0
      %v525 = vpop.trf.xlu0
      %v526 = vpop.trf.xlu0
      %v527 = vpop.trf.xlu0
      %v528 = vpop.trf.xlu0
      %v529 = vpop.trf.xlu0
      %v530 = vpop.trf.xlu0
      %v531 = vpop.trf.xlu0
      %532 = vxpose.xlu0.b32.start [1/16] %v380, 128
      %533 = vxpose.xlu0.b32.cont [2/16] 0.0, 128
      %534 = vxpose.xlu0.b32.cont [3/16] 0.0, 128
      %535 = vxpose.xlu0.b32.cont [4/16] 0.0, 128
      %536 = vxpose.xlu0.b32.cont [5/16] 0.0, 128
      %537 = vxpose.xlu0.b32.cont [6/16] 0.0, 128
      %538 = vxpose.xlu0.b32.cont [7/16] 0.0, 128
      %539 = vxpose.xlu0.b32.cont [8/16] 0.0, 128
      %540 = vxpose.xlu0.b32.cont [9/16] 0.0, 128
      %541 = vxpose.xlu0.b32.cont [10/16] 0.0, 128
      %542 = vxpose.xlu0.b32.cont [11/16] 0.0, 128
      %543 = vxpose.xlu0.b32.cont [12/16] 0.0, 128
      %544 = vxpose.xlu0.b32.cont [13/16] 0.0, 128
      %545 = vxpose.xlu0.b32.cont [14/16] 0.0, 128
      %546 = vxpose.xlu0.b32.cont [15/16] 0.0, 128
      %547 = vxpose.xlu0.b32.end [16/16] 0.0, 128
      %v548 = vpop.trf.xlu0
      %v549 = vpop.trf.xlu0
      %v550 = vpop.trf.xlu0
      %v551 = vpop.trf.xlu0
      %v552 = vpop.trf.xlu0
      %v553 = vpop.trf.xlu0
      %v554 = vpop.trf.xlu0
      %v555 = vpop.trf.xlu0
      %v556 = vpop.trf.xlu0
      %v557 = vpop.trf.xlu0
      %v558 = vpop.trf.xlu0
      %v559 = vpop.trf.xlu0
      %v560 = vpop.trf.xlu0
      %v561 = vpop.trf.xlu0
      %v562 = vpop.trf.xlu0
      %v563 = vpop.trf.xlu0
      %564 = vxpose.xlu0.b32.start [1/16] %v422, 128
      %565 = vxpose.xlu0.b32.cont [2/16] 0.0, 128
      %566 = vxpose.xlu0.b32.cont [3/16] 0.0, 128
      %567 = vxpose.xlu0.b32.cont [4/16] 0.0, 128
      %568 = vxpose.xlu0.b32.cont [5/16] 0.0, 128
      %569 = vxpose.xlu0.b32.cont [6/16] 0.0, 128
      %570 = vxpose.xlu0.b32.cont [7/16] 0.0, 128
      %571 = vxpose.xlu0.b32.cont [8/16] 0.0, 128
      %572 = vxpose.xlu0.b32.cont [9/16] 0.0, 128
      %573 = vxpose.xlu0.b32.cont [10/16] 0.0, 128
      %574 = vxpose.xlu0.b32.cont [11/16] 0.0, 128
      %575 = vxpose.xlu0.b32.cont [12/16] 0.0, 128
      %576 = vxpose.xlu0.b32.cont [13/16] 0.0, 128
      %577 = vxpose.xlu0.b32.cont [14/16] 0.0, 128
      %578 = vxpose.xlu0.b32.cont [15/16] 0.0, 128
      %579 = vxpose.xlu0.b32.end [16/16] 0.0, 128
      %v580 = vpop.trf.xlu0
      %v581 = vpop.trf.xlu0
      %v582 = vpop.trf.xlu0
      %v583 = vpop.trf.xlu0
      %v584 = vpop.trf.xlu0
      %v585 = vpop.trf.xlu0
      %v586 = vpop.trf.xlu0
      %v587 = vpop.trf.xlu0
      %v588 = vpop.trf.xlu0
      %v589 = vpop.trf.xlu0
      %v590 = vpop.trf.xlu0
      %v591 = vpop.trf.xlu0
      %v592 = vpop.trf.xlu0
      %v593 = vpop.trf.xlu0
      %v594 = vpop.trf.xlu0
      %v595 = vpop.trf.xlu0
      %596 = vxpose.xlu0.b32.start [1/16] %v425, 128
      %597 = vxpose.xlu0.b32.cont [2/16] 0.0, 128
      %598 = vxpose.xlu0.b32.cont [3/16] 0.0, 128
      %599 = vxpose.xlu0.b32.cont [4/16] 0.0, 128
      %600 = vxpose.xlu0.b32.cont [5/16] 0.0, 128
      %601 = vxpose.xlu0.b32.cont [6/16] 0.0, 128
      %602 = vxpose.xlu0.b32.cont [7/16] 0.0, 128
      %603 = vxpose.xlu0.b32.cont [8/16] 0.0, 128
      %604 = vxpose.xlu0.b32.cont [9/16] 0.0, 128
      %605 = vxpose.xlu0.b32.cont [10/16] 0.0, 128
      %606 = vxpose.xlu0.b32.cont [11/16] 0.0, 128
      %607 = vxpose.xlu0.b32.cont [12/16] 0.0, 128
      %608 = vxpose.xlu0.b32.cont [13/16] 0.0, 128
      %609 = vxpose.xlu0.b32.cont [14/16] 0.0, 128
      %610 = vxpose.xlu0.b32.cont [15/16] 0.0, 128
      %611 = vxpose.xlu0.b32.end [16/16] 0.0, 128
      %v612 = vpop.trf.xlu0
      %v613 = vpop.trf.xlu0
      %v614 = vpop.trf.xlu0
      %v615 = vpop.trf.xlu0
      %v616 = vpop.trf.xlu0
      %v617 = vpop.trf.xlu0
      %v618 = vpop.trf.xlu0
      %v619 = vpop.trf.xlu0
      %v620 = vpop.trf.xlu0
      %v621 = vpop.trf.xlu0
      %v622 = vpop.trf.xlu0
      %v623 = vpop.trf.xlu0
      %v624 = vpop.trf.xlu0
      %v625 = vpop.trf.xlu0
      %v626 = vpop.trf.xlu0
      %v627 = vpop.trf.xlu0
      %628 = vxpose.xlu0.b32.start [1/16] %v430, 128
      %629 = vxpose.xlu0.b32.cont [2/16] 0.0, 128
      %630 = vxpose.xlu0.b32.cont [3/16] 0.0, 128
      %631 = vxpose.xlu0.b32.cont [4/16] 0.0, 128
      %632 = vxpose.xlu0.b32.cont [5/16] 0.0, 128
      %633 = vxpose.xlu0.b32.cont [6/16] 0.0, 128
      %634 = vxpose.xlu0.b32.cont [7/16] 0.0, 128
      %635 = vxpose.xlu0.b32.cont [8/16] 0.0, 128
      %636 = vxpose.xlu0.b32.cont [9/16] 0.0, 128
      %637 = vxpose.xlu0.b32.cont [10/16] 0.0, 128
      %638 = vxpose.xlu0.b32.cont [11/16] 0.0, 128
      %639 = vxpose.xlu0.b32.cont [12/16] 0.0, 128
      %640 = vxpose.xlu0.b32.cont [13/16] 0.0, 128
      %641 = vxpose.xlu0.b32.cont [14/16] 0.0, 128
      %642 = vxpose.xlu0.b32.cont [15/16] 0.0, 128
      %643 = vxpose.xlu0.b32.end [16/16] 0.0, 128
      %v644 = vpop.trf.xlu0
      %v645 = vpop.trf.xlu0
      %v646 = vpop.trf.xlu0
      %v647 = vpop.trf.xlu0
      %v648 = vpop.trf.xlu0
      %v649 = vpop.trf.xlu0
      %v650 = vpop.trf.xlu0
      %v651 = vpop.trf.xlu0
      %v652 = vpop.trf.xlu0
      %v653 = vpop.trf.xlu0
      %v654 = vpop.trf.xlu0
      %v655 = vpop.trf.xlu0
      %v656 = vpop.trf.xlu0
      %v657 = vpop.trf.xlu0
      %v658 = vpop.trf.xlu0
      %v659 = vpop.trf.xlu0
      %660 = vxpose.xlu0.b32.start [1/16] %v433, 128
      %661 = vxpose.xlu0.b32.cont [2/16] 0.0, 128
      %662 = vxpose.xlu0.b32.cont [3/16] 0.0, 128
      %663 = vxpose.xlu0.b32.cont [4/16] 0.0, 128
      %664 = vxpose.xlu0.b32.cont [5/16] 0.0, 128
      %665 = vxpose.xlu0.b32.cont [6/16] 0.0, 128
      %666 = vxpose.xlu0.b32.cont [7/16] 0.0, 128
      %667 = vxpose.xlu0.b32.cont [8/16] 0.0, 128
      %668 = vxpose.xlu0.b32.cont [9/16] 0.0, 128
      %669 = vxpose.xlu0.b32.cont [10/16] 0.0, 128
      %670 = vxpose.xlu0.b32.cont [11/16] 0.0, 128
      %671 = vxpose.xlu0.b32.cont [12/16] 0.0, 128
      %672 = vxpose.xlu0.b32.cont [13/16] 0.0, 128
      %673 = vxpose.xlu0.b32.cont [14/16] 0.0, 128
      %674 = vxpose.xlu0.b32.cont [15/16] 0.0, 128
      %675 = vxpose.xlu0.b32.end [16/16] 0.0, 128
      %v676 = vpop.trf.xlu0
      %v677 = vpop.trf.xlu0
      %v678 = vpop.trf.xlu0
      %v679 = vpop.trf.xlu0
      %v680 = vpop.trf.xlu0
      %v681 = vpop.trf.xlu0
      %v682 = vpop.trf.xlu0
      %v683 = vpop.trf.xlu0
      %v684 = vpop.trf.xlu0
      %v685 = vpop.trf.xlu0
      %v686 = vpop.trf.xlu0
      %v687 = vpop.trf.xlu0
      %v688 = vpop.trf.xlu0
      %v689 = vpop.trf.xlu0
      %v690 = vpop.trf.xlu0
      %v691 = vpop.trf.xlu0
      %696 = vrot.lane.b32.xlu0 %v580, 8
      %v697 = vpop.permute.xlu0 %696
      %698 = vrot.lane.b32.xlu0 %v612, 8
      %v699 = vpop.permute.xlu0 %698
      %700 = vrot.lane.b32.xlu0 %v644, 8
      %v701 = vpop.permute.xlu0 %700
      %702 = vrot.lane.b32.xlu0 %v676, 8
      %v703 = vpop.permute.xlu0 %702
      %v708 = vsel %vm323, %v452, %v697
      %v709 = vsel %vm323, %v484, %v699
      %v710 = vsel %vm323, %v516, %v701
      %v711 = vsel %vm323, %v548, %v703
      %v712 = vpack.c.bf16 %v709, %v708
      %v713 = vpack.c.bf16 %v711, %v710
      %v714 = vld [vmem:[%s3] sm:$0xf]
      %v715 = vld [vmem:[%s3 + $0x4] sm:$0xf]
      %v718 = vunpack.c.l.b16 %v714
      %v719 = vunpack.c.l.b16 %v715
      %v720 = vpack.c.b16 %v719, %v718
      %vm722 = vcmask 130048
      %v724 = vsel %vm722, %v712, 0
      %v727 = vsel %vm722, %v713, 0
      %729 = vmatprep.subr.bf16.mxu0 0
      %730 = vmatpush1.bf16.msra.mxu0 %v720
      %731 = vmatprep.subr.bf16.mxu0 0
      %732 = vmatpush1.bf16.msra.mxu0 0
      %733 = vmatprep.subr.bf16.mxu0 0
      %734 = vmatpush1.bf16.msra.mxu0 0
      %735 = vmatprep.subr.bf16.mxu0 0
      %736 = vmatpush1.bf16.msra.mxu0 0
      %737 = vmatprep.subr.bf16.mxu0 0
      %738 = vmatpush1.bf16.msra.mxu0 0
      %739 = vmatprep.subr.bf16.mxu0 0
      %740 = vmatpush1.bf16.msra.mxu0 0
      %741 = vmatprep.subr.bf16.mxu0 0
      %742 = vmatpush1.bf16.msra.mxu0 0
      %743 = vmatprep.subr.bf16.mxu0 0
      %744 = vmatpush1.bf16.msra.mxu0 0
      %745 = vmatprep.subr.bf16.mxu0 0
      %746 = vmatpush1.bf16.msra.mxu0 0
      %747 = vmatprep.subr.bf16.mxu0 0
      %748 = vmatpush1.bf16.msra.mxu0 0
      %749 = vmatprep.subr.bf16.mxu0 0
      %750 = vmatpush1.bf16.msra.mxu0 0
      %751 = vmatprep.subr.bf16.mxu0 0
      %752 = vmatpush1.bf16.msra.mxu0 0
      %753 = vmatprep.subr.bf16.mxu0 0
      %754 = vmatpush1.bf16.msra.mxu0 0
      %755 = vmatprep.subr.bf16.mxu0 0
      %756 = vmatpush1.bf16.msra.mxu0 0
      %757 = vmatprep.subr.bf16.mxu0 0
      %758 = vmatpush1.bf16.msra.mxu0 0
      %759 = vmatprep.subr.bf16.mxu0 0
      %760 = vmatpush1.bf16.msra.mxu0 0
      %761 = vmatprep.mubr.bf16.mxu0 0
      %762 = vmatmul.mubr.bf16.gmra.mrb[0].mxu0 %v724
      %v763 = vpop.f32.mrb[0].mxu0
      %v764 = vadd.f32 0.0, %v763
      %v765 = vpop.f32.mrb[0].mxu0
      %v766 = vpop.f32.mrb[0].mxu0
      %v767 = vadd.f32 0.0, %v766
      %v768 = vpop.f32.mrb[0].mxu0
      %769 = vmatprep.mubr.bf16.mxu0 0
      %770 = vmatmul.mubr.bf16.gmra.mrb[0].mxu0 %v727
      %v771 = vpop.f32.mrb[0].mxu0
      %v772 = vadd.f32 0.0, %v771
      %v773 = vpop.f32.mrb[0].mxu0
      %v774 = vpop.f32.mrb[0].mxu0
      %v775 = vadd.f32 0.0, %v774
      %v776 = vpop.f32.mrb[0].mxu0
      %777 = vdwg.mxu0
      %v778 = vld [vmem:[%s4] sm:$0xf]
      %v779 = vld [vmem:[%s4 + $0x4] sm:$0xf]
      %v782 = vunpack.c.l.b16 %v778
      %v783 = vunpack.c.l.b16 %v779
      %v784 = vpack.c.b16 %v783, %v782
      %786 = vmatprep.subr.bf16.mxu0 0
      %787 = vmatpush1.bf16.msra.mxu0 %v784
      %788 = vmatprep.subr.bf16.mxu0 0
      %789 = vmatpush1.bf16.msra.mxu0 0
      %790 = vmatprep.subr.bf16.mxu0 0
      %791 = vmatpush1.bf16.msra.mxu0 0
      %792 = vmatprep.subr.bf16.mxu0 0
      %793 = vmatpush1.bf16.msra.mxu0 0
      %794 = vmatprep.subr.bf16.mxu0 0
      %795 = vmatpush1.bf16.msra.mxu0 0
      %796 = vmatprep.subr.bf16.mxu0 0
      %797 = vmatpush1.bf16.msra.mxu0 0
      %798 = vmatprep.subr.bf16.mxu0 0
      %799 = vmatpush1.bf16.msra.mxu0 0
      %800 = vmatprep.subr.bf16.mxu0 0
      %801 = vmatpush1.bf16.msra.mxu0 0
      %802 = vmatprep.subr.bf16.mxu0 0
      %803 = vmatpush1.bf16.msra.mxu0 0
      %804 = vmatprep.subr.bf16.mxu0 0
      %805 = vmatpush1.bf16.msra.mxu0 0
      %806 = vmatprep.subr.bf16.mxu0 0
      %807 = vmatpush1.bf16.msra.mxu0 0
      %808 = vmatprep.subr.bf16.mxu0 0
      %809 = vmatpush1.bf16.msra.mxu0 0
      %810 = vmatprep.subr.bf16.mxu0 0
      %811 = vmatpush1.bf16.msra.mxu0 0
      %812 = vmatprep.subr.bf16.mxu0 0
      %813 = vmatpush1.bf16.msra.mxu0 0
      %814 = vmatprep.subr.bf16.mxu0 0
      %815 = vmatpush1.bf16.msra.mxu0 0
      %816 = vmatprep.subr.bf16.mxu0 0
      %817 = vmatpush1.bf16.msra.mxu0 0
      %818 = vmatprep.mubr.bf16.mxu0 0
      %819 = vmatmul.mubr.bf16.gmra.mrb[0].mxu0 %v724
      %v820 = vpop.f32.mrb[0].mxu0
      %v821 = vadd.f32 0.0, %v820
      %v822 = vpop.f32.mrb[0].mxu0
      %v823 = vpop.f32.mrb[0].mxu0
      %v824 = vadd.f32 0.0, %v823
      %v825 = vpop.f32.mrb[0].mxu0
      %826 = vmatprep.mubr.bf16.mxu0 0
      %827 = vmatmul.mubr.bf16.gmra.mrb[0].mxu0 %v727
      %v828 = vpop.f32.mrb[0].mxu0
      %v829 = vadd.f32 0.0, %v828
      %v830 = vpop.f32.mrb[0].mxu0
      %v831 = vpop.f32.mrb[0].mxu0
      %v832 = vadd.f32 0.0, %v831
      %v833 = vpop.f32.mrb[0].mxu0
      %834 = vdwg.mxu0
      %v835 = vpack.c.bf16 %v764, %v764
      %v836 = vpack.c.bf16 %v767, %v767
      %v837 = vpack.c.bf16 %v772, %v772
      %v838 = vpack.c.bf16 %v775, %v775
      %vm839 = vcmask 60416
      %840 = vst.msk [vmem:[%s303] sm:$0xf] %vm839, %v835
      %841 = vst.msk [vmem:[%s303 + $0x4] sm:$0xf] %vm839, %v836
      %842 = vst.msk [vmem:[%s303 + $0x8] sm:$0xf] %vm839, %v837
      %843 = vst.msk [vmem:[%s303 + $0xc] sm:$0xf] %vm839, %v838
      %v844 = vpack.c.bf16 %v821, %v821
      %v845 = vpack.c.bf16 %v824, %v824
      %v846 = vpack.c.bf16 %v829, %v829
      %v847 = vpack.c.bf16 %v832, %v832
      %848 = vst.msk [vmem:[%s313] sm:$0xf] %vm839, %v844
      %849 = vst.msk [vmem:[%s313 + $0x4] sm:$0xf] %vm839, %v845
      %850 = vst.msk [vmem:[%s313 + $0x8] sm:$0xf] %vm839, %v846
      %851 = vst.msk [vmem:[%s313 + $0xc] sm:$0xf] %vm839, %v847
      %s852 = smul.u32 4, %s23
      %p853 = scmp.lt.s32.totalorder %s22, 1
      %s854 = scalar_select %p853, %s22, 1
      %p855 = scmp.lt.s32.totalorder %s852, 3
      %s856 = scalar_select %p855, %s852, 3
      %s857 = smul.addr %s854, 4
      %s858 = sadd.s32 %s856, %s857
      %s859 = smul.addr %s858, 4
      %s860 = scalar_lea.vmem %s5, %s859
      %s861 = smul.u32 4, %s23
      %p862 = scmp.lt.s32.totalorder %s22, 1
      %s863 = scalar_select %p862, %s22, 1
      %p864 = scmp.lt.s32.totalorder %s861, 3
      %s865 = scalar_select %p864, %s861, 3
      %s866 = smul.addr %s863, 4
      %s867 = sadd.s32 %s865, %s866
      %s868 = smul.addr %s867, 4
      %s869 = scalar_lea.vmem %s6, %s868
      // Predicated region
      $region41: #{mam_spectral_transform.12} parent=39 // pred_check
        %p870 = pneg %p162
      $region42: #{mam_spectral_transform.12} parent=39 // pred_check_branch
        %872 = sbr.rel (%p870) target = $region44
      $region43: #{mam_spectral_transform.12} parent=39 // pred_region
        %s873 = smul.u32 4, %s23
      $region44: #{mam_spectral_transform.12} parent=39 // pred_fallthru
        _
      // Predicated region
      $region45: #{mam_spectral_transform.12} parent=39 // pred_check
        %p874 = pneg %p190
      $region46: #{mam_spectral_transform.12} parent=39 // pred_check_branch
        %876 = sbr.rel (%p874) target = $region48
      $region47: #{mam_spectral_transform.12} parent=39 // pred_region
        %s877 = smul.u32 4, %s23
      $region48: #{mam_spectral_transform.12} parent=39 // pred_fallthru
        _
    $region40: #{mam_spectral_transform.12} parent=5 // pred_fallthru
      _
    %p878 = scmp.le.s32.totalorder 2, %s13
    // Predicated region
    $region49: #{mam_spectral_transform.12} parent=5 // pred_check
      %p879 = pneg %p878
    $region50: #{mam_spectral_transform.12} parent=5 // pred_check_branch
      %881 = sbr.rel (%p879) target = $region52
    $region51: #{mam_spectral_transform.12} parent=5 // pred_region
      %s882 = ssub.s32 %s13, 2
      // Predicated region
      $region53: #{mam_spectral_transform.12} parent=51 // pred_check
        %p883 = pneg %p168
      $region54: #{mam_spectral_transform.12} parent=51 // pred_check_branch
        %885 = sbr.rel (%p883) target = $region56
      $region55: #{mam_spectral_transform.12} parent=51 // pred_region
        %s886 = smul.u32 4, %s25
        %p887 = scmp.lt.s32.totalorder %s24, 1
        %s888 = scalar_select %p887, %s24, 1
        %p889 = scmp.lt.s32.totalorder %s886, 3
        %s890 = scalar_select %p889, %s886, 3
        %s891 = smul.addr %s888, 4
        %s892 = sadd.s32 %s890, %s891
        %s893 = smul.addr %s892, 4
        %s894 = scalar_lea.vmem %s5, %s893
      $region56: #{mam_spectral_transform.12} parent=51 // pred_fallthru
        _
      // Predicated region
      $region57: #{mam_spectral_transform.12} parent=51 // pred_check
        %p895 = pneg %p196
      $region58: #{mam_spectral_transform.12} parent=51 // pred_check_branch
        %897 = sbr.rel (%p895) target = $region60
      $region59: #{mam_spectral_transform.12} parent=51 // pred_region
        %s898 = smul.u32 4, %s25
        %p899 = scmp.lt.s32.totalorder %s24, 1
        %s900 = scalar_select %p899, %s24, 1
        %p901 = scmp.lt.s32.totalorder %s898, 3
        %s902 = scalar_select %p901, %s898, 3
        %s903 = smul.addr %s900, 4
        %s904 = sadd.s32 %s902, %s903
        %s905 = smul.addr %s904, 4
        %s906 = scalar_lea.vmem %s6, %s905
      $region60: #{mam_spectral_transform.12} parent=51 // pred_fallthru
        _
    $region52: #{mam_spectral_transform.12} parent=5 // pred_fallthru
      _
  $region6: #{mam_spectral_transform.12} parent=0 // loop_footer
    %s17 = sadd.s32 1, %s13
  $region7: #{mam_spectral_transform.12} parent=0 // loop_footer_branch
    %12 = sbr.rel target = $region3
  $region8: #{mam_spectral_transform.12} parent=0 // loop_exit
    _

// kernel: mam_spectral_transform.13
$region0: #{mam_spectral_transform.13}
  #allocation0 [shape = 'u32[]', space=smem, size = 0x4, offset = 0x4, fixed_abs, tag = 'smem constant byte address 0x4 - core index']
  #allocation1 [shape = 'u32[144,128]{1,0:T(1,128)}', space=vmem, size = 0x12000, scoped, tag = 'internal scratch']
  %s0 = inlined_call_operand.vmem [shape: bf16[2,4,64], index: 0, kind: input, shape index: {}]
  %s1 = inlined_call_operand.vmem [shape: bf16[2,4,64], index: 1, kind: input, shape index: {}]
  %s2 = inlined_call_operand.vmem [shape: bf16[4,4], index: 2, kind: input, shape index: {}]
  %s3 = inlined_call_operand.vmem [shape: bf16[4,4], index: 3, kind: input, shape index: {}]
  %s4 = inlined_call_operand.vmem [shape: bf16[4,4], index: 4, kind: input, shape index: {}]
  %s5 = inlined_call_operand.vmem [shape: bf16[4,4], index: 5, kind: input, shape index: {}]
  %s6 = inlined_call_operand.vmem [shape: bf16[2,4,64], index: 6, kind: output, shape index: {0}]
  %s7 = inlined_call_operand.vmem [shape: bf16[2,4,64], index: 7, kind: output, shape index: {1}]
  %8 = xla_tuple %s6, %s7
  %s9 = sld [smem:[#allocation0]]
  $region65: #{mam_spectral_transform.13} parent=0
    _
  %s11 = ssub.s32 1, %s9
  %s12 = scalar_select 0, %s11, %s9
  loop: start=0, step=1, limit=4
  $region2: #{mam_spectral_transform.13} parent=0 // loop_pre_header
    _
  $region3: #{mam_spectral_transform.13} parent=0 // loop_header
    %s14 = sphi 0, %s18
    %p15 = scmp.ge.s32.totalorder %s14, 4
    %s21 = sphi 0, %s33
    %s22 = sphi 0, %s29
    %s23 = sphi 0, %s21
    %s24 = sphi 0, %s22
    %s25 = sphi 0, %s23
    %s26 = sphi 0, %s24
    %s38 = sphi 0, %s40
    %s41 = sphi 0, %s38
    %s42 = sphi 0, %s41
    %s58 = sphi 0, %s42
    %s66 = sphi 0, %s68
    %s69 = sphi 0, %s66
    %s70 = sphi 0, %s69
    %s86 = sphi 0, %s70
    %s90 = sphi 0, %s90
    %s92 = sphi 0, %s90
    %s93 = sphi 0, %s92
    %s107 = sphi 0, %s93
    %s111 = sphi 0, %s111
    %s113 = sphi 0, %s111
    %s114 = sphi 0, %s113
    %s128 = sphi 0, %s114
    %s132 = sphi 0, %s132
    %s134 = sphi 0, %s132
    %s135 = sphi 0, %s134
    %s149 = sphi 0, %s135
    %s153 = sphi 0, %s153
    %s155 = sphi 0, %s153
    %s156 = sphi 0, %s155
    %s170 = sphi 0, %s156
    %s178 = sphi 0, %s180
    %s181 = sphi 0, %s178
    %s182 = sphi 0, %s181
    %s198 = sphi 0, %s182
    %s206 = sphi 0, %s208
    %s209 = sphi 0, %s206
    %s210 = sphi 0, %s209
    %s226 = sphi 0, %s210
  $region4: #{mam_spectral_transform.13} parent=0 // loop_header_branch
    %17 = sbr.rel (%p15) target = $region8
  $region5: #{mam_spectral_transform.13} parent=0 // loop_body
    %s19 = ssub.s32 %s14, 1
    %s20 = ssub.s32 %s14, 2
    %s27 = sadd.s32 1, %s22
    %p28 = scmp.ge.s32.totalorder %s27, 1
    %s29 = scalar_select %p28, 0, %s27
    %s30 = sadd.s32 1, %s21
    %s31 = scalar_select %p28, %s30, %s21
    %p32 = scmp.ge.s32.totalorder %s31, 2
    %s33 = scalar_select %p32, 0, %s31
    %s34 = ssub.s32 %s21, %s33
    %s35 = ssub.s32 %s22, %s29
    %s36 = sor.u32 %s34, %s35
    %p37 = scmp.eq.s32.totalorder %s36, 0
    %s39 = sadd.s32 %s38, 1
    %s40 = scalar_select %p37, %s38, %s39
    %p43 = pneg %p37
    %p44 = scmp.eq.s32.totalorder %s14, 1
    %p45 = por %p43, %p44
    %p46 = scmp.ne.s32.totalorder %s38, %s41
    %p47 = scmp.eq.s32.totalorder %s14, 0
    %p48 = por %p46, %p47
    %p49 = scmp.ne.s32.totalorder %s38, %s41
    %p50 = scmp.eq.s32.totalorder %s19, 1
    %p51 = por %p49, %p50
    %p52 = scmp.ne.s32.totalorder %s41, %s42
    %p53 = scmp.eq.s32.totalorder %s19, 0
    %p54 = por %p52, %p53
    %p55 = scmp.ne.s32.totalorder %s41, %s42
    %p56 = scmp.eq.s32.totalorder %s20, 1
    %p57 = por %p55, %p56
    %p59 = scmp.ne.s32.totalorder %s42, %s58
    %p60 = scmp.eq.s32.totalorder %s20, 0
    %p61 = por %p59, %p60
    %s62 = ssub.s32 %s21, %s33
    %s63 = ssub.s32 %s22, %s29
    %s64 = sor.u32 %s62, %s63
    %p65 = scmp.eq.s32.totalorder %s64, 0
    %s67 = sadd.s32 %s66, 1
    %s68 = scalar_select %p65, %s66, %s67
    %p71 = pneg %p65
    %p72 = scmp.eq.s32.totalorder %s14, 1
    %p73 = por %p71, %p72
    %p74 = scmp.ne.s32.totalorder %s66, %s69
    %p75 = scmp.eq.s32.totalorder %s14, 0
    %p76 = por %p74, %p75
    %p77 = scmp.ne.s32.totalorder %s66, %s69
    %p78 = scmp.eq.s32.totalorder %s19, 1
    %p79 = por %p77, %p78
    %p80 = scmp.ne.s32.totalorder %s69, %s70
    %p81 = scmp.eq.s32.totalorder %s19, 0
    %p82 = por %p80, %p81
    %p83 = scmp.ne.s32.totalorder %s69, %s70
    %p84 = scmp.eq.s32.totalorder %s20, 1
    %p85 = por %p83, %p84
    %p87 = scmp.ne.s32.totalorder %s70, %s86
    %p88 = scmp.eq.s32.totalorder %s20, 0
    %p89 = por %p87, %p88
    %s91 = sadd.s32 %s90, 1
    %p94 = scmp.eq.s32.totalorder %s14, 1
    %p95 = scmp.ne.s32.totalorder %s90, %s92
    %p96 = scmp.eq.s32.totalorder %s14, 0
    %p97 = por %p95, %p96
    %p98 = scmp.ne.s32.totalorder %s90, %s92
    %p99 = scmp.eq.s32.totalorder %s19, 1
    %p100 = por %p98, %p99
    %p101 = scmp.ne.s32.totalorder %s92, %s93
    %p102 = scmp.eq.s32.totalorder %s19, 0
    %p103 = por %p101, %p102
    %p104 = scmp.ne.s32.totalorder %s92, %s93
    %p105 = scmp.eq.s32.totalorder %s20, 1
    %p106 = por %p104, %p105
    %p108 = scmp.ne.s32.totalorder %s93, %s107
    %p109 = scmp.eq.s32.totalorder %s20, 0
    %p110 = por %p108, %p109
    %s112 = sadd.s32 %s111, 1
    %p115 = scmp.eq.s32.totalorder %s14, 1
    %p116 = scmp.ne.s32.totalorder %s111, %s113
    %p117 = scmp.eq.s32.totalorder %s14, 0
    %p118 = por %p116, %p117
    %p119 = scmp.ne.s32.totalorder %s111, %s113
    %p120 = scmp.eq.s32.totalorder %s19, 1
    %p121 = por %p119, %p120
    %p122 = scmp.ne.s32.totalorder %s113, %s114
    %p123 = scmp.eq.s32.totalorder %s19, 0
    %p124 = por %p122, %p123
    %p125 = scmp.ne.s32.totalorder %s113, %s114
    %p126 = scmp.eq.s32.totalorder %s20, 1
    %p127 = por %p125, %p126
    %p129 = scmp.ne.s32.totalorder %s114, %s128
    %p130 = scmp.eq.s32.totalorder %s20, 0
    %p131 = por %p129, %p130
    %s133 = sadd.s32 %s132, 1
    %p136 = scmp.eq.s32.totalorder %s14, 1
    %p137 = scmp.ne.s32.totalorder %s132, %s134
    %p138 = scmp.eq.s32.totalorder %s14, 0
    %p139 = por %p137, %p138
    %p140 = scmp.ne.s32.totalorder %s132, %s134
    %p141 = scmp.eq.s32.totalorder %s19, 1
    %p142 = por %p140, %p141
    %p143 = scmp.ne.s32.totalorder %s134, %s135
    %p144 = scmp.eq.s32.totalorder %s19, 0
    %p145 = por %p143, %p144
    %p146 = scmp.ne.s32.totalorder %s134, %s135
    %p147 = scmp.eq.s32.totalorder %s20, 1
    %p148 = por %p146, %p147
    %p150 = scmp.ne.s32.totalorder %s135, %s149
    %p151 = scmp.eq.s32.totalorder %s20, 0
    %p152 = por %p150, %p151
    %s154 = sadd.s32 %s153, 1
    %p157 = scmp.eq.s32.totalorder %s14, 1
    %p158 = scmp.ne.s32.totalorder %s153, %s155
    %p159 = scmp.eq.s32.totalorder %s14, 0
    %p160 = por %p158, %p159
    %p161 = scmp.ne.s32.totalorder %s153, %s155
    %p162 = scmp.eq.s32.totalorder %s19, 1
    %p163 = por %p161, %p162
    %p164 = scmp.ne.s32.totalorder %s155, %s156
    %p165 = scmp.eq.s32.totalorder %s19, 0
    %p166 = por %p164, %p165
    %p167 = scmp.ne.s32.totalorder %s155, %s156
    %p168 = scmp.eq.s32.totalorder %s20, 1
    %p169 = por %p167, %p168
    %p171 = scmp.ne.s32.totalorder %s156, %s170
    %p172 = scmp.eq.s32.totalorder %s20, 0
    %p173 = por %p171, %p172
    %s174 = ssub.s32 %s21, %s33
    %s175 = ssub.s32 %s22, %s29
    %s176 = sor.u32 %s174, %s175
    %p177 = scmp.eq.s32.totalorder %s176, 0
    %s179 = sadd.s32 %s178, 1
    %s180 = scalar_select %p177, %s178, %s179
    %p183 = pneg %p177
    %p184 = scmp.eq.s32.totalorder %s14, 1
    %p185 = por %p183, %p184
    %p186 = scmp.ne.s32.totalorder %s178, %s181
    %p187 = scmp.eq.s32.totalorder %s14, 0
    %p188 = por %p186, %p187
    %p189 = scmp.ne.s32.totalorder %s178, %s181
    %p190 = scmp.eq.s32.totalorder %s19, 1
    %p191 = por %p189, %p190
    %p192 = scmp.ne.s32.totalorder %s181, %s182
    %p193 = scmp.eq.s32.totalorder %s19, 0
    %p194 = por %p192, %p193
    %p195 = scmp.ne.s32.totalorder %s181, %s182
    %p196 = scmp.eq.s32.totalorder %s20, 1
    %p197 = por %p195, %p196
    %p199 = scmp.ne.s32.totalorder %s182, %s198
    %p200 = scmp.eq.s32.totalorder %s20, 0
    %p201 = por %p199, %p200
    %s202 = ssub.s32 %s21, %s33
    %s203 = ssub.s32 %s22, %s29
    %s204 = sor.u32 %s202, %s203
    %p205 = scmp.eq.s32.totalorder %s204, 0
    %s207 = sadd.s32 %s206, 1
    %s208 = scalar_select %p205, %s206, %s207
    %p211 = pneg %p205
    %p212 = scmp.eq.s32.totalorder %s14, 1
    %p213 = por %p211, %p212
    %p214 = scmp.ne.s32.totalorder %s206, %s209
    %p215 = scmp.eq.s32.totalorder %s14, 0
    %p216 = por %p214, %p215
    %p217 = scmp.ne.s32.totalorder %s206, %s209
    %p218 = scmp.eq.s32.totalorder %s19, 1
    %p219 = por %p217, %p218
    %p220 = scmp.ne.s32.totalorder %s209, %s210
    %p221 = scmp.eq.s32.totalorder %s19, 0
    %p222 = por %p220, %p221
    %p223 = scmp.ne.s32.totalorder %s209, %s210
    %p224 = scmp.eq.s32.totalorder %s20, 1
    %p225 = por %p223, %p224
    %p227 = scmp.ne.s32.totalorder %s210, %s226
    %p228 = scmp.eq.s32.totalorder %s20, 0
    %p229 = por %p227, %p228
    %p230 = scmp.le.s32.totalorder 1, %s14
    %p231 = scmp.lt.s32.totalorder %s14, 3
    %p232 = pnand %p230, %p231
    %p233 = pneg %p232
    // Predicated region
    $region9: #{mam_spectral_transform.13} parent=5 // pred_check
      _
    $region10: #{mam_spectral_transform.13} parent=5 // pred_check_branch
      %235 = sbr.rel (%p232) target = $region12
    $region11: #{mam_spectral_transform.13} parent=5 // pred_region
      %s236 = ssub.s32 %s14, 1
      // Predicated region
      $region13: #{mam_spectral_transform.13} parent=11 // pred_check
        %p237 = pneg %p103
      $region14: #{mam_spectral_transform.13} parent=11 // pred_check_branch
        %239 = sbr.rel (%p237) target = $region16
      $region15: #{mam_spectral_transform.13} parent=11 // pred_region
        _
      $region16: #{mam_spectral_transform.13} parent=11 // pred_fallthru
        _
      // Predicated region
      $region17: #{mam_spectral_transform.13} parent=11 // pred_check
        %p240 = pneg %p124
      $region18: #{mam_spectral_transform.13} parent=11 // pred_check_branch
        %242 = sbr.rel (%p240) target = $region20
      $region19: #{mam_spectral_transform.13} parent=11 // pred_region
        _
      $region20: #{mam_spectral_transform.13} parent=11 // pred_fallthru
        _
      // Predicated region
      $region21: #{mam_spectral_transform.13} parent=11 // pred_check
        %p243 = pneg %p145
      $region22: #{mam_spectral_transform.13} parent=11 // pred_check_branch
        %245 = sbr.rel (%p243) target = $region24
      $region23: #{mam_spectral_transform.13} parent=11 // pred_region
        _
      $region24: #{mam_spectral_transform.13} parent=11 // pred_fallthru
        _
      // Predicated region
      $region25: #{mam_spectral_transform.13} parent=11 // pred_check
        %p246 = pneg %p166
      $region26: #{mam_spectral_transform.13} parent=11 // pred_check_branch
        %248 = sbr.rel (%p246) target = $region28
      $region27: #{mam_spectral_transform.13} parent=11 // pred_region
        _
      $region28: #{mam_spectral_transform.13} parent=11 // pred_fallthru
        _
    $region12: #{mam_spectral_transform.13} parent=5 // pred_fallthru
      _
    %p249 = scmp.lt.s32.totalorder %s14, 2
    // Predicated region
    $region29: #{mam_spectral_transform.13} parent=5 // pred_check
      %p250 = pneg %p249
    $region30: #{mam_spectral_transform.13} parent=5 // pred_check_branch
      %252 = sbr.rel (%p250) target = $region32
    $region31: #{mam_spectral_transform.13} parent=5 // pred_region
      // Predicated region
      $region33: #{mam_spectral_transform.13} parent=31 // pred_check
        %p253 = pneg %p48
      $region34: #{mam_spectral_transform.13} parent=31 // pred_check_branch
        %255 = sbr.rel (%p253) target = $region36
      $region35: #{mam_spectral_transform.13} parent=31 // pred_region
        %p256 = scmp.lt.s32.totalorder %s21, 1
        %s257 = scalar_select %p256, %s21, 1
        %p258 = scmp.lt.s32.totalorder %s22, 0
        %s259 = scalar_select %p258, %s22, 0
        %s260 = sadd.s32 %s259, %s257
        %s261 = smul.addr %s260, 2
        %s262 = scalar_lea.vmem %s0, %s261
      $region36: #{mam_spectral_transform.13} parent=31 // pred_fallthru
        _
      // Predicated region
      $region37: #{mam_spectral_transform.13} parent=31 // pred_check
        %p263 = pneg %p76
      $region38: #{mam_spectral_transform.13} parent=31 // pred_check_branch
        %265 = sbr.rel (%p263) target = $region40
      $region39: #{mam_spectral_transform.13} parent=31 // pred_region
        %p266 = scmp.lt.s32.totalorder %s21, 1
        %s267 = scalar_select %p266, %s21, 1
        %p268 = scmp.lt.s32.totalorder %s22, 0
        %s269 = scalar_select %p268, %s22, 0
        %s270 = sadd.s32 %s269, %s267
        %s271 = smul.addr %s270, 2
        %s272 = scalar_lea.vmem %s1, %s271
      $region40: #{mam_spectral_transform.13} parent=31 // pred_fallthru
        _
    $region32: #{mam_spectral_transform.13} parent=5 // pred_fallthru
      _
    %p273 = scmp.le.s32.totalorder 1, %s14
    %p274 = scmp.lt.s32.totalorder %s14, 3
    %p275 = pnand %p273, %p274
    %p276 = pneg %p275
    // Predicated region
    $region41: #{mam_spectral_transform.13} parent=5 // pred_check
      _
    $region42: #{mam_spectral_transform.13} parent=5 // pred_check_branch
      %278 = sbr.rel (%p275) target = $region44
    $region43: #{mam_spectral_transform.13} parent=5 // pred_region
      %s279 = ssub.s32 %s14, 1
      %p280 = scmp.lt.s32.totalorder %s23, 1
      %s281 = scalar_select %p280, %s23, 1
      %p282 = scmp.lt.s32.totalorder %s24, 0
      %s283 = scalar_select %p282, %s24, 0
      %s284 = sadd.s32 %s283, %s281
      %s285 = smul.addr %s284, 2
      %s286 = scalar_lea.vmem %s0, %s285
      %p287 = pneg %p54
      %p288 = pneg %p51
      %p289 = scmp.lt.s32.totalorder %s23, 1
      %s290 = scalar_select %p289, %s23, 1
      %p291 = scmp.lt.s32.totalorder %s24, 0
      %s292 = scalar_select %p291, %s24, 0
      %s293 = sadd.s32 %s292, %s290
      %s294 = smul.addr %s293, 2
      %s295 = scalar_lea.vmem %s1, %s294
      %p296 = pneg %p82
      %p297 = pneg %p79
      %p298 = pneg %p103
      %p299 = pneg %p100
      %p300 = pneg %p124
      %p301 = pneg %p121
      %p302 = pneg %p145
      %p303 = pneg %p142
      %p304 = pneg %p166
      %p305 = pneg %p163
      %p306 = pneg %p194
      %p307 = pneg %p191
      %p308 = scmp.lt.s32.totalorder %s23, 1
      %s309 = scalar_select %p308, %s23, 1
      %p310 = scmp.lt.s32.totalorder %s24, 0
      %s311 = scalar_select %p310, %s24, 0
      %s312 = sadd.s32 %s311, %s309
      %s313 = smul.addr %s312, 2
      %s314 = scalar_lea.vmem %s6, %s313
      %p315 = pneg %p222
      %p316 = pneg %p219
      %p317 = scmp.lt.s32.totalorder %s23, 1
      %s318 = scalar_select %p317, %s23, 1
      %p319 = scmp.lt.s32.totalorder %s24, 0
      %s320 = scalar_select %p319, %s24, 0
      %s321 = sadd.s32 %s320, %s318
      %s322 = smul.addr %s321, 2
      %s323 = scalar_lea.vmem %s7, %s322
      %p324 = scmp.lt.s32.totalorder %s23, 1
      %s325 = scalar_select %p324, %s23, 1
      %p326 = scmp.lt.s32.totalorder %s24, 0
      %s327 = scalar_select %p326, %s24, 0
      %s328 = sadd.s32 %s327, %s325
      %s329 = smul.addr %s328, 2
      %s330 = scalar_lea.vmem %s0, %s329
      %p331 = scmp.lt.s32.totalorder %s23, 1
      %s332 = scalar_select %p331, %s23, 1
      %p333 = scmp.lt.s32.totalorder %s24, 0
      %s334 = scalar_select %p333, %s24, 0
      %s335 = sadd.s32 %s334, %s332
      %s336 = smul.addr %s335, 2
      %s337 = scalar_lea.vmem %s1, %s336
      %p338 = scmp.lt.s32.totalorder %s23, 1
      %s339 = scalar_select %p338, %s23, 1
      %p340 = scmp.lt.s32.totalorder %s24, 0
      %s341 = scalar_select %p340, %s24, 0
      %s342 = sadd.s32 %s341, %s339
      %s343 = smul.addr %s342, 2
      %s344 = scalar_lea.vmem %s6, %s343
      %p345 = scmp.lt.s32.totalorder %s23, 1
      %s346 = scalar_select %p345, %s23, 1
      %p347 = scmp.lt.s32.totalorder %s24, 0
      %s348 = scalar_select %p347, %s24, 0
      %s349 = sadd.s32 %s348, %s346
      %s350 = smul.addr %s349, 2
      %s351 = scalar_lea.vmem %s7, %s350
      %v353 = vld [vmem:[%s330] sm:$0x3]
      %v354 = vld [vmem:[%s337] sm:$0x3]
      %v355 = vld [vmem:[%s2] sm:$0x3]
      %v356 = vld [vmem:[%s3] sm:$0x3]
      %vm357 = vcmask 31744
      %v359 = vsel %vm357, %v356, 0
      %vm361 = vcmask 1041408
      %v363 = vsel %vm361, %v354, 0
      %365 = vmatprep.subr.bf16.mxu0 0
      %366 = vmatpush1.bf16.msra.mxu0 %v363
      %367 = vmatprep.subr.bf16.mxu0 0
      %368 = vmatpush1.bf16.msra.mxu0 0
      %369 = vmatprep.subr.bf16.mxu0 0
      %370 = vmatpush1.bf16.msra.mxu0 0
      %371 = vmatprep.subr.bf16.mxu0 0
      %372 = vmatpush1.bf16.msra.mxu0 0
      %373 = vmatprep.subr.bf16.mxu0 0
      %374 = vmatpush1.bf16.msra.mxu0 0
      %375 = vmatprep.subr.bf16.mxu0 0
      %376 = vmatpush1.bf16.msra.mxu0 0
      %377 = vmatprep.subr.bf16.mxu0 0
      %378 = vmatpush1.bf16.msra.mxu0 0
      %379 = vmatprep.subr.bf16.mxu0 0
      %380 = vmatpush1.bf16.msra.mxu0 0
      %381 = vmatprep.subr.bf16.mxu0 0
      %382 = vmatpush1.bf16.msra.mxu0 0
      %383 = vmatprep.subr.bf16.mxu0 0
      %384 = vmatpush1.bf16.msra.mxu0 0
      %385 = vmatprep.subr.bf16.mxu0 0
      %386 = vmatpush1.bf16.msra.mxu0 0
      %387 = vmatprep.subr.bf16.mxu0 0
      %388 = vmatpush1.bf16.msra.mxu0 0
      %389 = vmatprep.subr.bf16.mxu0 0
      %390 = vmatpush1.bf16.msra.mxu0 0
      %391 = vmatprep.subr.bf16.mxu0 0
      %392 = vmatpush1.bf16.msra.mxu0 0
      %393 = vmatprep.subr.bf16.mxu0 0
      %394 = vmatpush1.bf16.msra.mxu0 0
      %395 = vmatprep.subr.bf16.mxu0 0
      %396 = vmatpush1.bf16.msra.mxu0 0
      %397 = vmatprep.mubr.bf16.mxu0 0
      %398 = vmatmul.mubr.bf16.gmra.mrb[0].mxu0 %v359
      %v399 = vpop.f32.mrb[0].mxu0
      %v400 = vadd.f32 0.0, %v399
      %v401 = vpop.f32.mrb[0].mxu0
      %v402 = vpop.f32.mrb[0].mxu0
      %v403 = vpop.f32.mrb[0].mxu0
      %404 = vdwg.mxu0
      %v406 = vsel %vm357, %v355, 0
      %v409 = vsel %vm361, %v353, 0
      %411 = vmatprep.subr.bf16.mxu0 0
      %412 = vmatpush1.bf16.msra.mxu0 %v409
      %413 = vmatprep.subr.bf16.mxu0 0
      %414 = vmatpush1.bf16.msra.mxu0 0
      %415 = vmatprep.subr.bf16.mxu0 0
      %416 = vmatpush1.bf16.msra.mxu0 0
      %417 = vmatprep.subr.bf16.mxu0 0
      %418 = vmatpush1.bf16.msra.mxu0 0
      %419 = vmatprep.subr.bf16.mxu0 0
      %420 = vmatpush1.bf16.msra.mxu0 0
      %421 = vmatprep.subr.bf16.mxu0 0
      %422 = vmatpush1.bf16.msra.mxu0 0
      %423 = vmatprep.subr.bf16.mxu0 0
      %424 = vmatpush1.bf16.msra.mxu0 0
      %425 = vmatprep.subr.bf16.mxu0 0
      %426 = vmatpush1.bf16.msra.mxu0 0
      %427 = vmatprep.subr.bf16.mxu0 0
      %428 = vmatpush1.bf16.msra.mxu0 0
      %429 = vmatprep.subr.bf16.mxu0 0
      %430 = vmatpush1.bf16.msra.mxu0 0
      %431 = vmatprep.subr.bf16.mxu0 0
      %432 = vmatpush1.bf16.msra.mxu0 0
      %433 = vmatprep.subr.bf16.mxu0 0
      %434 = vmatpush1.bf16.msra.mxu0 0
      %435 = vmatprep.subr.bf16.mxu0 0
      %436 = vmatpush1.bf16.msra.mxu0 0
      %437 = vmatprep.subr.bf16.mxu0 0
      %438 = vmatpush1.bf16.msra.mxu0 0
      %439 = vmatprep.subr.bf16.mxu0 0
      %440 = vmatpush1.bf16.msra.mxu0 0
      %441 = vmatprep.subr.bf16.mxu0 0
      %442 = vmatpush1.bf16.msra.mxu0 0
      %443 = vmatprep.mubr.bf16.mxu0 0
      %444 = vmatmul.mubr.bf16.gmra.mrb[0].mxu0 %v406
      %v445 = vpop.f32.mrb[0].mxu0
      %v446 = vadd.f32 %v400, %v445
      %v447 = vpop.f32.mrb[0].mxu0
      %v448 = vpop.f32.mrb[0].mxu0
      %v449 = vpop.f32.mrb[0].mxu0
      %450 = vdwg.mxu0
      %v451 = vld [vmem:[%s4] sm:$0x3]
      %v452 = vld [vmem:[%s5] sm:$0x3]
      %v454 = vsel %vm357, %v452, 0
      %456 = vmatprep.subr.bf16.mxu0 0
      %457 = vmatpush1.bf16.msra.mxu0 %v363
      %458 = vmatprep.subr.bf16.mxu0 0
      %459 = vmatpush1.bf16.msra.mxu0 0
      %460 = vmatprep.subr.bf16.mxu0 0
      %461 = vmatpush1.bf16.msra.mxu0 0
      %462 = vmatprep.subr.bf16.mxu0 0
      %463 = vmatpush1.bf16.msra.mxu0 0
      %464 = vmatprep.subr.bf16.mxu0 0
      %465 = vmatpush1.bf16.msra.mxu0 0
      %466 = vmatprep.subr.bf16.mxu0 0
      %467 = vmatpush1.bf16.msra.mxu0 0
      %468 = vmatprep.subr.bf16.mxu0 0
      %469 = vmatpush1.bf16.msra.mxu0 0
      %470 = vmatprep.subr.bf16.mxu0 0
      %471 = vmatpush1.bf16.msra.mxu0 0
      %472 = vmatprep.subr.bf16.mxu0 0
      %473 = vmatpush1.bf16.msra.mxu0 0
      %474 = vmatprep.subr.bf16.mxu0 0
      %475 = vmatpush1.bf16.msra.mxu0 0
      %476 = vmatprep.subr.bf16.mxu0 0
      %477 = vmatpush1.bf16.msra.mxu0 0
      %478 = vmatprep.subr.bf16.mxu0 0
      %479 = vmatpush1.bf16.msra.mxu0 0
      %480 = vmatprep.subr.bf16.mxu0 0
      %481 = vmatpush1.bf16.msra.mxu0 0
      %482 = vmatprep.subr.bf16.mxu0 0
      %483 = vmatpush1.bf16.msra.mxu0 0
      %484 = vmatprep.subr.bf16.mxu0 0
      %485 = vmatpush1.bf16.msra.mxu0 0
      %486 = vmatprep.subr.bf16.mxu0 0
      %487 = vmatpush1.bf16.msra.mxu0 0
      %488 = vmatprep.mubr.bf16.mxu0 0
      %489 = vmatmul.mubr.bf16.gmra.mrb[0].mxu0 %v454
      %v490 = vpop.f32.mrb[0].mxu0
      %v491 = vadd.f32 0.0, %v490
      %v492 = vpop.f32.mrb[0].mxu0
      %v493 = vpop.f32.mrb[0].mxu0
      %v494 = vpop.f32.mrb[0].mxu0
      %495 = vdwg.mxu0
      %v497 = vsel %vm357, %v451, 0
      %499 = vmatprep.subr.bf16.mxu0 0
      %500 = vmatpush1.bf16.msra.mxu0 %v409
      %501 = vmatprep.subr.bf16.mxu0 0
      %502 = vmatpush1.bf16.msra.mxu0 0
      %503 = vmatprep.subr.bf16.mxu0 0
      %504 = vmatpush1.bf16.msra.mxu0 0
      %505 = vmatprep.subr.bf16.mxu0 0
      %506 = vmatpush1.bf16.msra.mxu0 0
      %507 = vmatprep.subr.bf16.mxu0 0
      %508 = vmatpush1.bf16.msra.mxu0 0
      %509 = vmatprep.subr.bf16.mxu0 0
      %510 = vmatpush1.bf16.msra.mxu0 0
      %511 = vmatprep.subr.bf16.mxu0 0
      %512 = vmatpush1.bf16.msra.mxu0 0
      %513 = vmatprep.subr.bf16.mxu0 0
      %514 = vmatpush1.bf16.msra.mxu0 0
      %515 = vmatprep.subr.bf16.mxu0 0
      %516 = vmatpush1.bf16.msra.mxu0 0
      %517 = vmatprep.subr.bf16.mxu0 0
      %518 = vmatpush1.bf16.msra.mxu0 0
      %519 = vmatprep.subr.bf16.mxu0 0
      %520 = vmatpush1.bf16.msra.mxu0 0
      %521 = vmatprep.subr.bf16.mxu0 0
      %522 = vmatpush1.bf16.msra.mxu0 0
      %523 = vmatprep.subr.bf16.mxu0 0
      %524 = vmatpush1.bf16.msra.mxu0 0
      %525 = vmatprep.subr.bf16.mxu0 0
      %526 = vmatpush1.bf16.msra.mxu0 0
      %527 = vmatprep.subr.bf16.mxu0 0
      %528 = vmatpush1.bf16.msra.mxu0 0
      %529 = vmatprep.subr.bf16.mxu0 0
      %530 = vmatpush1.bf16.msra.mxu0 0
      %531 = vmatprep.mubr.bf16.mxu0 0
      %532 = vmatmul.mubr.bf16.gmra.mrb[0].mxu0 %v497
      %v533 = vpop.f32.mrb[0].mxu0
      %v534 = vadd.f32 %v491, %v533
      %v535 = vpop.f32.mrb[0].mxu0
      %v536 = vpop.f32.mrb[0].mxu0
      %v537 = vpop.f32.mrb[0].mxu0
      %538 = vdwg.mxu0
      %v539 = vmax.f32 %v446, 0.0
      %v540 = vpack.c.bf16 %v539, %v539
      %vm541 = vcmask 517120
      %542 = vst.msk [vmem:[%s344] sm:$0x3] %vm541, %v540
      %v543 = vmax.f32 %v534, 0.0
      %v544 = vpack.c.bf16 %v543, %v543
      %545 = vst.msk [vmem:[%s351] sm:$0x3] %vm541, %v544
      %p546 = scmp.lt.s32.totalorder %s23, 1
      %s547 = scalar_select %p546, %s23, 1
      %p548 = scmp.lt.s32.totalorder %s24, 0
      %s549 = scalar_select %p548, %s24, 0
      %s550 = sadd.s32 %s549, %s547
      %s551 = smul.addr %s550, 2
      %s552 = scalar_lea.vmem %s6, %s551
      %p553 = scmp.lt.s32.totalorder %s23, 1
      %s554 = scalar_select %p553, %s23, 1
      %p555 = scmp.lt.s32.totalorder %s24, 0
      %s556 = scalar_select %p555, %s24, 0
      %s557 = sadd.s32 %s556, %s554
      %s558 = smul.addr %s557, 2
      %s559 = scalar_lea.vmem %s7, %s558
      // Predicated region
      $region45: #{mam_spectral_transform.13} parent=43 // pred_check
        %p560 = pneg %p191
      $region46: #{mam_spectral_transform.13} parent=43 // pred_check_branch
        %562 = sbr.rel (%p560) target = $region48
      $region47: #{mam_spectral_transform.13} parent=43 // pred_region
        _
      $region48: #{mam_spectral_transform.13} parent=43 // pred_fallthru
        _
      // Predicated region
      $region49: #{mam_spectral_transform.13} parent=43 // pred_check
        %p563 = pneg %p219
      $region50: #{mam_spectral_transform.13} parent=43 // pred_check_branch
        %565 = sbr.rel (%p563) target = $region52
      $region51: #{mam_spectral_transform.13} parent=43 // pred_region
        _
      $region52: #{mam_spectral_transform.13} parent=43 // pred_fallthru
        _
    $region44: #{mam_spectral_transform.13} parent=5 // pred_fallthru
      _
    %p566 = scmp.le.s32.totalorder 2, %s14
    // Predicated region
    $region53: #{mam_spectral_transform.13} parent=5 // pred_check
      %p567 = pneg %p566
    $region54: #{mam_spectral_transform.13} parent=5 // pred_check_branch
      %569 = sbr.rel (%p567) target = $region56
    $region55: #{mam_spectral_transform.13} parent=5 // pred_region
      %s570 = ssub.s32 %s14, 2
      // Predicated region
      $region57: #{mam_spectral_transform.13} parent=55 // pred_check
        %p571 = pneg %p197
      $region58: #{mam_spectral_transform.13} parent=55 // pred_check_branch
        %573 = sbr.rel (%p571) target = $region60
      $region59: #{mam_spectral_transform.13} parent=55 // pred_region
        %p574 = scmp.lt.s32.totalorder %s25, 1
        %s575 = scalar_select %p574, %s25, 1
        %p576 = scmp.lt.s32.totalorder %s26, 0
        %s577 = scalar_select %p576, %s26, 0
        %s578 = sadd.s32 %s577, %s575
        %s579 = smul.addr %s578, 2
        %s580 = scalar_lea.vmem %s6, %s579
      $region60: #{mam_spectral_transform.13} parent=55 // pred_fallthru
        _
      // Predicated region
      $region61: #{mam_spectral_transform.13} parent=55 // pred_check
        %p581 = pneg %p225
      $region62: #{mam_spectral_transform.13} parent=55 // pred_check_branch
        %583 = sbr.rel (%p581) target = $region64
      $region63: #{mam_spectral_transform.13} parent=55 // pred_region
        %p584 = scmp.lt.s32.totalorder %s25, 1
        %s585 = scalar_select %p584, %s25, 1
        %p586 = scmp.lt.s32.totalorder %s26, 0
        %s587 = scalar_select %p586, %s26, 0
        %s588 = sadd.s32 %s587, %s585
        %s589 = smul.addr %s588, 2
        %s590 = scalar_lea.vmem %s7, %s589
      $region64: #{mam_spectral_transform.13} parent=55 // pred_fallthru
        _
    $region56: #{mam_spectral_transform.13} parent=5 // pred_fallthru
      _
  $region6: #{mam_spectral_transform.13} parent=0 // loop_footer
    %s18 = sadd.s32 1, %s14
  $region7: #{mam_spectral_transform.13} parent=0 // loop_footer_branch
    %13 = sbr.rel target = $region3
  $region8: #{mam_spectral_transform.13} parent=0 // loop_exit
    _

// kernel: mam_spectral_transform.14
$region0: #{mam_spectral_transform.14}
  #allocation0 [shape = 'u32[]', space=smem, size = 0x4, offset = 0x4, fixed_abs, tag = 'smem constant byte address 0x4 - core index']
  #allocation1 [shape = 'u32[144,128]{1,0:T(1,128)}', space=vmem, size = 0x12000, scoped, tag = 'internal scratch']
  %s0 = inlined_call_operand.vmem [shape: bf16[2,4,8,8], index: 0, kind: input, shape index: {}]
  %s1 = inlined_call_operand.vmem [shape: bf16[2,4,8,8], index: 1, kind: input, shape index: {}]
  %s2 = inlined_call_operand.vmem [shape: bf16[16,8], index: 2, kind: input, shape index: {}, may-alias: {2,4}]
  %s3 = inlined_call_operand.vmem [shape: bf16[16,8], index: 3, kind: input, shape index: {}]
  %s4 = inlined_call_operand.vmem [shape: bf16[16,8], index: 4, kind: input, shape index: {}, may-alias: {2,4}]
  %s5 = inlined_call_operand.vmem [shape: f32[2,4,8,16], index: 5, kind: output, shape index: {}]
  %s6 = sld [smem:[#allocation0]]
  $region53: #{mam_spectral_transform.14} parent=0
    _
  %s8 = ssub.s32 1, %s6
  %s9 = scalar_select 0, %s8, %s6
  loop: start=0, step=1, limit=4
  $region2: #{mam_spectral_transform.14} parent=0 // loop_pre_header
    _
  $region3: #{mam_spectral_transform.14} parent=0 // loop_header
    %s11 = sphi 0, %s15
    %p12 = scmp.ge.s32.totalorder %s11, 4
    %s18 = sphi 0, %s30
    %s19 = sphi 0, %s26
    %s20 = sphi 0, %s18
    %s21 = sphi 0, %s19
    %s22 = sphi 0, %s20
    %s23 = sphi 0, %s21
    %s35 = sphi 0, %s37
    %s38 = sphi 0, %s35
    %s39 = sphi 0, %s38
    %s55 = sphi 0, %s39
    %s63 = sphi 0, %s65
    %s66 = sphi 0, %s63
    %s67 = sphi 0, %s66
    %s83 = sphi 0, %s67
    %s87 = sphi 0, %s87
    %s89 = sphi 0, %s87
    %s90 = sphi 0, %s89
    %s104 = sphi 0, %s90
    %s108 = sphi 0, %s108
    %s110 = sphi 0, %s108
    %s111 = sphi 0, %s110
    %s125 = sphi 0, %s111
    %s129 = sphi 0, %s129
    %s131 = sphi 0, %s129
    %s132 = sphi 0, %s131
    %s146 = sphi 0, %s132
    %s154 = sphi 0, %s156
    %s157 = sphi 0, %s154
    %s158 = sphi 0, %s157
    %s174 = sphi 0, %s158
  $region4: #{mam_spectral_transform.14} parent=0 // loop_header_branch
    %14 = sbr.rel (%p12) target = $region8
  $region5: #{mam_spectral_transform.14} parent=0 // loop_body
    %s16 = ssub.s32 %s11, 1
    %s17 = ssub.s32 %s11, 2
    %s24 = sadd.s32 1, %s19
    %p25 = scmp.ge.s32.totalorder %s24, 1
    %s26 = scalar_select %p25, 0, %s24
    %s27 = sadd.s32 1, %s18
    %s28 = scalar_select %p25, %s27, %s18
    %p29 = scmp.ge.s32.totalorder %s28, 2
    %s30 = scalar_select %p29, 0, %s28
    %s31 = ssub.s32 %s18, %s30
    %s32 = ssub.s32 %s19, %s26
    %s33 = sor.u32 %s31, %s32
    %p34 = scmp.eq.s32.totalorder %s33, 0
    %s36 = sadd.s32 %s35, 1
    %s37 = scalar_select %p34, %s35, %s36
    %p40 = pneg %p34
    %p41 = scmp.eq.s32.totalorder %s11, 1
    %p42 = por %p40, %p41
    %p43 = scmp.ne.s32.totalorder %s35, %s38
    %p44 = scmp.eq.s32.totalorder %s11, 0
    %p45 = por %p43, %p44
    %p46 = scmp.ne.s32.totalorder %s35, %s38
    %p47 = scmp.eq.s32.totalorder %s16, 1
    %p48 = por %p46, %p47
    %p49 = scmp.ne.s32.totalorder %s38, %s39
    %p50 = scmp.eq.s32.totalorder %s16, 0
    %p51 = por %p49, %p50
    %p52 = scmp.ne.s32.totalorder %s38, %s39
    %p53 = scmp.eq.s32.totalorder %s17, 1
    %p54 = por %p52, %p53
    %p56 = scmp.ne.s32.totalorder %s39, %s55
    %p57 = scmp.eq.s32.totalorder %s17, 0
    %p58 = por %p56, %p57
    %s59 = ssub.s32 %s18, %s30
    %s60 = ssub.s32 %s19, %s26
    %s61 = sor.u32 %s59, %s60
    %p62 = scmp.eq.s32.totalorder %s61, 0
    %s64 = sadd.s32 %s63, 1
    %s65 = scalar_select %p62, %s63, %s64
    %p68 = pneg %p62
    %p69 = scmp.eq.s32.totalorder %s11, 1
    %p70 = por %p68, %p69
    %p71 = scmp.ne.s32.totalorder %s63, %s66
    %p72 = scmp.eq.s32.totalorder %s11, 0
    %p73 = por %p71, %p72
    %p74 = scmp.ne.s32.totalorder %s63, %s66
    %p75 = scmp.eq.s32.totalorder %s16, 1
    %p76 = por %p74, %p75
    %p77 = scmp.ne.s32.totalorder %s66, %s67
    %p78 = scmp.eq.s32.totalorder %s16, 0
    %p79 = por %p77, %p78
    %p80 = scmp.ne.s32.totalorder %s66, %s67
    %p81 = scmp.eq.s32.totalorder %s17, 1
    %p82 = por %p80, %p81
    %p84 = scmp.ne.s32.totalorder %s67, %s83
    %p85 = scmp.eq.s32.totalorder %s17, 0
    %p86 = por %p84, %p85
    %s88 = sadd.s32 %s87, 1
    %p91 = scmp.eq.s32.totalorder %s11, 1
    %p92 = scmp.ne.s32.totalorder %s87, %s89
    %p93 = scmp.eq.s32.totalorder %s11, 0
    %p94 = por %p92, %p93
    %p95 = scmp.ne.s32.totalorder %s87, %s89
    %p96 = scmp.eq.s32.totalorder %s16, 1
    %p97 = por %p95, %p96
    %p98 = scmp.ne.s32.totalorder %s89, %s90
    %p99 = scmp.eq.s32.totalorder %s16, 0
    %p100 = por %p98, %p99
    %p101 = scmp.ne.s32.totalorder %s89, %s90
    %p102 = scmp.eq.s32.totalorder %s17, 1
    %p103 = por %p101, %p102
    %p105 = scmp.ne.s32.totalorder %s90, %s104
    %p106 = scmp.eq.s32.totalorder %s17, 0
    %p107 = por %p105, %p106
    %s109 = sadd.s32 %s108, 1
    %p112 = scmp.eq.s32.totalorder %s11, 1
    %p113 = scmp.ne.s32.totalorder %s108, %s110
    %p114 = scmp.eq.s32.totalorder %s11, 0
    %p115 = por %p113, %p114
    %p116 = scmp.ne.s32.totalorder %s108, %s110
    %p117 = scmp.eq.s32.totalorder %s16, 1
    %p118 = por %p116, %p117
    %p119 = scmp.ne.s32.totalorder %s110, %s111
    %p120 = scmp.eq.s32.totalorder %s16, 0
    %p121 = por %p119, %p120
    %p122 = scmp.ne.s32.totalorder %s110, %s111
    %p123 = scmp.eq.s32.totalorder %s17, 1
    %p124 = por %p122, %p123
    %p126 = scmp.ne.s32.totalorder %s111, %s125
    %p127 = scmp.eq.s32.totalorder %s17, 0
    %p128 = por %p126, %p127
    %s130 = sadd.s32 %s129, 1
    %p133 = scmp.eq.s32.totalorder %s11, 1
    %p134 = scmp.ne.s32.totalorder %s129, %s131
    %p135 = scmp.eq.s32.totalorder %s11, 0
    %p136 = por %p134, %p135
    %p137 = scmp.ne.s32.totalorder %s129, %s131
    %p138 = scmp.eq.s32.totalorder %s16, 1
    %p139 = por %p137, %p138
    %p140 = scmp.ne.s32.totalorder %s131, %s132
    %p141 = scmp.eq.s32.totalorder %s16, 0
    %p142 = por %p140, %p141
    %p143 = scmp.ne.s32.totalorder %s131, %s132
    %p144 = scmp.eq.s32.totalorder %s17, 1
    %p145 = por %p143, %p144
    %p147 = scmp.ne.s32.totalorder %s132, %s146
    %p148 = scmp.eq.s32.totalorder %s17, 0
    %p149 = por %p147, %p148
    %s150 = ssub.s32 %s18, %s30
    %s151 = ssub.s32 %s19, %s26
    %s152 = sor.u32 %s150, %s151
    %p153 = scmp.eq.s32.totalorder %s152, 0
    %s155 = sadd.s32 %s154, 1
    %s156 = scalar_select %p153, %s154, %s155
    %p159 = pneg %p153
    %p160 = scmp.eq.s32.totalorder %s11, 1
    %p161 = por %p159, %p160
    %p162 = scmp.ne.s32.totalorder %s154, %s157
    %p163 = scmp.eq.s32.totalorder %s11, 0
    %p164 = por %p162, %p163
    %p165 = scmp.ne.s32.totalorder %s154, %s157
    %p166 = scmp.eq.s32.totalorder %s16, 1
    %p167 = por %p165, %p166
    %p168 = scmp.ne.s32.totalorder %s157, %s158
    %p169 = scmp.eq.s32.totalorder %s16, 0
    %p170 = por %p168, %p169
    %p171 = scmp.ne.s32.totalorder %s157, %s158
    %p172 = scmp.eq.s32.totalorder %s17, 1
    %p173 = por %p171, %p172
    %p175 = scmp.ne.s32.totalorder %s158, %s174
    %p176 = scmp.eq.s32.totalorder %s17, 0
    %p177 = por %p175, %p176
    %p178 = scmp.le.s32.totalorder 1, %s11
    %p179 = scmp.lt.s32.totalorder %s11, 3
    %p180 = pnand %p178, %p179
    %p181 = pneg %p180
    // Predicated region
    $region9: #{mam_spectral_transform.14} parent=5 // pred_check
      _
    $region10: #{mam_spectral_transform.14} parent=5 // pred_check_branch
      %183 = sbr.rel (%p180) target = $region12
    $region11: #{mam_spectral_transform.14} parent=5 // pred_region
      %s184 = ssub.s32 %s11, 1
      // Predicated region
      $region13: #{mam_spectral_transform.14} parent=11 // pred_check
        %p185 = pneg %p100
      $region14: #{mam_spectral_transform.14} parent=11 // pred_check_branch
        %187 = sbr.rel (%p185) target = $region16
      $region15: #{mam_spectral_transform.14} parent=11 // pred_region
        _
      $region16: #{mam_spectral_transform.14} parent=11 // pred_fallthru
        _
      // Predicated region
      $region17: #{mam_spectral_transform.14} parent=11 // pred_check
        %p188 = pneg %p121
      $region18: #{mam_spectral_transform.14} parent=11 // pred_check_branch
        %190 = sbr.rel (%p188) target = $region20
      $region19: #{mam_spectral_transform.14} parent=11 // pred_region
        _
      $region20: #{mam_spectral_transform.14} parent=11 // pred_fallthru
        _
      // Predicated region
      $region21: #{mam_spectral_transform.14} parent=11 // pred_check
        %p191 = pneg %p142
      $region22: #{mam_spectral_transform.14} parent=11 // pred_check_branch
        %193 = sbr.rel (%p191) target = $region24
      $region23: #{mam_spectral_transform.14} parent=11 // pred_region
        _
      $region24: #{mam_spectral_transform.14} parent=11 // pred_fallthru
        _
    $region12: #{mam_spectral_transform.14} parent=5 // pred_fallthru
      _
    %p194 = scmp.lt.s32.totalorder %s11, 2
    // Predicated region
    $region25: #{mam_spectral_transform.14} parent=5 // pred_check
      %p195 = pneg %p194
    $region26: #{mam_spectral_transform.14} parent=5 // pred_check_branch
      %197 = sbr.rel (%p195) target = $region28
    $region27: #{mam_spectral_transform.14} parent=5 // pred_region
      // Predicated region
      $region29: #{mam_spectral_transform.14} parent=27 // pred_check
        %p198 = pneg %p45
      $region30: #{mam_spectral_transform.14} parent=27 // pred_check_branch
        %200 = sbr.rel (%p198) target = $region32
      $region31: #{mam_spectral_transform.14} parent=27 // pred_region
        %s201 = smul.u32 4, %s19
        %p202 = scmp.lt.s32.totalorder %s18, 1
        %s203 = scalar_select %p202, %s18, 1
        %p204 = scmp.lt.s32.totalorder %s201, 3
        %s205 = scalar_select %p204, %s201, 3
        %s206 = smul.addr %s203, 4
        %s207 = sadd.s32 %s205, %s206
        %s208 = smul.addr %s207, 4
        %s209 = scalar_lea.vmem %s0, %s208
        %s210 = smul.u32 4, %s19
      $region32: #{mam_spectral_transform.14} parent=27 // pred_fallthru
        _
      // Predicated region
      $region33: #{mam_spectral_transform.14} parent=27 // pred_check
        %p211 = pneg %p73
      $region34: #{mam_spectral_transform.14} parent=27 // pred_check_branch
        %213 = sbr.rel (%p211) target = $region36
      $region35: #{mam_spectral_transform.14} parent=27 // pred_region
        %s214 = smul.u32 4, %s19
        %p215 = scmp.lt.s32.totalorder %s18, 1
        %s216 = scalar_select %p215, %s18, 1
        %p217 = scmp.lt.s32.totalorder %s214, 3
        %s218 = scalar_select %p217, %s214, 3
        %s219 = smul.addr %s216, 4
        %s220 = sadd.s32 %s218, %s219
        %s221 = smul.addr %s220, 4
        %s222 = scalar_lea.vmem %s1, %s221
        %s223 = smul.u32 4, %s19
      $region36: #{mam_spectral_transform.14} parent=27 // pred_fallthru
        _
    $region28: #{mam_spectral_transform.14} parent=5 // pred_fallthru
      _
    %p224 = scmp.le.s32.totalorder 1, %s11
    %p225 = scmp.lt.s32.totalorder %s11, 3
    %p226 = pnand %p224, %p225
    %p227 = pneg %p226
    // Predicated region
    $region37: #{mam_spectral_transform.14} parent=5 // pred_check
      _
    $region38: #{mam_spectral_transform.14} parent=5 // pred_check_branch
      %229 = sbr.rel (%p226) target = $region40
    $region39: #{mam_spectral_transform.14} parent=5 // pred_region
      %s230 = ssub.s32 %s11, 1
      %s231 = smul.u32 4, %s21
      %p232 = scmp.lt.s32.totalorder %s20, 1
      %s233 = scalar_select %p232, %s20, 1
      %p234 = scmp.lt.s32.totalorder %s231, 3
      %s235 = scalar_select %p234, %s231, 3
      %s236 = smul.addr %s233, 4
      %s237 = sadd.s32 %s235, %s236
      %s238 = smul.addr %s237, 4
      %s239 = scalar_lea.vmem %s0, %s238
      %p240 = pneg %p51
      %p241 = pneg %p48
      %s242 = smul.u32 4, %s21
      %p243 = scmp.lt.s32.totalorder %s20, 1
      %s244 = scalar_select %p243, %s20, 1
      %p245 = scmp.lt.s32.totalorder %s242, 3
      %s246 = scalar_select %p245, %s242, 3
      %s247 = smul.addr %s244, 4
      %s248 = sadd.s32 %s246, %s247
      %s249 = smul.addr %s248, 4
      %s250 = scalar_lea.vmem %s1, %s249
      %p251 = pneg %p79
      %p252 = pneg %p76
      %p253 = pneg %p100
      %p254 = pneg %p97
      %p255 = pneg %p121
      %p256 = pneg %p118
      %p257 = pneg %p142
      %p258 = pneg %p139
      %p259 = pneg %p170
      %p260 = pneg %p167
      %s261 = smul.u32 4, %s21
      %p262 = scmp.lt.s32.totalorder %s20, 1
      %s263 = scalar_select %p262, %s20, 1
      %p264 = scmp.lt.s32.totalorder %s261, 3
      %s265 = scalar_select %p264, %s261, 3
      %s266 = smul.addr %s263, 4
      %s267 = sadd.s32 %s265, %s266
      %s268 = smul.addr %s267, 8
      %s269 = scalar_lea.vmem %s5, %s268
      %s270 = smul.u32 4, %s21
      %p271 = scmp.lt.s32.totalorder %s20, 1
      %s272 = scalar_select %p271, %s20, 1
      %p273 = scmp.lt.s32.totalorder %s270, 3
      %s274 = scalar_select %p273, %s270, 3
      %s275 = smul.addr %s272, 4
      %s276 = sadd.s32 %s274, %s275
      %s277 = smul.addr %s276, 4
      %s278 = scalar_lea.vmem %s0, %s277
      %s279 = smul.u32 4, %s21
      %s280 = smul.u32 4, %s21
      %p281 = scmp.lt.s32.totalorder %s20, 1
      %s282 = scalar_select %p281, %s20, 1
      %p283 = scmp.lt.s32.totalorder %s280, 3
      %s284 = scalar_select %p283, %s280, 3
      %s285 = smul.addr %s282, 4
      %s286 = sadd.s32 %s284, %s285
      %s287 = smul.addr %s286, 4
      %s288 = scalar_lea.vmem %s1, %s287
      %s289 = smul.u32 4, %s21
      %s290 = smul.u32 4, %s21
      %p291 = scmp.lt.s32.totalorder %s20, 1
      %s292 = scalar_select %p291, %s20, 1
      %p293 = scmp.lt.s32.totalorder %s290, 3
      %s294 = scalar_select %p293, %s290, 3
      %s295 = smul.addr %s292, 4
      %s296 = sadd.s32 %s294, %s295
      %s297 = smul.addr %s296, 8
      %s298 = scalar_lea.vmem %s5, %s297
      %s299 = smul.u32 4, %s21
      %v301 = vld [vmem:[%s278] sm:$0xf]
      %v302 = vld [vmem:[%s278 + $0x4] sm:$0xf]
      %v303 = vld [vmem:[%s278 + $0x8] sm:$0xf]
      %v304 = vld [vmem:[%s278 + $0xc] sm:$0xf]
      %v305 = vld [vmem:[%s288] sm:$0xf]
      %v306 = vld [vmem:[%s288 + $0x4] sm:$0xf]
      %v307 = vld [vmem:[%s288 + $0x8] sm:$0xf]
      %v308 = vld [vmem:[%s288 + $0xc] sm:$0xf]
      %v313 = vunpack.c.l.b16 %v301
      %v314 = vunpack.c.l.b16 %v302
      %v315 = vunpack.c.l.b16 %v303
      %v316 = vunpack.c.l.b16 %v304
      %v317 = vpack.c.b16 %v314, %v313
      %v318 = vpack.c.b16 %v316, %v315
      %v323 = vunpack.c.l.b16 %v305
      %v324 = vunpack.c.l.b16 %v306
      %v325 = vunpack.c.l.b16 %v307
      %v326 = vunpack.c.l.b16 %v308
      %v327 = vpack.c.b16 %v324, %v323
      %v328 = vpack.c.b16 %v326, %v325
      %329 = vrot.lane.b32.xlu0 %v327, 8
      %v330 = vpop.permute.xlu0 %329
      %331 = vrot.lane.b32.xlu0 %v328, 8
      %v332 = vpop.permute.xlu0 %331
      %vm333 = vcmask 64512
      %v336 = vsel %vm333, %v317, %v330
      %v339 = vsel %vm333, %v318, %v332
      %v340 = vld [vmem:[%s2] sm:$0xf]
      %v341 = vld [vmem:[%s2 + $0x4] sm:$0xf]
      %v344 = vunpack.c.l.b16 %v340
      %v345 = vunpack.c.l.b16 %v341
      %v346 = vpack.c.b16 %v345, %v344
      %vm348 = vcmask 130048
      %v349 = vsel %vm348, %v336, 0
      %v351 = vsel %vm348, %v339, 0
      %353 = vmatprep.subr.bf16.mxu0 0
      %354 = vmatpush1.bf16.msra.mxu0 %v346
      %355 = vmatprep.subr.bf16.mxu0 0
      %356 = vmatpush1.bf16.msra.mxu0 0
      %357 = vmatprep.subr.bf16.mxu0 0
      %358 = vmatpush1.bf16.msra.mxu0 0
      %359 = vmatprep.subr.bf16.mxu0 0
      %360 = vmatpush1.bf16.msra.mxu0 0
      %361 = vmatprep.subr.bf16.mxu0 0
      %362 = vmatpush1.bf16.msra.mxu0 0
      %363 = vmatprep.subr.bf16.mxu0 0
      %364 = vmatpush1.bf16.msra.mxu0 0
      %365 = vmatprep.subr.bf16.mxu0 0
      %366 = vmatpush1.bf16.msra.mxu0 0
      %367 = vmatprep.subr.bf16.mxu0 0
      %368 = vmatpush1.bf16.msra.mxu0 0
      %369 = vmatprep.subr.bf16.mxu0 0
      %370 = vmatpush1.bf16.msra.mxu0 0
      %371 = vmatprep.subr.bf16.mxu0 0
      %372 = vmatpush1.bf16.msra.mxu0 0
      %373 = vmatprep.subr.bf16.mxu0 0
      %374 = vmatpush1.bf16.msra.mxu0 0
      %375 = vmatprep.subr.bf16.mxu0 0
      %376 = vmatpush1.bf16.msra.mxu0 0
      %377 = vmatprep.subr.bf16.mxu0 0
      %378 = vmatpush1.bf16.msra.mxu0 0
      %379 = vmatprep.subr.bf16.mxu0 0
      %380 = vmatpush1.bf16.msra.mxu0 0
      %381 = vmatprep.subr.bf16.mxu0 0
      %382 = vmatpush1.bf16.msra.mxu0 0
      %383 = vmatprep.subr.bf16.mxu0 0
      %384 = vmatpush1.bf16.msra.mxu0 0
      %385 = vmatprep.mubr.bf16.mxu0 0
      %386 = vmatmul.mubr.bf16.gmra.mrb[0].mxu0 %v349
      %v387 = vpop.f32.mrb[0].mxu0
      %v388 = vadd.f32 0.0, %v387
      %v389 = vpop.f32.mrb[0].mxu0
      %v390 = vpop.f32.mrb[0].mxu0
      %v391 = vadd.f32 0.0, %v390
      %v392 = vpop.f32.mrb[0].mxu0
      %393 = vmatprep.mubr.bf16.mxu0 0
      %394 = vmatmul.mubr.bf16.gmra.mrb[0].mxu0 %v351
      %v395 = vpop.f32.mrb[0].mxu0
      %v396 = vadd.f32 0.0, %v395
      %v397 = vpop.f32.mrb[0].mxu0
      %v398 = vpop.f32.mrb[0].mxu0
      %v399 = vadd.f32 0.0, %v398
      %v400 = vpop.f32.mrb[0].mxu0
      %401 = vdwg.mxu0
      %v402 = vld [vmem:[%s3] sm:$0xf]
      %v403 = vld [vmem:[%s3 + $0x4] sm:$0xf]
      %v406 = vunpack.c.l.b16 %v402
      %v407 = vunpack.c.l.b16 %v403
      %v408 = vpack.c.b16 %v407, %v406
      %410 = vmatprep.subr.bf16.mxu0 0
      %411 = vmatpush1.bf16.msra.mxu0 %v408
      %412 = vmatprep.subr.bf16.mxu0 0
      %413 = vmatpush1.bf16.msra.mxu0 0
      %414 = vmatprep.subr.bf16.mxu0 0
      %415 = vmatpush1.bf16.msra.mxu0 0
      %416 = vmatprep.subr.bf16.mxu0 0
      %417 = vmatpush1.bf16.msra.mxu0 0
      %418 = vmatprep.subr.bf16.mxu0 0
      %419 = vmatpush1.bf16.msra.mxu0 0
      %420 = vmatprep.subr.bf16.mxu0 0
      %421 = vmatpush1.bf16.msra.mxu0 0
      %422 = vmatprep.subr.bf16.mxu0 0
      %423 = vmatpush1.bf16.msra.mxu0 0
      %424 = vmatprep.subr.bf16.mxu0 0
      %425 = vmatpush1.bf16.msra.mxu0 0
      %426 = vmatprep.subr.bf16.mxu0 0
      %427 = vmatpush1.bf16.msra.mxu0 0
      %428 = vmatprep.subr.bf16.mxu0 0
      %429 = vmatpush1.bf16.msra.mxu0 0
      %430 = vmatprep.subr.bf16.mxu0 0
      %431 = vmatpush1.bf16.msra.mxu0 0
      %432 = vmatprep.subr.bf16.mxu0 0
      %433 = vmatpush1.bf16.msra.mxu0 0
      %434 = vmatprep.subr.bf16.mxu0 0
      %435 = vmatpush1.bf16.msra.mxu0 0
      %436 = vmatprep.subr.bf16.mxu0 0
      %437 = vmatpush1.bf16.msra.mxu0 0
      %438 = vmatprep.subr.bf16.mxu0 0
      %439 = vmatpush1.bf16.msra.mxu0 0
      %440 = vmatprep.subr.bf16.mxu0 0
      %441 = vmatpush1.bf16.msra.mxu0 0
      %442 = vmatprep.mubr.bf16.mxu0 0
      %443 = vmatmul.mubr.bf16.gmra.mrb[0].mxu0 %v349
      %v444 = vpop.f32.mrb[0].mxu0
      %v445 = vadd.f32 0.0, %v444
      %v446 = vpop.f32.mrb[0].mxu0
      %v447 = vpop.f32.mrb[0].mxu0
      %v448 = vadd.f32 0.0, %v447
      %v449 = vpop.f32.mrb[0].mxu0
      %450 = vmatprep.mubr.bf16.mxu0 0
      %451 = vmatmul.mubr.bf16.gmra.mrb[0].mxu0 %v351
      %v452 = vpop.f32.mrb[0].mxu0
      %v453 = vadd.f32 0.0, %v452
      %v454 = vpop.f32.mrb[0].mxu0
      %v455 = vpop.f32.mrb[0].mxu0
      %v456 = vadd.f32 0.0, %v455
      %v457 = vpop.f32.mrb[0].mxu0
      %458 = vdwg.mxu0
      %459 = vxpose.xlu0.b32.start [1/16] %v388, 128
      %460 = vxpose.xlu0.b32.cont [2/16] 0.0, 128
      %461 = vxpose.xlu0.b32.cont [3/16] 0.0, 128
      %462 = vxpose.xlu0.b32.cont [4/16] 0.0, 128
      %463 = vxpose.xlu0.b32.cont [5/16] 0.0, 128
      %464 = vxpose.xlu0.b32.cont [6/16] 0.0, 128
      %465 = vxpose.xlu0.b32.cont [7/16] 0.0, 128
      %466 = vxpose.xlu0.b32.cont [8/16] 0.0, 128
      %467 = vxpose.xlu0.b32.cont [9/16] 0.0, 128
      %468 = vxpose.xlu0.b32.cont [10/16] 0.0, 128
      %469 = vxpose.xlu0.b32.cont [11/16] 0.0, 128
      %470 = vxpose.xlu0.b32.cont [12/16] 0.0, 128
      %471 = vxpose.xlu0.b32.cont [13/16] 0.0, 128
      %472 = vxpose.xlu0.b32.cont [14/16] 0.0, 128
      %473 = vxpose.xlu0.b32.cont [15/16] 0.0, 128
      %474 = vxpose.xlu0.b32.end [16/16] 0.0, 128
      %v475 = vpop.trf.xlu0
      %v476 = vpop.trf.xlu0
      %v477 = vpop.trf.xlu0
      %v478 = vpop.trf.xlu0
      %v479 = vpop.trf.xlu0
      %v480 = vpop.trf.xlu0
      %v481 = vpop.trf.xlu0
      %v482 = vpop.trf.xlu0
      %v483 = vpop.trf.xlu0
      %v484 = vpop.trf.xlu0
      %v485 = vpop.trf.xlu0
      %v486 = vpop.trf.xlu0
      %v487 = vpop.trf.xlu0
      %v488 = vpop.trf.xlu0
      %v489 = vpop.trf.xlu0
      %v490 = vpop.trf.xlu0
      %491 = vxpose.xlu0.b32.start [1/16] %v391, 128
      %492 = vxpose.xlu0.b32.cont [2/16] 0.0, 128
      %493 = vxpose.xlu0.b32.cont [3/16] 0.0, 128
      %494 = vxpose.xlu0.b32.cont [4/16] 0.0, 128
      %495 = vxpose.xlu0.b32.cont [5/16] 0.0, 128
      %496 = vxpose.xlu0.b32.cont [6/16] 0.0, 128
      %497 = vxpose.xlu0.b32.cont [7/16] 0.0, 128
      %498 = vxpose.xlu0.b32.cont [8/16] 0.0, 128
      %499 = vxpose.xlu0.b32.cont [9/16] 0.0, 128
      %500 = vxpose.xlu0.b32.cont [10/16] 0.0, 128
      %501 = vxpose.xlu0.b32.cont [11/16] 0.0, 128
      %502 = vxpose.xlu0.b32.cont [12/16] 0.0, 128
      %503 = vxpose.xlu0.b32.cont [13/16] 0.0, 128
      %504 = vxpose.xlu0.b32.cont [14/16] 0.0, 128
      %505 = vxpose.xlu0.b32.cont [15/16] 0.0, 128
      %506 = vxpose.xlu0.b32.end [16/16] 0.0, 128
      %v507 = vpop.trf.xlu0
      %v508 = vpop.trf.xlu0
      %v509 = vpop.trf.xlu0
      %v510 = vpop.trf.xlu0
      %v511 = vpop.trf.xlu0
      %v512 = vpop.trf.xlu0
      %v513 = vpop.trf.xlu0
      %v514 = vpop.trf.xlu0
      %v515 = vpop.trf.xlu0
      %v516 = vpop.trf.xlu0
      %v517 = vpop.trf.xlu0
      %v518 = vpop.trf.xlu0
      %v519 = vpop.trf.xlu0
      %v520 = vpop.trf.xlu0
      %v521 = vpop.trf.xlu0
      %v522 = vpop.trf.xlu0
      %523 = vxpose.xlu0.b32.start [1/16] %v396, 128
      %524 = vxpose.xlu0.b32.cont [2/16] 0.0, 128
      %525 = vxpose.xlu0.b32.cont [3/16] 0.0, 128
      %526 = vxpose.xlu0.b32.cont [4/16] 0.0, 128
      %527 = vxpose.xlu0.b32.cont [5/16] 0.0, 128
      %528 = vxpose.xlu0.b32.cont [6/16] 0.0, 128
      %529 = vxpose.xlu0.b32.cont [7/16] 0.0, 128
      %530 = vxpose.xlu0.b32.cont [8/16] 0.0, 128
      %531 = vxpose.xlu0.b32.cont [9/16] 0.0, 128
      %532 = vxpose.xlu0.b32.cont [10/16] 0.0, 128
      %533 = vxpose.xlu0.b32.cont [11/16] 0.0, 128
      %534 = vxpose.xlu0.b32.cont [12/16] 0.0, 128
      %535 = vxpose.xlu0.b32.cont [13/16] 0.0, 128
      %536 = vxpose.xlu0.b32.cont [14/16] 0.0, 128
      %537 = vxpose.xlu0.b32.cont [15/16] 0.0, 128
      %538 = vxpose.xlu0.b32.end [16/16] 0.0, 128
      %v539 = vpop.trf.xlu0
      %v540 = vpop.trf.xlu0
      %v541 = vpop.trf.xlu0
      %v542 = vpop.trf.xlu0
      %v543 = vpop.trf.xlu0
      %v544 = vpop.trf.xlu0
      %v545 = vpop.trf.xlu0
      %v546 = vpop.trf.xlu0
      %v547 = vpop.trf.xlu0
      %v548 = vpop.trf.xlu0
      %v549 = vpop.trf.xlu0
      %v550 = vpop.trf.xlu0
      %v551 = vpop.trf.xlu0
      %v552 = vpop.trf.xlu0
      %v553 = vpop.trf.xlu0
      %v554 = vpop.trf.xlu0
      %555 = vxpose.xlu0.b32.start [1/16] %v399, 128
      %556 = vxpose.xlu0.b32.cont [2/16] 0.0, 128
      %557 = vxpose.xlu0.b32.cont [3/16] 0.0, 128
      %558 = vxpose.xlu0.b32.cont [4/16] 0.0, 128
      %559 = vxpose.xlu0.b32.cont [5/16] 0.0, 128
      %560 = vxpose.xlu0.b32.cont [6/16] 0.0, 128
      %561 = vxpose.xlu0.b32.cont [7/16] 0.0, 128
      %562 = vxpose.xlu0.b32.cont [8/16] 0.0, 128
      %563 = vxpose.xlu0.b32.cont [9/16] 0.0, 128
      %564 = vxpose.xlu0.b32.cont [10/16] 0.0, 128
      %565 = vxpose.xlu0.b32.cont [11/16] 0.0, 128
      %566 = vxpose.xlu0.b32.cont [12/16] 0.0, 128
      %567 = vxpose.xlu0.b32.cont [13/16] 0.0, 128
      %568 = vxpose.xlu0.b32.cont [14/16] 0.0, 128
      %569 = vxpose.xlu0.b32.cont [15/16] 0.0, 128
      %570 = vxpose.xlu0.b32.end [16/16] 0.0, 128
      %v571 = vpop.trf.xlu0
      %v572 = vpop.trf.xlu0
      %v573 = vpop.trf.xlu0
      %v574 = vpop.trf.xlu0
      %v575 = vpop.trf.xlu0
      %v576 = vpop.trf.xlu0
      %v577 = vpop.trf.xlu0
      %v578 = vpop.trf.xlu0
      %v579 = vpop.trf.xlu0
      %v580 = vpop.trf.xlu0
      %v581 = vpop.trf.xlu0
      %v582 = vpop.trf.xlu0
      %v583 = vpop.trf.xlu0
      %v584 = vpop.trf.xlu0
      %v585 = vpop.trf.xlu0
      %v586 = vpop.trf.xlu0
      %587 = vxpose.xlu0.b32.start [1/16] %v445, 128
      %588 = vxpose.xlu0.b32.cont [2/16] 0.0, 128
      %589 = vxpose.xlu0.b32.cont [3/16] 0.0, 128
      %590 = vxpose.xlu0.b32.cont [4/16] 0.0, 128
      %591 = vxpose.xlu0.b32.cont [5/16] 0.0, 128
      %592 = vxpose.xlu0.b32.cont [6/16] 0.0, 128
      %593 = vxpose.xlu0.b32.cont [7/16] 0.0, 128
      %594 = vxpose.xlu0.b32.cont [8/16] 0.0, 128
      %595 = vxpose.xlu0.b32.cont [9/16] 0.0, 128
      %596 = vxpose.xlu0.b32.cont [10/16] 0.0, 128
      %597 = vxpose.xlu0.b32.cont [11/16] 0.0, 128
      %598 = vxpose.xlu0.b32.cont [12/16] 0.0, 128
      %599 = vxpose.xlu0.b32.cont [13/16] 0.0, 128
      %600 = vxpose.xlu0.b32.cont [14/16] 0.0, 128
      %601 = vxpose.xlu0.b32.cont [15/16] 0.0, 128
      %602 = vxpose.xlu0.b32.end [16/16] 0.0, 128
      %v603 = vpop.trf.xlu0
      %v604 = vpop.trf.xlu0
      %v605 = vpop.trf.xlu0
      %v606 = vpop.trf.xlu0
      %v607 = vpop.trf.xlu0
      %v608 = vpop.trf.xlu0
      %v609 = vpop.trf.xlu0
      %v610 = vpop.trf.xlu0
      %v611 = vpop.trf.xlu0
      %v612 = vpop.trf.xlu0
      %v613 = vpop.trf.xlu0
      %v614 = vpop.trf.xlu0
      %v615 = vpop.trf.xlu0
      %v616 = vpop.trf.xlu0
      %v617 = vpop.trf.xlu0
      %v618 = vpop.trf.xlu0
      %619 = vxpose.xlu0.b32.start [1/16] %v448, 128
      %620 = vxpose.xlu0.b32.cont [2/16] 0.0, 128
      %621 = vxpose.xlu0.b32.cont [3/16] 0.0, 128
      %622 = vxpose.xlu0.b32.cont [4/16] 0.0, 128
      %623 = vxpose.xlu0.b32.cont [5/16] 0.0, 128
      %624 = vxpose.xlu0.b32.cont [6/16] 0.0, 128
      %625 = vxpose.xlu0.b32.cont [7/16] 0.0, 128
      %626 = vxpose.xlu0.b32.cont [8/16] 0.0, 128
      %627 = vxpose.xlu0.b32.cont [9/16] 0.0, 128
      %628 = vxpose.xlu0.b32.cont [10/16] 0.0, 128
      %629 = vxpose.xlu0.b32.cont [11/16] 0.0, 128
      %630 = vxpose.xlu0.b32.cont [12/16] 0.0, 128
      %631 = vxpose.xlu0.b32.cont [13/16] 0.0, 128
      %632 = vxpose.xlu0.b32.cont [14/16] 0.0, 128
      %633 = vxpose.xlu0.b32.cont [15/16] 0.0, 128
      %634 = vxpose.xlu0.b32.end [16/16] 0.0, 128
      %v635 = vpop.trf.xlu0
      %v636 = vpop.trf.xlu0
      %v637 = vpop.trf.xlu0
      %v638 = vpop.trf.xlu0
      %v639 = vpop.trf.xlu0
      %v640 = vpop.trf.xlu0
      %v641 = vpop.trf.xlu0
      %v642 = vpop.trf.xlu0
      %v643 = vpop.trf.xlu0
      %v644 = vpop.trf.xlu0
      %v645 = vpop.trf.xlu0
      %v646 = vpop.trf.xlu0
      %v647 = vpop.trf.xlu0
      %v648 = vpop.trf.xlu0
      %v649 = vpop.trf.xlu0
      %v650 = vpop.trf.xlu0
      %651 = vxpose.xlu0.b32.start [1/16] %v453, 128
      %652 = vxpose.xlu0.b32.cont [2/16] 0.0, 128
      %653 = vxpose.xlu0.b32.cont [3/16] 0.0, 128
      %654 = vxpose.xlu0.b32.cont [4/16] 0.0, 128
      %655 = vxpose.xlu0.b32.cont [5/16] 0.0, 128
      %656 = vxpose.xlu0.b32.cont [6/16] 0.0, 128
      %657 = vxpose.xlu0.b32.cont [7/16] 0.0, 128
      %658 = vxpose.xlu0.b32.cont [8/16] 0.0, 128
      %659 = vxpose.xlu0.b32.cont [9/16] 0.0, 128
      %660 = vxpose.xlu0.b32.cont [10/16] 0.0, 128
      %661 = vxpose.xlu0.b32.cont [11/16] 0.0, 128
      %662 = vxpose.xlu0.b32.cont [12/16] 0.0, 128
      %663 = vxpose.xlu0.b32.cont [13/16] 0.0, 128
      %664 = vxpose.xlu0.b32.cont [14/16] 0.0, 128
      %665 = vxpose.xlu0.b32.cont [15/16] 0.0, 128
      %666 = vxpose.xlu0.b32.end [16/16] 0.0, 128
      %v667 = vpop.trf.xlu0
      %v668 = vpop.trf.xlu0
      %v669 = vpop.trf.xlu0
      %v670 = vpop.trf.xlu0
      %v671 = vpop.trf.xlu0
      %v672 = vpop.trf.xlu0
      %v673 = vpop.trf.xlu0
      %v674 = vpop.trf.xlu0
      %v675 = vpop.trf.xlu0
      %v676 = vpop.trf.xlu0
      %v677 = vpop.trf.xlu0
      %v678 = vpop.trf.xlu0
      %v679 = vpop.trf.xlu0
      %v680 = vpop.trf.xlu0
      %v681 = vpop.trf.xlu0
      %v682 = vpop.trf.xlu0
      %683 = vxpose.xlu0.b32.start [1/16] %v456, 128
      %684 = vxpose.xlu0.b32.cont [2/16] 0.0, 128
      %685 = vxpose.xlu0.b32.cont [3/16] 0.0, 128
      %686 = vxpose.xlu0.b32.cont [4/16] 0.0, 128
      %687 = vxpose.xlu0.b32.cont [5/16] 0.0, 128
      %688 = vxpose.xlu0.b32.cont [6/16] 0.0, 128
      %689 = vxpose.xlu0.b32.cont [7/16] 0.0, 128
      %690 = vxpose.xlu0.b32.cont [8/16] 0.0, 128
      %691 = vxpose.xlu0.b32.cont [9/16] 0.0, 128
      %692 = vxpose.xlu0.b32.cont [10/16] 0.0, 128
      %693 = vxpose.xlu0.b32.cont [11/16] 0.0, 128
      %694 = vxpose.xlu0.b32.cont [12/16] 0.0, 128
      %695 = vxpose.xlu0.b32.cont [13/16] 0.0, 128
      %696 = vxpose.xlu0.b32.cont [14/16] 0.0, 128
      %697 = vxpose.xlu0.b32.cont [15/16] 0.0, 128
      %698 = vxpose.xlu0.b32.end [16/16] 0.0, 128
      %v699 = vpop.trf.xlu0
      %v700 = vpop.trf.xlu0
      %v701 = vpop.trf.xlu0
      %v702 = vpop.trf.xlu0
      %v703 = vpop.trf.xlu0
      %v704 = vpop.trf.xlu0
      %v705 = vpop.trf.xlu0
      %v706 = vpop.trf.xlu0
      %v707 = vpop.trf.xlu0
      %v708 = vpop.trf.xlu0
      %v709 = vpop.trf.xlu0
      %v710 = vpop.trf.xlu0
      %v711 = vpop.trf.xlu0
      %v712 = vpop.trf.xlu0
      %v713 = vpop.trf.xlu0
      %v714 = vpop.trf.xlu0
      %719 = vrot.lane.b32.xlu0 %v603, 8
      %v720 = vpop.permute.xlu0 %719
      %721 = vrot.lane.b32.xlu0 %v635, 8
      %v722 = vpop.permute.xlu0 %721
      %723 = vrot.lane.b32.xlu0 %v667, 8
      %v724 = vpop.permute.xlu0 %723
      %725 = vrot.lane.b32.xlu0 %v699, 8
      %v726 = vpop.permute.xlu0 %725
      %v731 = vsel %vm333, %v475, %v720
      %v732 = vsel %vm333, %v507, %v722
      %v733 = vsel %vm333, %v539, %v724
      %v734 = vsel %vm333, %v571, %v726
      %v735 = vpack.c.bf16 %v732, %v731
      %v736 = vpack.c.bf16 %v734, %v733
      %v737 = vld [vmem:[%s4] sm:$0xf]
      %v738 = vld [vmem:[%s4 + $0x4] sm:$0xf]
      %v741 = vunpack.c.l.b16 %v737
      %v742 = vunpack.c.l.b16 %v738
      %v743 = vpack.c.b16 %v742, %v741
      %v746 = vsel %vm348, %v735, 0
      %v749 = vsel %vm348, %v736, 0
      %751 = vmatprep.subr.bf16.mxu0 0
      %752 = vmatpush1.bf16.msra.mxu0 %v743
      %753 = vmatprep.subr.bf16.mxu0 0
      %754 = vmatpush1.bf16.msra.mxu0 0
      %755 = vmatprep.subr.bf16.mxu0 0
      %756 = vmatpush1.bf16.msra.mxu0 0
      %757 = vmatprep.subr.bf16.mxu0 0
      %758 = vmatpush1.bf16.msra.mxu0 0
      %759 = vmatprep.subr.bf16.mxu0 0
      %760 = vmatpush1.bf16.msra.mxu0 0
      %761 = vmatprep.subr.bf16.mxu0 0
      %762 = vmatpush1.bf16.msra.mxu0 0
      %763 = vmatprep.subr.bf16.mxu0 0
      %764 = vmatpush1.bf16.msra.mxu0 0
      %765 = vmatprep.subr.bf16.mxu0 0
      %766 = vmatpush1.bf16.msra.mxu0 0
      %767 = vmatprep.subr.bf16.mxu0 0
      %768 = vmatpush1.bf16.msra.mxu0 0
      %769 = vmatprep.subr.bf16.mxu0 0
      %770 = vmatpush1.bf16.msra.mxu0 0
      %771 = vmatprep.subr.bf16.mxu0 0
      %772 = vmatpush1.bf16.msra.mxu0 0
      %773 = vmatprep.subr.bf16.mxu0 0
      %774 = vmatpush1.bf16.msra.mxu0 0
      %775 = vmatprep.subr.bf16.mxu0 0
      %776 = vmatpush1.bf16.msra.mxu0 0
      %777 = vmatprep.subr.bf16.mxu0 0
      %778 = vmatpush1.bf16.msra.mxu0 0
      %779 = vmatprep.subr.bf16.mxu0 0
      %780 = vmatpush1.bf16.msra.mxu0 0
      %781 = vmatprep.subr.bf16.mxu0 0
      %782 = vmatpush1.bf16.msra.mxu0 0
      %783 = vmatprep.mubr.bf16.mxu0 0
      %784 = vmatmul.mubr.bf16.gmra.mrb[0].mxu0 %v746
      %v785 = vpop.f32.mrb[0].mxu0
      %v786 = vadd.f32 0.0, %v785
      %v787 = vpop.f32.mrb[0].mxu0
      %v788 = vpop.f32.mrb[0].mxu0
      %v789 = vadd.f32 0.0, %v788
      %v790 = vpop.f32.mrb[0].mxu0
      %791 = vmatprep.mubr.bf16.mxu0 0
      %792 = vmatmul.mubr.bf16.gmra.mrb[0].mxu0 %v749
      %v793 = vpop.f32.mrb[0].mxu0
      %v794 = vadd.f32 0.0, %v793
      %v795 = vpop.f32.mrb[0].mxu0
      %v796 = vpop.f32.mrb[0].mxu0
      %v797 = vadd.f32 0.0, %v796
      %v798 = vpop.f32.mrb[0].mxu0
      %799 = vdwg.mxu0
      %804 = vrot.lane.b32.xlu0 %v786, 8
      %v805 = vpop.permute.xlu0 %804
      %806 = vrot.lane.b32.xlu0 %v789, 8
      %v807 = vpop.permute.xlu0 %806
      %808 = vrot.lane.b32.xlu0 %v794, 8
      %v809 = vpop.permute.xlu0 %808
      %810 = vrot.lane.b32.xlu0 %v797, 8
      %v811 = vpop.permute.xlu0 %810
      %v816 = vsel %vm333, %v786, %v805
      %v817 = vsel %vm333, %v789, %v807
      %v818 = vsel %vm333, %v794, %v809
      %v819 = vsel %vm333, %v797, %v811
      %820 = vst.msk [vmem:[%s298] sm:$0xff] %vm348, %v816
      %821 = vst.msk [vmem:[%s298 + $0x8] sm:$0xff] %vm348, %v817
      %822 = vst.msk [vmem:[%s298 + $0x10] sm:$0xff] %vm348, %v818
      %823 = vst.msk [vmem:[%s298 + $0x18] sm:$0xff] %vm348, %v819
      %s824 = smul.u32 4, %s21
      %p825 = scmp.lt.s32.totalorder %s20, 1
      %s826 = scalar_select %p825, %s20, 1
      %p827 = scmp.lt.s32.totalorder %s824, 3
      %s828 = scalar_select %p827, %s824, 3
      %s829 = smul.addr %s826, 4
      %s830 = sadd.s32 %s828, %s829
      %s831 = smul.addr %s830, 8
      %s832 = scalar_lea.vmem %s5, %s831
      // Predicated region
      $region41: #{mam_spectral_transform.14} parent=39 // pred_check
        %p833 = pneg %p167
      $region42: #{mam_spectral_transform.14} parent=39 // pred_check_branch
        %835 = sbr.rel (%p833) target = $region44
      $region43: #{mam_spectral_transform.14} parent=39 // pred_region
        %s836 = smul.u32 4, %s21
      $region44: #{mam_spectral_transform.14} parent=39 // pred_fallthru
        _
    $region40: #{mam_spectral_transform.14} parent=5 // pred_fallthru
      _
    %p837 = scmp.le.s32.totalorder 2, %s11
    // Predicated region
    $region45: #{mam_spectral_transform.14} parent=5 // pred_check
      %p838 = pneg %p837
    $region46: #{mam_spectral_transform.14} parent=5 // pred_check_branch
      %840 = sbr.rel (%p838) target = $region48
    $region47: #{mam_spectral_transform.14} parent=5 // pred_region
      %s841 = ssub.s32 %s11, 2
      // Predicated region
      $region49: #{mam_spectral_transform.14} parent=47 // pred_check
        %p842 = pneg %p173
      $region50: #{mam_spectral_transform.14} parent=47 // pred_check_branch
        %844 = sbr.rel (%p842) target = $region52
      $region51: #{mam_spectral_transform.14} parent=47 // pred_region
        %s845 = smul.u32 4, %s23
        %p846 = scmp.lt.s32.totalorder %s22, 1
        %s847 = scalar_select %p846, %s22, 1
        %p848 = scmp.lt.s32.totalorder %s845, 3
        %s849 = scalar_select %p848, %s845, 3
        %s850 = smul.addr %s847, 4
        %s851 = sadd.s32 %s849, %s850
        %s852 = smul.addr %s851, 8
        %s853 = scalar_lea.vmem %s5, %s852
      $region52: #{mam_spectral_transform.14} parent=47 // pred_fallthru
        _
    $region48: #{mam_spectral_transform.14} parent=5 // pred_fallthru
      _
  $region6: #{mam_spectral_transform.14} parent=0 // loop_footer
    %s15 = sadd.s32 1, %s11
  $region7: #{mam_spectral_transform.14} parent=0 // loop_footer_branch
    %10 = sbr.rel target = $region3
  $region8: #{mam_spectral_transform.14} parent=0 // loop_exit
    _

// kernel: mam_spectral_transform.9
$region0: #{mam_spectral_transform.9}
  #allocation0 [shape = 'u32[]', space=smem, size = 0x4, offset = 0x4, fixed_abs, tag = 'smem constant byte address 0x4 - core index']
  #allocation1 [shape = 'u32[144,128]{1,0:T(1,128)}', space=vmem, size = 0x12000, scoped, tag = 'internal scratch']
  %s0 = inlined_call_operand.vmem [shape: f32[2,4,16,16], index: 0, kind: input, shape index: {}]
  %s1 = inlined_call_operand.vmem [shape: bf16[16,16], index: 1, kind: input, shape index: {}]
  %s2 = inlined_call_operand.vmem [shape: bf16[16,16], index: 2, kind: input, shape index: {}]
  %s3 = inlined_call_operand.vmem [shape: bf16[32,16], index: 3, kind: input, shape index: {}]
  %s4 = inlined_call_operand.vmem [shape: bf16[32,16], index: 4, kind: input, shape index: {}]
  %s5 = inlined_call_operand.vmem [shape: bf16[2,4,16,16], index: 5, kind: output, shape index: {0}]
  %s6 = inlined_call_operand.vmem [shape: bf16[2,4,16,16], index: 6, kind: output, shape index: {1}]
  %7 = xla_tuple %s5, %s6
  %s8 = sld [smem:[#allocation0]]
  $region61: #{mam_spectral_transform.9} parent=0
    _
  %s10 = ssub.s32 1, %s8
  %s11 = scalar_select 0, %s10, %s8
  loop: start=0, step=1, limit=4
  $region2: #{mam_spectral_transform.9} parent=0 // loop_pre_header
    _
  $region3: #{mam_spectral_transform.9} parent=0 // loop_header
    %s13 = sphi 0, %s17
    %p14 = scmp.ge.s32.totalorder %s13, 4
    %s20 = sphi 0, %s32
    %s21 = sphi 0, %s28
    %s22 = sphi 0, %s20
    %s23 = sphi 0, %s21
    %s24 = sphi 0, %s22
    %s25 = sphi 0, %s23
    %s37 = sphi 0, %s39
    %s40 = sphi 0, %s37
    %s41 = sphi 0, %s40
    %s57 = sphi 0, %s41
    %s61 = sphi 0, %s61
    %s63 = sphi 0, %s61
    %s64 = sphi 0, %s63
    %s78 = sphi 0, %s64
    %s82 = sphi 0, %s82
    %s84 = sphi 0, %s82
    %s85 = sphi 0, %s84
    %s99 = sphi 0, %s85
    %s103 = sphi 0, %s103
    %s105 = sphi 0, %s103
    %s106 = sphi 0, %s105
    %s120 = sphi 0, %s106
    %s124 = sphi 0, %s124
    %s126 = sphi 0, %s124
    %s127 = sphi 0, %s126
    %s141 = sphi 0, %s127
    %s149 = sphi 0, %s151
    %s152 = sphi 0, %s149
    %s153 = sphi 0, %s152
    %s169 = sphi 0, %s153
    %s177 = sphi 0, %s179
    %s180 = sphi 0, %s177
    %s181 = sphi 0, %s180
    %s197 = sphi 0, %s181
  $region4: #{mam_spectral_transform.9} parent=0 // loop_header_branch
    %16 = sbr.rel (%p14) target = $region8
  $region5: #{mam_spectral_transform.9} parent=0 // loop_body
    %s18 = ssub.s32 %s13, 1
    %s19 = ssub.s32 %s13, 2
    %s26 = sadd.s32 1, %s21
    %p27 = scmp.ge.s32.totalorder %s26, 1
    %s28 = scalar_select %p27, 0, %s26
    %s29 = sadd.s32 1, %s20
    %s30 = scalar_select %p27, %s29, %s20
    %p31 = scmp.ge.s32.totalorder %s30, 2
    %s32 = scalar_select %p31, 0, %s30
    %s33 = ssub.s32 %s20, %s32
    %s34 = ssub.s32 %s21, %s28
    %s35 = sor.u32 %s33, %s34
    %p36 = scmp.eq.s32.totalorder %s35, 0
    %s38 = sadd.s32 %s37, 1
    %s39 = scalar_select %p36, %s37, %s38
    %p42 = pneg %p36
    %p43 = scmp.eq.s32.totalorder %s13, 1
    %p44 = por %p42, %p43
    %p45 = scmp.ne.s32.totalorder %s37, %s40
    %p46 = scmp.eq.s32.totalorder %s13, 0
    %p47 = por %p45, %p46
    %p48 = scmp.ne.s32.totalorder %s37, %s40
    %p49 = scmp.eq.s32.totalorder %s18, 1
    %p50 = por %p48, %p49
    %p51 = scmp.ne.s32.totalorder %s40, %s41
    %p52 = scmp.eq.s32.totalorder %s18, 0
    %p53 = por %p51, %p52
    %p54 = scmp.ne.s32.totalorder %s40, %s41
    %p55 = scmp.eq.s32.totalorder %s19, 1
    %p56 = por %p54, %p55
    %p58 = scmp.ne.s32.totalorder %s41, %s57
    %p59 = scmp.eq.s32.totalorder %s19, 0
    %p60 = por %p58, %p59
    %s62 = sadd.s32 %s61, 1
    %p65 = scmp.eq.s32.totalorder %s13, 1
    %p66 = scmp.ne.s32.totalorder %s61, %s63
    %p67 = scmp.eq.s32.totalorder %s13, 0
    %p68 = por %p66, %p67
    %p69 = scmp.ne.s32.totalorder %s61, %s63
    %p70 = scmp.eq.s32.totalorder %s18, 1
    %p71 = por %p69, %p70
    %p72 = scmp.ne.s32.totalorder %s63, %s64
    %p73 = scmp.eq.s32.totalorder %s18, 0
    %p74 = por %p72, %p73
    %p75 = scmp.ne.s32.totalorder %s63, %s64
    %p76 = scmp.eq.s32.totalorder %s19, 1
    %p77 = por %p75, %p76
    %p79 = scmp.ne.s32.totalorder %s64, %s78
    %p80 = scmp.eq.s32.totalorder %s19, 0
    %p81 = por %p79, %p80
    %s83 = sadd.s32 %s82, 1
    %p86 = scmp.eq.s32.totalorder %s13, 1
    %p87 = scmp.ne.s32.totalorder %s82, %s84
    %p88 = scmp.eq.s32.totalorder %s13, 0
    %p89 = por %p87, %p88
    %p90 = scmp.ne.s32.totalorder %s82, %s84
    %p91 = scmp.eq.s32.totalorder %s18, 1
    %p92 = por %p90, %p91
    %p93 = scmp.ne.s32.totalorder %s84, %s85
    %p94 = scmp.eq.s32.totalorder %s18, 0
    %p95 = por %p93, %p94
    %p96 = scmp.ne.s32.totalorder %s84, %s85
    %p97 = scmp.eq.s32.totalorder %s19, 1
    %p98 = por %p96, %p97
    %p100 = scmp.ne.s32.totalorder %s85, %s99
    %p101 = scmp.eq.s32.totalorder %s19, 0
    %p102 = por %p100, %p101
    %s104 = sadd.s32 %s103, 1
    %p107 = scmp.eq.s32.totalorder %s13, 1
    %p108 = scmp.ne.s32.totalorder %s103, %s105
    %p109 = scmp.eq.s32.totalorder %s13, 0
    %p110 = por %p108, %p109
    %p111 = scmp.ne.s32.totalorder %s103, %s105
    %p112 = scmp.eq.s32.totalorder %s18, 1
    %p113 = por %p111, %p112
    %p114 = scmp.ne.s32.totalorder %s105, %s106
    %p115 = scmp.eq.s32.totalorder %s18, 0
    %p116 = por %p114, %p115
    %p117 = scmp.ne.s32.totalorder %s105, %s106
    %p118 = scmp.eq.s32.totalorder %s19, 1
    %p119 = por %p117, %p118
    %p121 = scmp.ne.s32.totalorder %s106, %s120
    %p122 = scmp.eq.s32.totalorder %s19, 0
    %p123 = por %p121, %p122
    %s125 = sadd.s32 %s124, 1
    %p128 = scmp.eq.s32.totalorder %s13, 1
    %p129 = scmp.ne.s32.totalorder %s124, %s126
    %p130 = scmp.eq.s32.totalorder %s13, 0
    %p131 = por %p129, %p130
    %p132 = scmp.ne.s32.totalorder %s124, %s126
    %p133 = scmp.eq.s32.totalorder %s18, 1
    %p134 = por %p132, %p133
    %p135 = scmp.ne.s32.totalorder %s126, %s127
    %p136 = scmp.eq.s32.totalorder %s18, 0
    %p137 = por %p135, %p136
    %p138 = scmp.ne.s32.totalorder %s126, %s127
    %p139 = scmp.eq.s32.totalorder %s19, 1
    %p140 = por %p138, %p139
    %p142 = scmp.ne.s32.totalorder %s127, %s141
    %p143 = scmp.eq.s32.totalorder %s19, 0
    %p144 = por %p142, %p143
    %s145 = ssub.s32 %s20, %s32
    %s146 = ssub.s32 %s21, %s28
    %s147 = sor.u32 %s145, %s146
    %p148 = scmp.eq.s32.totalorder %s147, 0
    %s150 = sadd.s32 %s149, 1
    %s151 = scalar_select %p148, %s149, %s150
    %p154 = pneg %p148
    %p155 = scmp.eq.s32.totalorder %s13, 1
    %p156 = por %p154, %p155
    %p157 = scmp.ne.s32.totalorder %s149, %s152
    %p158 = scmp.eq.s32.totalorder %s13, 0
    %p159 = por %p157, %p158
    %p160 = scmp.ne.s32.totalorder %s149, %s152
    %p161 = scmp.eq.s32.totalorder %s18, 1
    %p162 = por %p160, %p161
    %p163 = scmp.ne.s32.totalorder %s152, %s153
    %p164 = scmp.eq.s32.totalorder %s18, 0
    %p165 = por %p163, %p164
    %p166 = scmp.ne.s32.totalorder %s152, %s153
    %p167 = scmp.eq.s32.totalorder %s19, 1
    %p168 = por %p166, %p167
    %p170 = scmp.ne.s32.totalorder %s153, %s169
    %p171 = scmp.eq.s32.totalorder %s19, 0
    %p172 = por %p170, %p171
    %s173 = ssub.s32 %s20, %s32
    %s174 = ssub.s32 %s21, %s28
    %s175 = sor.u32 %s173, %s174
    %p176 = scmp.eq.s32.totalorder %s175, 0
    %s178 = sadd.s32 %s177, 1
    %s179 = scalar_select %p176, %s177, %s178
    %p182 = pneg %p176
    %p183 = scmp.eq.s32.totalorder %s13, 1
    %p184 = por %p182, %p183
    %p185 = scmp.ne.s32.totalorder %s177, %s180
    %p186 = scmp.eq.s32.totalorder %s13, 0
    %p187 = por %p185, %p186
    %p188 = scmp.ne.s32.totalorder %s177, %s180
    %p189 = scmp.eq.s32.totalorder %s18, 1
    %p190 = por %p188, %p189
    %p191 = scmp.ne.s32.totalorder %s180, %s181
    %p192 = scmp.eq.s32.totalorder %s18, 0
    %p193 = por %p191, %p192
    %p194 = scmp.ne.s32.totalorder %s180, %s181
    %p195 = scmp.eq.s32.totalorder %s19, 1
    %p196 = por %p194, %p195
    %p198 = scmp.ne.s32.totalorder %s181, %s197
    %p199 = scmp.eq.s32.totalorder %s19, 0
    %p200 = por %p198, %p199
    %p201 = scmp.le.s32.totalorder 1, %s13
    %p202 = scmp.lt.s32.totalorder %s13, 3
    %p203 = pnand %p201, %p202
    %p204 = pneg %p203
    // Predicated region
    $region9: #{mam_spectral_transform.9} parent=5 // pred_check
      _
    $region10: #{mam_spectral_transform.9} parent=5 // pred_check_branch
      %206 = sbr.rel (%p203) target = $region12
    $region11: #{mam_spectral_transform.9} parent=5 // pred_region
      %s207 = ssub.s32 %s13, 1
      // Predicated region
      $region13: #{mam_spectral_transform.9} parent=11 // pred_check
        %p208 = pneg %p74
      $region14: #{mam_spectral_transform.9} parent=11 // pred_check_branch
        %210 = sbr.rel (%p208) target = $region16
      $region15: #{mam_spectral_transform.9} parent=11 // pred_region
        _
      $region16: #{mam_spectral_transform.9} parent=11 // pred_fallthru
        _
      // Predicated region
      $region17: #{mam_spectral_transform.9} parent=11 // pred_check
        %p211 = pneg %p95
      $region18: #{mam_spectral_transform.9} parent=11 // pred_check_branch
        %213 = sbr.rel (%p211) target = $region20
      $region19: #{mam_spectral_transform.9} parent=11 // pred_region
        _
      $region20: #{mam_spectral_transform.9} parent=11 // pred_fallthru
        _
      // Predicated region
      $region21: #{mam_spectral_transform.9} parent=11 // pred_check
        %p214 = pneg %p116
      $region22: #{mam_spectral_transform.9} parent=11 // pred_check_branch
        %216 = sbr.rel (%p214) target = $region24
      $region23: #{mam_spectral_transform.9} parent=11 // pred_region
        _
      $region24: #{mam_spectral_transform.9} parent=11 // pred_fallthru
        _
      // Predicated region
      $region25: #{mam_spectral_transform.9} parent=11 // pred_check
        %p217 = pneg %p137
      $region26: #{mam_spectral_transform.9} parent=11 // pred_check_branch
        %219 = sbr.rel (%p217) target = $region28
      $region27: #{mam_spectral_transform.9} parent=11 // pred_region
        _
      $region28: #{mam_spectral_transform.9} parent=11 // pred_fallthru
        _
    $region12: #{mam_spectral_transform.9} parent=5 // pred_fallthru
      _
    %p220 = scmp.lt.s32.totalorder %s13, 2
    // Predicated region
    $region29: #{mam_spectral_transform.9} parent=5 // pred_check
      %p221 = pneg %p220
    $region30: #{mam_spectral_transform.9} parent=5 // pred_check_branch
      %223 = sbr.rel (%p221) target = $region32
    $region31: #{mam_spectral_transform.9} parent=5 // pred_region
      // Predicated region
      $region33: #{mam_spectral_transform.9} parent=31 // pred_check
        %p224 = pneg %p47
      $region34: #{mam_spectral_transform.9} parent=31 // pred_check_branch
        %226 = sbr.rel (%p224) target = $region36
      $region35: #{mam_spectral_transform.9} parent=31 // pred_region
        %s227 = smul.u32 4, %s21
        %p228 = scmp.lt.s32.totalorder %s20, 1
        %s229 = scalar_select %p228, %s20, 1
        %p230 = scmp.lt.s32.totalorder %s227, 3
        %s231 = scalar_select %p230, %s227, 3
        %s232 = smul.addr %s231, 2
        %s233 = smul.addr %s229, 8
        %s234 = sadd.s32 %s232, %s233
        %s235 = smul.addr %s234, 8
        %s236 = scalar_lea.vmem %s0, %s235
        %s237 = smul.u32 4, %s21
      $region36: #{mam_spectral_transform.9} parent=31 // pred_fallthru
        _
    $region32: #{mam_spectral_transform.9} parent=5 // pred_fallthru
      _
    %p238 = scmp.le.s32.totalorder 1, %s13
    %p239 = scmp.lt.s32.totalorder %s13, 3
    %p240 = pnand %p238, %p239
    %p241 = pneg %p240
    // Predicated region
    $region37: #{mam_spectral_transform.9} parent=5 // pred_check
      _
    $region38: #{mam_spectral_transform.9} parent=5 // pred_check_branch
      %243 = sbr.rel (%p240) target = $region40
    $region39: #{mam_spectral_transform.9} parent=5 // pred_region
      %s244 = ssub.s32 %s13, 1
      %s245 = smul.u32 4, %s23
      %p246 = scmp.lt.s32.totalorder %s22, 1
      %s247 = scalar_select %p246, %s22, 1
      %p248 = scmp.lt.s32.totalorder %s245, 3
      %s249 = scalar_select %p248, %s245, 3
      %s250 = smul.addr %s249, 2
      %s251 = smul.addr %s247, 8
      %s252 = sadd.s32 %s250, %s251
      %s253 = smul.addr %s252, 8
      %s254 = scalar_lea.vmem %s0, %s253
      %p255 = pneg %p53
      %p256 = pneg %p50
      %p257 = pneg %p74
      %p258 = pneg %p71
      %p259 = pneg %p95
      %p260 = pneg %p92
      %p261 = pneg %p116
      %p262 = pneg %p113
      %p263 = pneg %p137
      %p264 = pneg %p134
      %p265 = pneg %p165
      %p266 = pneg %p162
      %s267 = smul.u32 4, %s23
      %p268 = scmp.lt.s32.totalorder %s22, 1
      %s269 = scalar_select %p268, %s22, 1
      %p270 = scmp.lt.s32.totalorder %s267, 3
      %s271 = scalar_select %p270, %s267, 3
      %s272 = smul.addr %s271, 2
      %s273 = smul.addr %s269, 8
      %s274 = sadd.s32 %s272, %s273
      %s275 = smul.addr %s274, 4
      %s276 = scalar_lea.vmem %s5, %s275
      %p277 = pneg %p193
      %p278 = pneg %p190
      %s279 = smul.u32 4, %s23
      %p280 = scmp.lt.s32.totalorder %s22, 1
      %s281 = scalar_select %p280, %s22, 1
      %p282 = scmp.lt.s32.totalorder %s279, 3
      %s283 = scalar_select %p282, %s279, 3
      %s284 = smul.addr %s283, 2
      %s285 = smul.addr %s281, 8
      %s286 = sadd.s32 %s284, %s285
      %s287 = smul.addr %s286, 4
      %s288 = scalar_lea.vmem %s6, %s287
      %s289 = smul.u32 4, %s23
      %p290 = scmp.lt.s32.totalorder %s22, 1
      %s291 = scalar_select %p290, %s22, 1
      %p292 = scmp.lt.s32.totalorder %s289, 3
      %s293 = scalar_select %p292, %s289, 3
      %s294 = smul.addr %s293, 2
      %s295 = smul.addr %s291, 8
      %s296 = sadd.s32 %s294, %s295
      %s297 = smul.addr %s296, 8
      %s298 = scalar_lea.vmem %s0, %s297
      %s299 = smul.u32 4, %s23
      %s300 = smul.u32 4, %s23
      %p301 = scmp.lt.s32.totalorder %s22, 1
      %s302 = scalar_select %p301, %s22, 1
      %p303 = scmp.lt.s32.totalorder %s300, 3
      %s304 = scalar_select %p303, %s300, 3
      %s305 = smul.addr %s304, 2
      %s306 = smul.addr %s302, 8
      %s307 = sadd.s32 %s305, %s306
      %s308 = smul.addr %s307, 4
      %s309 = scalar_lea.vmem %s5, %s308
      %s310 = smul.u32 4, %s23
      %s311 = smul.u32 4, %s23
      %p312 = scmp.lt.s32.totalorder %s22, 1
      %s313 = scalar_select %p312, %s22, 1
      %p314 = scmp.lt.s32.totalorder %s311, 3
      %s315 = scalar_select %p314, %s311, 3
      %s316 = smul.addr %s315, 2
      %s317 = smul.addr %s313, 8
      %s318 = sadd.s32 %s316, %s317
      %s319 = smul.addr %s318, 4
      %s320 = scalar_lea.vmem %s6, %s319
      %s321 = smul.u32 4, %s23
      %v323 = vld [vmem:[%s298] sm:$0xff]
      %v324 = vld [vmem:[%s298 + $0x8] sm:$0xff]
      %v325 = vld [vmem:[%s298 + $0x10] sm:$0xff]
      %v326 = vld [vmem:[%s298 + $0x18] sm:$0xff]
      %v327 = vld [vmem:[%s298 + $0x20] sm:$0xff]
      %v328 = vld [vmem:[%s298 + $0x28] sm:$0xff]
      %v329 = vld [vmem:[%s298 + $0x30] sm:$0xff]
      %v330 = vld [vmem:[%s298 + $0x38] sm:$0xff]
      %v331 = vpack.c.bf16 %v324, %v323
      %v332 = vpack.c.bf16 %v326, %v325
      %v333 = vpack.c.bf16 %v328, %v327
      %v334 = vpack.c.bf16 %v330, %v329
      %v335 = vld [vmem:[%s1] sm:$0xf]
      %v336 = vld [vmem:[%s1 + $0x4] sm:$0xf]
      %v339 = vunpack.c.l.b16 %v335
      %v340 = vunpack.c.l.b16 %v336
      %v341 = vpack.c.b16 %v340, %v339
      %vm343 = vcmask 130048
      %v345 = vsel %vm343, %v331, 0
      %v348 = vsel %vm343, %v332, 0
      %v351 = vsel %vm343, %v333, 0
      %v354 = vsel %vm343, %v334, 0
      %356 = vmatprep.subr.bf16.mxu0 0
      %357 = vmatpush1.bf16.msra.mxu0 %v341
      %358 = vmatprep.subr.bf16.mxu0 0
      %359 = vmatpush1.bf16.msra.mxu0 0
      %360 = vmatprep.subr.bf16.mxu0 0
      %361 = vmatpush1.bf16.msra.mxu0 0
      %362 = vmatprep.subr.bf16.mxu0 0
      %363 = vmatpush1.bf16.msra.mxu0 0
      %364 = vmatprep.subr.bf16.mxu0 0
      %365 = vmatpush1.bf16.msra.mxu0 0
      %366 = vmatprep.subr.bf16.mxu0 0
      %367 = vmatpush1.bf16.msra.mxu0 0
      %368 = vmatprep.subr.bf16.mxu0 0
      %369 = vmatpush1.bf16.msra.mxu0 0
      %370 = vmatprep.subr.bf16.mxu0 0
      %371 = vmatpush1.bf16.msra.mxu0 0
      %372 = vmatprep.subr.bf16.mxu0 0
      %373 = vmatpush1.bf16.msra.mxu0 0
      %374 = vmatprep.subr.bf16.mxu0 0
      %375 = vmatpush1.bf16.msra.mxu0 0
      %376 = vmatprep.subr.bf16.mxu0 0
      %377 = vmatpush1.bf16.msra.mxu0 0
      %378 = vmatprep.subr.bf16.mxu0 0
      %379 = vmatpush1.bf16.msra.mxu0 0
      %380 = vmatprep.subr.bf16.mxu0 0
      %381 = vmatpush1.bf16.msra.mxu0 0
      %382 = vmatprep.subr.bf16.mxu0 0
      %383 = vmatpush1.bf16.msra.mxu0 0
      %384 = vmatprep.subr.bf16.mxu0 0
      %385 = vmatpush1.bf16.msra.mxu0 0
      %386 = vmatprep.subr.bf16.mxu0 0
      %387 = vmatpush1.bf16.msra.mxu0 0
      %388 = vmatprep.mubr.bf16.mxu0 0
      %389 = vmatmul.mubr.bf16.gmra.mrb[0].mxu0 %v345
      %v390 = vpop.f32.mrb[0].mxu0
      %v391 = vadd.f32 0.0, %v390
      %v392 = vpop.f32.mrb[0].mxu0
      %v393 = vpop.f32.mrb[0].mxu0
      %v394 = vadd.f32 0.0, %v393
      %v395 = vpop.f32.mrb[0].mxu0
      %396 = vmatprep.mubr.bf16.mxu0 0
      %397 = vmatmul.mubr.bf16.gmra.mrb[0].mxu0 %v348
      %v398 = vpop.f32.mrb[0].mxu0
      %v399 = vadd.f32 0.0, %v398
      %v400 = vpop.f32.mrb[0].mxu0
      %v401 = vpop.f32.mrb[0].mxu0
      %v402 = vadd.f32 0.0, %v401
      %v403 = vpop.f32.mrb[0].mxu0
      %404 = vmatprep.mubr.bf16.mxu0 0
      %405 = vmatmul.mubr.bf16.gmra.mrb[0].mxu0 %v351
      %v406 = vpop.f32.mrb[0].mxu0
      %v407 = vadd.f32 0.0, %v406
      %v408 = vpop.f32.mrb[0].mxu0
      %v409 = vpop.f32.mrb[0].mxu0
      %v410 = vadd.f32 0.0, %v409
      %v411 = vpop.f32.mrb[0].mxu0
      %412 = vmatprep.mubr.bf16.mxu0 0
      %413 = vmatmul.mubr.bf16.gmra.mrb[0].mxu0 %v354
      %v414 = vpop.f32.mrb[0].mxu0
      %v415 = vadd.f32 0.0, %v414
      %v416 = vpop.f32.mrb[0].mxu0
      %v417 = vpop.f32.mrb[0].mxu0
      %v418 = vadd.f32 0.0, %v417
      %v419 = vpop.f32.mrb[0].mxu0
      %420 = vdwg.mxu0
      %v421 = vld [vmem:[%s2] sm:$0xf]
      %v422 = vld [vmem:[%s2 + $0x4] sm:$0xf]
      %v425 = vunpack.c.l.b16 %v421
      %v426 = vunpack.c.l.b16 %v422
      %v427 = vpack.c.b16 %v426, %v425
      %429 = vmatprep.subr.bf16.mxu0 0
      %430 = vmatpush1.bf16.msra.mxu0 %v427
      %431 = vmatprep.subr.bf16.mxu0 0
      %432 = vmatpush1.bf16.msra.mxu0 0
      %433 = vmatprep.subr.bf16.mxu0 0
      %434 = vmatpush1.bf16.msra.mxu0 0
      %435 = vmatprep.subr.bf16.mxu0 0
      %436 = vmatpush1.bf16.msra.mxu0 0
      %437 = vmatprep.subr.bf16.mxu0 0
      %438 = vmatpush1.bf16.msra.mxu0 0
      %439 = vmatprep.subr.bf16.mxu0 0
      %440 = vmatpush1.bf16.msra.mxu0 0
      %441 = vmatprep.subr.bf16.mxu0 0
      %442 = vmatpush1.bf16.msra.mxu0 0
      %443 = vmatprep.subr.bf16.mxu0 0
      %444 = vmatpush1.bf16.msra.mxu0 0
      %445 = vmatprep.subr.bf16.mxu0 0
      %446 = vmatpush1.bf16.msra.mxu0 0
      %447 = vmatprep.subr.bf16.mxu0 0
      %448 = vmatpush1.bf16.msra.mxu0 0
      %449 = vmatprep.subr.bf16.mxu0 0
      %450 = vmatpush1.bf16.msra.mxu0 0
      %451 = vmatprep.subr.bf16.mxu0 0
      %452 = vmatpush1.bf16.msra.mxu0 0
      %453 = vmatprep.subr.bf16.mxu0 0
      %454 = vmatpush1.bf16.msra.mxu0 0
      %455 = vmatprep.subr.bf16.mxu0 0
      %456 = vmatpush1.bf16.msra.mxu0 0
      %457 = vmatprep.subr.bf16.mxu0 0
      %458 = vmatpush1.bf16.msra.mxu0 0
      %459 = vmatprep.subr.bf16.mxu0 0
      %460 = vmatpush1.bf16.msra.mxu0 0
      %461 = vmatprep.mubr.bf16.mxu0 0
      %462 = vmatmul.mubr.bf16.gmra.mrb[0].mxu0 %v345
      %v463 = vpop.f32.mrb[0].mxu0
      %v464 = vadd.f32 0.0, %v463
      %v465 = vpop.f32.mrb[0].mxu0
      %v466 = vpop.f32.mrb[0].mxu0
      %v467 = vadd.f32 0.0, %v466
      %v468 = vpop.f32.mrb[0].mxu0
      %469 = vmatprep.mubr.bf16.mxu0 0
      %470 = vmatmul.mubr.bf16.gmra.mrb[0].mxu0 %v348
      %v471 = vpop.f32.mrb[0].mxu0
      %v472 = vadd.f32 0.0, %v471
      %v473 = vpop.f32.mrb[0].mxu0
      %v474 = vpop.f32.mrb[0].mxu0
      %v475 = vadd.f32 0.0, %v474
      %v476 = vpop.f32.mrb[0].mxu0
      %477 = vmatprep.mubr.bf16.mxu0 0
      %478 = vmatmul.mubr.bf16.gmra.mrb[0].mxu0 %v351
      %v479 = vpop.f32.mrb[0].mxu0
      %v480 = vadd.f32 0.0, %v479
      %v481 = vpop.f32.mrb[0].mxu0
      %v482 = vpop.f32.mrb[0].mxu0
      %v483 = vadd.f32 0.0, %v482
      %v484 = vpop.f32.mrb[0].mxu0
      %485 = vmatprep.mubr.bf16.mxu0 0
      %486 = vmatmul.mubr.bf16.gmra.mrb[0].mxu0 %v354
      %v487 = vpop.f32.mrb[0].mxu0
      %v488 = vadd.f32 0.0, %v487
      %v489 = vpop.f32.mrb[0].mxu0
      %v490 = vpop.f32.mrb[0].mxu0
      %v491 = vadd.f32 0.0, %v490
      %v492 = vpop.f32.mrb[0].mxu0
      %493 = vdwg.mxu0
      %494 = vxpose.xlu0.b32.start [1/16] %v391, 128
      %495 = vxpose.xlu0.b32.cont [2/16] %v394, 128
      %496 = vxpose.xlu0.b32.cont [3/16] 0.0, 128
      %497 = vxpose.xlu0.b32.cont [4/16] 0.0, 128
      %498 = vxpose.xlu0.b32.cont [5/16] 0.0, 128
      %499 = vxpose.xlu0.b32.cont [6/16] 0.0, 128
      %500 = vxpose.xlu0.b32.cont [7/16] 0.0, 128
      %501 = vxpose.xlu0.b32.cont [8/16] 0.0, 128
      %502 = vxpose.xlu0.b32.cont [9/16] 0.0, 128
      %503 = vxpose.xlu0.b32.cont [10/16] 0.0, 128
      %504 = vxpose.xlu0.b32.cont [11/16] 0.0, 128
      %505 = vxpose.xlu0.b32.cont [12/16] 0.0, 128
      %506 = vxpose.xlu0.b32.cont [13/16] 0.0, 128
      %507 = vxpose.xlu0.b32.cont [14/16] 0.0, 128
      %508 = vxpose.xlu0.b32.cont [15/16] 0.0, 128
      %509 = vxpose.xlu0.b32.end [16/16] 0.0, 128
      %v510 = vpop.trf.xlu0
      %v511 = vpop.trf.xlu0
      %v512 = vpop.trf.xlu0
      %v513 = vpop.trf.xlu0
      %v514 = vpop.trf.xlu0
      %v515 = vpop.trf.xlu0
      %v516 = vpop.trf.xlu0
      %v517 = vpop.trf.xlu0
      %v518 = vpop.trf.xlu0
      %v519 = vpop.trf.xlu0
      %v520 = vpop.trf.xlu0
      %v521 = vpop.trf.xlu0
      %v522 = vpop.trf.xlu0
      %v523 = vpop.trf.xlu0
      %v524 = vpop.trf.xlu0
      %v525 = vpop.trf.xlu0
      %526 = vxpose.xlu0.b32.start [1/16] %v399, 128
      %527 = vxpose.xlu0.b32.cont [2/16] %v402, 128
      %528 = vxpose.xlu0.b32.cont [3/16] 0.0, 128
      %529 = vxpose.xlu0.b32.cont [4/16] 0.0, 128
      %530 = vxpose.xlu0.b32.cont [5/16] 0.0, 128
      %531 = vxpose.xlu0.b32.cont [6/16] 0.0, 128
      %532 = vxpose.xlu0.b32.cont [7/16] 0.0, 128
      %533 = vxpose.xlu0.b32.cont [8/16] 0.0, 128
      %534 = vxpose.xlu0.b32.cont [9/16] 0.0, 128
      %535 = vxpose.xlu0.b32.cont [10/16] 0.0, 128
      %536 = vxpose.xlu0.b32.cont [11/16] 0.0, 128
      %537 = vxpose.xlu0.b32.cont [12/16] 0.0, 128
      %538 = vxpose.xlu0.b32.cont [13/16] 0.0, 128
      %539 = vxpose.xlu0.b32.cont [14/16] 0.0, 128
      %540 = vxpose.xlu0.b32.cont [15/16] 0.0, 128
      %541 = vxpose.xlu0.b32.end [16/16] 0.0, 128
      %v542 = vpop.trf.xlu0
      %v543 = vpop.trf.xlu0
      %v544 = vpop.trf.xlu0
      %v545 = vpop.trf.xlu0
      %v546 = vpop.trf.xlu0
      %v547 = vpop.trf.xlu0
      %v548 = vpop.trf.xlu0
      %v549 = vpop.trf.xlu0
      %v550 = vpop.trf.xlu0
      %v551 = vpop.trf.xlu0
      %v552 = vpop.trf.xlu0
      %v553 = vpop.trf.xlu0
      %v554 = vpop.trf.xlu0
      %v555 = vpop.trf.xlu0
      %v556 = vpop.trf.xlu0
      %v557 = vpop.trf.xlu0
      %558 = vxpose.xlu0.b32.start [1/16] %v407, 128
      %559 = vxpose.xlu0.b32.cont [2/16] %v410, 128
      %560 = vxpose.xlu0.b32.cont [3/16] 0.0, 128
      %561 = vxpose.xlu0.b32.cont [4/16] 0.0, 128
      %562 = vxpose.xlu0.b32.cont [5/16] 0.0, 128
      %563 = vxpose.xlu0.b32.cont [6/16] 0.0, 128
      %564 = vxpose.xlu0.b32.cont [7/16] 0.0, 128
      %565 = vxpose.xlu0.b32.cont [8/16] 0.0, 128
      %566 = vxpose.xlu0.b32.cont [9/16] 0.0, 128
      %567 = vxpose.xlu0.b32.cont [10/16] 0.0, 128
      %568 = vxpose.xlu0.b32.cont [11/16] 0.0, 128
      %569 = vxpose.xlu0.b32.cont [12/16] 0.0, 128
      %570 = vxpose.xlu0.b32.cont [13/16] 0.0, 128
      %571 = vxpose.xlu0.b32.cont [14/16] 0.0, 128
      %572 = vxpose.xlu0.b32.cont [15/16] 0.0, 128
      %573 = vxpose.xlu0.b32.end [16/16] 0.0, 128
      %v574 = vpop.trf.xlu0
      %v575 = vpop.trf.xlu0
      %v576 = vpop.trf.xlu0
      %v577 = vpop.trf.xlu0
      %v578 = vpop.trf.xlu0
      %v579 = vpop.trf.xlu0
      %v580 = vpop.trf.xlu0
      %v581 = vpop.trf.xlu0
      %v582 = vpop.trf.xlu0
      %v583 = vpop.trf.xlu0
      %v584 = vpop.trf.xlu0
      %v585 = vpop.trf.xlu0
      %v586 = vpop.trf.xlu0
      %v587 = vpop.trf.xlu0
      %v588 = vpop.trf.xlu0
      %v589 = vpop.trf.xlu0
      %590 = vxpose.xlu0.b32.start [1/16] %v415, 128
      %591 = vxpose.xlu0.b32.cont [2/16] %v418, 128
      %592 = vxpose.xlu0.b32.cont [3/16] 0.0, 128
      %593 = vxpose.xlu0.b32.cont [4/16] 0.0, 128
      %594 = vxpose.xlu0.b32.cont [5/16] 0.0, 128
      %595 = vxpose.xlu0.b32.cont [6/16] 0.0, 128
      %596 = vxpose.xlu0.b32.cont [7/16] 0.0, 128
      %597 = vxpose.xlu0.b32.cont [8/16] 0.0, 128
      %598 = vxpose.xlu0.b32.cont [9/16] 0.0, 128
      %599 = vxpose.xlu0.b32.cont [10/16] 0.0, 128
      %600 = vxpose.xlu0.b32.cont [11/16] 0.0, 128
      %601 = vxpose.xlu0.b32.cont [12/16] 0.0, 128
      %602 = vxpose.xlu0.b32.cont [13/16] 0.0, 128
      %603 = vxpose.xlu0.b32.cont [14/16] 0.0, 128
      %604 = vxpose.xlu0.b32.cont [15/16] 0.0, 128
      %605 = vxpose.xlu0.b32.end [16/16] 0.0, 128
      %v606 = vpop.trf.xlu0
      %v607 = vpop.trf.xlu0
      %v608 = vpop.trf.xlu0
      %v609 = vpop.trf.xlu0
      %v610 = vpop.trf.xlu0
      %v611 = vpop.trf.xlu0
      %v612 = vpop.trf.xlu0
      %v613 = vpop.trf.xlu0
      %v614 = vpop.trf.xlu0
      %v615 = vpop.trf.xlu0
      %v616 = vpop.trf.xlu0
      %v617 = vpop.trf.xlu0
      %v618 = vpop.trf.xlu0
      %v619 = vpop.trf.xlu0
      %v620 = vpop.trf.xlu0
      %v621 = vpop.trf.xlu0
      %622 = vxpose.xlu0.b32.start [1/16] %v464, 128
      %623 = vxpose.xlu0.b32.cont [2/16] %v467, 128
      %624 = vxpose.xlu0.b32.cont [3/16] 0.0, 128
      %625 = vxpose.xlu0.b32.cont [4/16] 0.0, 128
      %626 = vxpose.xlu0.b32.cont [5/16] 0.0, 128
      %627 = vxpose.xlu0.b32.cont [6/16] 0.0, 128
      %628 = vxpose.xlu0.b32.cont [7/16] 0.0, 128
      %629 = vxpose.xlu0.b32.cont [8/16] 0.0, 128
      %630 = vxpose.xlu0.b32.cont [9/16] 0.0, 128
      %631 = vxpose.xlu0.b32.cont [10/16] 0.0, 128
      %632 = vxpose.xlu0.b32.cont [11/16] 0.0, 128
      %633 = vxpose.xlu0.b32.cont [12/16] 0.0, 128
      %634 = vxpose.xlu0.b32.cont [13/16] 0.0, 128
      %635 = vxpose.xlu0.b32.cont [14/16] 0.0, 128
      %636 = vxpose.xlu0.b32.cont [15/16] 0.0, 128
      %637 = vxpose.xlu0.b32.end [16/16] 0.0, 128
      %v638 = vpop.trf.xlu0
      %v639 = vpop.trf.xlu0
      %v640 = vpop.trf.xlu0
      %v641 = vpop.trf.xlu0
      %v642 = vpop.trf.xlu0
      %v643 = vpop.trf.xlu0
      %v644 = vpop.trf.xlu0
      %v645 = vpop.trf.xlu0
      %v646 = vpop.trf.xlu0
      %v647 = vpop.trf.xlu0
      %v648 = vpop.trf.xlu0
      %v649 = vpop.trf.xlu0
      %v650 = vpop.trf.xlu0
      %v651 = vpop.trf.xlu0
      %v652 = vpop.trf.xlu0
      %v653 = vpop.trf.xlu0
      %654 = vxpose.xlu0.b32.start [1/16] %v472, 128
      %655 = vxpose.xlu0.b32.cont [2/16] %v475, 128
      %656 = vxpose.xlu0.b32.cont [3/16] 0.0, 128
      %657 = vxpose.xlu0.b32.cont [4/16] 0.0, 128
      %658 = vxpose.xlu0.b32.cont [5/16] 0.0, 128
      %659 = vxpose.xlu0.b32.cont [6/16] 0.0, 128
      %660 = vxpose.xlu0.b32.cont [7/16] 0.0, 128
      %661 = vxpose.xlu0.b32.cont [8/16] 0.0, 128
      %662 = vxpose.xlu0.b32.cont [9/16] 0.0, 128
      %663 = vxpose.xlu0.b32.cont [10/16] 0.0, 128
      %664 = vxpose.xlu0.b32.cont [11/16] 0.0, 128
      %665 = vxpose.xlu0.b32.cont [12/16] 0.0, 128
      %666 = vxpose.xlu0.b32.cont [13/16] 0.0, 128
      %667 = vxpose.xlu0.b32.cont [14/16] 0.0, 128
      %668 = vxpose.xlu0.b32.cont [15/16] 0.0, 128
      %669 = vxpose.xlu0.b32.end [16/16] 0.0, 128
      %v670 = vpop.trf.xlu0
      %v671 = vpop.trf.xlu0
      %v672 = vpop.trf.xlu0
      %v673 = vpop.trf.xlu0
      %v674 = vpop.trf.xlu0
      %v675 = vpop.trf.xlu0
      %v676 = vpop.trf.xlu0
      %v677 = vpop.trf.xlu0
      %v678 = vpop.trf.xlu0
      %v679 = vpop.trf.xlu0
      %v680 = vpop.trf.xlu0
      %v681 = vpop.trf.xlu0
      %v682 = vpop.trf.xlu0
      %v683 = vpop.trf.xlu0
      %v684 = vpop.trf.xlu0
      %v685 = vpop.trf.xlu0
      %686 = vxpose.xlu0.b32.start [1/16] %v480, 128
      %687 = vxpose.xlu0.b32.cont [2/16] %v483, 128
      %688 = vxpose.xlu0.b32.cont [3/16] 0.0, 128
      %689 = vxpose.xlu0.b32.cont [4/16] 0.0, 128
      %690 = vxpose.xlu0.b32.cont [5/16] 0.0, 128
      %691 = vxpose.xlu0.b32.cont [6/16] 0.0, 128
      %692 = vxpose.xlu0.b32.cont [7/16] 0.0, 128
      %693 = vxpose.xlu0.b32.cont [8/16] 0.0, 128
      %694 = vxpose.xlu0.b32.cont [9/16] 0.0, 128
      %695 = vxpose.xlu0.b32.cont [10/16] 0.0, 128
      %696 = vxpose.xlu0.b32.cont [11/16] 0.0, 128
      %697 = vxpose.xlu0.b32.cont [12/16] 0.0, 128
      %698 = vxpose.xlu0.b32.cont [13/16] 0.0, 128
      %699 = vxpose.xlu0.b32.cont [14/16] 0.0, 128
      %700 = vxpose.xlu0.b32.cont [15/16] 0.0, 128
      %701 = vxpose.xlu0.b32.end [16/16] 0.0, 128
      %v702 = vpop.trf.xlu0
      %v703 = vpop.trf.xlu0
      %v704 = vpop.trf.xlu0
      %v705 = vpop.trf.xlu0
      %v706 = vpop.trf.xlu0
      %v707 = vpop.trf.xlu0
      %v708 = vpop.trf.xlu0
      %v709 = vpop.trf.xlu0
      %v710 = vpop.trf.xlu0
      %v711 = vpop.trf.xlu0
      %v712 = vpop.trf.xlu0
      %v713 = vpop.trf.xlu0
      %v714 = vpop.trf.xlu0
      %v715 = vpop.trf.xlu0
      %v716 = vpop.trf.xlu0
      %v717 = vpop.trf.xlu0
      %718 = vxpose.xlu0.b32.start [1/16] %v488, 128
      %719 = vxpose.xlu0.b32.cont [2/16] %v491, 128
      %720 = vxpose.xlu0.b32.cont [3/16] 0.0, 128
      %721 = vxpose.xlu0.b32.cont [4/16] 0.0, 128
      %722 = vxpose.xlu0.b32.cont [5/16] 0.0, 128
      %723 = vxpose.xlu0.b32.cont [6/16] 0.0, 128
      %724 = vxpose.xlu0.b32.cont [7/16] 0.0, 128
      %725 = vxpose.xlu0.b32.cont [8/16] 0.0, 128
      %726 = vxpose.xlu0.b32.cont [9/16] 0.0, 128
      %727 = vxpose.xlu0.b32.cont [10/16] 0.0, 128
      %728 = vxpose.xlu0.b32.cont [11/16] 0.0, 128
      %729 = vxpose.xlu0.b32.cont [12/16] 0.0, 128
      %730 = vxpose.xlu0.b32.cont [13/16] 0.0, 128
      %731 = vxpose.xlu0.b32.cont [14/16] 0.0, 128
      %732 = vxpose.xlu0.b32.cont [15/16] 0.0, 128
      %733 = vxpose.xlu0.b32.end [16/16] 0.0, 128
      %v734 = vpop.trf.xlu0
      %v735 = vpop.trf.xlu0
      %v736 = vpop.trf.xlu0
      %v737 = vpop.trf.xlu0
      %v738 = vpop.trf.xlu0
      %v739 = vpop.trf.xlu0
      %v740 = vpop.trf.xlu0
      %v741 = vpop.trf.xlu0
      %v742 = vpop.trf.xlu0
      %v743 = vpop.trf.xlu0
      %v744 = vpop.trf.xlu0
      %v745 = vpop.trf.xlu0
      %v746 = vpop.trf.xlu0
      %v747 = vpop.trf.xlu0
      %v748 = vpop.trf.xlu0
      %v749 = vpop.trf.xlu0
      %758 = vrot.lane.b32.xlu0 %v638, 16
      %v759 = vpop.permute.xlu0 %758
      %760 = vrot.lane.b32.xlu0 %v639, 16
      %v761 = vpop.permute.xlu0 %760
      %762 = vrot.lane.b32.xlu0 %v670, 16
      %v763 = vpop.permute.xlu0 %762
      %764 = vrot.lane.b32.xlu0 %v671, 16
      %v765 = vpop.permute.xlu0 %764
      %766 = vrot.lane.b32.xlu0 %v702, 16
      %v767 = vpop.permute.xlu0 %766
      %768 = vrot.lane.b32.xlu0 %v703, 16
      %v769 = vpop.permute.xlu0 %768
      %770 = vrot.lane.b32.xlu0 %v734, 16
      %v771 = vpop.permute.xlu0 %770
      %772 = vrot.lane.b32.xlu0 %v735, 16
      %v773 = vpop.permute.xlu0 %772
      %v782 = vsel %vm343, %v510, %v759
      %v783 = vsel %vm343, %v511, %v761
      %v784 = vsel %vm343, %v542, %v763
      %v785 = vsel %vm343, %v543, %v765
      %v786 = vsel %vm343, %v574, %v767
      %v787 = vsel %vm343, %v575, %v769
      %v788 = vsel %vm343, %v606, %v771
      %v789 = vsel %vm343, %v607, %v773
      %v790 = vpack.c.bf16 %v783, %v782
      %v791 = vpack.c.bf16 %v785, %v784
      %v792 = vpack.c.bf16 %v787, %v786
      %v793 = vpack.c.bf16 %v789, %v788
      %v794 = vld [vmem:[%s3] sm:$0xf]
      %v795 = vld [vmem:[%s3 + $0x4] sm:$0xf]
      %v796 = vld [vmem:[%s3 + $0x8] sm:$0xf]
      %v797 = vld [vmem:[%s3 + $0xc] sm:$0xf]
      %v802 = vunpack.c.l.b16 %v794
      %v803 = vunpack.c.l.b16 %v795
      %v804 = vunpack.c.l.b16 %v796
      %v805 = vunpack.c.l.b16 %v797
      %v806 = vpack.c.b16 %v803, %v802
      %v807 = vpack.c.b16 %v805, %v804
      %vm810 = vcmask 261120
      %v812 = vsel %vm810, %v790, 0
      %v815 = vsel %vm810, %v791, 0
      %v818 = vsel %vm810, %v792, 0
      %v821 = vsel %vm810, %v793, 0
      %823 = vmatprep.subr.bf16.mxu0 0
      %824 = vmatpush1.bf16.msra.mxu0 %v806
      %825 = vmatprep.subr.bf16.mxu0 0
      %826 = vmatpush1.bf16.msra.mxu0 %v807
      %827 = vmatprep.subr.bf16.mxu0 0
      %828 = vmatpush1.bf16.msra.mxu0 0
      %829 = vmatprep.subr.bf16.mxu0 0
      %830 = vmatpush1.bf16.msra.mxu0 0
      %831 = vmatprep.subr.bf16.mxu0 0
      %832 = vmatpush1.bf16.msra.mxu0 0
      %833 = vmatprep.subr.bf16.mxu0 0
      %834 = vmatpush1.bf16.msra.mxu0 0
      %835 = vmatprep.subr.bf16.mxu0 0
      %836 = vmatpush1.bf16.msra.mxu0 0
      %837 = vmatprep.subr.bf16.mxu0 0
      %838 = vmatpush1.bf16.msra.mxu0 0
      %839 = vmatprep.subr.bf16.mxu0 0
      %840 = vmatpush1.bf16.msra.mxu0 0
      %841 = vmatprep.subr.bf16.mxu0 0
      %842 = vmatpush1.bf16.msra.mxu0 0
      %843 = vmatprep.subr.bf16.mxu0 0
      %844 = vmatpush1.bf16.msra.mxu0 0
      %845 = vmatprep.subr.bf16.mxu0 0
      %846 = vmatpush1.bf16.msra.mxu0 0
      %847 = vmatprep.subr.bf16.mxu0 0
      %848 = vmatpush1.bf16.msra.mxu0 0
      %849 = vmatprep.subr.bf16.mxu0 0
      %850 = vmatpush1.bf16.msra.mxu0 0
      %851 = vmatprep.subr.bf16.mxu0 0
      %852 = vmatpush1.bf16.msra.mxu0 0
      %853 = vmatprep.subr.bf16.mxu0 0
      %854 = vmatpush1.bf16.msra.mxu0 0
      %855 = vmatprep.mubr.bf16.mxu0 0
      %856 = vmatmul.mubr.bf16.gmra.mrb[0].mxu0 %v812
      %v857 = vpop.f32.mrb[0].mxu0
      %v858 = vadd.f32 0.0, %v857
      %v859 = vpop.f32.mrb[0].mxu0
      %v860 = vpop.f32.mrb[0].mxu0
      %v861 = vadd.f32 0.0, %v860
      %v862 = vpop.f32.mrb[0].mxu0
      %863 = vmatprep.mubr.bf16.mxu0 0
      %864 = vmatmul.mubr.bf16.gmra.mrb[0].mxu0 %v815
      %v865 = vpop.f32.mrb[0].mxu0
      %v866 = vadd.f32 0.0, %v865
      %v867 = vpop.f32.mrb[0].mxu0
      %v868 = vpop.f32.mrb[0].mxu0
      %v869 = vadd.f32 0.0, %v868
      %v870 = vpop.f32.mrb[0].mxu0
      %871 = vmatprep.mubr.bf16.mxu0 0
      %872 = vmatmul.mubr.bf16.gmra.mrb[0].mxu0 %v818
      %v873 = vpop.f32.mrb[0].mxu0
      %v874 = vadd.f32 0.0, %v873
      %v875 = vpop.f32.mrb[0].mxu0
      %v876 = vpop.f32.mrb[0].mxu0
      %v877 = vadd.f32 0.0, %v876
      %v878 = vpop.f32.mrb[0].mxu0
      %879 = vmatprep.mubr.bf16.mxu0 0
      %880 = vmatmul.mubr.bf16.gmra.mrb[0].mxu0 %v821
      %v881 = vpop.f32.mrb[0].mxu0
      %v882 = vadd.f32 0.0, %v881
      %v883 = vpop.f32.mrb[0].mxu0
      %v884 = vpop.f32.mrb[0].mxu0
      %v885 = vadd.f32 0.0, %v884
      %v886 = vpop.f32.mrb[0].mxu0
      %887 = vdwg.mxu0
      %v888 = vld [vmem:[%s4] sm:$0xf]
      %v889 = vld [vmem:[%s4 + $0x4] sm:$0xf]
      %v890 = vld [vmem:[%s4 + $0x8] sm:$0xf]
      %v891 = vld [vmem:[%s4 + $0xc] sm:$0xf]
      %v896 = vunpack.c.l.b16 %v888
      %v897 = vunpack.c.l.b16 %v889
      %v898 = vunpack.c.l.b16 %v890
      %v899 = vunpack.c.l.b16 %v891
      %v900 = vpack.c.b16 %v897, %v896
      %v901 = vpack.c.b16 %v899, %v898
      %904 = vmatprep.subr.bf16.mxu0 0
      %905 = vmatpush1.bf16.msra.mxu0 %v900
      %906 = vmatprep.subr.bf16.mxu0 0
      %907 = vmatpush1.bf16.msra.mxu0 %v901
      %908 = vmatprep.subr.bf16.mxu0 0
      %909 = vmatpush1.bf16.msra.mxu0 0
      %910 = vmatprep.subr.bf16.mxu0 0
      %911 = vmatpush1.bf16.msra.mxu0 0
      %912 = vmatprep.subr.bf16.mxu0 0
      %913 = vmatpush1.bf16.msra.mxu0 0
      %914 = vmatprep.subr.bf16.mxu0 0
      %915 = vmatpush1.bf16.msra.mxu0 0
      %916 = vmatprep.subr.bf16.mxu0 0
      %917 = vmatpush1.bf16.msra.mxu0 0
      %918 = vmatprep.subr.bf16.mxu0 0
      %919 = vmatpush1.bf16.msra.mxu0 0
      %920 = vmatprep.subr.bf16.mxu0 0
      %921 = vmatpush1.bf16.msra.mxu0 0
      %922 = vmatprep.subr.bf16.mxu0 0
      %923 = vmatpush1.bf16.msra.mxu0 0
      %924 = vmatprep.subr.bf16.mxu0 0
      %925 = vmatpush1.bf16.msra.mxu0 0
      %926 = vmatprep.subr.bf16.mxu0 0
      %927 = vmatpush1.bf16.msra.mxu0 0
      %928 = vmatprep.subr.bf16.mxu0 0
      %929 = vmatpush1.bf16.msra.mxu0 0
      %930 = vmatprep.subr.bf16.mxu0 0
      %931 = vmatpush1.bf16.msra.mxu0 0
      %932 = vmatprep.subr.bf16.mxu0 0
      %933 = vmatpush1.bf16.msra.mxu0 0
      %934 = vmatprep.subr.bf16.mxu0 0
      %935 = vmatpush1.bf16.msra.mxu0 0
      %936 = vmatprep.mubr.bf16.mxu0 0
      %937 = vmatmul.mubr.bf16.gmra.mrb[0].mxu0 %v812
      %v938 = vpop.f32.mrb[0].mxu0
      %v939 = vadd.f32 0.0, %v938
      %v940 = vpop.f32.mrb[0].mxu0
      %v941 = vpop.f32.mrb[0].mxu0
      %v942 = vadd.f32 0.0, %v941
      %v943 = vpop.f32.mrb[0].mxu0
      %944 = vmatprep.mubr.bf16.mxu0 0
      %945 = vmatmul.mubr.bf16.gmra.mrb[0].mxu0 %v815
      %v946 = vpop.f32.mrb[0].mxu0
      %v947 = vadd.f32 0.0, %v946
      %v948 = vpop.f32.mrb[0].mxu0
      %v949 = vpop.f32.mrb[0].mxu0
      %v950 = vadd.f32 0.0, %v949
      %v951 = vpop.f32.mrb[0].mxu0
      %952 = vmatprep.mubr.bf16.mxu0 0
      %953 = vmatmul.mubr.bf16.gmra.mrb[0].mxu0 %v818
      %v954 = vpop.f32.mrb[0].mxu0
      %v955 = vadd.f32 0.0, %v954
      %v956 = vpop.f32.mrb[0].mxu0
      %v957 = vpop.f32.mrb[0].mxu0
      %v958 = vadd.f32 0.0, %v957
      %v959 = vpop.f32.mrb[0].mxu0
      %960 = vmatprep.mubr.bf16.mxu0 0
      %961 = vmatmul.mubr.bf16.gmra.mrb[0].mxu0 %v821
      %v962 = vpop.f32.mrb[0].mxu0
      %v963 = vadd.f32 0.0, %v962
      %v964 = vpop.f32.mrb[0].mxu0
      %v965 = vpop.f32.mrb[0].mxu0
      %v966 = vadd.f32 0.0, %v965
      %v967 = vpop.f32.mrb[0].mxu0
      %968 = vdwg.mxu0
      %v969 = vpack.c.bf16 %v861, %v858
      %v970 = vpack.c.bf16 %v869, %v866
      %v971 = vpack.c.bf16 %v877, %v874
      %v972 = vpack.c.bf16 %v885, %v882
      %v977 = vunpack.c.l.b16 %v969
      %v978 = vunpack.c.h.b16 %v969
      %v979 = vunpack.c.l.b16 %v970
      %v980 = vunpack.c.h.b16 %v970
      %v981 = vunpack.c.l.b16 %v971
      %v982 = vunpack.c.h.b16 %v971
      %v983 = vunpack.c.l.b16 %v972
      %v984 = vunpack.c.h.b16 %v972
      %v985 = vpack.c.b16 %v977, %v977
      %v986 = vpack.c.b16 %v978, %v978
      %v987 = vpack.c.b16 %v979, %v979
      %v988 = vpack.c.b16 %v980, %v980
      %v989 = vpack.c.b16 %v981, %v981
      %v990 = vpack.c.b16 %v982, %v982
      %v991 = vpack.c.b16 %v983, %v983
      %v992 = vpack.c.b16 %v984, %v984
      %vm1001 = vcmask 125952
      %1002 = vst.msk [vmem:[%s309] sm:$0xf] %vm1001, %v985
      %1003 = vst.msk [vmem:[%s309 + $0x4] sm:$0xf] %vm1001, %v986
      %1004 = vst.msk [vmem:[%s309 + $0x8] sm:$0xf] %vm1001, %v987
      %1005 = vst.msk [vmem:[%s309 + $0xc] sm:$0xf] %vm1001, %v988
      %1006 = vst.msk [vmem:[%s309 + $0x10] sm:$0xf] %vm1001, %v989
      %1007 = vst.msk [vmem:[%s309 + $0x14] sm:$0xf] %vm1001, %v990
      %1008 = vst.msk [vmem:[%s309 + $0x18] sm:$0xf] %vm1001, %v991
      %1009 = vst.msk [vmem:[%s309 + $0x1c] sm:$0xf] %vm1001, %v992
      %v1010 = vpack.c.bf16 %v942, %v939
      %v1011 = vpack.c.bf16 %v950, %v947
      %v1012 = vpack.c.bf16 %v958, %v955
      %v1013 = vpack.c.bf16 %v966, %v963
      %v1018 = vunpack.c.l.b16 %v1010
      %v1019 = vunpack.c.h.b16 %v1010
      %v1020 = vunpack.c.l.b16 %v1011
      %v1021 = vunpack.c.h.b16 %v1011
      %v1022 = vunpack.c.l.b16 %v1012
      %v1023 = vunpack.c.h.b16 %v1012
      %v1024 = vunpack.c.l.b16 %v1013
      %v1025 = vunpack.c.h.b16 %v1013
      %v1026 = vpack.c.b16 %v1018, %v1018
      %v1027 = vpack.c.b16 %v1019, %v1019
      %v1028 = vpack.c.b16 %v1020, %v1020
      %v1029 = vpack.c.b16 %v1021, %v1021
      %v1030 = vpack.c.b16 %v1022, %v1022
      %v1031 = vpack.c.b16 %v1023, %v1023
      %v1032 = vpack.c.b16 %v1024, %v1024
      %v1033 = vpack.c.b16 %v1025, %v1025
      %1042 = vst.msk [vmem:[%s320] sm:$0xf] %vm1001, %v1026
      %1043 = vst.msk [vmem:[%s320 + $0x4] sm:$0xf] %vm1001, %v1027
      %1044 = vst.msk [vmem:[%s320 + $0x8] sm:$0xf] %vm1001, %v1028
      %1045 = vst.msk [vmem:[%s320 + $0xc] sm:$0xf] %vm1001, %v1029
      %1046 = vst.msk [vmem:[%s320 + $0x10] sm:$0xf] %vm1001, %v1030
      %1047 = vst.msk [vmem:[%s320 + $0x14] sm:$0xf] %vm1001, %v1031
      %1048 = vst.msk [vmem:[%s320 + $0x18] sm:$0xf] %vm1001, %v1032
      %1049 = vst.msk [vmem:[%s320 + $0x1c] sm:$0xf] %vm1001, %v1033
      %s1050 = smul.u32 4, %s23
      %p1051 = scmp.lt.s32.totalorder %s22, 1
      %s1052 = scalar_select %p1051, %s22, 1
      %p1053 = scmp.lt.s32.totalorder %s1050, 3
      %s1054 = scalar_select %p1053, %s1050, 3
      %s1055 = smul.addr %s1054, 2
      %s1056 = smul.addr %s1052, 8
      %s1057 = sadd.s32 %s1055, %s1056
      %s1058 = smul.addr %s1057, 4
      %s1059 = scalar_lea.vmem %s5, %s1058
      %s1060 = smul.u32 4, %s23
      %p1061 = scmp.lt.s32.totalorder %s22, 1
      %s1062 = scalar_select %p1061, %s22, 1
      %p1063 = scmp.lt.s32.totalorder %s1060, 3
      %s1064 = scalar_select %p1063, %s1060, 3
      %s1065 = smul.addr %s1064, 2
      %s1066 = smul.addr %s1062, 8
      %s1067 = sadd.s32 %s1065, %s1066
      %s1068 = smul.addr %s1067, 4
      %s1069 = scalar_lea.vmem %s6, %s1068
      // Predicated region
      $region41: #{mam_spectral_transform.9} parent=39 // pred_check
        %p1070 = pneg %p162
      $region42: #{mam_spectral_transform.9} parent=39 // pred_check_branch
        %1072 = sbr.rel (%p1070) target = $region44
      $region43: #{mam_spectral_transform.9} parent=39 // pred_region
        %s1073 = smul.u32 4, %s23
      $region44: #{mam_spectral_transform.9} parent=39 // pred_fallthru
        _
      // Predicated region
      $region45: #{mam_spectral_transform.9} parent=39 // pred_check
        %p1074 = pneg %p190
      $region46: #{mam_spectral_transform.9} parent=39 // pred_check_branch
        %1076 = sbr.rel (%p1074) target = $region48
      $region47: #{mam_spectral_transform.9} parent=39 // pred_region
        %s1077 = smul.u32 4, %s23
      $region48: #{mam_spectral_transform.9} parent=39 // pred_fallthru
        _
    $region40: #{mam_spectral_transform.9} parent=5 // pred_fallthru
      _
    %p1078 = scmp.le.s32.totalorder 2, %s13
    // Predicated region
    $region49: #{mam_spectral_transform.9} parent=5 // pred_check
      %p1079 = pneg %p1078
    $region50: #{mam_spectral_transform.9} parent=5 // pred_check_branch
      %1081 = sbr.rel (%p1079) target = $region52
    $region51: #{mam_spectral_transform.9} parent=5 // pred_region
      %s1082 = ssub.s32 %s13, 2
      // Predicated region
      $region53: #{mam_spectral_transform.9} parent=51 // pred_check
        %p1083 = pneg %p168
      $region54: #{mam_spectral_transform.9} parent=51 // pred_check_branch
        %1085 = sbr.rel (%p1083) target = $region56
      $region55: #{mam_spectral_transform.9} parent=51 // pred_region
        %s1086 = smul.u32 4, %s25
        %p1087 = scmp.lt.s32.totalorder %s24, 1
        %s1088 = scalar_select %p1087, %s24, 1
        %p1089 = scmp.lt.s32.totalorder %s1086, 3
        %s1090 = scalar_select %p1089, %s1086, 3
        %s1091 = smul.addr %s1090, 2
        %s1092 = smul.addr %s1088, 8
        %s1093 = sadd.s32 %s1091, %s1092
        %s1094 = smul.addr %s1093, 4
        %s1095 = scalar_lea.vmem %s5, %s1094
      $region56: #{mam_spectral_transform.9} parent=51 // pred_fallthru
        _
      // Predicated region
      $region57: #{mam_spectral_transform.9} parent=51 // pred_check
        %p1096 = pneg %p196
      $region58: #{mam_spectral_transform.9} parent=51 // pred_check_branch
        %1098 = sbr.rel (%p1096) target = $region60
      $region59: #{mam_spectral_transform.9} parent=51 // pred_region
        %s1099 = smul.u32 4, %s25
        %p1100 = scmp.lt.s32.totalorder %s24, 1
        %s1101 = scalar_select %p1100, %s24, 1
        %p1102 = scmp.lt.s32.totalorder %s1099, 3
        %s1103 = scalar_select %p1102, %s1099, 3
        %s1104 = smul.addr %s1103, 2
        %s1105 = smul.addr %s1101, 8
        %s1106 = sadd.s32 %s1104, %s1105
        %s1107 = smul.addr %s1106, 4
        %s1108 = scalar_lea.vmem %s6, %s1107
      $region60: #{mam_spectral_transform.9} parent=51 // pred_fallthru
        _
    $region52: #{mam_spectral_transform.9} parent=5 // pred_fallthru
      _
  $region6: #{mam_spectral_transform.9} parent=0 // loop_footer
    %s17 = sadd.s32 1, %s13
  $region7: #{mam_spectral_transform.9} parent=0 // loop_footer_branch
    %12 = sbr.rel target = $region3
  $region8: #{mam_spectral_transform.9} parent=0 // loop_exit
    _

// kernel: mam_spectral_transform.10
$region0: #{mam_spectral_transform.10}
  #allocation0 [shape = 'u32[]', space=smem, size = 0x4, offset = 0x4, fixed_abs, tag = 'smem constant byte address 0x4 - core index']
  #allocation1 [shape = 'u32[144,128]{1,0:T(1,128)}', space=vmem, size = 0x12000, scoped, tag = 'internal scratch']
  %s0 = inlined_call_operand.vmem [shape: bf16[2,4,256], index: 0, kind: input, shape index: {}]
  %s1 = inlined_call_operand.vmem [shape: bf16[2,4,256], index: 1, kind: input, shape index: {}]
  %s2 = inlined_call_operand.vmem [shape: bf16[4,4], index: 2, kind: input, shape index: {}]
  %s3 = inlined_call_operand.vmem [shape: bf16[4,4], index: 3, kind: input, shape index: {}]
  %s4 = inlined_call_operand.vmem [shape: bf16[4,4], index: 4, kind: input, shape index: {}]
  %s5 = inlined_call_operand.vmem [shape: bf16[4,4], index: 5, kind: input, shape index: {}]
  %s6 = inlined_call_operand.vmem [shape: bf16[2,4,256], index: 6, kind: output, shape index: {0}]
  %s7 = inlined_call_operand.vmem [shape: bf16[2,4,256], index: 7, kind: output, shape index: {1}]
  %8 = xla_tuple %s6, %s7
  %s9 = sld [smem:[#allocation0]]
  $region65: #{mam_spectral_transform.10} parent=0
    _
  %s11 = ssub.s32 1, %s9
  %s12 = scalar_select 0, %s11, %s9
  loop: start=0, step=1, limit=4
  $region2: #{mam_spectral_transform.10} parent=0 // loop_pre_header
    _
  $region3: #{mam_spectral_transform.10} parent=0 // loop_header
    %s14 = sphi 0, %s18
    %p15 = scmp.ge.s32.totalorder %s14, 4
    %s21 = sphi 0, %s33
    %s22 = sphi 0, %s29
    %s23 = sphi 0, %s21
    %s24 = sphi 0, %s22
    %s25 = sphi 0, %s23
    %s26 = sphi 0, %s24
    %s38 = sphi 0, %s40
    %s41 = sphi 0, %s38
    %s42 = sphi 0, %s41
    %s58 = sphi 0, %s42
    %s66 = sphi 0, %s68
    %s69 = sphi 0, %s66
    %s70 = sphi 0, %s69
    %s86 = sphi 0, %s70
    %s90 = sphi 0, %s90
    %s92 = sphi 0, %s90
    %s93 = sphi 0, %s92
    %s107 = sphi 0, %s93
    %s111 = sphi 0, %s111
    %s113 = sphi 0, %s111
    %s114 = sphi 0, %s113
    %s128 = sphi 0, %s114
    %s132 = sphi 0, %s132
    %s134 = sphi 0, %s132
    %s135 = sphi 0, %s134
    %s149 = sphi 0, %s135
    %s153 = sphi 0, %s153
    %s155 = sphi 0, %s153
    %s156 = sphi 0, %s155
    %s170 = sphi 0, %s156
    %s178 = sphi 0, %s180
    %s181 = sphi 0, %s178
    %s182 = sphi 0, %s181
    %s198 = sphi 0, %s182
    %s206 = sphi 0, %s208
    %s209 = sphi 0, %s206
    %s210 = sphi 0, %s209
    %s226 = sphi 0, %s210
  $region4: #{mam_spectral_transform.10} parent=0 // loop_header_branch
    %17 = sbr.rel (%p15) target = $region8
  $region5: #{mam_spectral_transform.10} parent=0 // loop_body
    %s19 = ssub.s32 %s14, 1
    %s20 = ssub.s32 %s14, 2
    %s27 = sadd.s32 1, %s22
    %p28 = scmp.ge.s32.totalorder %s27, 1
    %s29 = scalar_select %p28, 0, %s27
    %s30 = sadd.s32 1, %s21
    %s31 = scalar_select %p28, %s30, %s21
    %p32 = scmp.ge.s32.totalorder %s31, 2
    %s33 = scalar_select %p32, 0, %s31
    %s34 = ssub.s32 %s21, %s33
    %s35 = ssub.s32 %s22, %s29
    %s36 = sor.u32 %s34, %s35
    %p37 = scmp.eq.s32.totalorder %s36, 0
    %s39 = sadd.s32 %s38, 1
    %s40 = scalar_select %p37, %s38, %s39
    %p43 = pneg %p37
    %p44 = scmp.eq.s32.totalorder %s14, 1
    %p45 = por %p43, %p44
    %p46 = scmp.ne.s32.totalorder %s38, %s41
    %p47 = scmp.eq.s32.totalorder %s14, 0
    %p48 = por %p46, %p47
    %p49 = scmp.ne.s32.totalorder %s38, %s41
    %p50 = scmp.eq.s32.totalorder %s19, 1
    %p51 = por %p49, %p50
    %p52 = scmp.ne.s32.totalorder %s41, %s42
    %p53 = scmp.eq.s32.totalorder %s19, 0
    %p54 = por %p52, %p53
    %p55 = scmp.ne.s32.totalorder %s41, %s42
    %p56 = scmp.eq.s32.totalorder %s20, 1
    %p57 = por %p55, %p56
    %p59 = scmp.ne.s32.totalorder %s42, %s58
    %p60 = scmp.eq.s32.totalorder %s20, 0
    %p61 = por %p59, %p60
    %s62 = ssub.s32 %s21, %s33
    %s63 = ssub.s32 %s22, %s29
    %s64 = sor.u32 %s62, %s63
    %p65 = scmp.eq.s32.totalorder %s64, 0
    %s67 = sadd.s32 %s66, 1
    %s68 = scalar_select %p65, %s66, %s67
    %p71 = pneg %p65
    %p72 = scmp.eq.s32.totalorder %s14, 1
    %p73 = por %p71, %p72
    %p74 = scmp.ne.s32.totalorder %s66, %s69
    %p75 = scmp.eq.s32.totalorder %s14, 0
    %p76 = por %p74, %p75
    %p77 = scmp.ne.s32.totalorder %s66, %s69
    %p78 = scmp.eq.s32.totalorder %s19, 1
    %p79 = por %p77, %p78
    %p80 = scmp.ne.s32.totalorder %s69, %s70
    %p81 = scmp.eq.s32.totalorder %s19, 0
    %p82 = por %p80, %p81
    %p83 = scmp.ne.s32.totalorder %s69, %s70
    %p84 = scmp.eq.s32.totalorder %s20, 1
    %p85 = por %p83, %p84
    %p87 = scmp.ne.s32.totalorder %s70, %s86
    %p88 = scmp.eq.s32.totalorder %s20, 0
    %p89 = por %p87, %p88
    %s91 = sadd.s32 %s90, 1
    %p94 = scmp.eq.s32.totalorder %s14, 1
    %p95 = scmp.ne.s32.totalorder %s90, %s92
    %p96 = scmp.eq.s32.totalorder %s14, 0
    %p97 = por %p95, %p96
    %p98 = scmp.ne.s32.totalorder %s90, %s92
    %p99 = scmp.eq.s32.totalorder %s19, 1
    %p100 = por %p98, %p99
    %p101 = scmp.ne.s32.totalorder %s92, %s93
    %p102 = scmp.eq.s32.totalorder %s19, 0
    %p103 = por %p101, %p102
    %p104 = scmp.ne.s32.totalorder %s92, %s93
    %p105 = scmp.eq.s32.totalorder %s20, 1
    %p106 = por %p104, %p105
    %p108 = scmp.ne.s32.totalorder %s93, %s107
    %p109 = scmp.eq.s32.totalorder %s20, 0
    %p110 = por %p108, %p109
    %s112 = sadd.s32 %s111, 1
    %p115 = scmp.eq.s32.totalorder %s14, 1
    %p116 = scmp.ne.s32.totalorder %s111, %s113
    %p117 = scmp.eq.s32.totalorder %s14, 0
    %p118 = por %p116, %p117
    %p119 = scmp.ne.s32.totalorder %s111, %s113
    %p120 = scmp.eq.s32.totalorder %s19, 1
    %p121 = por %p119, %p120
    %p122 = scmp.ne.s32.totalorder %s113, %s114
    %p123 = scmp.eq.s32.totalorder %s19, 0
    %p124 = por %p122, %p123
    %p125 = scmp.ne.s32.totalorder %s113, %s114
    %p126 = scmp.eq.s32.totalorder %s20, 1
    %p127 = por %p125, %p126
    %p129 = scmp.ne.s32.totalorder %s114, %s128
    %p130 = scmp.eq.s32.totalorder %s20, 0
    %p131 = por %p129, %p130
    %s133 = sadd.s32 %s132, 1
    %p136 = scmp.eq.s32.totalorder %s14, 1
    %p137 = scmp.ne.s32.totalorder %s132, %s134
    %p138 = scmp.eq.s32.totalorder %s14, 0
    %p139 = por %p137, %p138
    %p140 = scmp.ne.s32.totalorder %s132, %s134
    %p141 = scmp.eq.s32.totalorder %s19, 1
    %p142 = por %p140, %p141
    %p143 = scmp.ne.s32.totalorder %s134, %s135
    %p144 = scmp.eq.s32.totalorder %s19, 0
    %p145 = por %p143, %p144
    %p146 = scmp.ne.s32.totalorder %s134, %s135
    %p147 = scmp.eq.s32.totalorder %s20, 1
    %p148 = por %p146, %p147
    %p150 = scmp.ne.s32.totalorder %s135, %s149
    %p151 = scmp.eq.s32.totalorder %s20, 0
    %p152 = por %p150, %p151
    %s154 = sadd.s32 %s153, 1
    %p157 = scmp.eq.s32.totalorder %s14, 1
    %p158 = scmp.ne.s32.totalorder %s153, %s155
    %p159 = scmp.eq.s32.totalorder %s14, 0
    %p160 = por %p158, %p159
    %p161 = scmp.ne.s32.totalorder %s153, %s155
    %p162 = scmp.eq.s32.totalorder %s19, 1
    %p163 = por %p161, %p162
    %p164 = scmp.ne.s32.totalorder %s155, %s156
    %p165 = scmp.eq.s32.totalorder %s19, 0
    %p166 = por %p164, %p165
    %p167 = scmp.ne.s32.totalorder %s155, %s156
    %p168 = scmp.eq.s32.totalorder %s20, 1
    %p169 = por %p167, %p168
    %p171 = scmp.ne.s32.totalorder %s156, %s170
    %p172 = scmp.eq.s32.totalorder %s20, 0
    %p173 = por %p171, %p172
    %s174 = ssub.s32 %s21, %s33
    %s175 = ssub.s32 %s22, %s29
    %s176 = sor.u32 %s174, %s175
    %p177 = scmp.eq.s32.totalorder %s176, 0
    %s179 = sadd.s32 %s178, 1
    %s180 = scalar_select %p177, %s178, %s179
    %p183 = pneg %p177
    %p184 = scmp.eq.s32.totalorder %s14, 1
    %p185 = por %p183, %p184
    %p186 = scmp.ne.s32.totalorder %s178, %s181
    %p187 = scmp.eq.s32.totalorder %s14, 0
    %p188 = por %p186, %p187
    %p189 = scmp.ne.s32.totalorder %s178, %s181
    %p190 = scmp.eq.s32.totalorder %s19, 1
    %p191 = por %p189, %p190
    %p192 = scmp.ne.s32.totalorder %s181, %s182
    %p193 = scmp.eq.s32.totalorder %s19, 0
    %p194 = por %p192, %p193
    %p195 = scmp.ne.s32.totalorder %s181, %s182
    %p196 = scmp.eq.s32.totalorder %s20, 1
    %p197 = por %p195, %p196
    %p199 = scmp.ne.s32.totalorder %s182, %s198
    %p200 = scmp.eq.s32.totalorder %s20, 0
    %p201 = por %p199, %p200
    %s202 = ssub.s32 %s21, %s33
    %s203 = ssub.s32 %s22, %s29
    %s204 = sor.u32 %s202, %s203
    %p205 = scmp.eq.s32.totalorder %s204, 0
    %s207 = sadd.s32 %s206, 1
    %s208 = scalar_select %p205, %s206, %s207
    %p211 = pneg %p205
    %p212 = scmp.eq.s32.totalorder %s14, 1
    %p213 = por %p211, %p212
    %p214 = scmp.ne.s32.totalorder %s206, %s209
    %p215 = scmp.eq.s32.totalorder %s14, 0
    %p216 = por %p214, %p215
    %p217 = scmp.ne.s32.totalorder %s206, %s209
    %p218 = scmp.eq.s32.totalorder %s19, 1
    %p219 = por %p217, %p218
    %p220 = scmp.ne.s32.totalorder %s209, %s210
    %p221 = scmp.eq.s32.totalorder %s19, 0
    %p222 = por %p220, %p221
    %p223 = scmp.ne.s32.totalorder %s209, %s210
    %p224 = scmp.eq.s32.totalorder %s20, 1
    %p225 = por %p223, %p224
    %p227 = scmp.ne.s32.totalorder %s210, %s226
    %p228 = scmp.eq.s32.totalorder %s20, 0
    %p229 = por %p227, %p228
    %p230 = scmp.le.s32.totalorder 1, %s14
    %p231 = scmp.lt.s32.totalorder %s14, 3
    %p232 = pnand %p230, %p231
    %p233 = pneg %p232
    // Predicated region
    $region9: #{mam_spectral_transform.10} parent=5 // pred_check
      _
    $region10: #{mam_spectral_transform.10} parent=5 // pred_check_branch
      %235 = sbr.rel (%p232) target = $region12
    $region11: #{mam_spectral_transform.10} parent=5 // pred_region
      %s236 = ssub.s32 %s14, 1
      // Predicated region
      $region13: #{mam_spectral_transform.10} parent=11 // pred_check
        %p237 = pneg %p103
      $region14: #{mam_spectral_transform.10} parent=11 // pred_check_branch
        %239 = sbr.rel (%p237) target = $region16
      $region15: #{mam_spectral_transform.10} parent=11 // pred_region
        _
      $region16: #{mam_spectral_transform.10} parent=11 // pred_fallthru
        _
      // Predicated region
      $region17: #{mam_spectral_transform.10} parent=11 // pred_check
        %p240 = pneg %p124
      $region18: #{mam_spectral_transform.10} parent=11 // pred_check_branch
        %242 = sbr.rel (%p240) target = $region20
      $region19: #{mam_spectral_transform.10} parent=11 // pred_region
        _
      $region20: #{mam_spectral_transform.10} parent=11 // pred_fallthru
        _
      // Predicated region
      $region21: #{mam_spectral_transform.10} parent=11 // pred_check
        %p243 = pneg %p145
      $region22: #{mam_spectral_transform.10} parent=11 // pred_check_branch
        %245 = sbr.rel (%p243) target = $region24
      $region23: #{mam_spectral_transform.10} parent=11 // pred_region
        _
      $region24: #{mam_spectral_transform.10} parent=11 // pred_fallthru
        _
      // Predicated region
      $region25: #{mam_spectral_transform.10} parent=11 // pred_check
        %p246 = pneg %p166
      $region26: #{mam_spectral_transform.10} parent=11 // pred_check_branch
        %248 = sbr.rel (%p246) target = $region28
      $region27: #{mam_spectral_transform.10} parent=11 // pred_region
        _
      $region28: #{mam_spectral_transform.10} parent=11 // pred_fallthru
        _
    $region12: #{mam_spectral_transform.10} parent=5 // pred_fallthru
      _
    %p249 = scmp.lt.s32.totalorder %s14, 2
    // Predicated region
    $region29: #{mam_spectral_transform.10} parent=5 // pred_check
      %p250 = pneg %p249
    $region30: #{mam_spectral_transform.10} parent=5 // pred_check_branch
      %252 = sbr.rel (%p250) target = $region32
    $region31: #{mam_spectral_transform.10} parent=5 // pred_region
      // Predicated region
      $region33: #{mam_spectral_transform.10} parent=31 // pred_check
        %p253 = pneg %p48
      $region34: #{mam_spectral_transform.10} parent=31 // pred_check_branch
        %255 = sbr.rel (%p253) target = $region36
      $region35: #{mam_spectral_transform.10} parent=31 // pred_region
        %s256 = smul.u32 2, %s22
        %p257 = scmp.lt.s32.totalorder %s21, 1
        %s258 = scalar_select %p257, %s21, 1
        %p259 = scmp.lt.s32.totalorder %s256, 1
        %s260 = scalar_select %p259, %s256, 1
        %s261 = smul.addr %s258, 2
        %s262 = sadd.s32 %s260, %s261
        %s263 = smul.addr %s262, 2
        %s264 = scalar_lea.vmem %s0, %s263
        %s265 = smul.u32 2, %s22
      $region36: #{mam_spectral_transform.10} parent=31 // pred_fallthru
        _
      // Predicated region
      $region37: #{mam_spectral_transform.10} parent=31 // pred_check
        %p266 = pneg %p76
      $region38: #{mam_spectral_transform.10} parent=31 // pred_check_branch
        %268 = sbr.rel (%p266) target = $region40
      $region39: #{mam_spectral_transform.10} parent=31 // pred_region
        %s269 = smul.u32 2, %s22
        %p270 = scmp.lt.s32.totalorder %s21, 1
        %s271 = scalar_select %p270, %s21, 1
        %p272 = scmp.lt.s32.totalorder %s269, 1
        %s273 = scalar_select %p272, %s269, 1
        %s274 = smul.addr %s271, 2
        %s275 = sadd.s32 %s273, %s274
        %s276 = smul.addr %s275, 2
        %s277 = scalar_lea.vmem %s1, %s276
        %s278 = smul.u32 2, %s22
      $region40: #{mam_spectral_transform.10} parent=31 // pred_fallthru
        _
    $region32: #{mam_spectral_transform.10} parent=5 // pred_fallthru
      _
    %p279 = scmp.le.s32.totalorder 1, %s14
    %p280 = scmp.lt.s32.totalorder %s14, 3
    %p281 = pnand %p279, %p280
    %p282 = pneg %p281
    // Predicated region
    $region41: #{mam_spectral_transform.10} parent=5 // pred_check
      _
    $region42: #{mam_spectral_transform.10} parent=5 // pred_check_branch
      %284 = sbr.rel (%p281) target = $region44
    $region43: #{mam_spectral_transform.10} parent=5 // pred_region
      %s285 = ssub.s32 %s14, 1
      %s286 = smul.u32 2, %s24
      %p287 = scmp.lt.s32.totalorder %s23, 1
      %s288 = scalar_select %p287, %s23, 1
      %p289 = scmp.lt.s32.totalorder %s286, 1
      %s290 = scalar_select %p289, %s286, 1
      %s291 = smul.addr %s288, 2
      %s292 = sadd.s32 %s290, %s291
      %s293 = smul.addr %s292, 2
      %s294 = scalar_lea.vmem %s0, %s293
      %p295 = pneg %p54
      %p296 = pneg %p51
      %s297 = smul.u32 2, %s24
      %p298 = scmp.lt.s32.totalorder %s23, 1
      %s299 = scalar_select %p298, %s23, 1
      %p300 = scmp.lt.s32.totalorder %s297, 1
      %s301 = scalar_select %p300, %s297, 1
      %s302 = smul.addr %s299, 2
      %s303 = sadd.s32 %s301, %s302
      %s304 = smul.addr %s303, 2
      %s305 = scalar_lea.vmem %s1, %s304
      %p306 = pneg %p82
      %p307 = pneg %p79
      %p308 = pneg %p103
      %p309 = pneg %p100
      %p310 = pneg %p124
      %p311 = pneg %p121
      %p312 = pneg %p145
      %p313 = pneg %p142
      %p314 = pneg %p166
      %p315 = pneg %p163
      %p316 = pneg %p194
      %p317 = pneg %p191
      %s318 = smul.u32 2, %s24
      %p319 = scmp.lt.s32.totalorder %s23, 1
      %s320 = scalar_select %p319, %s23, 1
      %p321 = scmp.lt.s32.totalorder %s318, 1
      %s322 = scalar_select %p321, %s318, 1
      %s323 = smul.addr %s320, 2
      %s324 = sadd.s32 %s322, %s323
      %s325 = smul.addr %s324, 2
      %s326 = scalar_lea.vmem %s6, %s325
      %p327 = pneg %p222
      %p328 = pneg %p219
      %s329 = smul.u32 2, %s24
      %p330 = scmp.lt.s32.totalorder %s23, 1
      %s331 = scalar_select %p330, %s23, 1
      %p332 = scmp.lt.s32.totalorder %s329, 1
      %s333 = scalar_select %p332, %s329, 1
      %s334 = smul.addr %s331, 2
      %s335 = sadd.s32 %s333, %s334
      %s336 = smul.addr %s335, 2
      %s337 = scalar_lea.vmem %s7, %s336
      %s338 = smul.u32 2, %s24
      %p339 = scmp.lt.s32.totalorder %s23, 1
      %s340 = scalar_select %p339, %s23, 1
      %p341 = scmp.lt.s32.totalorder %s338, 1
      %s342 = scalar_select %p341, %s338, 1
      %s343 = smul.addr %s340, 2
      %s344 = sadd.s32 %s342, %s343
      %s345 = smul.addr %s344, 2
      %s346 = scalar_lea.vmem %s0, %s345
      %s347 = smul.u32 2, %s24
      %s348 = smul.u32 2, %s24
      %p349 = scmp.lt.s32.totalorder %s23, 1
      %s350 = scalar_select %p349, %s23, 1
      %p351 = scmp.lt.s32.totalorder %s348, 1
      %s352 = scalar_select %p351, %s348, 1
      %s353 = smul.addr %s350, 2
      %s354 = sadd.s32 %s352, %s353
      %s355 = smul.addr %s354, 2
      %s356 = scalar_lea.vmem %s1, %s355
      %s357 = smul.u32 2, %s24
      %s358 = smul.u32 2, %s24
      %p359 = scmp.lt.s32.totalorder %s23, 1
      %s360 = scalar_select %p359, %s23, 1
      %p361 = scmp.lt.s32.totalorder %s358, 1
      %s362 = scalar_select %p361, %s358, 1
      %s363 = smul.addr %s360, 2
      %s364 = sadd.s32 %s362, %s363
      %s365 = smul.addr %s364, 2
      %s366 = scalar_lea.vmem %s6, %s365
      %s367 = smul.u32 2, %s24
      %s368 = smul.u32 2, %s24
      %p369 = scmp.lt.s32.totalorder %s23, 1
      %s370 = scalar_select %p369, %s23, 1
      %p371 = scmp.lt.s32.totalorder %s368, 1
      %s372 = scalar_select %p371, %s368, 1
      %s373 = smul.addr %s370, 2
      %s374 = sadd.s32 %s372, %s373
      %s375 = smul.addr %s374, 2
      %s376 = scalar_lea.vmem %s7, %s375
      %s377 = smul.u32 2, %s24
      %v379 = vld [vmem:[%s346] sm:$0xf]
      %v380 = vld [vmem:[%s356] sm:$0xf]
      %v381 = vld [vmem:[%s2] sm:$0x3]
      %v382 = vld [vmem:[%s3] sm:$0x3]
      %v385 = vunpack.c.l.s4 1983009808
      %v386 = vunpack.c.0.s8 %v385
      %v387 = vlaneseq
      %v388 = vshrl.u32 %v387, 7
      %v389 = vsub.s32 %v386, %v388
      %v390 = vrot.slane %v380, %v389
      %v391 = vcombine.high %v390, %v390
      %vm392 = vcmask 31744
      %v394 = vsel %vm392, %v382, 0
      %vm396 = vcmask 1041408
      %v398 = vsel %vm396, %v390, 0
      %v401 = vsel %vm396, %v391, 0
      %403 = vmatprep.subr.bf16.mxu0 %v401
      %404 = vmatpush1.bf16.msra.mxu0 %v398
      %405 = vmatprep.subr.bf16.mxu0 0
      %406 = vmatpush1.bf16.msra.mxu0 0
      %407 = vmatprep.subr.bf16.mxu0 0
      %408 = vmatpush1.bf16.msra.mxu0 0
      %409 = vmatprep.subr.bf16.mxu0 0
      %410 = vmatpush1.bf16.msra.mxu0 0
      %411 = vmatprep.subr.bf16.mxu0 0
      %412 = vmatpush1.bf16.msra.mxu0 0
      %413 = vmatprep.subr.bf16.mxu0 0
      %414 = vmatpush1.bf16.msra.mxu0 0
      %415 = vmatprep.subr.bf16.mxu0 0
      %416 = vmatpush1.bf16.msra.mxu0 0
      %417 = vmatprep.subr.bf16.mxu0 0
      %418 = vmatpush1.bf16.msra.mxu0 0
      %419 = vmatprep.subr.bf16.mxu0 0
      %420 = vmatpush1.bf16.msra.mxu0 0
      %421 = vmatprep.subr.bf16.mxu0 0
      %422 = vmatpush1.bf16.msra.mxu0 0
      %423 = vmatprep.subr.bf16.mxu0 0
      %424 = vmatpush1.bf16.msra.mxu0 0
      %425 = vmatprep.subr.bf16.mxu0 0
      %426 = vmatpush1.bf16.msra.mxu0 0
      %427 = vmatprep.subr.bf16.mxu0 0
      %428 = vmatpush1.bf16.msra.mxu0 0
      %429 = vmatprep.subr.bf16.mxu0 0
      %430 = vmatpush1.bf16.msra.mxu0 0
      %431 = vmatprep.subr.bf16.mxu0 0
      %432 = vmatpush1.bf16.msra.mxu0 0
      %433 = vmatprep.subr.bf16.mxu0 0
      %434 = vmatpush1.bf16.msra.mxu0 0
      %435 = vmatprep.mubr.bf16.mxu0 0
      %436 = vmatmul.mubr.bf16.gmra.mrb[0].mxu0 %v394
      %v437 = vpop.f32.mrb[0].mxu0
      %v438 = vadd.f32 0.0, %v437
      %v439 = vpop.f32.mrb[0].mxu0
      %v440 = vadd.f32 0.0, %v439
      %v441 = vpop.f32.mrb[0].mxu0
      %v442 = vpop.f32.mrb[0].mxu0
      %443 = vdwg.mxu0
      %v446 = vunpack.c.l.s4 1983009808
      %v447 = vunpack.c.0.s8 %v446
      %v448 = vlaneseq
      %v449 = vshrl.u32 %v448, 7
      %v450 = vsub.s32 %v447, %v449
      %v451 = vrot.slane %v379, %v450
      %v452 = vcombine.high %v451, %v451
      %v454 = vsel %vm392, %v381, 0
      %v457 = vsel %vm396, %v451, 0
      %v460 = vsel %vm396, %v452, 0
      %462 = vmatprep.subr.bf16.mxu0 %v460
      %463 = vmatpush1.bf16.msra.mxu0 %v457
      %464 = vmatprep.subr.bf16.mxu0 0
      %465 = vmatpush1.bf16.msra.mxu0 0
      %466 = vmatprep.subr.bf16.mxu0 0
      %467 = vmatpush1.bf16.msra.mxu0 0
      %468 = vmatprep.subr.bf16.mxu0 0
      %469 = vmatpush1.bf16.msra.mxu0 0
      %470 = vmatprep.subr.bf16.mxu0 0
      %471 = vmatpush1.bf16.msra.mxu0 0
      %472 = vmatprep.subr.bf16.mxu0 0
      %473 = vmatpush1.bf16.msra.mxu0 0
      %474 = vmatprep.subr.bf16.mxu0 0
      %475 = vmatpush1.bf16.msra.mxu0 0
      %476 = vmatprep.subr.bf16.mxu0 0
      %477 = vmatpush1.bf16.msra.mxu0 0
      %478 = vmatprep.subr.bf16.mxu0 0
      %479 = vmatpush1.bf16.msra.mxu0 0
      %480 = vmatprep.subr.bf16.mxu0 0
      %481 = vmatpush1.bf16.msra.mxu0 0
      %482 = vmatprep.subr.bf16.mxu0 0
      %483 = vmatpush1.bf16.msra.mxu0 0
      %484 = vmatprep.subr.bf16.mxu0 0
      %485 = vmatpush1.bf16.msra.mxu0 0
      %486 = vmatprep.subr.bf16.mxu0 0
      %487 = vmatpush1.bf16.msra.mxu0 0
      %488 = vmatprep.subr.bf16.mxu0 0
      %489 = vmatpush1.bf16.msra.mxu0 0
      %490 = vmatprep.subr.bf16.mxu0 0
      %491 = vmatpush1.bf16.msra.mxu0 0
      %492 = vmatprep.subr.bf16.mxu0 0
      %493 = vmatpush1.bf16.msra.mxu0 0
      %494 = vmatprep.mubr.bf16.mxu0 0
      %495 = vmatmul.mubr.bf16.gmra.mrb[0].mxu0 %v454
      %v496 = vpop.f32.mrb[0].mxu0
      %v497 = vadd.f32 %v438, %v496
      %v498 = vpop.f32.mrb[0].mxu0
      %v499 = vadd.f32 %v440, %v498
      %v500 = vpop.f32.mrb[0].mxu0
      %v501 = vpop.f32.mrb[0].mxu0
      %502 = vdwg.mxu0
      %v503 = vld [vmem:[%s4] sm:$0x3]
      %v504 = vld [vmem:[%s5] sm:$0x3]
      %v506 = vsel %vm392, %v504, 0
      %508 = vmatprep.subr.bf16.mxu0 %v401
      %509 = vmatpush1.bf16.msra.mxu0 %v398
      %510 = vmatprep.subr.bf16.mxu0 0
      %511 = vmatpush1.bf16.msra.mxu0 0
      %512 = vmatprep.subr.bf16.mxu0 0
      %513 = vmatpush1.bf16.msra.mxu0 0
      %514 = vmatprep.subr.bf16.mxu0 0
      %515 = vmatpush1.bf16.msra.mxu0 0
      %516 = vmatprep.subr.bf16.mxu0 0
      %517 = vmatpush1.bf16.msra.mxu0 0
      %518 = vmatprep.subr.bf16.mxu0 0
      %519 = vmatpush1.bf16.msra.mxu0 0
      %520 = vmatprep.subr.bf16.mxu0 0
      %521 = vmatpush1.bf16.msra.mxu0 0
      %522 = vmatprep.subr.bf16.mxu0 0
      %523 = vmatpush1.bf16.msra.mxu0 0
      %524 = vmatprep.subr.bf16.mxu0 0
      %525 = vmatpush1.bf16.msra.mxu0 0
      %526 = vmatprep.subr.bf16.mxu0 0
      %527 = vmatpush1.bf16.msra.mxu0 0
      %528 = vmatprep.subr.bf16.mxu0 0
      %529 = vmatpush1.bf16.msra.mxu0 0
      %530 = vmatprep.subr.bf16.mxu0 0
      %531 = vmatpush1.bf16.msra.mxu0 0
      %532 = vmatprep.subr.bf16.mxu0 0
      %533 = vmatpush1.bf16.msra.mxu0 0
      %534 = vmatprep.subr.bf16.mxu0 0
      %535 = vmatpush1.bf16.msra.mxu0 0
      %536 = vmatprep.subr.bf16.mxu0 0
      %537 = vmatpush1.bf16.msra.mxu0 0
      %538 = vmatprep.subr.bf16.mxu0 0
      %539 = vmatpush1.bf16.msra.mxu0 0
      %540 = vmatprep.mubr.bf16.mxu0 0
      %541 = vmatmul.mubr.bf16.gmra.mrb[0].mxu0 %v506
      %v542 = vpop.f32.mrb[0].mxu0
      %v543 = vadd.f32 0.0, %v542
      %v544 = vpop.f32.mrb[0].mxu0
      %v545 = vadd.f32 0.0, %v544
      %v546 = vpop.f32.mrb[0].mxu0
      %v547 = vpop.f32.mrb[0].mxu0
      %548 = vdwg.mxu0
      %v550 = vsel %vm392, %v503, 0
      %552 = vmatprep.subr.bf16.mxu0 %v460
      %553 = vmatpush1.bf16.msra.mxu0 %v457
      %554 = vmatprep.subr.bf16.mxu0 0
      %555 = vmatpush1.bf16.msra.mxu0 0
      %556 = vmatprep.subr.bf16.mxu0 0
      %557 = vmatpush1.bf16.msra.mxu0 0
      %558 = vmatprep.subr.bf16.mxu0 0
      %559 = vmatpush1.bf16.msra.mxu0 0
      %560 = vmatprep.subr.bf16.mxu0 0
      %561 = vmatpush1.bf16.msra.mxu0 0
      %562 = vmatprep.subr.bf16.mxu0 0
      %563 = vmatpush1.bf16.msra.mxu0 0
      %564 = vmatprep.subr.bf16.mxu0 0
      %565 = vmatpush1.bf16.msra.mxu0 0
      %566 = vmatprep.subr.bf16.mxu0 0
      %567 = vmatpush1.bf16.msra.mxu0 0
      %568 = vmatprep.subr.bf16.mxu0 0
      %569 = vmatpush1.bf16.msra.mxu0 0
      %570 = vmatprep.subr.bf16.mxu0 0
      %571 = vmatpush1.bf16.msra.mxu0 0
      %572 = vmatprep.subr.bf16.mxu0 0
      %573 = vmatpush1.bf16.msra.mxu0 0
      %574 = vmatprep.subr.bf16.mxu0 0
      %575 = vmatpush1.bf16.msra.mxu0 0
      %576 = vmatprep.subr.bf16.mxu0 0
      %577 = vmatpush1.bf16.msra.mxu0 0
      %578 = vmatprep.subr.bf16.mxu0 0
      %579 = vmatpush1.bf16.msra.mxu0 0
      %580 = vmatprep.subr.bf16.mxu0 0
      %581 = vmatpush1.bf16.msra.mxu0 0
      %582 = vmatprep.subr.bf16.mxu0 0
      %583 = vmatpush1.bf16.msra.mxu0 0
      %584 = vmatprep.mubr.bf16.mxu0 0
      %585 = vmatmul.mubr.bf16.gmra.mrb[0].mxu0 %v550
      %v586 = vpop.f32.mrb[0].mxu0
      %v587 = vadd.f32 %v543, %v586
      %v588 = vpop.f32.mrb[0].mxu0
      %v589 = vadd.f32 %v545, %v588
      %v590 = vpop.f32.mrb[0].mxu0
      %v591 = vpop.f32.mrb[0].mxu0
      %592 = vdwg.mxu0
      %v593 = vmax.f32 %v497, 0.0
      %v594 = vmax.f32 %v499, 0.0
      %v595 = vpack.c.bf16 %v593, %v593
      %v596 = vpack.c.bf16 %v594, %v594
      %v599 = vcombine.low %v595, %v596
      %v601 = vunpack.c.l.s4 1983009808
      %v602 = vunpack.c.0.s8 %v601
      %v603 = vlaneseq
      %v604 = vshrl.u32 %v603, 7
      %v605 = vsub.s32 %v602, %v604
      %v606 = vrot.slane %v599, %v605
      %608 = vst [vmem:[%s366] sm:$0xf] %v606
      %v609 = vmax.f32 %v587, 0.0
      %v610 = vmax.f32 %v589, 0.0
      %v611 = vpack.c.bf16 %v609, %v609
      %v612 = vpack.c.bf16 %v610, %v610
      %v615 = vcombine.low %v611, %v612
      %v617 = vunpack.c.l.s4 1983009808
      %v618 = vunpack.c.0.s8 %v617
      %v619 = vlaneseq
      %v620 = vshrl.u32 %v619, 7
      %v621 = vsub.s32 %v618, %v620
      %v622 = vrot.slane %v615, %v621
      %624 = vst [vmem:[%s376] sm:$0xf] %v622
      %s625 = smul.u32 2, %s24
      %p626 = scmp.lt.s32.totalorder %s23, 1
      %s627 = scalar_select %p626, %s23, 1
      %p628 = scmp.lt.s32.totalorder %s625, 1
      %s629 = scalar_select %p628, %s625, 1
      %s630 = smul.addr %s627, 2
      %s631 = sadd.s32 %s629, %s630
      %s632 = smul.addr %s631, 2
      %s633 = scalar_lea.vmem %s6, %s632
      %s634 = smul.u32 2, %s24
      %p635 = scmp.lt.s32.totalorder %s23, 1
      %s636 = scalar_select %p635, %s23, 1
      %p637 = scmp.lt.s32.totalorder %s634, 1
      %s638 = scalar_select %p637, %s634, 1
      %s639 = smul.addr %s636, 2
      %s640 = sadd.s32 %s638, %s639
      %s641 = smul.addr %s640, 2
      %s642 = scalar_lea.vmem %s7, %s641
      // Predicated region
      $region45: #{mam_spectral_transform.10} parent=43 // pred_check
        %p643 = pneg %p191
      $region46: #{mam_spectral_transform.10} parent=43 // pred_check_branch
        %645 = sbr.rel (%p643) target = $region48
      $region47: #{mam_spectral_transform.10} parent=43 // pred_region
        %s646 = smul.u32 2, %s24
      $region48: #{mam_spectral_transform.10} parent=43 // pred_fallthru
        _
      // Predicated region
      $region49: #{mam_spectral_transform.10} parent=43 // pred_check
        %p647 = pneg %p219
      $region50: #{mam_spectral_transform.10} parent=43 // pred_check_branch
        %649 = sbr.rel (%p647) target = $region52
      $region51: #{mam_spectral_transform.10} parent=43 // pred_region
        %s650 = smul.u32 2, %s24
      $region52: #{mam_spectral_transform.10} parent=43 // pred_fallthru
        _
    $region44: #{mam_spectral_transform.10} parent=5 // pred_fallthru
      _
    %p651 = scmp.le.s32.totalorder 2, %s14
    // Predicated region
    $region53: #{mam_spectral_transform.10} parent=5 // pred_check
      %p652 = pneg %p651
    $region54: #{mam_spectral_transform.10} parent=5 // pred_check_branch
      %654 = sbr.rel (%p652) target = $region56
    $region55: #{mam_spectral_transform.10} parent=5 // pred_region
      %s655 = ssub.s32 %s14, 2
      // Predicated region
      $region57: #{mam_spectral_transform.10} parent=55 // pred_check
        %p656 = pneg %p197
      $region58: #{mam_spectral_transform.10} parent=55 // pred_check_branch
        %658 = sbr.rel (%p656) target = $region60
      $region59: #{mam_spectral_transform.10} parent=55 // pred_region
        %s659 = smul.u32 2, %s26
        %p660 = scmp.lt.s32.totalorder %s25, 1
        %s661 = scalar_select %p660, %s25, 1
        %p662 = scmp.lt.s32.totalorder %s659, 1
        %s663 = scalar_select %p662, %s659, 1
        %s664 = smul.addr %s661, 2
        %s665 = sadd.s32 %s663, %s664
        %s666 = smul.addr %s665, 2
        %s667 = scalar_lea.vmem %s6, %s666
      $region60: #{mam_spectral_transform.10} parent=55 // pred_fallthru
        _
      // Predicated region
      $region61: #{mam_spectral_transform.10} parent=55 // pred_check
        %p668 = pneg %p225
      $region62: #{mam_spectral_transform.10} parent=55 // pred_check_branch
        %670 = sbr.rel (%p668) target = $region64
      $region63: #{mam_spectral_transform.10} parent=55 // pred_region
        %s671 = smul.u32 2, %s26
        %p672 = scmp.lt.s32.totalorder %s25, 1
        %s673 = scalar_select %p672, %s25, 1
        %p674 = scmp.lt.s32.totalorder %s671, 1
        %s675 = scalar_select %p674, %s671, 1
        %s676 = smul.addr %s673, 2
        %s677 = sadd.s32 %s675, %s676
        %s678 = smul.addr %s677, 2
        %s679 = scalar_lea.vmem %s7, %s678
      $region64: #{mam_spectral_transform.10} parent=55 // pred_fallthru
        _
    $region56: #{mam_spectral_transform.10} parent=5 // pred_fallthru
      _
  $region6: #{mam_spectral_transform.10} parent=0 // loop_footer
    %s18 = sadd.s32 1, %s14
  $region7: #{mam_spectral_transform.10} parent=0 // loop_footer_branch
    %13 = sbr.rel target = $region3
  $region8: #{mam_spectral_transform.10} parent=0 // loop_exit
    _

// kernel: mam_spectral_transform.11
$region0: #{mam_spectral_transform.11}
  #allocation0 [shape = 'u32[]', space=smem, size = 0x4, offset = 0x4, fixed_abs, tag = 'smem constant byte address 0x4 - core index']
  #allocation1 [shape = 'u32[144,128]{1,0:T(1,128)}', space=vmem, size = 0x12000, scoped, tag = 'internal scratch']
  %s0 = inlined_call_operand.vmem [shape: bf16[2,4,16,16], index: 0, kind: input, shape index: {}]
  %s1 = inlined_call_operand.vmem [shape: bf16[2,4,16,16], index: 1, kind: input, shape index: {}]
  %s2 = inlined_call_operand.vmem [shape: bf16[32,16], index: 2, kind: input, shape index: {}, may-alias: {2,4}]
  %s3 = inlined_call_operand.vmem [shape: bf16[32,16], index: 3, kind: input, shape index: {}]
  %s4 = inlined_call_operand.vmem [shape: bf16[32,16], index: 4, kind: input, shape index: {}, may-alias: {2,4}]
  %s5 = inlined_call_operand.vmem [shape: f32[2,4,16,16], index: 5, kind: output, shape index: {}]
  %s6 = sld [smem:[#allocation0]]
  $region53: #{mam_spectral_transform.11} parent=0
    _
  %s8 = ssub.s32 1, %s6
  %s9 = scalar_select 0, %s8, %s6
  loop: start=0, step=1, limit=4
  $region2: #{mam_spectral_transform.11} parent=0 // loop_pre_header
    _
  $region3: #{mam_spectral_transform.11} parent=0 // loop_header
    %s11 = sphi 0, %s15
    %p12 = scmp.ge.s32.totalorder %s11, 4
    %s18 = sphi 0, %s30
    %s19 = sphi 0, %s26
    %s20 = sphi 0, %s18
    %s21 = sphi 0, %s19
    %s22 = sphi 0, %s20
    %s23 = sphi 0, %s21
    %s35 = sphi 0, %s37
    %s38 = sphi 0, %s35
    %s39 = sphi 0, %s38
    %s55 = sphi 0, %s39
    %s63 = sphi 0, %s65
    %s66 = sphi 0, %s63
    %s67 = sphi 0, %s66
    %s83 = sphi 0, %s67
    %s87 = sphi 0, %s87
    %s89 = sphi 0, %s87
    %s90 = sphi 0, %s89
    %s104 = sphi 0, %s90
    %s108 = sphi 0, %s108
    %s110 = sphi 0, %s108
    %s111 = sphi 0, %s110
    %s125 = sphi 0, %s111
    %s129 = sphi 0, %s129
    %s131 = sphi 0, %s129
    %s132 = sphi 0, %s131
    %s146 = sphi 0, %s132
    %s154 = sphi 0, %s156
    %s157 = sphi 0, %s154
    %s158 = sphi 0, %s157
    %s174 = sphi 0, %s158
  $region4: #{mam_spectral_transform.11} parent=0 // loop_header_branch
    %14 = sbr.rel (%p12) target = $region8
  $region5: #{mam_spectral_transform.11} parent=0 // loop_body
    %s16 = ssub.s32 %s11, 1
    %s17 = ssub.s32 %s11, 2
    %s24 = sadd.s32 1, %s19
    %p25 = scmp.ge.s32.totalorder %s24, 1
    %s26 = scalar_select %p25, 0, %s24
    %s27 = sadd.s32 1, %s18
    %s28 = scalar_select %p25, %s27, %s18
    %p29 = scmp.ge.s32.totalorder %s28, 2
    %s30 = scalar_select %p29, 0, %s28
    %s31 = ssub.s32 %s18, %s30
    %s32 = ssub.s32 %s19, %s26
    %s33 = sor.u32 %s31, %s32
    %p34 = scmp.eq.s32.totalorder %s33, 0
    %s36 = sadd.s32 %s35, 1
    %s37 = scalar_select %p34, %s35, %s36
    %p40 = pneg %p34
    %p41 = scmp.eq.s32.totalorder %s11, 1
    %p42 = por %p40, %p41
    %p43 = scmp.ne.s32.totalorder %s35, %s38
    %p44 = scmp.eq.s32.totalorder %s11, 0
    %p45 = por %p43, %p44
    %p46 = scmp.ne.s32.totalorder %s35, %s38
    %p47 = scmp.eq.s32.totalorder %s16, 1
    %p48 = por %p46, %p47
    %p49 = scmp.ne.s32.totalorder %s38, %s39
    %p50 = scmp.eq.s32.totalorder %s16, 0
    %p51 = por %p49, %p50
    %p52 = scmp.ne.s32.totalorder %s38, %s39
    %p53 = scmp.eq.s32.totalorder %s17, 1
    %p54 = por %p52, %p53
    %p56 = scmp.ne.s32.totalorder %s39, %s55
    %p57 = scmp.eq.s32.totalorder %s17, 0
    %p58 = por %p56, %p57
    %s59 = ssub.s32 %s18, %s30
    %s60 = ssub.s32 %s19, %s26
    %s61 = sor.u32 %s59, %s60
    %p62 = scmp.eq.s32.totalorder %s61, 0
    %s64 = sadd.s32 %s63, 1
    %s65 = scalar_select %p62, %s63, %s64
    %p68 = pneg %p62
    %p69 = scmp.eq.s32.totalorder %s11, 1
    %p70 = por %p68, %p69
    %p71 = scmp.ne.s32.totalorder %s63, %s66
    %p72 = scmp.eq.s32.totalorder %s11, 0
    %p73 = por %p71, %p72
    %p74 = scmp.ne.s32.totalorder %s63, %s66
    %p75 = scmp.eq.s32.totalorder %s16, 1
    %p76 = por %p74, %p75
    %p77 = scmp.ne.s32.totalorder %s66, %s67
    %p78 = scmp.eq.s32.totalorder %s16, 0
    %p79 = por %p77, %p78
    %p80 = scmp.ne.s32.totalorder %s66, %s67
    %p81 = scmp.eq.s32.totalorder %s17, 1
    %p82 = por %p80, %p81
    %p84 = scmp.ne.s32.totalorder %s67, %s83
    %p85 = scmp.eq.s32.totalorder %s17, 0
    %p86 = por %p84, %p85
    %s88 = sadd.s32 %s87, 1
    %p91 = scmp.eq.s32.totalorder %s11, 1
    %p92 = scmp.ne.s32.totalorder %s87, %s89
    %p93 = scmp.eq.s32.totalorder %s11, 0
    %p94 = por %p92, %p93
    %p95 = scmp.ne.s32.totalorder %s87, %s89
    %p96 = scmp.eq.s32.totalorder %s16, 1
    %p97 = por %p95, %p96
    %p98 = scmp.ne.s32.totalorder %s89, %s90
    %p99 = scmp.eq.s32.totalorder %s16, 0
    %p100 = por %p98, %p99
    %p101 = scmp.ne.s32.totalorder %s89, %s90
    %p102 = scmp.eq.s32.totalorder %s17, 1
    %p103 = por %p101, %p102
    %p105 = scmp.ne.s32.totalorder %s90, %s104
    %p106 = scmp.eq.s32.totalorder %s17, 0
    %p107 = por %p105, %p106
    %s109 = sadd.s32 %s108, 1
    %p112 = scmp.eq.s32.totalorder %s11, 1
    %p113 = scmp.ne.s32.totalorder %s108, %s110
    %p114 = scmp.eq.s32.totalorder %s11, 0
    %p115 = por %p113, %p114
    %p116 = scmp.ne.s32.totalorder %s108, %s110
    %p117 = scmp.eq.s32.totalorder %s16, 1
    %p118 = por %p116, %p117
    %p119 = scmp.ne.s32.totalorder %s110, %s111
    %p120 = scmp.eq.s32.totalorder %s16, 0
    %p121 = por %p119, %p120
    %p122 = scmp.ne.s32.totalorder %s110, %s111
    %p123 = scmp.eq.s32.totalorder %s17, 1
    %p124 = por %p122, %p123
    %p126 = scmp.ne.s32.totalorder %s111, %s125
    %p127 = scmp.eq.s32.totalorder %s17, 0
    %p128 = por %p126, %p127
    %s130 = sadd.s32 %s129, 1
    %p133 = scmp.eq.s32.totalorder %s11, 1
    %p134 = scmp.ne.s32.totalorder %s129, %s131
    %p135 = scmp.eq.s32.totalorder %s11, 0
    %p136 = por %p134, %p135
    %p137 = scmp.ne.s32.totalorder %s129, %s131
    %p138 = scmp.eq.s32.totalorder %s16, 1
    %p139 = por %p137, %p138
    %p140 = scmp.ne.s32.totalorder %s131, %s132
    %p141 = scmp.eq.s32.totalorder %s16, 0
    %p142 = por %p140, %p141
    %p143 = scmp.ne.s32.totalorder %s131, %s132
    %p144 = scmp.eq.s32.totalorder %s17, 1
    %p145 = por %p143, %p144
    %p147 = scmp.ne.s32.totalorder %s132, %s146
    %p148 = scmp.eq.s32.totalorder %s17, 0
    %p149 = por %p147, %p148
    %s150 = ssub.s32 %s18, %s30
    %s151 = ssub.s32 %s19, %s26
    %s152 = sor.u32 %s150, %s151
    %p153 = scmp.eq.s32.totalorder %s152, 0
    %s155 = sadd.s32 %s154, 1
    %s156 = scalar_select %p153, %s154, %s155
    %p159 = pneg %p153
    %p160 = scmp.eq.s32.totalorder %s11, 1
    %p161 = por %p159, %p160
    %p162 = scmp.ne.s32.totalorder %s154, %s157
    %p163 = scmp.eq.s32.totalorder %s11, 0
    %p164 = por %p162, %p163
    %p165 = scmp.ne.s32.totalorder %s154, %s157
    %p166 = scmp.eq.s32.totalorder %s16, 1
    %p167 = por %p165, %p166
    %p168 = scmp.ne.s32.totalorder %s157, %s158
    %p169 = scmp.eq.s32.totalorder %s16, 0
    %p170 = por %p168, %p169
    %p171 = scmp.ne.s32.totalorder %s157, %s158
    %p172 = scmp.eq.s32.totalorder %s17, 1
    %p173 = por %p171, %p172
    %p175 = scmp.ne.s32.totalorder %s158, %s174
    %p176 = scmp.eq.s32.totalorder %s17, 0
    %p177 = por %p175, %p176
    %p178 = scmp.le.s32.totalorder 1, %s11
    %p179 = scmp.lt.s32.totalorder %s11, 3
    %p180 = pnand %p178, %p179
    %p181 = pneg %p180
    // Predicated region
    $region9: #{mam_spectral_transform.11} parent=5 // pred_check
      _
    $region10: #{mam_spectral_transform.11} parent=5 // pred_check_branch
      %183 = sbr.rel (%p180) target = $region12
    $region11: #{mam_spectral_transform.11} parent=5 // pred_region
      %s184 = ssub.s32 %s11, 1
      // Predicated region
      $region13: #{mam_spectral_transform.11} parent=11 // pred_check
        %p185 = pneg %p100
      $region14: #{mam_spectral_transform.11} parent=11 // pred_check_branch
        %187 = sbr.rel (%p185) target = $region16
      $region15: #{mam_spectral_transform.11} parent=11 // pred_region
        _
      $region16: #{mam_spectral_transform.11} parent=11 // pred_fallthru
        _
      // Predicated region
      $region17: #{mam_spectral_transform.11} parent=11 // pred_check
        %p188 = pneg %p121
      $region18: #{mam_spectral_transform.11} parent=11 // pred_check_branch
        %190 = sbr.rel (%p188) target = $region20
      $region19: #{mam_spectral_transform.11} parent=11 // pred_region
        _
      $region20: #{mam_spectral_transform.11} parent=11 // pred_fallthru
        _
      // Predicated region
      $region21: #{mam_spectral_transform.11} parent=11 // pred_check
        %p191 = pneg %p142
      $region22: #{mam_spectral_transform.11} parent=11 // pred_check_branch
        %193 = sbr.rel (%p191) target = $region24
      $region23: #{mam_spectral_transform.11} parent=11 // pred_region
        _
      $region24: #{mam_spectral_transform.11} parent=11 // pred_fallthru
        _
    $region12: #{mam_spectral_transform.11} parent=5 // pred_fallthru
      _
    %p194 = scmp.lt.s32.totalorder %s11, 2
    // Predicated region
    $region25: #{mam_spectral_transform.11} parent=5 // pred_check
      %p195 = pneg %p194
    $region26: #{mam_spectral_transform.11} parent=5 // pred_check_branch
      %197 = sbr.rel (%p195) target = $region28
    $region27: #{mam_spectral_transform.11} parent=5 // pred_region
      // Predicated region
      $region29: #{mam_spectral_transform.11} parent=27 // pred_check
        %p198 = pneg %p45
      $region30: #{mam_spectral_transform.11} parent=27 // pred_check_branch
        %200 = sbr.rel (%p198) target = $region32
      $region31: #{mam_spectral_transform.11} parent=27 // pred_region
        %s201 = smul.u32 4, %s19
        %p202 = scmp.lt.s32.totalorder %s18, 1
        %s203 = scalar_select %p202, %s18, 1
        %p204 = scmp.lt.s32.totalorder %s201, 3
        %s205 = scalar_select %p204, %s201, 3
        %s206 = smul.addr %s205, 2
        %s207 = smul.addr %s203, 8
        %s208 = sadd.s32 %s206, %s207
        %s209 = smul.addr %s208, 4
        %s210 = scalar_lea.vmem %s0, %s209
        %s211 = smul.u32 4, %s19
      $region32: #{mam_spectral_transform.11} parent=27 // pred_fallthru
        _
      // Predicated region
      $region33: #{mam_spectral_transform.11} parent=27 // pred_check
        %p212 = pneg %p73
      $region34: #{mam_spectral_transform.11} parent=27 // pred_check_branch
        %214 = sbr.rel (%p212) target = $region36
      $region35: #{mam_spectral_transform.11} parent=27 // pred_region
        %s215 = smul.u32 4, %s19
        %p216 = scmp.lt.s32.totalorder %s18, 1
        %s217 = scalar_select %p216, %s18, 1
        %p218 = scmp.lt.s32.totalorder %s215, 3
        %s219 = scalar_select %p218, %s215, 3
        %s220 = smul.addr %s219, 2
        %s221 = smul.addr %s217, 8
        %s222 = sadd.s32 %s220, %s221
        %s223 = smul.addr %s222, 4
        %s224 = scalar_lea.vmem %s1, %s223
        %s225 = smul.u32 4, %s19
      $region36: #{mam_spectral_transform.11} parent=27 // pred_fallthru
        _
    $region28: #{mam_spectral_transform.11} parent=5 // pred_fallthru
      _
    %p226 = scmp.le.s32.totalorder 1, %s11
    %p227 = scmp.lt.s32.totalorder %s11, 3
    %p228 = pnand %p226, %p227
    %p229 = pneg %p228
    // Predicated region
    $region37: #{mam_spectral_transform.11} parent=5 // pred_check
      _
    $region38: #{mam_spectral_transform.11} parent=5 // pred_check_branch
      %231 = sbr.rel (%p228) target = $region40
    $region39: #{mam_spectral_transform.11} parent=5 // pred_region
      %s232 = ssub.s32 %s11, 1
      %s233 = smul.u32 4, %s21
      %p234 = scmp.lt.s32.totalorder %s20, 1
      %s235 = scalar_select %p234, %s20, 1
      %p236 = scmp.lt.s32.totalorder %s233, 3
      %s237 = scalar_select %p236, %s233, 3
      %s238 = smul.addr %s237, 2
      %s239 = smul.addr %s235, 8
      %s240 = sadd.s32 %s238, %s239
      %s241 = smul.addr %s240, 4
      %s242 = scalar_lea.vmem %s0, %s241
      %p243 = pneg %p51
      %p244 = pneg %p48
      %s245 = smul.u32 4, %s21
      %p246 = scmp.lt.s32.totalorder %s20, 1
      %s247 = scalar_select %p246, %s20, 1
      %p248 = scmp.lt.s32.totalorder %s245, 3
      %s249 = scalar_select %p248, %s245, 3
      %s250 = smul.addr %s249, 2
      %s251 = smul.addr %s247, 8
      %s252 = sadd.s32 %s250, %s251
      %s253 = smul.addr %s252, 4
      %s254 = scalar_lea.vmem %s1, %s253
      %p255 = pneg %p79
      %p256 = pneg %p76
      %p257 = pneg %p100
      %p258 = pneg %p97
      %p259 = pneg %p121
      %p260 = pneg %p118
      %p261 = pneg %p142
      %p262 = pneg %p139
      %p263 = pneg %p170
      %p264 = pneg %p167
      %s265 = smul.u32 4, %s21
      %p266 = scmp.lt.s32.totalorder %s20, 1
      %s267 = scalar_select %p266, %s20, 1
      %p268 = scmp.lt.s32.totalorder %s265, 3
      %s269 = scalar_select %p268, %s265, 3
      %s270 = smul.addr %s269, 2
      %s271 = smul.addr %s267, 8
      %s272 = sadd.s32 %s270, %s271
      %s273 = smul.addr %s272, 8
      %s274 = scalar_lea.vmem %s5, %s273
      %s275 = smul.u32 4, %s21
      %p276 = scmp.lt.s32.totalorder %s20, 1
      %s277 = scalar_select %p276, %s20, 1
      %p278 = scmp.lt.s32.totalorder %s275, 3
      %s279 = scalar_select %p278, %s275, 3
      %s280 = smul.addr %s279, 2
      %s281 = smul.addr %s277, 8
      %s282 = sadd.s32 %s280, %s281
      %s283 = smul.addr %s282, 4
      %s284 = scalar_lea.vmem %s0, %s283
      %s285 = smul.u32 4, %s21
      %s286 = smul.u32 4, %s21
      %p287 = scmp.lt.s32.totalorder %s20, 1
      %s288 = scalar_select %p287, %s20, 1
      %p289 = scmp.lt.s32.totalorder %s286, 3
      %s290 = scalar_select %p289, %s286, 3
      %s291 = smul.addr %s290, 2
      %s292 = smul.addr %s288, 8
      %s293 = sadd.s32 %s291, %s292
      %s294 = smul.addr %s293, 4
      %s295 = scalar_lea.vmem %s1, %s294
      %s296 = smul.u32 4, %s21
      %s297 = smul.u32 4, %s21
      %p298 = scmp.lt.s32.totalorder %s20, 1
      %s299 = scalar_select %p298, %s20, 1
      %p300 = scmp.lt.s32.totalorder %s297, 3
      %s301 = scalar_select %p300, %s297, 3
      %s302 = smul.addr %s301, 2
      %s303 = smul.addr %s299, 8
      %s304 = sadd.s32 %s302, %s303
      %s305 = smul.addr %s304, 8
      %s306 = scalar_lea.vmem %s5, %s305
      %s307 = smul.u32 4, %s21
      %v309 = vld [vmem:[%s284] sm:$0xf]
      %v310 = vld [vmem:[%s284 + $0x4] sm:$0xf]
      %v311 = vld [vmem:[%s284 + $0x8] sm:$0xf]
      %v312 = vld [vmem:[%s284 + $0xc] sm:$0xf]
      %v313 = vld [vmem:[%s284 + $0x10] sm:$0xf]
      %v314 = vld [vmem:[%s284 + $0x14] sm:$0xf]
      %v315 = vld [vmem:[%s284 + $0x18] sm:$0xf]
      %v316 = vld [vmem:[%s284 + $0x1c] sm:$0xf]
      %v317 = vld [vmem:[%s295] sm:$0xf]
      %v318 = vld [vmem:[%s295 + $0x4] sm:$0xf]
      %v319 = vld [vmem:[%s295 + $0x8] sm:$0xf]
      %v320 = vld [vmem:[%s295 + $0xc] sm:$0xf]
      %v321 = vld [vmem:[%s295 + $0x10] sm:$0xf]
      %v322 = vld [vmem:[%s295 + $0x14] sm:$0xf]
      %v323 = vld [vmem:[%s295 + $0x18] sm:$0xf]
      %v324 = vld [vmem:[%s295 + $0x1c] sm:$0xf]
      %v333 = vunpack.c.l.b16 %v309
      %v334 = vunpack.c.l.b16 %v310
      %v335 = vunpack.c.l.b16 %v311
      %v336 = vunpack.c.l.b16 %v312
      %v337 = vunpack.c.l.b16 %v313
      %v338 = vunpack.c.l.b16 %v314
      %v339 = vunpack.c.l.b16 %v315
      %v340 = vunpack.c.l.b16 %v316
      %v341 = vpack.c.b16 %v334, %v333
      %v342 = vpack.c.b16 %v336, %v335
      %v343 = vpack.c.b16 %v338, %v337
      %v344 = vpack.c.b16 %v340, %v339
      %v353 = vunpack.c.l.b16 %v317
      %v354 = vunpack.c.l.b16 %v318
      %v355 = vunpack.c.l.b16 %v319
      %v356 = vunpack.c.l.b16 %v320
      %v357 = vunpack.c.l.b16 %v321
      %v358 = vunpack.c.l.b16 %v322
      %v359 = vunpack.c.l.b16 %v323
      %v360 = vunpack.c.l.b16 %v324
      %v361 = vpack.c.b16 %v354, %v353
      %v362 = vpack.c.b16 %v356, %v355
      %v363 = vpack.c.b16 %v358, %v357
      %v364 = vpack.c.b16 %v360, %v359
      %365 = vrot.lane.b32.xlu0 %v361, 16
      %v366 = vpop.permute.xlu0 %365
      %367 = vrot.lane.b32.xlu0 %v362, 16
      %v368 = vpop.permute.xlu0 %367
      %369 = vrot.lane.b32.xlu0 %v363, 16
      %v370 = vpop.permute.xlu0 %369
      %371 = vrot.lane.b32.xlu0 %v364, 16
      %v372 = vpop.permute.xlu0 %371
      %vm373 = vcmask 130048
      %v376 = vsel %vm373, %v341, %v366
      %v379 = vsel %vm373, %v342, %v368
      %v382 = vsel %vm373, %v343, %v370
      %v385 = vsel %vm373, %v344, %v372
      %v386 = vld [vmem:[%s2] sm:$0xf]
      %v387 = vld [vmem:[%s2 + $0x4] sm:$0xf]
      %v388 = vld [vmem:[%s2 + $0x8] sm:$0xf]
      %v389 = vld [vmem:[%s2 + $0xc] sm:$0xf]
      %v394 = vunpack.c.l.b16 %v386
      %v395 = vunpack.c.l.b16 %v387
      %v396 = vunpack.c.l.b16 %v388
      %v397 = vunpack.c.l.b16 %v389
      %v398 = vpack.c.b16 %v395, %v394
      %v399 = vpack.c.b16 %v397, %v396
      %vm402 = vcmask 261120
      %v403 = vsel %vm402, %v376, 0
      %v405 = vsel %vm402, %v379, 0
      %v407 = vsel %vm402, %v382, 0
      %v409 = vsel %vm402, %v385, 0
      %411 = vmatprep.subr.bf16.mxu0 0
      %412 = vmatpush1.bf16.msra.mxu0 %v398
      %413 = vmatprep.subr.bf16.mxu0 0
      %414 = vmatpush1.bf16.msra.mxu0 %v399
      %415 = vmatprep.subr.bf16.mxu0 0
      %416 = vmatpush1.bf16.msra.mxu0 0
      %417 = vmatprep.subr.bf16.mxu0 0
      %418 = vmatpush1.bf16.msra.mxu0 0
      %419 = vmatprep.subr.bf16.mxu0 0
      %420 = vmatpush1.bf16.msra.mxu0 0
      %421 = vmatprep.subr.bf16.mxu0 0
      %422 = vmatpush1.bf16.msra.mxu0 0
      %423 = vmatprep.subr.bf16.mxu0 0
      %424 = vmatpush1.bf16.msra.mxu0 0
      %425 = vmatprep.subr.bf16.mxu0 0
      %426 = vmatpush1.bf16.msra.mxu0 0
      %427 = vmatprep.subr.bf16.mxu0 0
      %428 = vmatpush1.bf16.msra.mxu0 0
      %429 = vmatprep.subr.bf16.mxu0 0
      %430 = vmatpush1.bf16.msra.mxu0 0
      %431 = vmatprep.subr.bf16.mxu0 0
      %432 = vmatpush1.bf16.msra.mxu0 0
      %433 = vmatprep.subr.bf16.mxu0 0
      %434 = vmatpush1.bf16.msra.mxu0 0
      %435 = vmatprep.subr.bf16.mxu0 0
      %436 = vmatpush1.bf16.msra.mxu0 0
      %437 = vmatprep.subr.bf16.mxu0 0
      %438 = vmatpush1.bf16.msra.mxu0 0
      %439 = vmatprep.subr.bf16.mxu0 0
      %440 = vmatpush1.bf16.msra.mxu0 0
      %441 = vmatprep.subr.bf16.mxu0 0
      %442 = vmatpush1.bf16.msra.mxu0 0
      %443 = vmatprep.mubr.bf16.mxu0 0
      %444 = vmatmul.mubr.bf16.gmra.mrb[0].mxu0 %v403
      %v445 = vpop.f32.mrb[0].mxu0
      %v446 = vadd.f32 0.0, %v445
      %v447 = vpop.f32.mrb[0].mxu0
      %v448 = vpop.f32.mrb[0].mxu0
      %v449 = vadd.f32 0.0, %v448
      %v450 = vpop.f32.mrb[0].mxu0
      %451 = vmatprep.mubr.bf16.mxu0 0
      %452 = vmatmul.mubr.bf16.gmra.mrb[0].mxu0 %v405
      %v453 = vpop.f32.mrb[0].mxu0
      %v454 = vadd.f32 0.0, %v453
      %v455 = vpop.f32.mrb[0].mxu0
      %v456 = vpop.f32.mrb[0].mxu0
      %v457 = vadd.f32 0.0, %v456
      %v458 = vpop.f32.mrb[0].mxu0
      %459 = vmatprep.mubr.bf16.mxu0 0
      %460 = vmatmul.mubr.bf16.gmra.mrb[0].mxu0 %v407
      %v461 = vpop.f32.mrb[0].mxu0
      %v462 = vadd.f32 0.0, %v461
      %v463 = vpop.f32.mrb[0].mxu0
      %v464 = vpop.f32.mrb[0].mxu0
      %v465 = vadd.f32 0.0, %v464
      %v466 = vpop.f32.mrb[0].mxu0
      %467 = vmatprep.mubr.bf16.mxu0 0
      %468 = vmatmul.mubr.bf16.gmra.mrb[0].mxu0 %v409
      %v469 = vpop.f32.mrb[0].mxu0
      %v470 = vadd.f32 0.0, %v469
      %v471 = vpop.f32.mrb[0].mxu0
      %v472 = vpop.f32.mrb[0].mxu0
      %v473 = vadd.f32 0.0, %v472
      %v474 = vpop.f32.mrb[0].mxu0
      %475 = vdwg.mxu0
      %v476 = vld [vmem:[%s3] sm:$0xf]
      %v477 = vld [vmem:[%s3 + $0x4] sm:$0xf]
      %v478 = vld [vmem:[%s3 + $0x8] sm:$0xf]
      %v479 = vld [vmem:[%s3 + $0xc] sm:$0xf]
      %v484 = vunpack.c.l.b16 %v476
      %v485 = vunpack.c.l.b16 %v477
      %v486 = vunpack.c.l.b16 %v478
      %v487 = vunpack.c.l.b16 %v479
      %v488 = vpack.c.b16 %v485, %v484
      %v489 = vpack.c.b16 %v487, %v486
      %492 = vmatprep.subr.bf16.mxu0 0
      %493 = vmatpush1.bf16.msra.mxu0 %v488
      %494 = vmatprep.subr.bf16.mxu0 0
      %495 = vmatpush1.bf16.msra.mxu0 %v489
      %496 = vmatprep.subr.bf16.mxu0 0
      %497 = vmatpush1.bf16.msra.mxu0 0
      %498 = vmatprep.subr.bf16.mxu0 0
      %499 = vmatpush1.bf16.msra.mxu0 0
      %500 = vmatprep.subr.bf16.mxu0 0
      %501 = vmatpush1.bf16.msra.mxu0 0
      %502 = vmatprep.subr.bf16.mxu0 0
      %503 = vmatpush1.bf16.msra.mxu0 0
      %504 = vmatprep.subr.bf16.mxu0 0
      %505 = vmatpush1.bf16.msra.mxu0 0
      %506 = vmatprep.subr.bf16.mxu0 0
      %507 = vmatpush1.bf16.msra.mxu0 0
      %508 = vmatprep.subr.bf16.mxu0 0
      %509 = vmatpush1.bf16.msra.mxu0 0
      %510 = vmatprep.subr.bf16.mxu0 0
      %511 = vmatpush1.bf16.msra.mxu0 0
      %512 = vmatprep.subr.bf16.mxu0 0
      %513 = vmatpush1.bf16.msra.mxu0 0
      %514 = vmatprep.subr.bf16.mxu0 0
      %515 = vmatpush1.bf16.msra.mxu0 0
      %516 = vmatprep.subr.bf16.mxu0 0
      %517 = vmatpush1.bf16.msra.mxu0 0
      %518 = vmatprep.subr.bf16.mxu0 0
      %519 = vmatpush1.bf16.msra.mxu0 0
      %520 = vmatprep.subr.bf16.mxu0 0
      %521 = vmatpush1.bf16.msra.mxu0 0
      %522 = vmatprep.subr.bf16.mxu0 0
      %523 = vmatpush1.bf16.msra.mxu0 0
      %524 = vmatprep.mubr.bf16.mxu0 0
      %525 = vmatmul.mubr.bf16.gmra.mrb[0].mxu0 %v403
      %v526 = vpop.f32.mrb[0].mxu0
      %v527 = vadd.f32 0.0, %v526
      %v528 = vpop.f32.mrb[0].mxu0
      %v529 = vpop.f32.mrb[0].mxu0
      %v530 = vadd.f32 0.0, %v529
      %v531 = vpop.f32.mrb[0].mxu0
      %532 = vmatprep.mubr.bf16.mxu0 0
      %533 = vmatmul.mubr.bf16.gmra.mrb[0].mxu0 %v405
      %v534 = vpop.f32.mrb[0].mxu0
      %v535 = vadd.f32 0.0, %v534
      %v536 = vpop.f32.mrb[0].mxu0
      %v537 = vpop.f32.mrb[0].mxu0
      %v538 = vadd.f32 0.0, %v537
      %v539 = vpop.f32.mrb[0].mxu0
      %540 = vmatprep.mubr.bf16.mxu0 0
      %541 = vmatmul.mubr.bf16.gmra.mrb[0].mxu0 %v407
      %v542 = vpop.f32.mrb[0].mxu0
      %v543 = vadd.f32 0.0, %v542
      %v544 = vpop.f32.mrb[0].mxu0
      %v545 = vpop.f32.mrb[0].mxu0
      %v546 = vadd.f32 0.0, %v545
      %v547 = vpop.f32.mrb[0].mxu0
      %548 = vmatprep.mubr.bf16.mxu0 0
      %549 = vmatmul.mubr.bf16.gmra.mrb[0].mxu0 %v409
      %v550 = vpop.f32.mrb[0].mxu0
      %v551 = vadd.f32 0.0, %v550
      %v552 = vpop.f32.mrb[0].mxu0
      %v553 = vpop.f32.mrb[0].mxu0
      %v554 = vadd.f32 0.0, %v553
      %v555 = vpop.f32.mrb[0].mxu0
      %556 = vdwg.mxu0
      %557 = vxpose.xlu0.b32.start [1/16] %v446, 128
      %558 = vxpose.xlu0.b32.cont [2/16] %v449, 128
      %559 = vxpose.xlu0.b32.cont [3/16] 0.0, 128
      %560 = vxpose.xlu0.b32.cont [4/16] 0.0, 128
      %561 = vxpose.xlu0.b32.cont [5/16] 0.0, 128
      %562 = vxpose.xlu0.b32.cont [6/16] 0.0, 128
      %563 = vxpose.xlu0.b32.cont [7/16] 0.0, 128
      %564 = vxpose.xlu0.b32.cont [8/16] 0.0, 128
      %565 = vxpose.xlu0.b32.cont [9/16] 0.0, 128
      %566 = vxpose.xlu0.b32.cont [10/16] 0.0, 128
      %567 = vxpose.xlu0.b32.cont [11/16] 0.0, 128
      %568 = vxpose.xlu0.b32.cont [12/16] 0.0, 128
      %569 = vxpose.xlu0.b32.cont [13/16] 0.0, 128
      %570 = vxpose.xlu0.b32.cont [14/16] 0.0, 128
      %571 = vxpose.xlu0.b32.cont [15/16] 0.0, 128
      %572 = vxpose.xlu0.b32.end [16/16] 0.0, 128
      %v573 = vpop.trf.xlu0
      %v574 = vpop.trf.xlu0
      %v575 = vpop.trf.xlu0
      %v576 = vpop.trf.xlu0
      %v577 = vpop.trf.xlu0
      %v578 = vpop.trf.xlu0
      %v579 = vpop.trf.xlu0
      %v580 = vpop.trf.xlu0
      %v581 = vpop.trf.xlu0
      %v582 = vpop.trf.xlu0
      %v583 = vpop.trf.xlu0
      %v584 = vpop.trf.xlu0
      %v585 = vpop.trf.xlu0
      %v586 = vpop.trf.xlu0
      %v587 = vpop.trf.xlu0
      %v588 = vpop.trf.xlu0
      %589 = vxpose.xlu0.b32.start [1/16] %v454, 128
      %590 = vxpose.xlu0.b32.cont [2/16] %v457, 128
      %591 = vxpose.xlu0.b32.cont [3/16] 0.0, 128
      %592 = vxpose.xlu0.b32.cont [4/16] 0.0, 128
      %593 = vxpose.xlu0.b32.cont [5/16] 0.0, 128
      %594 = vxpose.xlu0.b32.cont [6/16] 0.0, 128
      %595 = vxpose.xlu0.b32.cont [7/16] 0.0, 128
      %596 = vxpose.xlu0.b32.cont [8/16] 0.0, 128
      %597 = vxpose.xlu0.b32.cont [9/16] 0.0, 128
      %598 = vxpose.xlu0.b32.cont [10/16] 0.0, 128
      %599 = vxpose.xlu0.b32.cont [11/16] 0.0, 128
      %600 = vxpose.xlu0.b32.cont [12/16] 0.0, 128
      %601 = vxpose.xlu0.b32.cont [13/16] 0.0, 128
      %602 = vxpose.xlu0.b32.cont [14/16] 0.0, 128
      %603 = vxpose.xlu0.b32.cont [15/16] 0.0, 128
      %604 = vxpose.xlu0.b32.end [16/16] 0.0, 128
      %v605 = vpop.trf.xlu0
      %v606 = vpop.trf.xlu0
      %v607 = vpop.trf.xlu0
      %v608 = vpop.trf.xlu0
      %v609 = vpop.trf.xlu0
      %v610 = vpop.trf.xlu0
      %v611 = vpop.trf.xlu0
      %v612 = vpop.trf.xlu0
      %v613 = vpop.trf.xlu0
      %v614 = vpop.trf.xlu0
      %v615 = vpop.trf.xlu0
      %v616 = vpop.trf.xlu0
      %v617 = vpop.trf.xlu0
      %v618 = vpop.trf.xlu0
      %v619 = vpop.trf.xlu0
      %v620 = vpop.trf.xlu0
      %621 = vxpose.xlu0.b32.start [1/16] %v462, 128
      %622 = vxpose.xlu0.b32.cont [2/16] %v465, 128
      %623 = vxpose.xlu0.b32.cont [3/16] 0.0, 128
      %624 = vxpose.xlu0.b32.cont [4/16] 0.0, 128
      %625 = vxpose.xlu0.b32.cont [5/16] 0.0, 128
      %626 = vxpose.xlu0.b32.cont [6/16] 0.0, 128
      %627 = vxpose.xlu0.b32.cont [7/16] 0.0, 128
      %628 = vxpose.xlu0.b32.cont [8/16] 0.0, 128
      %629 = vxpose.xlu0.b32.cont [9/16] 0.0, 128
      %630 = vxpose.xlu0.b32.cont [10/16] 0.0, 128
      %631 = vxpose.xlu0.b32.cont [11/16] 0.0, 128
      %632 = vxpose.xlu0.b32.cont [12/16] 0.0, 128
      %633 = vxpose.xlu0.b32.cont [13/16] 0.0, 128
      %634 = vxpose.xlu0.b32.cont [14/16] 0.0, 128
      %635 = vxpose.xlu0.b32.cont [15/16] 0.0, 128
      %636 = vxpose.xlu0.b32.end [16/16] 0.0, 128
      %v637 = vpop.trf.xlu0
      %v638 = vpop.trf.xlu0
      %v639 = vpop.trf.xlu0
      %v640 = vpop.trf.xlu0
      %v641 = vpop.trf.xlu0
      %v642 = vpop.trf.xlu0
      %v643 = vpop.trf.xlu0
      %v644 = vpop.trf.xlu0
      %v645 = vpop.trf.xlu0
      %v646 = vpop.trf.xlu0
      %v647 = vpop.trf.xlu0
      %v648 = vpop.trf.xlu0
      %v649 = vpop.trf.xlu0
      %v650 = vpop.trf.xlu0
      %v651 = vpop.trf.xlu0
      %v652 = vpop.trf.xlu0
      %653 = vxpose.xlu0.b32.start [1/16] %v470, 128
      %654 = vxpose.xlu0.b32.cont [2/16] %v473, 128
      %655 = vxpose.xlu0.b32.cont [3/16] 0.0, 128
      %656 = vxpose.xlu0.b32.cont [4/16] 0.0, 128
      %657 = vxpose.xlu0.b32.cont [5/16] 0.0, 128
      %658 = vxpose.xlu0.b32.cont [6/16] 0.0, 128
      %659 = vxpose.xlu0.b32.cont [7/16] 0.0, 128
      %660 = vxpose.xlu0.b32.cont [8/16] 0.0, 128
      %661 = vxpose.xlu0.b32.cont [9/16] 0.0, 128
      %662 = vxpose.xlu0.b32.cont [10/16] 0.0, 128
      %663 = vxpose.xlu0.b32.cont [11/16] 0.0, 128
      %664 = vxpose.xlu0.b32.cont [12/16] 0.0, 128
      %665 = vxpose.xlu0.b32.cont [13/16] 0.0, 128
      %666 = vxpose.xlu0.b32.cont [14/16] 0.0, 128
      %667 = vxpose.xlu0.b32.cont [15/16] 0.0, 128
      %668 = vxpose.xlu0.b32.end [16/16] 0.0, 128
      %v669 = vpop.trf.xlu0
      %v670 = vpop.trf.xlu0
      %v671 = vpop.trf.xlu0
      %v672 = vpop.trf.xlu0
      %v673 = vpop.trf.xlu0
      %v674 = vpop.trf.xlu0
      %v675 = vpop.trf.xlu0
      %v676 = vpop.trf.xlu0
      %v677 = vpop.trf.xlu0
      %v678 = vpop.trf.xlu0
      %v679 = vpop.trf.xlu0
      %v680 = vpop.trf.xlu0
      %v681 = vpop.trf.xlu0
      %v682 = vpop.trf.xlu0
      %v683 = vpop.trf.xlu0
      %v684 = vpop.trf.xlu0
      %685 = vxpose.xlu0.b32.start [1/16] %v527, 128
      %686 = vxpose.xlu0.b32.cont [2/16] %v530, 128
      %687 = vxpose.xlu0.b32.cont [3/16] 0.0, 128
      %688 = vxpose.xlu0.b32.cont [4/16] 0.0, 128
      %689 = vxpose.xlu0.b32.cont [5/16] 0.0, 128
      %690 = vxpose.xlu0.b32.cont [6/16] 0.0, 128
      %691 = vxpose.xlu0.b32.cont [7/16] 0.0, 128
      %692 = vxpose.xlu0.b32.cont [8/16] 0.0, 128
      %693 = vxpose.xlu0.b32.cont [9/16] 0.0, 128
      %694 = vxpose.xlu0.b32.cont [10/16] 0.0, 128
      %695 = vxpose.xlu0.b32.cont [11/16] 0.0, 128
      %696 = vxpose.xlu0.b32.cont [12/16] 0.0, 128
      %697 = vxpose.xlu0.b32.cont [13/16] 0.0, 128
      %698 = vxpose.xlu0.b32.cont [14/16] 0.0, 128
      %699 = vxpose.xlu0.b32.cont [15/16] 0.0, 128
      %700 = vxpose.xlu0.b32.end [16/16] 0.0, 128
      %v701 = vpop.trf.xlu0
      %v702 = vpop.trf.xlu0
      %v703 = vpop.trf.xlu0
      %v704 = vpop.trf.xlu0
      %v705 = vpop.trf.xlu0
      %v706 = vpop.trf.xlu0
      %v707 = vpop.trf.xlu0
      %v708 = vpop.trf.xlu0
      %v709 = vpop.trf.xlu0
      %v710 = vpop.trf.xlu0
      %v711 = vpop.trf.xlu0
      %v712 = vpop.trf.xlu0
      %v713 = vpop.trf.xlu0
      %v714 = vpop.trf.xlu0
      %v715 = vpop.trf.xlu0
      %v716 = vpop.trf.xlu0
      %717 = vxpose.xlu0.b32.start [1/16] %v535, 128
      %718 = vxpose.xlu0.b32.cont [2/16] %v538, 128
      %719 = vxpose.xlu0.b32.cont [3/16] 0.0, 128
      %720 = vxpose.xlu0.b32.cont [4/16] 0.0, 128
      %721 = vxpose.xlu0.b32.cont [5/16] 0.0, 128
      %722 = vxpose.xlu0.b32.cont [6/16] 0.0, 128
      %723 = vxpose.xlu0.b32.cont [7/16] 0.0, 128
      %724 = vxpose.xlu0.b32.cont [8/16] 0.0, 128
      %725 = vxpose.xlu0.b32.cont [9/16] 0.0, 128
      %726 = vxpose.xlu0.b32.cont [10/16] 0.0, 128
      %727 = vxpose.xlu0.b32.cont [11/16] 0.0, 128
      %728 = vxpose.xlu0.b32.cont [12/16] 0.0, 128
      %729 = vxpose.xlu0.b32.cont [13/16] 0.0, 128
      %730 = vxpose.xlu0.b32.cont [14/16] 0.0, 128
      %731 = vxpose.xlu0.b32.cont [15/16] 0.0, 128
      %732 = vxpose.xlu0.b32.end [16/16] 0.0, 128
      %v733 = vpop.trf.xlu0
      %v734 = vpop.trf.xlu0
      %v735 = vpop.trf.xlu0
      %v736 = vpop.trf.xlu0
      %v737 = vpop.trf.xlu0
      %v738 = vpop.trf.xlu0
      %v739 = vpop.trf.xlu0
      %v740 = vpop.trf.xlu0
      %v741 = vpop.trf.xlu0
      %v742 = vpop.trf.xlu0
      %v743 = vpop.trf.xlu0
      %v744 = vpop.trf.xlu0
      %v745 = vpop.trf.xlu0
      %v746 = vpop.trf.xlu0
      %v747 = vpop.trf.xlu0
      %v748 = vpop.trf.xlu0
      %749 = vxpose.xlu0.b32.start [1/16] %v543, 128
      %750 = vxpose.xlu0.b32.cont [2/16] %v546, 128
      %751 = vxpose.xlu0.b32.cont [3/16] 0.0, 128
      %752 = vxpose.xlu0.b32.cont [4/16] 0.0, 128
      %753 = vxpose.xlu0.b32.cont [5/16] 0.0, 128
      %754 = vxpose.xlu0.b32.cont [6/16] 0.0, 128
      %755 = vxpose.xlu0.b32.cont [7/16] 0.0, 128
      %756 = vxpose.xlu0.b32.cont [8/16] 0.0, 128
      %757 = vxpose.xlu0.b32.cont [9/16] 0.0, 128
      %758 = vxpose.xlu0.b32.cont [10/16] 0.0, 128
      %759 = vxpose.xlu0.b32.cont [11/16] 0.0, 128
      %760 = vxpose.xlu0.b32.cont [12/16] 0.0, 128
      %761 = vxpose.xlu0.b32.cont [13/16] 0.0, 128
      %762 = vxpose.xlu0.b32.cont [14/16] 0.0, 128
      %763 = vxpose.xlu0.b32.cont [15/16] 0.0, 128
      %764 = vxpose.xlu0.b32.end [16/16] 0.0, 128
      %v765 = vpop.trf.xlu0
      %v766 = vpop.trf.xlu0
      %v767 = vpop.trf.xlu0
      %v768 = vpop.trf.xlu0
      %v769 = vpop.trf.xlu0
      %v770 = vpop.trf.xlu0
      %v771 = vpop.trf.xlu0
      %v772 = vpop.trf.xlu0
      %v773 = vpop.trf.xlu0
      %v774 = vpop.trf.xlu0
      %v775 = vpop.trf.xlu0
      %v776 = vpop.trf.xlu0
      %v777 = vpop.trf.xlu0
      %v778 = vpop.trf.xlu0
      %v779 = vpop.trf.xlu0
      %v780 = vpop.trf.xlu0
      %781 = vxpose.xlu0.b32.start [1/16] %v551, 128
      %782 = vxpose.xlu0.b32.cont [2/16] %v554, 128
      %783 = vxpose.xlu0.b32.cont [3/16] 0.0, 128
      %784 = vxpose.xlu0.b32.cont [4/16] 0.0, 128
      %785 = vxpose.xlu0.b32.cont [5/16] 0.0, 128
      %786 = vxpose.xlu0.b32.cont [6/16] 0.0, 128
      %787 = vxpose.xlu0.b32.cont [7/16] 0.0, 128
      %788 = vxpose.xlu0.b32.cont [8/16] 0.0, 128
      %789 = vxpose.xlu0.b32.cont [9/16] 0.0, 128
      %790 = vxpose.xlu0.b32.cont [10/16] 0.0, 128
      %791 = vxpose.xlu0.b32.cont [11/16] 0.0, 128
      %792 = vxpose.xlu0.b32.cont [12/16] 0.0, 128
      %793 = vxpose.xlu0.b32.cont [13/16] 0.0, 128
      %794 = vxpose.xlu0.b32.cont [14/16] 0.0, 128
      %795 = vxpose.xlu0.b32.cont [15/16] 0.0, 128
      %796 = vxpose.xlu0.b32.end [16/16] 0.0, 128
      %v797 = vpop.trf.xlu0
      %v798 = vpop.trf.xlu0
      %v799 = vpop.trf.xlu0
      %v800 = vpop.trf.xlu0
      %v801 = vpop.trf.xlu0
      %v802 = vpop.trf.xlu0
      %v803 = vpop.trf.xlu0
      %v804 = vpop.trf.xlu0
      %v805 = vpop.trf.xlu0
      %v806 = vpop.trf.xlu0
      %v807 = vpop.trf.xlu0
      %v808 = vpop.trf.xlu0
      %v809 = vpop.trf.xlu0
      %v810 = vpop.trf.xlu0
      %v811 = vpop.trf.xlu0
      %v812 = vpop.trf.xlu0
      %821 = vrot.lane.b32.xlu0 %v701, 16
      %v822 = vpop.permute.xlu0 %821
      %823 = vrot.lane.b32.xlu0 %v702, 16
      %v824 = vpop.permute.xlu0 %823
      %825 = vrot.lane.b32.xlu0 %v733, 16
      %v826 = vpop.permute.xlu0 %825
      %827 = vrot.lane.b32.xlu0 %v734, 16
      %v828 = vpop.permute.xlu0 %827
      %829 = vrot.lane.b32.xlu0 %v765, 16
      %v830 = vpop.permute.xlu0 %829
      %831 = vrot.lane.b32.xlu0 %v766, 16
      %v832 = vpop.permute.xlu0 %831
      %833 = vrot.lane.b32.xlu0 %v797, 16
      %v834 = vpop.permute.xlu0 %833
      %835 = vrot.lane.b32.xlu0 %v798, 16
      %v836 = vpop.permute.xlu0 %835
      %v845 = vsel %vm373, %v573, %v822
      %v846 = vsel %vm373, %v574, %v824
      %v847 = vsel %vm373, %v605, %v826
      %v848 = vsel %vm373, %v606, %v828
      %v849 = vsel %vm373, %v637, %v830
      %v850 = vsel %vm373, %v638, %v832
      %v851 = vsel %vm373, %v669, %v834
      %v852 = vsel %vm373, %v670, %v836
      %v853 = vpack.c.bf16 %v846, %v845
      %v854 = vpack.c.bf16 %v848, %v847
      %v855 = vpack.c.bf16 %v850, %v849
      %v856 = vpack.c.bf16 %v852, %v851
      %v857 = vld [vmem:[%s4] sm:$0xf]
      %v858 = vld [vmem:[%s4 + $0x4] sm:$0xf]
      %v859 = vld [vmem:[%s4 + $0x8] sm:$0xf]
      %v860 = vld [vmem:[%s4 + $0xc] sm:$0xf]
      %v865 = vunpack.c.l.b16 %v857
      %v866 = vunpack.c.l.b16 %v858
      %v867 = vunpack.c.l.b16 %v859
      %v868 = vunpack.c.l.b16 %v860
      %v869 = vpack.c.b16 %v866, %v865
      %v870 = vpack.c.b16 %v868, %v867
      %v874 = vsel %vm402, %v853, 0
      %v877 = vsel %vm402, %v854, 0
      %v880 = vsel %vm402, %v855, 0
      %v883 = vsel %vm402, %v856, 0
      %885 = vmatprep.subr.bf16.mxu0 0
      %886 = vmatpush1.bf16.msra.mxu0 %v869
      %887 = vmatprep.subr.bf16.mxu0 0
      %888 = vmatpush1.bf16.msra.mxu0 %v870
      %889 = vmatprep.subr.bf16.mxu0 0
      %890 = vmatpush1.bf16.msra.mxu0 0
      %891 = vmatprep.subr.bf16.mxu0 0
      %892 = vmatpush1.bf16.msra.mxu0 0
      %893 = vmatprep.subr.bf16.mxu0 0
      %894 = vmatpush1.bf16.msra.mxu0 0
      %895 = vmatprep.subr.bf16.mxu0 0
      %896 = vmatpush1.bf16.msra.mxu0 0
      %897 = vmatprep.subr.bf16.mxu0 0
      %898 = vmatpush1.bf16.msra.mxu0 0
      %899 = vmatprep.subr.bf16.mxu0 0
      %900 = vmatpush1.bf16.msra.mxu0 0
      %901 = vmatprep.subr.bf16.mxu0 0
      %902 = vmatpush1.bf16.msra.mxu0 0
      %903 = vmatprep.subr.bf16.mxu0 0
      %904 = vmatpush1.bf16.msra.mxu0 0
      %905 = vmatprep.subr.bf16.mxu0 0
      %906 = vmatpush1.bf16.msra.mxu0 0
      %907 = vmatprep.subr.bf16.mxu0 0
      %908 = vmatpush1.bf16.msra.mxu0 0
      %909 = vmatprep.subr.bf16.mxu0 0
      %910 = vmatpush1.bf16.msra.mxu0 0
      %911 = vmatprep.subr.bf16.mxu0 0
      %912 = vmatpush1.bf16.msra.mxu0 0
      %913 = vmatprep.subr.bf16.mxu0 0
      %914 = vmatpush1.bf16.msra.mxu0 0
      %915 = vmatprep.subr.bf16.mxu0 0
      %916 = vmatpush1.bf16.msra.mxu0 0
      %917 = vmatprep.mubr.bf16.mxu0 0
      %918 = vmatmul.mubr.bf16.gmra.mrb[0].mxu0 %v874
      %v919 = vpop.f32.mrb[0].mxu0
      %v920 = vadd.f32 0.0, %v919
      %v921 = vpop.f32.mrb[0].mxu0
      %v922 = vpop.f32.mrb[0].mxu0
      %v923 = vadd.f32 0.0, %v922
      %v924 = vpop.f32.mrb[0].mxu0
      %925 = vmatprep.mubr.bf16.mxu0 0
      %926 = vmatmul.mubr.bf16.gmra.mrb[0].mxu0 %v877
      %v927 = vpop.f32.mrb[0].mxu0
      %v928 = vadd.f32 0.0, %v927
      %v929 = vpop.f32.mrb[0].mxu0
      %v930 = vpop.f32.mrb[0].mxu0
      %v931 = vadd.f32 0.0, %v930
      %v932 = vpop.f32.mrb[0].mxu0
      %933 = vmatprep.mubr.bf16.mxu0 0
      %934 = vmatmul.mubr.bf16.gmra.mrb[0].mxu0 %v880
      %v935 = vpop.f32.mrb[0].mxu0
      %v936 = vadd.f32 0.0, %v935
      %v937 = vpop.f32.mrb[0].mxu0
      %v938 = vpop.f32.mrb[0].mxu0
      %v939 = vadd.f32 0.0, %v938
      %v940 = vpop.f32.mrb[0].mxu0
      %941 = vmatprep.mubr.bf16.mxu0 0
      %942 = vmatmul.mubr.bf16.gmra.mrb[0].mxu0 %v883
      %v943 = vpop.f32.mrb[0].mxu0
      %v944 = vadd.f32 0.0, %v943
      %v945 = vpop.f32.mrb[0].mxu0
      %v946 = vpop.f32.mrb[0].mxu0
      %v947 = vadd.f32 0.0, %v946
      %v948 = vpop.f32.mrb[0].mxu0
      %949 = vdwg.mxu0
      %950 = vst.msk [vmem:[%s306] sm:$0xff] %vm373, %v920
      %951 = vst.msk [vmem:[%s306 + $0x8] sm:$0xff] %vm373, %v923
      %952 = vst.msk [vmem:[%s306 + $0x10] sm:$0xff] %vm373, %v928
      %953 = vst.msk [vmem:[%s306 + $0x18] sm:$0xff] %vm373, %v931
      %954 = vst.msk [vmem:[%s306 + $0x20] sm:$0xff] %vm373, %v936
      %955 = vst.msk [vmem:[%s306 + $0x28] sm:$0xff] %vm373, %v939
      %956 = vst.msk [vmem:[%s306 + $0x30] sm:$0xff] %vm373, %v944
      %957 = vst.msk [vmem:[%s306 + $0x38] sm:$0xff] %vm373, %v947
      %s958 = smul.u32 4, %s21
      %p959 = scmp.lt.s32.totalorder %s20, 1
      %s960 = scalar_select %p959, %s20, 1
      %p961 = scmp.lt.s32.totalorder %s958, 3
      %s962 = scalar_select %p961, %s958, 3
      %s963 = smul.addr %s962, 2
      %s964 = smul.addr %s960, 8
      %s965 = sadd.s32 %s963, %s964
      %s966 = smul.addr %s965, 8
      %s967 = scalar_lea.vmem %s5, %s966
      // Predicated region
      $region41: #{mam_spectral_transform.11} parent=39 // pred_check
        %p968 = pneg %p167
      $region42: #{mam_spectral_transform.11} parent=39 // pred_check_branch
        %970 = sbr.rel (%p968) target = $region44
      $region43: #{mam_spectral_transform.11} parent=39 // pred_region
        %s971 = smul.u32 4, %s21
      $region44: #{mam_spectral_transform.11} parent=39 // pred_fallthru
        _
    $region40: #{mam_spectral_transform.11} parent=5 // pred_fallthru
      _
    %p972 = scmp.le.s32.totalorder 2, %s11
    // Predicated region
    $region45: #{mam_spectral_transform.11} parent=5 // pred_check
      %p973 = pneg %p972
    $region46: #{mam_spectral_transform.11} parent=5 // pred_check_branch
      %975 = sbr.rel (%p973) target = $region48
    $region47: #{mam_spectral_transform.11} parent=5 // pred_region
      %s976 = ssub.s32 %s11, 2
      // Predicated region
      $region49: #{mam_spectral_transform.11} parent=47 // pred_check
        %p977 = pneg %p173
      $region50: #{mam_spectral_transform.11} parent=47 // pred_check_branch
        %979 = sbr.rel (%p977) target = $region52
      $region51: #{mam_spectral_transform.11} parent=47 // pred_region
        %s980 = smul.u32 4, %s23
        %p981 = scmp.lt.s32.totalorder %s22, 1
        %s982 = scalar_select %p981, %s22, 1
        %p983 = scmp.lt.s32.totalorder %s980, 3
        %s984 = scalar_select %p983, %s980, 3
        %s985 = smul.addr %s984, 2
        %s986 = smul.addr %s982, 8
        %s987 = sadd.s32 %s985, %s986
        %s988 = smul.addr %s987, 8
        %s989 = scalar_lea.vmem %s5, %s988
      $region52: #{mam_spectral_transform.11} parent=47 // pred_fallthru
        _
    $region48: #{mam_spectral_transform.11} parent=5 // pred_fallthru
      _
  $region6: #{mam_spectral_transform.11} parent=0 // loop_footer
    %s15 = sadd.s32 1, %s11
  $region7: #{mam_spectral_transform.11} parent=0 // loop_footer_branch
    %10 = sbr.rel target = $region3
  $region8: #{mam_spectral_transform.11} parent=0 // loop_exit
    _

// kernel: mam_spectral_transform.15
$region0: #{mam_spectral_transform.15}
  #allocation0 [shape = 'u32[]', space=smem, size = 0x4, offset = 0x4, fixed_abs, tag = 'smem constant byte address 0x4 - core index']
  #allocation1 [shape = 'u32[144,128]{1,0:T(1,128)}', space=vmem, size = 0x12000, scoped, tag = 'internal scratch']
  %s0 = inlined_call_operand.vmem [shape: f32[2,4,256], index: 0, kind: input, shape index: {}]
  %s1 = inlined_call_operand.vmem [shape: f32[2,4,256], index: 1, kind: input, shape index: {}]
  %s2 = inlined_call_operand.vmem [shape: f32[2,4,128], index: 2, kind: input, shape index: {}]
  %s3 = inlined_call_operand.vmem [shape: f32[8,4], index: 3, kind: input, shape index: {}]
  %s4 = inlined_call_operand.vmem [shape: f32[2,8,256], index: 4, kind: output, shape index: {}]
  %s5 = sld [smem:[#allocation0]]
  $region49: #{mam_spectral_transform.15} parent=0
    _
  %s7 = ssub.s32 1, %s5
  %s8 = scalar_select 0, %s7, %s5
  loop: start=0, step=1, limit=6
  $region2: #{mam_spectral_transform.15} parent=0 // loop_pre_header
    _
  $region3: #{mam_spectral_transform.15} parent=0 // loop_header
    %s10 = sphi 0, %s14
    %p11 = scmp.ge.s32.totalorder %s10, 6
    %s17 = sphi 0, %s36
    %s18 = sphi 0, %s32
    %s19 = sphi 0, %s28
    %s20 = sphi 0, %s17
    %s21 = sphi 0, %s18
    %s22 = sphi 0, %s19
    %s23 = sphi 0, %s20
    %s24 = sphi 0, %s21
    %s25 = sphi 0, %s22
    %s43 = sphi 0, %s45
    %s46 = sphi 0, %s43
    %s47 = sphi 0, %s46
    %s63 = sphi 0, %s47
    %s73 = sphi 0, %s75
    %s76 = sphi 0, %s73
    %s77 = sphi 0, %s76
    %s93 = sphi 0, %s77
    %s101 = sphi 0, %s103
    %s104 = sphi 0, %s101
    %s105 = sphi 0, %s104
    %s121 = sphi 0, %s105
    %s125 = sphi 0, %s125
    %s127 = sphi 0, %s125
    %s128 = sphi 0, %s127
    %s142 = sphi 0, %s128
    %s152 = sphi 0, %s154
    %s155 = sphi 0, %s152
    %s156 = sphi 0, %s155
    %s172 = sphi 0, %s156
  $region4: #{mam_spectral_transform.15} parent=0 // loop_header_branch
    %13 = sbr.rel (%p11) target = $region8
  $region5: #{mam_spectral_transform.15} parent=0 // loop_body
    %s15 = ssub.s32 %s10, 1
    %s16 = ssub.s32 %s10, 2
    %s26 = sadd.s32 1, %s19
    %p27 = scmp.ge.s32.totalorder %s26, 2
    %s28 = scalar_select %p27, 0, %s26
    %s29 = sadd.s32 1, %s18
    %s30 = scalar_select %p27, %s29, %s18
    %p31 = scmp.ge.s32.totalorder %s30, 1
    %s32 = scalar_select %p31, 0, %s30
    %s33 = sadd.s32 1, %s17
    %s34 = scalar_select %p31, %s33, %s17
    %p35 = scmp.ge.s32.totalorder %s34, 2
    %s36 = scalar_select %p35, 0, %s34
    %s37 = sadd.s32 %s19, %s18
    %s38 = sadd.s32 %s28, %s32
    %s39 = ssub.s32 %s17, %s36
    %s40 = ssub.s32 %s37, %s38
    %s41 = sor.u32 %s39, %s40
    %p42 = scmp.eq.s32.totalorder %s41, 0
    %s44 = sadd.s32 %s43, 1
    %s45 = scalar_select %p42, %s43, %s44
    %p48 = pneg %p42
    %p49 = scmp.eq.s32.totalorder %s10, 3
    %p50 = por %p48, %p49
    %p51 = scmp.ne.s32.totalorder %s43, %s46
    %p52 = scmp.eq.s32.totalorder %s10, 0
    %p53 = por %p51, %p52
    %p54 = scmp.ne.s32.totalorder %s43, %s46
    %p55 = scmp.eq.s32.totalorder %s15, 3
    %p56 = por %p54, %p55
    %p57 = scmp.ne.s32.totalorder %s46, %s47
    %p58 = scmp.eq.s32.totalorder %s15, 0
    %p59 = por %p57, %p58
    %p60 = scmp.ne.s32.totalorder %s46, %s47
    %p61 = scmp.eq.s32.totalorder %s16, 3
    %p62 = por %p60, %p61
    %p64 = scmp.ne.s32.totalorder %s47, %s63
    %p65 = scmp.eq.s32.totalorder %s16, 0
    %p66 = por %p64, %p65
    %s67 = sadd.s32 %s19, %s18
    %s68 = sadd.s32 %s28, %s32
    %s69 = ssub.s32 %s17, %s36
    %s70 = ssub.s32 %s67, %s68
    %s71 = sor.u32 %s69, %s70
    %p72 = scmp.eq.s32.totalorder %s71, 0
    %s74 = sadd.s32 %s73, 1
    %s75 = scalar_select %p72, %s73, %s74
    %p78 = pneg %p72
    %p79 = scmp.eq.s32.totalorder %s10, 3
    %p80 = por %p78, %p79
    %p81 = scmp.ne.s32.totalorder %s73, %s76
    %p82 = scmp.eq.s32.totalorder %s10, 0
    %p83 = por %p81, %p82
    %p84 = scmp.ne.s32.totalorder %s73, %s76
    %p85 = scmp.eq.s32.totalorder %s15, 3
    %p86 = por %p84, %p85
    %p87 = scmp.ne.s32.totalorder %s76, %s77
    %p88 = scmp.eq.s32.totalorder %s15, 0
    %p89 = por %p87, %p88
    %p90 = scmp.ne.s32.totalorder %s76, %s77
    %p91 = scmp.eq.s32.totalorder %s16, 3
    %p92 = por %p90, %p91
    %p94 = scmp.ne.s32.totalorder %s77, %s93
    %p95 = scmp.eq.s32.totalorder %s16, 0
    %p96 = por %p94, %p95
    %s97 = ssub.s32 %s17, %s36
    %s98 = ssub.s32 %s18, %s32
    %s99 = sor.u32 %s97, %s98
    %p100 = scmp.eq.s32.totalorder %s99, 0
    %s102 = sadd.s32 %s101, 1
    %s103 = scalar_select %p100, %s101, %s102
    %p106 = pneg %p100
    %p107 = scmp.eq.s32.totalorder %s10, 3
    %p108 = por %p106, %p107
    %p109 = scmp.ne.s32.totalorder %s101, %s104
    %p110 = scmp.eq.s32.totalorder %s10, 0
    %p111 = por %p109, %p110
    %p112 = scmp.ne.s32.totalorder %s101, %s104
    %p113 = scmp.eq.s32.totalorder %s15, 3
    %p114 = por %p112, %p113
    %p115 = scmp.ne.s32.totalorder %s104, %s105
    %p116 = scmp.eq.s32.totalorder %s15, 0
    %p117 = por %p115, %p116
    %p118 = scmp.ne.s32.totalorder %s104, %s105
    %p119 = scmp.eq.s32.totalorder %s16, 3
    %p120 = por %p118, %p119
    %p122 = scmp.ne.s32.totalorder %s105, %s121
    %p123 = scmp.eq.s32.totalorder %s16, 0
    %p124 = por %p122, %p123
    %s126 = sadd.s32 %s125, 1
    %p129 = scmp.eq.s32.totalorder %s10, 3
    %p130 = scmp.ne.s32.totalorder %s125, %s127
    %p131 = scmp.eq.s32.totalorder %s10, 0
    %p132 = por %p130, %p131
    %p133 = scmp.ne.s32.totalorder %s125, %s127
    %p134 = scmp.eq.s32.totalorder %s15, 3
    %p135 = por %p133, %p134
    %p136 = scmp.ne.s32.totalorder %s127, %s128
    %p137 = scmp.eq.s32.totalorder %s15, 0
    %p138 = por %p136, %p137
    %p139 = scmp.ne.s32.totalorder %s127, %s128
    %p140 = scmp.eq.s32.totalorder %s16, 3
    %p141 = por %p139, %p140
    %p143 = scmp.ne.s32.totalorder %s128, %s142
    %p144 = scmp.eq.s32.totalorder %s16, 0
    %p145 = por %p143, %p144
    %s146 = sadd.s32 %s19, %s18
    %s147 = sadd.s32 %s28, %s32
    %s148 = ssub.s32 %s17, %s36
    %s149 = ssub.s32 %s146, %s147
    %s150 = sor.u32 %s148, %s149
    %p151 = scmp.eq.s32.totalorder %s150, 0
    %s153 = sadd.s32 %s152, 1
    %s154 = scalar_select %p151, %s152, %s153
    %p157 = pneg %p151
    %p158 = scmp.eq.s32.totalorder %s10, 3
    %p159 = por %p157, %p158
    %p160 = scmp.ne.s32.totalorder %s152, %s155
    %p161 = scmp.eq.s32.totalorder %s10, 0
    %p162 = por %p160, %p161
    %p163 = scmp.ne.s32.totalorder %s152, %s155
    %p164 = scmp.eq.s32.totalorder %s15, 3
    %p165 = por %p163, %p164
    %p166 = scmp.ne.s32.totalorder %s155, %s156
    %p167 = scmp.eq.s32.totalorder %s15, 0
    %p168 = por %p166, %p167
    %p169 = scmp.ne.s32.totalorder %s155, %s156
    %p170 = scmp.eq.s32.totalorder %s16, 3
    %p171 = por %p169, %p170
    %p173 = scmp.ne.s32.totalorder %s156, %s172
    %p174 = scmp.eq.s32.totalorder %s16, 0
    %p175 = por %p173, %p174
    %p176 = scmp.le.s32.totalorder 1, %s10
    %p177 = scmp.lt.s32.totalorder %s10, 5
    %p178 = pnand %p176, %p177
    %p179 = pneg %p178
    // Predicated region
    $region9: #{mam_spectral_transform.15} parent=5 // pred_check
      _
    $region10: #{mam_spectral_transform.15} parent=5 // pred_check_branch
      %181 = sbr.rel (%p178) target = $region12
    $region11: #{mam_spectral_transform.15} parent=5 // pred_region
      %s182 = ssub.s32 %s10, 1
      // Predicated region
      $region13: #{mam_spectral_transform.15} parent=11 // pred_check
        %p183 = pneg %p138
      $region14: #{mam_spectral_transform.15} parent=11 // pred_check_branch
        %185 = sbr.rel (%p183) target = $region16
      $region15: #{mam_spectral_transform.15} parent=11 // pred_region
        _
      $region16: #{mam_spectral_transform.15} parent=11 // pred_fallthru
        _
    $region12: #{mam_spectral_transform.15} parent=5 // pred_fallthru
      _
    %p186 = scmp.lt.s32.totalorder %s10, 4
    // Predicated region
    $region17: #{mam_spectral_transform.15} parent=5 // pred_check
      %p187 = pneg %p186
    $region18: #{mam_spectral_transform.15} parent=5 // pred_check_branch
      %189 = sbr.rel (%p187) target = $region20
    $region19: #{mam_spectral_transform.15} parent=5 // pred_region
      // Predicated region
      $region21: #{mam_spectral_transform.15} parent=19 // pred_check
        %p190 = pneg %p53
      $region22: #{mam_spectral_transform.15} parent=19 // pred_check_branch
        %192 = sbr.rel (%p190) target = $region24
      $region23: #{mam_spectral_transform.15} parent=19 // pred_region
        %s193 = sadd.s32 %s19, %s18
        %p194 = scmp.lt.s32.totalorder %s17, 1
        %s195 = scalar_select %p194, %s17, 1
        %p196 = scmp.lt.s32.totalorder %s193, 1
        %s197 = scalar_select %p196, %s193, 1
        %s198 = smul.addr %s195, 2
        %s199 = sadd.s32 %s197, %s198
        %s200 = smul.addr %s199, 4
        %s201 = scalar_lea.vmem %s0, %s200
        %s202 = sadd.s32 %s19, %s18
      $region24: #{mam_spectral_transform.15} parent=19 // pred_fallthru
        _
      // Predicated region
      $region25: #{mam_spectral_transform.15} parent=19 // pred_check
        %p203 = pneg %p83
      $region26: #{mam_spectral_transform.15} parent=19 // pred_check_branch
        %205 = sbr.rel (%p203) target = $region28
      $region27: #{mam_spectral_transform.15} parent=19 // pred_region
        %s206 = sadd.s32 %s19, %s18
        %p207 = scmp.lt.s32.totalorder %s17, 1
        %s208 = scalar_select %p207, %s17, 1
        %p209 = scmp.lt.s32.totalorder %s206, 1
        %s210 = scalar_select %p209, %s206, 1
        %s211 = smul.addr %s208, 2
        %s212 = sadd.s32 %s210, %s211
        %s213 = smul.addr %s212, 4
        %s214 = scalar_lea.vmem %s1, %s213
        %s215 = sadd.s32 %s19, %s18
      $region28: #{mam_spectral_transform.15} parent=19 // pred_fallthru
        _
      // Predicated region
      $region29: #{mam_spectral_transform.15} parent=19 // pred_check
        %p216 = pneg %p111
      $region30: #{mam_spectral_transform.15} parent=19 // pred_check_branch
        %218 = sbr.rel (%p216) target = $region32
      $region31: #{mam_spectral_transform.15} parent=19 // pred_region
        %p219 = scmp.lt.s32.totalorder %s17, 1
        %s220 = scalar_select %p219, %s17, 1
        %p221 = scmp.lt.s32.totalorder %s18, 0
        %s222 = scalar_select %p221, %s18, 0
        %s223 = sadd.s32 %s222, %s220
        %s224 = smul.addr %s223, 4
        %s225 = scalar_lea.vmem %s2, %s224
      $region32: #{mam_spectral_transform.15} parent=19 // pred_fallthru
        _
    $region20: #{mam_spectral_transform.15} parent=5 // pred_fallthru
      _
    %p226 = scmp.le.s32.totalorder 1, %s10
    %p227 = scmp.lt.s32.totalorder %s10, 5
    %p228 = pnand %p226, %p227
    %p229 = pneg %p228
    // Predicated region
    $region33: #{mam_spectral_transform.15} parent=5 // pred_check
      _
    $region34: #{mam_spectral_transform.15} parent=5 // pred_check_branch
      %231 = sbr.rel (%p228) target = $region36
    $region35: #{mam_spectral_transform.15} parent=5 // pred_region
      %s232 = ssub.s32 %s10, 1
      %s233 = sadd.s32 %s22, %s21
      %p234 = scmp.lt.s32.totalorder %s20, 1
      %s235 = scalar_select %p234, %s20, 1
      %p236 = scmp.lt.s32.totalorder %s233, 1
      %s237 = scalar_select %p236, %s233, 1
      %s238 = smul.addr %s235, 2
      %s239 = sadd.s32 %s237, %s238
      %s240 = smul.addr %s239, 4
      %s241 = scalar_lea.vmem %s0, %s240
      %p242 = pneg %p59
      %p243 = pneg %p56
      %s244 = sadd.s32 %s22, %s21
      %p245 = scmp.lt.s32.totalorder %s20, 1
      %s246 = scalar_select %p245, %s20, 1
      %p247 = scmp.lt.s32.totalorder %s244, 1
      %s248 = scalar_select %p247, %s244, 1
      %s249 = smul.addr %s246, 2
      %s250 = sadd.s32 %s248, %s249
      %s251 = smul.addr %s250, 4
      %s252 = scalar_lea.vmem %s1, %s251
      %p253 = pneg %p89
      %p254 = pneg %p86
      %p255 = scmp.lt.s32.totalorder %s20, 1
      %s256 = scalar_select %p255, %s20, 1
      %p257 = scmp.lt.s32.totalorder %s21, 0
      %s258 = scalar_select %p257, %s21, 0
      %s259 = sadd.s32 %s258, %s256
      %s260 = smul.addr %s259, 4
      %s261 = scalar_lea.vmem %s2, %s260
      %p262 = pneg %p117
      %p263 = pneg %p114
      %p264 = pneg %p138
      %p265 = pneg %p135
      %p266 = pneg %p168
      %p267 = pneg %p165
      %s268 = sadd.s32 %s22, %s21
      %p269 = scmp.lt.s32.totalorder %s20, 1
      %s270 = scalar_select %p269, %s20, 1
      %p271 = scmp.lt.s32.totalorder %s268, 1
      %s272 = scalar_select %p271, %s268, 1
      %s273 = smul.addr %s270, 2
      %s274 = sadd.s32 %s272, %s273
      %s275 = smul.addr %s274, 8
      %s276 = scalar_lea.vmem %s4, %s275
      %s277 = sadd.s32 %s22, %s21
      %p278 = scmp.lt.s32.totalorder %s20, 1
      %s279 = scalar_select %p278, %s20, 1
      %p280 = scmp.lt.s32.totalorder %s277, 1
      %s281 = scalar_select %p280, %s277, 1
      %s282 = smul.addr %s279, 2
      %s283 = sadd.s32 %s281, %s282
      %s284 = smul.addr %s283, 4
      %s285 = scalar_lea.vmem %s0, %s284
      %s286 = sadd.s32 %s22, %s21
      %s287 = sadd.s32 %s22, %s21
      %p288 = scmp.lt.s32.totalorder %s20, 1
      %s289 = scalar_select %p288, %s20, 1
      %p290 = scmp.lt.s32.totalorder %s287, 1
      %s291 = scalar_select %p290, %s287, 1
      %s292 = smul.addr %s289, 2
      %s293 = sadd.s32 %s291, %s292
      %s294 = smul.addr %s293, 4
      %s295 = scalar_lea.vmem %s1, %s294
      %s296 = sadd.s32 %s22, %s21
      %p297 = scmp.lt.s32.totalorder %s20, 1
      %s298 = scalar_select %p297, %s20, 1
      %p299 = scmp.lt.s32.totalorder %s21, 0
      %s300 = scalar_select %p299, %s21, 0
      %s301 = sadd.s32 %s300, %s298
      %s302 = smul.addr %s301, 4
      %s303 = scalar_lea.vmem %s2, %s302
      %s304 = sadd.s32 %s22, %s21
      %p305 = scmp.lt.s32.totalorder %s20, 1
      %s306 = scalar_select %p305, %s20, 1
      %p307 = scmp.lt.s32.totalorder %s304, 1
      %s308 = scalar_select %p307, %s304, 1
      %s309 = smul.addr %s306, 2
      %s310 = sadd.s32 %s308, %s309
      %s311 = smul.addr %s310, 8
      %s312 = scalar_lea.vmem %s4, %s311
      %s313 = sadd.s32 %s22, %s21
      %v314 = vld [vmem:[%s285] sm:$0xf]
      %v315 = vld [vmem:[%s295] sm:$0xf]
      %v316 = vadd.f32 %v314, %v315
      %v317 = vld [vmem:[%s303] sm:$0xf]
      %v318 = vadd.f32 %v316, %v317
      %v319 = vld [vmem:[%s3] sm:$0xff]
      %vm320 = vcmask 31744
      %v322 = vsel %vm320, %v319, 0
      %vm324 = vcmask 1043456
      %v326 = vsel %vm324, %v318, 0
      %328 = vmatprep.subr.mxu0 0.0
      %v329 = vand.u32 %v326, 4294901760
      %330 = vmatpush1.msra.mxu0 %v329
      %331 = vmatprep.subr.mxu0 0.0
      %332 = vmatpush1.msra.mxu0 0.0
      %333 = vmatprep.subr.mxu0 0.0
      %334 = vmatpush1.msra.mxu0 0.0
      %335 = vmatprep.subr.mxu0 0.0
      %336 = vmatpush1.msra.mxu0 0.0
      %337 = vmatprep.subr.mxu0 0.0
      %338 = vmatpush1.msra.mxu0 0.0
      %339 = vmatprep.subr.mxu0 0.0
      %340 = vmatpush1.msra.mxu0 0.0
      %341 = vmatprep.subr.mxu0 0.0
      %342 = vmatpush1.msra.mxu0 0.0
      %343 = vmatprep.subr.mxu0 0.0
      %344 = vmatpush1.msra.mxu0 0.0
      %345 = vmatprep.subr.mxu0 0.0
      %346 = vmatpush1.msra.mxu0 0.0
      %347 = vmatprep.subr.mxu0 0.0
      %348 = vmatpush1.msra.mxu0 0.0
      %349 = vmatprep.subr.mxu0 0.0
      %350 = vmatpush1.msra.mxu0 0.0
      %351 = vmatprep.subr.mxu0 0.0
      %352 = vmatpush1.msra.mxu0 0.0
      %353 = vmatprep.subr.mxu0 0.0
      %354 = vmatpush1.msra.mxu0 0.0
      %355 = vmatprep.subr.mxu0 0.0
      %356 = vmatpush1.msra.mxu0 0.0
      %357 = vmatprep.subr.mxu0 0.0
      %358 = vmatpush1.msra.mxu0 0.0
      %359 = vmatprep.subr.mxu0 0.0
      %360 = vmatpush1.msra.mxu0 0.0
      %361 = vmatprep.subr.mxu0 0.0
      %362 = vmatpush1.msra.mxu0 0.0
      %363 = vmatprep.subr.mxu0 0.0
      %364 = vmatpush1.msra.mxu0 0.0
      %365 = vmatprep.subr.mxu0 0.0
      %366 = vmatpush1.msra.mxu0 0.0
      %367 = vmatprep.subr.mxu0 0.0
      %368 = vmatpush1.msra.mxu0 0.0
      %369 = vmatprep.subr.mxu0 0.0
      %370 = vmatpush1.msra.mxu0 0.0
      %371 = vmatprep.subr.mxu0 0.0
      %372 = vmatpush1.msra.mxu0 0.0
      %373 = vmatprep.subr.mxu0 0.0
      %374 = vmatpush1.msra.mxu0 0.0
      %375 = vmatprep.subr.mxu0 0.0
      %376 = vmatpush1.msra.mxu0 0.0
      %377 = vmatprep.subr.mxu0 0.0
      %378 = vmatpush1.msra.mxu0 0.0
      %379 = vmatprep.subr.mxu0 0.0
      %380 = vmatpush1.msra.mxu0 0.0
      %381 = vmatprep.subr.mxu0 0.0
      %382 = vmatpush1.msra.mxu0 0.0
      %383 = vmatprep.subr.mxu0 0.0
      %384 = vmatpush1.msra.mxu0 0.0
      %385 = vmatprep.subr.mxu0 0.0
      %386 = vmatpush1.msra.mxu0 0.0
      %387 = vmatprep.subr.mxu0 0.0
      %388 = vmatpush1.msra.mxu0 0.0
      %389 = vmatprep.subr.mxu0 0.0
      %390 = vmatpush1.msra.mxu0 0.0
      %391 = vmatprep.subr.mxu0 0.0
      %392 = vmatpush1.msra.mxu0 0.0
      %393 = vmatprep.mubr.f32.mxu0 0.0
      %v394 = vand.u32 %v322, 4294901760
      %v395 = vsub.f32 %v322, %v394
      %v396 = vand.u32 %v395, 4294901760
      %v397 = vsub.f32 %v395, %v396
      %v398 = vand.u32 %v397, 4294901760
      %399 = vmatmul.mubr.f32.gmra.mrb[0].mxu0 %v398
      %v400 = vpop.f32.mrb[0].mxu0
      %v401 = vadd.f32 0.0, %v400
      %v402 = vpop.f32.mrb[0].mxu0
      %403 = vdwg.mxu0
      %404 = vmatprep.subr.mxu0 0.0
      %v405 = vand.u32 %v326, 4294901760
      %v406 = vsub.f32 %v326, %v405
      %v407 = vand.u32 %v406, 4294901760
      %v408 = vsub.f32 %v406, %v407
      %v409 = vand.u32 %v408, 4294901760
      %410 = vmatpush1.msra.mxu0 %v409
      %411 = vmatprep.subr.mxu0 0.0
      %412 = vmatpush1.msra.mxu0 0.0
      %413 = vmatprep.subr.mxu0 0.0
      %414 = vmatpush1.msra.mxu0 0.0
      %415 = vmatprep.subr.mxu0 0.0
      %416 = vmatpush1.msra.mxu0 0.0
      %417 = vmatprep.subr.mxu0 0.0
      %418 = vmatpush1.msra.mxu0 0.0
      %419 = vmatprep.subr.mxu0 0.0
      %420 = vmatpush1.msra.mxu0 0.0
      %421 = vmatprep.subr.mxu0 0.0
      %422 = vmatpush1.msra.mxu0 0.0
      %423 = vmatprep.subr.mxu0 0.0
      %424 = vmatpush1.msra.mxu0 0.0
      %425 = vmatprep.subr.mxu0 0.0
      %426 = vmatpush1.msra.mxu0 0.0
      %427 = vmatprep.subr.mxu0 0.0
      %428 = vmatpush1.msra.mxu0 0.0
      %429 = vmatprep.subr.mxu0 0.0
      %430 = vmatpush1.msra.mxu0 0.0
      %431 = vmatprep.subr.mxu0 0.0
      %432 = vmatpush1.msra.mxu0 0.0
      %433 = vmatprep.subr.mxu0 0.0
      %434 = vmatpush1.msra.mxu0 0.0
      %435 = vmatprep.subr.mxu0 0.0
      %436 = vmatpush1.msra.mxu0 0.0
      %437 = vmatprep.subr.mxu0 0.0
      %438 = vmatpush1.msra.mxu0 0.0
      %439 = vmatprep.subr.mxu0 0.0
      %440 = vmatpush1.msra.mxu0 0.0
      %441 = vmatprep.subr.mxu0 0.0
      %442 = vmatpush1.msra.mxu0 0.0
      %443 = vmatprep.subr.mxu0 0.0
      %444 = vmatpush1.msra.mxu0 0.0
      %445 = vmatprep.subr.mxu0 0.0
      %446 = vmatpush1.msra.mxu0 0.0
      %447 = vmatprep.subr.mxu0 0.0
      %448 = vmatpush1.msra.mxu0 0.0
      %449 = vmatprep.subr.mxu0 0.0
      %450 = vmatpush1.msra.mxu0 0.0
      %451 = vmatprep.subr.mxu0 0.0
      %452 = vmatpush1.msra.mxu0 0.0
      %453 = vmatprep.subr.mxu0 0.0
      %454 = vmatpush1.msra.mxu0 0.0
      %455 = vmatprep.subr.mxu0 0.0
      %456 = vmatpush1.msra.mxu0 0.0
      %457 = vmatprep.subr.mxu0 0.0
      %458 = vmatpush1.msra.mxu0 0.0
      %459 = vmatprep.subr.mxu0 0.0
      %460 = vmatpush1.msra.mxu0 0.0
      %461 = vmatprep.subr.mxu0 0.0
      %462 = vmatpush1.msra.mxu0 0.0
      %463 = vmatprep.subr.mxu0 0.0
      %464 = vmatpush1.msra.mxu0 0.0
      %465 = vmatprep.subr.mxu0 0.0
      %466 = vmatpush1.msra.mxu0 0.0
      %467 = vmatprep.subr.mxu0 0.0
      %468 = vmatpush1.msra.mxu0 0.0
      %469 = vmatprep.subr.mxu0 0.0
      %470 = vmatpush1.msra.mxu0 0.0
      %471 = vmatprep.subr.mxu0 0.0
      %472 = vmatpush1.msra.mxu0 0.0
      %473 = vmatprep.mubr.f32.mxu0 0.0
      %v474 = vand.u32 %v322, 4294901760
      %475 = vmatmul.mubr.f32.gmra.mrb[0].mxu0 %v474
      %v476 = vpop.f32.mrb[0].mxu0
      %v477 = vadd.f32 %v401, %v476
      %v478 = vpop.f32.mrb[0].mxu0
      %479 = vdwg.mxu0
      %480 = vmatprep.subr.mxu0 0.0
      %v481 = vand.u32 %v326, 4294901760
      %v482 = vsub.f32 %v326, %v481
      %483 = vmatpush1.msra.mxu0 %v482
      %484 = vmatprep.subr.mxu0 0.0
      %485 = vmatpush1.msra.mxu0 0.0
      %486 = vmatprep.subr.mxu0 0.0
      %487 = vmatpush1.msra.mxu0 0.0
      %488 = vmatprep.subr.mxu0 0.0
      %489 = vmatpush1.msra.mxu0 0.0
      %490 = vmatprep.subr.mxu0 0.0
      %491 = vmatpush1.msra.mxu0 0.0
      %492 = vmatprep.subr.mxu0 0.0
      %493 = vmatpush1.msra.mxu0 0.0
      %494 = vmatprep.subr.mxu0 0.0
      %495 = vmatpush1.msra.mxu0 0.0
      %496 = vmatprep.subr.mxu0 0.0
      %497 = vmatpush1.msra.mxu0 0.0
      %498 = vmatprep.subr.mxu0 0.0
      %499 = vmatpush1.msra.mxu0 0.0
      %500 = vmatprep.subr.mxu0 0.0
      %501 = vmatpush1.msra.mxu0 0.0
      %502 = vmatprep.subr.mxu0 0.0
      %503 = vmatpush1.msra.mxu0 0.0
      %504 = vmatprep.subr.mxu0 0.0
      %505 = vmatpush1.msra.mxu0 0.0
      %506 = vmatprep.subr.mxu0 0.0
      %507 = vmatpush1.msra.mxu0 0.0
      %508 = vmatprep.subr.mxu0 0.0
      %509 = vmatpush1.msra.mxu0 0.0
      %510 = vmatprep.subr.mxu0 0.0
      %511 = vmatpush1.msra.mxu0 0.0
      %512 = vmatprep.subr.mxu0 0.0
      %513 = vmatpush1.msra.mxu0 0.0
      %514 = vmatprep.subr.mxu0 0.0
      %515 = vmatpush1.msra.mxu0 0.0
      %516 = vmatprep.subr.mxu0 0.0
      %517 = vmatpush1.msra.mxu0 0.0
      %518 = vmatprep.subr.mxu0 0.0
      %519 = vmatpush1.msra.mxu0 0.0
      %520 = vmatprep.subr.mxu0 0.0
      %521 = vmatpush1.msra.mxu0 0.0
      %522 = vmatprep.subr.mxu0 0.0
      %523 = vmatpush1.msra.mxu0 0.0
      %524 = vmatprep.subr.mxu0 0.0
      %525 = vmatpush1.msra.mxu0 0.0
      %526 = vmatprep.subr.mxu0 0.0
      %527 = vmatpush1.msra.mxu0 0.0
      %528 = vmatprep.subr.mxu0 0.0
      %529 = vmatpush1.msra.mxu0 0.0
      %530 = vmatprep.subr.mxu0 0.0
      %531 = vmatpush1.msra.mxu0 0.0
      %532 = vmatprep.subr.mxu0 0.0
      %533 = vmatpush1.msra.mxu0 0.0
      %534 = vmatprep.subr.mxu0 0.0
      %535 = vmatpush1.msra.mxu0 0.0
      %536 = vmatprep.subr.mxu0 0.0
      %537 = vmatpush1.msra.mxu0 0.0
      %538 = vmatprep.subr.mxu0 0.0
      %539 = vmatpush1.msra.mxu0 0.0
      %540 = vmatprep.subr.mxu0 0.0
      %541 = vmatpush1.msra.mxu0 0.0
      %542 = vmatprep.subr.mxu0 0.0
      %543 = vmatpush1.msra.mxu0 0.0
      %544 = vmatprep.subr.mxu0 0.0
      %545 = vmatpush1.msra.mxu0 0.0
      %546 = vmatprep.mubr.f32.mxu0 0.0
      %v547 = vand.u32 %v322, 4294901760
      %v548 = vsub.f32 %v322, %v547
      %549 = vmatmul.mubr.f32.gmra.mrb[0].mxu0 %v548
      %v550 = vpop.f32.mrb[0].mxu0
      %v551 = vadd.f32 %v477, %v550
      %v552 = vpop.f32.mrb[0].mxu0
      %553 = vdwg.mxu0
      %554 = vmatprep.subr.mxu0 0.0
      %v555 = vand.u32 %v326, 4294901760
      %556 = vmatpush1.msra.mxu0 %v555
      %557 = vmatprep.subr.mxu0 0.0
      %558 = vmatpush1.msra.mxu0 0.0
      %559 = vmatprep.subr.mxu0 0.0
      %560 = vmatpush1.msra.mxu0 0.0
      %561 = vmatprep.subr.mxu0 0.0
      %562 = vmatpush1.msra.mxu0 0.0
      %563 = vmatprep.subr.mxu0 0.0
      %564 = vmatpush1.msra.mxu0 0.0
      %565 = vmatprep.subr.mxu0 0.0
      %566 = vmatpush1.msra.mxu0 0.0
      %567 = vmatprep.subr.mxu0 0.0
      %568 = vmatpush1.msra.mxu0 0.0
      %569 = vmatprep.subr.mxu0 0.0
      %570 = vmatpush1.msra.mxu0 0.0
      %571 = vmatprep.subr.mxu0 0.0
      %572 = vmatpush1.msra.mxu0 0.0
      %573 = vmatprep.subr.mxu0 0.0
      %574 = vmatpush1.msra.mxu0 0.0
      %575 = vmatprep.subr.mxu0 0.0
      %576 = vmatpush1.msra.mxu0 0.0
      %577 = vmatprep.subr.mxu0 0.0
      %578 = vmatpush1.msra.mxu0 0.0
      %579 = vmatprep.subr.mxu0 0.0
      %580 = vmatpush1.msra.mxu0 0.0
      %581 = vmatprep.subr.mxu0 0.0
      %582 = vmatpush1.msra.mxu0 0.0
      %583 = vmatprep.subr.mxu0 0.0
      %584 = vmatpush1.msra.mxu0 0.0
      %585 = vmatprep.subr.mxu0 0.0
      %586 = vmatpush1.msra.mxu0 0.0
      %587 = vmatprep.subr.mxu0 0.0
      %588 = vmatpush1.msra.mxu0 0.0
      %589 = vmatprep.subr.mxu0 0.0
      %590 = vmatpush1.msra.mxu0 0.0
      %591 = vmatprep.subr.mxu0 0.0
      %592 = vmatpush1.msra.mxu0 0.0
      %593 = vmatprep.subr.mxu0 0.0
      %594 = vmatpush1.msra.mxu0 0.0
      %595 = vmatprep.subr.mxu0 0.0
      %596 = vmatpush1.msra.mxu0 0.0
      %597 = vmatprep.subr.mxu0 0.0
      %598 = vmatpush1.msra.mxu0 0.0
      %599 = vmatprep.subr.mxu0 0.0
      %600 = vmatpush1.msra.mxu0 0.0
      %601 = vmatprep.subr.mxu0 0.0
      %602 = vmatpush1.msra.mxu0 0.0
      %603 = vmatprep.subr.mxu0 0.0
      %604 = vmatpush1.msra.mxu0 0.0
      %605 = vmatprep.subr.mxu0 0.0
      %606 = vmatpush1.msra.mxu0 0.0
      %607 = vmatprep.subr.mxu0 0.0
      %608 = vmatpush1.msra.mxu0 0.0
      %609 = vmatprep.subr.mxu0 0.0
      %610 = vmatpush1.msra.mxu0 0.0
      %611 = vmatprep.subr.mxu0 0.0
      %612 = vmatpush1.msra.mxu0 0.0
      %613 = vmatprep.subr.mxu0 0.0
      %614 = vmatpush1.msra.mxu0 0.0
      %615 = vmatprep.subr.mxu0 0.0
      %616 = vmatpush1.msra.mxu0 0.0
      %617 = vmatprep.subr.mxu0 0.0
      %618 = vmatpush1.msra.mxu0 0.0
      %619 = vmatprep.mubr.f32.mxu0 0.0
      %v620 = vand.u32 %v322, 4294901760
      %v621 = vsub.f32 %v322, %v620
      %v622 = vand.u32 %v621, 4294901760
      %623 = vmatmul.mubr.f32.gmra.mrb[0].mxu0 %v622
      %v624 = vpop.f32.mrb[0].mxu0
      %v625 = vadd.f32 %v551, %v624
      %v626 = vpop.f32.mrb[0].mxu0
      %627 = vdwg.mxu0
      %628 = vmatprep.subr.mxu0 0.0
      %v629 = vand.u32 %v326, 4294901760
      %v630 = vsub.f32 %v326, %v629
      %v631 = vand.u32 %v630, 4294901760
      %632 = vmatpush1.msra.mxu0 %v631
      %633 = vmatprep.subr.mxu0 0.0
      %634 = vmatpush1.msra.mxu0 0.0
      %635 = vmatprep.subr.mxu0 0.0
      %636 = vmatpush1.msra.mxu0 0.0
      %637 = vmatprep.subr.mxu0 0.0
      %638 = vmatpush1.msra.mxu0 0.0
      %639 = vmatprep.subr.mxu0 0.0
      %640 = vmatpush1.msra.mxu0 0.0
      %641 = vmatprep.subr.mxu0 0.0
      %642 = vmatpush1.msra.mxu0 0.0
      %643 = vmatprep.subr.mxu0 0.0
      %644 = vmatpush1.msra.mxu0 0.0
      %645 = vmatprep.subr.mxu0 0.0
      %646 = vmatpush1.msra.mxu0 0.0
      %647 = vmatprep.subr.mxu0 0.0
      %648 = vmatpush1.msra.mxu0 0.0
      %649 = vmatprep.subr.mxu0 0.0
      %650 = vmatpush1.msra.mxu0 0.0
      %651 = vmatprep.subr.mxu0 0.0
      %652 = vmatpush1.msra.mxu0 0.0
      %653 = vmatprep.subr.mxu0 0.0
      %654 = vmatpush1.msra.mxu0 0.0
      %655 = vmatprep.subr.mxu0 0.0
      %656 = vmatpush1.msra.mxu0 0.0
      %657 = vmatprep.subr.mxu0 0.0
      %658 = vmatpush1.msra.mxu0 0.0
      %659 = vmatprep.subr.mxu0 0.0
      %660 = vmatpush1.msra.mxu0 0.0
      %661 = vmatprep.subr.mxu0 0.0
      %662 = vmatpush1.msra.mxu0 0.0
      %663 = vmatprep.subr.mxu0 0.0
      %664 = vmatpush1.msra.mxu0 0.0
      %665 = vmatprep.subr.mxu0 0.0
      %666 = vmatpush1.msra.mxu0 0.0
      %667 = vmatprep.subr.mxu0 0.0
      %668 = vmatpush1.msra.mxu0 0.0
      %669 = vmatprep.subr.mxu0 0.0
      %670 = vmatpush1.msra.mxu0 0.0
      %671 = vmatprep.subr.mxu0 0.0
      %672 = vmatpush1.msra.mxu0 0.0
      %673 = vmatprep.subr.mxu0 0.0
      %674 = vmatpush1.msra.mxu0 0.0
      %675 = vmatprep.subr.mxu0 0.0
      %676 = vmatpush1.msra.mxu0 0.0
      %677 = vmatprep.subr.mxu0 0.0
      %678 = vmatpush1.msra.mxu0 0.0
      %679 = vmatprep.subr.mxu0 0.0
      %680 = vmatpush1.msra.mxu0 0.0
      %681 = vmatprep.subr.mxu0 0.0
      %682 = vmatpush1.msra.mxu0 0.0
      %683 = vmatprep.subr.mxu0 0.0
      %684 = vmatpush1.msra.mxu0 0.0
      %685 = vmatprep.subr.mxu0 0.0
      %686 = vmatpush1.msra.mxu0 0.0
      %687 = vmatprep.subr.mxu0 0.0
      %688 = vmatpush1.msra.mxu0 0.0
      %689 = vmatprep.subr.mxu0 0.0
      %690 = vmatpush1.msra.mxu0 0.0
      %691 = vmatprep.subr.mxu0 0.0
      %692 = vmatpush1.msra.mxu0 0.0
      %693 = vmatprep.subr.mxu0 0.0
      %694 = vmatpush1.msra.mxu0 0.0
      %695 = vmatprep.mubr.f32.mxu0 0.0
      %v696 = vand.u32 %v322, 4294901760
      %697 = vmatmul.mubr.f32.gmra.mrb[0].mxu0 %v696
      %v698 = vpop.f32.mrb[0].mxu0
      %v699 = vadd.f32 %v625, %v698
      %v700 = vpop.f32.mrb[0].mxu0
      %701 = vdwg.mxu0
      %702 = vmatprep.subr.mxu0 0.0
      %v703 = vand.u32 %v326, 4294901760
      %704 = vmatpush1.msra.mxu0 %v703
      %705 = vmatprep.subr.mxu0 0.0
      %706 = vmatpush1.msra.mxu0 0.0
      %707 = vmatprep.subr.mxu0 0.0
      %708 = vmatpush1.msra.mxu0 0.0
      %709 = vmatprep.subr.mxu0 0.0
      %710 = vmatpush1.msra.mxu0 0.0
      %711 = vmatprep.subr.mxu0 0.0
      %712 = vmatpush1.msra.mxu0 0.0
      %713 = vmatprep.subr.mxu0 0.0
      %714 = vmatpush1.msra.mxu0 0.0
      %715 = vmatprep.subr.mxu0 0.0
      %716 = vmatpush1.msra.mxu0 0.0
      %717 = vmatprep.subr.mxu0 0.0
      %718 = vmatpush1.msra.mxu0 0.0
      %719 = vmatprep.subr.mxu0 0.0
      %720 = vmatpush1.msra.mxu0 0.0
      %721 = vmatprep.subr.mxu0 0.0
      %722 = vmatpush1.msra.mxu0 0.0
      %723 = vmatprep.subr.mxu0 0.0
      %724 = vmatpush1.msra.mxu0 0.0
      %725 = vmatprep.subr.mxu0 0.0
      %726 = vmatpush1.msra.mxu0 0.0
      %727 = vmatprep.subr.mxu0 0.0
      %728 = vmatpush1.msra.mxu0 0.0
      %729 = vmatprep.subr.mxu0 0.0
      %730 = vmatpush1.msra.mxu0 0.0
      %731 = vmatprep.subr.mxu0 0.0
      %732 = vmatpush1.msra.mxu0 0.0
      %733 = vmatprep.subr.mxu0 0.0
      %734 = vmatpush1.msra.mxu0 0.0
      %735 = vmatprep.subr.mxu0 0.0
      %736 = vmatpush1.msra.mxu0 0.0
      %737 = vmatprep.subr.mxu0 0.0
      %738 = vmatpush1.msra.mxu0 0.0
      %739 = vmatprep.subr.mxu0 0.0
      %740 = vmatpush1.msra.mxu0 0.0
      %741 = vmatprep.subr.mxu0 0.0
      %742 = vmatpush1.msra.mxu0 0.0
      %743 = vmatprep.subr.mxu0 0.0
      %744 = vmatpush1.msra.mxu0 0.0
      %745 = vmatprep.subr.mxu0 0.0
      %746 = vmatpush1.msra.mxu0 0.0
      %747 = vmatprep.subr.mxu0 0.0
      %748 = vmatpush1.msra.mxu0 0.0
      %749 = vmatprep.subr.mxu0 0.0
      %750 = vmatpush1.msra.mxu0 0.0
      %751 = vmatprep.subr.mxu0 0.0
      %752 = vmatpush1.msra.mxu0 0.0
      %753 = vmatprep.subr.mxu0 0.0
      %754 = vmatpush1.msra.mxu0 0.0
      %755 = vmatprep.subr.mxu0 0.0
      %756 = vmatpush1.msra.mxu0 0.0
      %757 = vmatprep.subr.mxu0 0.0
      %758 = vmatpush1.msra.mxu0 0.0
      %759 = vmatprep.subr.mxu0 0.0
      %760 = vmatpush1.msra.mxu0 0.0
      %761 = vmatprep.subr.mxu0 0.0
      %762 = vmatpush1.msra.mxu0 0.0
      %763 = vmatprep.subr.mxu0 0.0
      %764 = vmatpush1.msra.mxu0 0.0
      %765 = vmatprep.subr.mxu0 0.0
      %766 = vmatpush1.msra.mxu0 0.0
      %767 = vmatprep.mubr.f32.mxu0 0.0
      %v768 = vand.u32 %v322, 4294901760
      %769 = vmatmul.mubr.f32.gmra.mrb[0].mxu0 %v768
      %v770 = vpop.f32.mrb[0].mxu0
      %v771 = vadd.f32 %v699, %v770
      %v772 = vpop.f32.mrb[0].mxu0
      %773 = vdwg.mxu0
      %774 = vst [vmem:[%s312] sm:$0xff] %v771
      %s775 = sadd.s32 %s22, %s21
      %p776 = scmp.lt.s32.totalorder %s20, 1
      %s777 = scalar_select %p776, %s20, 1
      %p778 = scmp.lt.s32.totalorder %s775, 1
      %s779 = scalar_select %p778, %s775, 1
      %s780 = smul.addr %s777, 2
      %s781 = sadd.s32 %s779, %s780
      %s782 = smul.addr %s781, 8
      %s783 = scalar_lea.vmem %s4, %s782
      // Predicated region
      $region37: #{mam_spectral_transform.15} parent=35 // pred_check
        %p784 = pneg %p165
      $region38: #{mam_spectral_transform.15} parent=35 // pred_check_branch
        %786 = sbr.rel (%p784) target = $region40
      $region39: #{mam_spectral_transform.15} parent=35 // pred_region
        %s787 = sadd.s32 %s22, %s21
      $region40: #{mam_spectral_transform.15} parent=35 // pred_fallthru
        _
    $region36: #{mam_spectral_transform.15} parent=5 // pred_fallthru
      _
    %p788 = scmp.le.s32.totalorder 2, %s10
    // Predicated region
    $region41: #{mam_spectral_transform.15} parent=5 // pred_check
      %p789 = pneg %p788
    $region42: #{mam_spectral_transform.15} parent=5 // pred_check_branch
      %791 = sbr.rel (%p789) target = $region44
    $region43: #{mam_spectral_transform.15} parent=5 // pred_region
      %s792 = ssub.s32 %s10, 2
      // Predicated region
      $region45: #{mam_spectral_transform.15} parent=43 // pred_check
        %p793 = pneg %p171
      $region46: #{mam_spectral_transform.15} parent=43 // pred_check_branch
        %795 = sbr.rel (%p793) target = $region48
      $region47: #{mam_spectral_transform.15} parent=43 // pred_region
        %s796 = sadd.s32 %s25, %s24
        %p797 = scmp.lt.s32.totalorder %s23, 1
        %s798 = scalar_select %p797, %s23, 1
        %p799 = scmp.lt.s32.totalorder %s796, 1
        %s800 = scalar_select %p799, %s796, 1
        %s801 = smul.addr %s798, 2
        %s802 = sadd.s32 %s800, %s801
        %s803 = smul.addr %s802, 8
        %s804 = scalar_lea.vmem %s4, %s803
      $region48: #{mam_spectral_transform.15} parent=43 // pred_fallthru
        _
    $region44: #{mam_spectral_transform.15} parent=5 // pred_fallthru
      _
  $region6: #{mam_spectral_transform.15} parent=0 // loop_footer
    %s14 = sadd.s32 1, %s10
  $region7: #{mam_spectral_transform.15} parent=0 // loop_footer_branch
    %9 = sbr.rel target = $region3
  $region8: #{mam_spectral_transform.15} parent=0 // loop_exit
    _

</llo_original>
